<compile_context>
chip_gen: v7x
topology: tpu7x:2x2x1
jax: 0.10.0
libtpu: 0.0.40
codegen_flags: <defaults>
</compile_context>

<pallas_src>
import functools
import math

import numpy as np
import jax
import jax.numpy as jnp
from jax.experimental import pallas as pl
from jax.experimental.pallas import tpu as pltpu


# --------------------------------------------------------------------------
# in-kernel helpers
# --------------------------------------------------------------------------
def _ln(x, g, b, eps=1e-5):
    """LayerNorm over last dim of a 2-D tile. g/b are (1, E)."""
    mu = jnp.mean(x, axis=-1, keepdims=True)
    var = jnp.mean((x - mu) ** 2, axis=-1, keepdims=True)
    return (x - mu) * jax.lax.rsqrt(var + eps) * g + b


# --------------------------------------------------------------------------
# constant matrices (built once in param prep)
# --------------------------------------------------------------------------
def make_shift_mats(H, W):
    """G[k] is (L, L): x @ G[k] == tap k of the 3x3 reflect-padded neighborhood."""
    L = H * W

    def refl(i, n):
        if i < 0:
            return -i
        if i >= n:
            return 2 * n - 2 - i
        return i

    G = np.zeros((9, L, L), np.float32)
    for kh in range(3):
        for kw in range(3):
            k = kh * 3 + kw
            for h in range(H):
                for w in range(W):
                    src = refl(h + kh - 1, H) * W + refl(w + kw - 1, W)
                    G[k, src, h * W + w] = 1.0
    return jnp.asarray(G)


def make_pool_matrix(L, E):
    """(L, E) matrix implementing AdaptiveAvgPool1d(E) exactly (general L)."""
    P = np.zeros((L, E), np.float32)
    for e in range(E):
        s = (e * L) // E
        t = -((-(e + 1) * L) // E)          # ceil((e+1)*L/E)
        P[s:t, e] = 1.0 / (t - s)
    return jnp.asarray(P)


# --------------------------------------------------------------------------
# kernel 1: full branch  (conv+GN+ReLU, conv+GN, adaptive pool, Linear/LN head)
# grid = (branch, batch); weights are stacked over the branch axis.
# --------------------------------------------------------------------------
def _branch_kernel(x_ref, g_ref, w1_ref, v1_ref, w2_ref, v2_ref,
                   pool_ref, wl_ref, vh_ref, o_ref):
    x = x_ref[0, 0]                                    # (Cb, L) channel-major

    def conv_gn(src, w_ref, v_ref, relu):
        # 3x3 reflect conv: gather the 9 shifted copies (9*Cb, L) then do ONE
        # weight matmul with contraction 9*Cb (tap accumulation on the MXU).
        shifted = jnp.concatenate(
            [jnp.dot(src, g_ref[k], preferred_element_type=jnp.float32)
             for k in range(9)], axis=0)               # (9*Cb, L)
        v = v_ref[0]                                   # (Cb, 3): bias, gamma, beta
        y = jnp.dot(w_ref[0], shifted, preferred_element_type=jnp.float32)
        y = y + v[:, 0:1]                              # conv bias (per channel)
        mu = jnp.mean(y, keepdims=True)                # GroupNorm(1, C): stats over (C, L)
        var = jnp.mean((y - mu) ** 2, keepdims=True)
        y = (y - mu) * jax.lax.rsqrt(var + 1e-5)
        y = y * v[:, 1:2] + v[:, 2:3]                  # per-channel affine
        return jnp.maximum(y, 0.0) if relu else y

    y1 = conv_gn(x, w1_ref, v1_ref, True)
    y2 = conv_gn(y1, w2_ref, v2_ref, False)

    # AdaptiveAvgPool1d(E) as a matmul (exact, general L)
    pooled = jnp.dot(y2, pool_ref[...], preferred_element_type=jnp.float32)   # (Cb, E)

    # Linear -> LN -> ReLU -> Linear -> LN
    vh = vh_ref[0]                                     # (6, E)
    h = jnp.dot(pooled, wl_ref[0, 0], preferred_element_type=jnp.float32) + vh[0:1, :]
    h = _ln(h, vh[1:2, :], vh[2:3, :])
    h = jnp.maximum(h, 0.0)
    h = jnp.dot(h, wl_ref[0, 1], preferred_element_type=jnp.float32) + vh[3:4, :]
    o_ref[0, 0] = _ln(h, vh[4:5, :], vh[5:6, :])


def run_branches(x, bp, G, P):
    """x: (S, B, Cb, L) stacked inputs; bp: branch params stacked over S."""
    S, B, Cb, L = x.shape
    E = P.shape[1]
    return pl.pallas_call(
        _branch_kernel,
        out_shape=jax.ShapeDtypeStruct((S, B, Cb, E), jnp.float32),
        grid=(S, B),
        in_specs=[
            pl.BlockSpec((1, 1, Cb, L), lambda s, b: (s, b, 0, 0)),
            pl.BlockSpec((9, L, L), lambda s, b: (0, 0, 0)),
            pl.BlockSpec((1, Cb, 9 * Cb), lambda s, b: (s, 0, 0)),
            pl.BlockSpec((1, Cb, 3), lambda s, b: (s, 0, 0)),
            pl.BlockSpec((1, Cb, 9 * Cb), lambda s, b: (s, 0, 0)),
            pl.BlockSpec((1, Cb, 3), lambda s, b: (s, 0, 0)),
            pl.BlockSpec((L, E), lambda s, b: (0, 0)),
            pl.BlockSpec((1, 2, E, E), lambda s, b: (s, 0, 0, 0)),
            pl.BlockSpec((1, 6, E), lambda s, b: (s, 0, 0)),
        ],
        out_specs=pl.BlockSpec((1, 1, Cb, E), lambda s, b: (s, b, 0, 0)),
        compiler_params=pltpu.CompilerParams(
            dimension_semantics=("parallel", "parallel")),
    )(x, G, bp["w1"], bp["v1"], bp["w2"], bp["v2"], P, bp["wl"], bp["vh"])


# --------------------------------------------------------------------------
# kernel 2: merged w_vi / w_ir projections (batch folded, single launch)
# first layers concatenated; second layers kept separate (no zero padding).
# --------------------------------------------------------------------------
def _wproj_kernel(x_ref, w1_ref, b1_ref, w2v_ref, b2v_ref, w2i_ref, b2i_ref,
                  ovi_ref, oir_ref, *, h1):
    h = jnp.dot(x_ref[...], w1_ref[...], preferred_element_type=jnp.float32) + b1_ref[...]
    ovi_ref[...] = (jnp.dot(h[:, :h1], w2v_ref[...],
                            preferred_element_type=jnp.float32) + b2v_ref[...])
    oir_ref[...] = (jnp.dot(h[:, h1:], w2i_ref[...],
                            preferred_element_type=jnp.float32) + b2i_ref[...])


def wproj(x, w1, b1, w2v, b2v, w2i, b2i):
    B, K1 = x.shape
    H2 = w2v.shape[0]          # hidden size (256)
    K2 = w2v.shape[1]          # 2*C*C
    kern = functools.partial(_wproj_kernel, h1=H2)
    return pl.pallas_call(
        kern,
        out_shape=(jax.ShapeDtypeStruct((B, K2), jnp.float32),
                   jax.ShapeDtypeStruct((B, K2), jnp.float32)),
        grid=(1,),
        in_specs=[
            pl.BlockSpec((B, K1), lambda i: (0, 0)),
            pl.BlockSpec((K1, 2 * H2), lambda i: (0, 0)),
            pl.BlockSpec((1, 2 * H2), lambda i: (0, 0)),
            pl.BlockSpec((H2, K2), lambda i: (0, 0)),
            pl.BlockSpec((1, K2), lambda i: (0, 0)),
            pl.BlockSpec((H2, K2), lambda i: (0, 0)),
            pl.BlockSpec((1, K2), lambda i: (0, 0)),
        ],
        out_specs=(pl.BlockSpec((B, K2), lambda i: (0, 0)),
                   pl.BlockSpec((B, K2), lambda i: (0, 0))),
        compiler_params=pltpu.CompilerParams(dimension_semantics=("arbitrary",)),
    )(x, w1, b1, w2v, b2v, w2i, b2i)


# --------------------------------------------------------------------------
# kernel 3: fused cross attention + 1x1 conv_out + InstanceNorm2d
# --------------------------------------------------------------------------
def _atten_kernel(vif_ref, irf_ref, catf_ref, wvi_ref, wir_ref, catre_ref,
                  qkw_ref, qkb_ref, cw_ref, o_ref, *, scale):
    vif = vif_ref[0]                 # (C, E)
    irf = irf_ref[0]                 # (C, E)
    catf = catf_ref[0]               # (2C, E)
    catre = catre_ref[0]             # (2C, L)  original concatenated features

    def lin(x, i):
        return (jnp.dot(x, qkw_ref[i], preferred_element_type=jnp.float32)
                + qkb_ref[i:i + 1, :])

    q_vi = lin(vif, 0)
    q_ir = lin(irf, 1)
    k_vi = lin(catf, 2)
    k_ir = lin(catf, 3)

    def attend(q, k, w):
        # scores (C, 2C) = (q @ k^T + w) / sqrt(E), softmax over last dim, @ catre
        s = jax.lax.dot_general(q, k, (((1,), (1,)), ((), ())),
                                preferred_element_type=jnp.float32)
        s = (s + w) * scale
        m = jnp.max(s, axis=-1, keepdims=True)
        e = jnp.exp(s - m)
        a = e / jnp.sum(e, axis=-1, keepdims=True)
        return jnp.dot(a, catre, preferred_element_type=jnp.float32)   # (C, L)

    wf_vi = attend(q_vi, k_ir, wvi_ref[0])
    wf_ir = attend(q_ir, k_vi, wir_ref[0])

    x = jnp.concatenate([wf_vi, wf_ir], axis=0)                        # (2C, L)
    # 1x1 conv == channel matmul; conv bias omitted (InstanceNorm cancels it)
    y = jnp.dot(cw_ref[...], x, preferred_element_type=jnp.float32)
    mu = jnp.mean(y, axis=-1, keepdims=True)
    var = jnp.mean((y - mu) ** 2, axis=-1, keepdims=True)
    o_ref[0] = (y - mu) * jax.lax.rsqrt(var + 1e-5)


def attention_out(vi_f, ir_f, cat_f, w_vi, w_ir, catf_re, qkw_t, qkb,
                  conv_w, embed_dim):
    B, C, E = vi_f.shape
    C2 = cat_f.shape[1]
    L = catf_re.shape[2]
    O = conv_w.shape[0]
    scale = 1.0 / math.sqrt(float(embed_dim))
    kern = functools.partial(_atten_kernel, scale=scale)
    return pl.pallas_call(
        kern,
        out_shape=jax.ShapeDtypeStruct((B, O, L), jnp.float32),
        grid=(B,),
        in_specs=[
            pl.BlockSpec((1, C, E), lambda i: (i, 0, 0)),
            pl.BlockSpec((1, C, E), lambda i: (i, 0, 0)),
            pl.BlockSpec((1, C2, E), lambda i: (i, 0, 0)),
            pl.BlockSpec((1, C, C2), lambda i: (i, 0, 0)),
            pl.BlockSpec((1, C, C2), lambda i: (i, 0, 0)),
            pl.BlockSpec((1, C2, L), lambda i: (i, 0, 0)),
            pl.BlockSpec((4, E, E), lambda i: (0, 0, 0)),
            pl.BlockSpec((4, E), lambda i: (0, 0)),
            pl.BlockSpec((O, C2), lambda i: (0, 0)),
        ],
        out_specs=pl.BlockSpec((1, O, L), lambda i: (i, 0, 0)),
        compiler_params=pltpu.CompilerParams(dimension_semantics=("parallel",)),
    )(vi_f, ir_f, cat_f, w_vi, w_ir, catf_re, qkw_t, qkb, conv_w)


# --------------------------------------------------------------------------
# full forward (only cheap reshapes / concats outside the 4 Pallas calls)
# --------------------------------------------------------------------------
def cla_forward(vif, irf, pp, *, C, E, O, H, W):
    B = vif.shape[0]
    L = H * W
    vif_f = vif.reshape(B, C, L)
    irf_f = irf.reshape(B, C, L)
    catf_re = jnp.concatenate([vif_f, irf_f], axis=1)              # (B, 2C, L)

    # vi and ir branches share one launch (grid (2, B)); cat branch is its own
    # launch (different channel count).
    vi_ir = run_branches(jnp.stack([vif_f, irf_f], axis=0),
                         pp["vi_ir"], pp["G"], pp["P"])            # (2, B, C, E)
    vi_f, ir_f = vi_ir[0], vi_ir[1]
    cat_f = run_branches(catf_re[None], pp["cat"], pp["G"], pp["P"])[0]   # (B, 2C, E)

    w_vi_flat, w_ir_flat = wproj(cat_f.reshape(B, 2 * C * E),
                                 pp["wp_w1"], pp["wp_b1"],
                                 pp["wp_w2_vi"], pp["wp_b2_vi"],
                                 pp["wp_w2_ir"], pp["wp_b2_ir"])   # 2 x (B, 2*C*C)
    w_vi = w_vi_flat.reshape(B, C, 2 * C)
    w_ir = w_ir_flat.reshape(B, C, 2 * C)

    y = attention_out(vi_f, ir_f, cat_f, w_vi, w_ir, catf_re,
                      pp["qkw"], pp["qkb"], pp["conv_out_w"], E)   # (B, O, L)
    return y.reshape(B, O, H, W)


# --------------------------------------------------------------------------
# parameters: raw (PyTorch-shaped) init + one-time kernel-friendly prep
# --------------------------------------------------------------------------
def _w(key, shape, scale=0.1):
    return scale * jax.random.normal(key, shape, dtype=jnp.float32)


def init_branch(key, Cb, E):
    ks = jax.random.split(key, 8)
    return dict(
        conv1_w=_w(ks[0], (Cb, Cb, 3, 3)), conv1_b=_w(ks[1], (Cb,), 0.01),
        gn1_g=jnp.ones((Cb,), jnp.float32), gn1_b=jnp.zeros((Cb,), jnp.float32),
        conv2_w=_w(ks[2], (Cb, Cb, 3, 3)), conv2_b=_w(ks[3], (Cb,), 0.01),
        gn2_g=jnp.ones((Cb,), jnp.float32), gn2_b=jnp.zeros((Cb,), jnp.float32),
        lin1_w=_w(ks[4], (E, E)), lin1_b=_w(ks[5], (E,), 0.01),
        ln1_g=jnp.ones((E,), jnp.float32), ln1_b=jnp.zeros((E,), jnp.float32),
        lin2_w=_w(ks[6], (E, E)), lin2_b=_w(ks[7], (E,), 0.01),
        ln2_g=jnp.ones((E,), jnp.float32), ln2_b=jnp.zeros((E,), jnp.float32),
    )


def init_params(key, C, E, O):
    keys = jax.random.split(key, 10)
    p = {
        "vi": init_branch(keys[0], C, E),
        "ir": init_branch(keys[1], C, E),
        "cat": init_branch(keys[2], 2 * C, E),
    }
    for name, k in zip(["q_vi", "q_ir", "k_vi", "k_ir"], keys[3:7]):
        k1, k2 = jax.random.split(k)
        p[name + "_w"] = _w(k1, (E, E))
        p[name + "_b"] = _w(k2, (E,), 0.01)
    for name, k in zip(["w_vi", "w_ir"], keys[7:9]):
        k1, k2, k3, k4 = jax.random.split(k, 4)
        p[name + "_w1"] = _w(k1, (256, 2 * C * E))
        p[name + "_b1"] = _w(k2, (256,), 0.01)
        p[name + "_w2"] = _w(k3, (2 * C * C, 256))
        p[name + "_b2"] = _w(k4, (2 * C * C,), 0.01)
    k1, _ = jax.random.split(keys[9])
    # 1x1 conv weight (O, 2C, 1, 1) stored as (O, 2C); bias omitted — it is
    # exactly cancelled by the InstanceNorm mean subtraction that follows.
    p["conv_out_w"] = _w(k1, (O, 2 * C))
    return p


def prepare_params(p, C, E, H, W):
    """One-time weight reshuffle: tap flattening, transposes, stacking, merges."""
    L = H * W

    def prep_branch(bp):
        Cb = bp["conv1_w"].shape[0]

        def flat_taps(w):   # (Cout, Cin, 3, 3) -> (Cout, 9*Cin), k = kh*3+kw major
            return jnp.transpose(w, (0, 2, 3, 1)).reshape(Cb, 9 * Cb)

        return dict(
            w1=flat_taps(bp["conv1_w"]),
            v1=jnp.stack([bp["conv1_b"], bp["gn1_g"], bp["gn1_b"]], axis=1),  # (Cb,3)
            w2=flat_taps(bp["conv2_w"]),
            v2=jnp.stack([bp["conv2_b"], bp["gn2_g"], bp["gn2_b"]], axis=1),
            wl=jnp.stack([bp["lin1_w"].T, bp["lin2_w"].T], axis=0),           # (2,E,E)
            vh=jnp.stack([bp["lin1_b"], bp["ln1_g"], bp["ln1_b"],
                          bp["lin2_b"], bp["ln2_g"], bp["ln2_b"]], axis=0),   # (6,E)
        )

    def stack(dicts):   # stack per-branch param dicts on a leading axis
        return {k: jnp.stack([d[k] for d in dicts], axis=0) for k in dicts[0]}

    H1 = p["w_vi_w1"].shape[0]          # 256
    wp_w1 = jnp.concatenate([p["w_vi_w1"].T, p["w_ir_w1"].T], axis=1)         # (2CE, 2*H1)
    wp_b1 = jnp.concatenate([p["w_vi_b1"], p["w_ir_b1"]]).reshape(1, 2 * H1)

    return dict(
        G=make_shift_mats(H, W),
        P=make_pool_matrix(L, E),
        vi_ir=stack([prep_branch(p["vi"]), prep_branch(p["ir"])]),
        cat=stack([prep_branch(p["cat"])]),
        wp_w1=wp_w1, wp_b1=wp_b1,
        wp_w2_vi=p["w_vi_w2"].T, wp_b2_vi=p["w_vi_b2"].reshape(1, -1),
        wp_w2_ir=p["w_ir_w2"].T, wp_b2_ir=p["w_ir_b2"].reshape(1, -1),
        qkw=jnp.stack([p["q_vi_w"].T, p["q_ir_w"].T,
                       p["k_vi_w"].T, p["k_ir_w"].T], axis=0),                # (4,E,E)
        qkb=jnp.stack([p["q_vi_b"], p["q_ir_b"],
                       p["k_vi_b"], p["k_ir_b"]], axis=0),                    # (4,E)
        conv_out_w=p["conv_out_w"],
    )


# --------------------------------------------------------------------------
if __name__ == "__main__":
    # small shapes consistent with the module: in_channels=8, embed_dim=16,
    # out_channels=16, H=W=8.
    B, C, E, H, W, O = 2, 8, 16, 8, 8, 16

    key = jax.random.PRNGKey(0)
    kp, kv, ki = jax.random.split(key, 3)
    params = init_params(kp, C, E, O)
    prepped = prepare_params(params, C, E, H, W)

    vif = jax.random.normal(kv, (B, C, H, W), dtype=jnp.float32)
    irf = jax.random.normal(ki, (B, C, H, W), dtype=jnp.float32)

    fwd = jax.jit(functools.partial(cla_forward, C=C, E=E, O=O, H=H, W=W))
    y = fwd(vif, irf, prepped)
    y = jax.block_until_ready(y)

    assert y.shape == (B, O, H, W), y.shape
    assert bool(jnp.all(jnp.isfinite(y)))
    print("KERNEL_OK")
</pallas_src>

<mosaic_0001>
module attributes {stable_mosaic.version = 11 : i64} {
  func.func @_atten_kernel(%arg0: i32, %arg1: memref<1x8x16xf32, #tpu.memory_space<vmem>>, %arg2: memref<1x8x16xf32, #tpu.memory_space<vmem>>, %arg3: memref<1x16x16xf32, #tpu.memory_space<vmem>>, %arg4: memref<1x8x16xf32, #tpu.memory_space<vmem>>, %arg5: memref<1x8x16xf32, #tpu.memory_space<vmem>>, %arg6: memref<1x16x64xf32, #tpu.memory_space<vmem>>, %arg7: memref<4x16x16xf32, #tpu.memory_space<vmem>>, %arg8: memref<4x16xf32, #tpu.memory_space<vmem>>, %arg9: memref<16x16xf32, #tpu.memory_space<vmem>>, %arg10: memref<1x16x64xf32, #tpu.memory_space<vmem>>) attributes {dimension_semantics = [#tpu.dimension_semantics<parallel>], iteration_bounds = array<i64: 2>, scalar_prefetch = 0 : i64, scratch_operands = 0 : i64, tpu.core_type = #tpu.core_type<tc>, window_params = [{transform_indices = @transform_0, window_bounds = array<i64: 1, 8, 16>}, {transform_indices = @transform_1, window_bounds = array<i64: 1, 8, 16>}, {transform_indices = @transform_2, window_bounds = array<i64: 1, 16, 16>}, {transform_indices = @transform_3, window_bounds = array<i64: 1, 8, 16>}, {transform_indices = @transform_4, window_bounds = array<i64: 1, 8, 16>}, {transform_indices = @transform_5, window_bounds = array<i64: 1, 16, 64>}, {pipeline_mode = #tpu.pipeline_mode<synchronous>, transform_indices = @transform_6, window_bounds = array<i64: 4, 16, 16>}, {pipeline_mode = #tpu.pipeline_mode<synchronous>, transform_indices = @transform_7, window_bounds = array<i64: 4, 16>}, {pipeline_mode = #tpu.pipeline_mode<synchronous>, transform_indices = @transform_8, window_bounds = array<i64: 16, 16>}, {transform_indices = @transform_9, window_bounds = array<i64: 1, 16, 64>}]} {
    %c0 = arith.constant 0 : index
    %c0_0 = arith.constant 0 : index
    %c0_1 = arith.constant 0 : index
    %0 = vector.load %arg1[%c0, %c0_0, %c0_1] : memref<1x8x16xf32, #tpu.memory_space<vmem>>, vector<1x8x16xf32>
    %1 = vector.shape_cast %0 : vector<1x8x16xf32> to vector<8x16xf32>
    %c0_2 = arith.constant 0 : index
    %c0_3 = arith.constant 0 : index
    %c0_4 = arith.constant 0 : index
    %2 = vector.load %arg2[%c0_2, %c0_3, %c0_4] : memref<1x8x16xf32, #tpu.memory_space<vmem>>, vector<1x8x16xf32>
    %3 = vector.shape_cast %2 : vector<1x8x16xf32> to vector<8x16xf32>
    %c0_5 = arith.constant 0 : index
    %c0_6 = arith.constant 0 : index
    %c0_7 = arith.constant 0 : index
    %4 = vector.load %arg3[%c0_5, %c0_6, %c0_7] : memref<1x16x16xf32, #tpu.memory_space<vmem>>, vector<1x16x16xf32>
    %5 = vector.shape_cast %4 : vector<1x16x16xf32> to vector<16x16xf32>
    %c0_8 = arith.constant 0 : index
    %c0_9 = arith.constant 0 : index
    %c0_10 = arith.constant 0 : index
    %6 = vector.load %arg6[%c0_8, %c0_9, %c0_10] : memref<1x16x64xf32, #tpu.memory_space<vmem>>, vector<1x16x64xf32>
    %7 = vector.shape_cast %6 : vector<1x16x64xf32> to vector<16x64xf32>
    %c0_11 = arith.constant 0 : index
    %c0_12 = arith.constant 0 : index
    %c0_13 = arith.constant 0 : index
    %8 = vector.load %arg7[%c0_11, %c0_12, %c0_13] : memref<4x16x16xf32, #tpu.memory_space<vmem>>, vector<1x16x16xf32>
    %9 = vector.shape_cast %8 : vector<1x16x16xf32> to vector<16x16xf32>
    %cst = arith.constant dense<0.000000e+00> : vector<8x16xf32>
    %10 = tpu.matmul %1, %9, %cst {dimension_numbers = #tpu.dot_dimension_numbers<[1], [0], [0], [1], [0, 0, 1, 1], [], []>} : vector<8x16xf32>, vector<16x16xf32>, vector<8x16xf32> -> vector<8x16xf32>
    %c0_14 = arith.constant 0 : index
    %c0_15 = arith.constant 0 : index
    %11 = vector.load %arg8[%c0_14, %c0_15] : memref<4x16xf32, #tpu.memory_space<vmem>>, vector<1x16xf32>
    %12 = vector.broadcast %11 : vector<1x16xf32> to vector<8x16xf32>
    %13 = arith.addf %10, %12 : vector<8x16xf32>
    %c1 = arith.constant 1 : index
    %c0_16 = arith.constant 0 : index
    %c0_17 = arith.constant 0 : index
    %14 = vector.load %arg7[%c1, %c0_16, %c0_17] : memref<4x16x16xf32, #tpu.memory_space<vmem>>, vector<1x16x16xf32>
    %15 = vector.shape_cast %14 : vector<1x16x16xf32> to vector<16x16xf32>
    %cst_18 = arith.constant dense<0.000000e+00> : vector<8x16xf32>
    %16 = tpu.matmul %3, %15, %cst_18 {dimension_numbers = #tpu.dot_dimension_numbers<[1], [0], [0], [1], [0, 0, 1, 1], [], []>} : vector<8x16xf32>, vector<16x16xf32>, vector<8x16xf32> -> vector<8x16xf32>
    %c1_19 = arith.constant 1 : index
    %c0_20 = arith.constant 0 : index
    %17 = vector.load %arg8[%c1_19, %c0_20] : memref<4x16xf32, #tpu.memory_space<vmem>>, vector<1x16xf32>
    %18 = vector.broadcast %17 : vector<1x16xf32> to vector<8x16xf32>
    %19 = arith.addf %16, %18 : vector<8x16xf32>
    %c2 = arith.constant 2 : index
    %c0_21 = arith.constant 0 : index
    %c0_22 = arith.constant 0 : index
    %20 = vector.load %arg7[%c2, %c0_21, %c0_22] : memref<4x16x16xf32, #tpu.memory_space<vmem>>, vector<1x16x16xf32>
    %21 = vector.shape_cast %20 : vector<1x16x16xf32> to vector<16x16xf32>
    %cst_23 = arith.constant dense<0.000000e+00> : vector<16x16xf32>
    %22 = tpu.matmul %5, %21, %cst_23 {dimension_numbers = #tpu.dot_dimension_numbers<[1], [0], [0], [1], [0, 0, 1, 1], [], []>} : vector<16x16xf32>, vector<16x16xf32>, vector<16x16xf32> -> vector<16x16xf32>
    %c2_24 = arith.constant 2 : index
    %c0_25 = arith.constant 0 : index
    %23 = vector.load %arg8[%c2_24, %c0_25] : memref<4x16xf32, #tpu.memory_space<vmem>>, vector<1x16xf32>
    %24 = vector.broadcast %23 : vector<1x16xf32> to vector<16x16xf32>
    %25 = arith.addf %22, %24 : vector<16x16xf32>
    %c3 = arith.constant 3 : index
    %c0_26 = arith.constant 0 : index
    %c0_27 = arith.constant 0 : index
    %26 = vector.load %arg7[%c3, %c0_26, %c0_27] : memref<4x16x16xf32, #tpu.memory_space<vmem>>, vector<1x16x16xf32>
    %27 = vector.shape_cast %26 : vector<1x16x16xf32> to vector<16x16xf32>
    %cst_28 = arith.constant dense<0.000000e+00> : vector<16x16xf32>
    %28 = tpu.matmul %5, %27, %cst_28 {dimension_numbers = #tpu.dot_dimension_numbers<[1], [0], [0], [1], [0, 0, 1, 1], [], []>} : vector<16x16xf32>, vector<16x16xf32>, vector<16x16xf32> -> vector<16x16xf32>
    %c3_29 = arith.constant 3 : index
    %c0_30 = arith.constant 0 : index
    %29 = vector.load %arg8[%c3_29, %c0_30] : memref<4x16xf32, #tpu.memory_space<vmem>>, vector<1x16xf32>
    %30 = vector.broadcast %29 : vector<1x16xf32> to vector<16x16xf32>
    %31 = arith.addf %28, %30 : vector<16x16xf32>
    %c0_31 = arith.constant 0 : index
    %c0_32 = arith.constant 0 : index
    %c0_33 = arith.constant 0 : index
    %32 = vector.load %arg4[%c0_31, %c0_32, %c0_33] : memref<1x8x16xf32, #tpu.memory_space<vmem>>, vector<1x8x16xf32>
    %33 = vector.shape_cast %32 : vector<1x8x16xf32> to vector<8x16xf32>
    %cst_34 = arith.constant dense<0.000000e+00> : vector<8x16xf32>
    %34 = tpu.matmul %13, %31, %cst_34 {dimension_numbers = #tpu.dot_dimension_numbers<[1], [1], [0], [0], [0, 0, 1, 0], [], []>} : vector<8x16xf32>, vector<16x16xf32>, vector<8x16xf32> -> vector<8x16xf32>
    %35 = arith.addf %34, %33 : vector<8x16xf32>
    %cst_35 = arith.constant 2.500000e-01 : f32
    %36 = vector.broadcast %cst_35 : f32 to vector<8x16xf32>
    %37 = arith.mulf %35, %36 : vector<8x16xf32>
    %cst_36 = arith.constant dense<0xFF800000> : vector<8xf32>
    %38 = vector.multi_reduction <maximumf>, %37, %cst_36 [1] : vector<8x16xf32> to vector<8xf32>
    %39 = vector.shape_cast %38 : vector<8xf32> to vector<8x1xf32>
    %40 = vector.broadcast %39 : vector<8x1xf32> to vector<8x16xf32>
    %41 = arith.subf %37, %40 : vector<8x16xf32>
    %42 = math.exp %41 : vector<8x16xf32>
    %cst_37 = arith.constant dense<0.000000e+00> : vector<8xf32>
    %43 = vector.multi_reduction <add>, %42, %cst_37 [1] : vector<8x16xf32> to vector<8xf32>
    %44 = vector.shape_cast %43 : vector<8xf32> to vector<8x1xf32>
    %45 = vector.broadcast %44 : vector<8x1xf32> to vector<8x16xf32>
    %46 = arith.divf %42, %45 : vector<8x16xf32>
    %cst_38 = arith.constant dense<0.000000e+00> : vector<8x64xf32>
    %47 = tpu.matmul %46, %7, %cst_38 {dimension_numbers = #tpu.dot_dimension_numbers<[1], [0], [0], [1], [0, 0, 1, 1], [], []>} : vector<8x16xf32>, vector<16x64xf32>, vector<8x64xf32> -> vector<8x64xf32>
    %c0_39 = arith.constant 0 : index
    %c0_40 = arith.constant 0 : index
    %c0_41 = arith.constant 0 : index
    %48 = vector.load %arg5[%c0_39, %c0_40, %c0_41] : memref<1x8x16xf32, #tpu.memory_space<vmem>>, vector<1x8x16xf32>
    %49 = vector.shape_cast %48 : vector<1x8x16xf32> to vector<8x16xf32>
    %cst_42 = arith.constant dense<0.000000e+00> : vector<8x16xf32>
    %50 = tpu.matmul %19, %25, %cst_42 {dimension_numbers = #tpu.dot_dimension_numbers<[1], [1], [0], [0], [0, 0, 1, 0], [], []>} : vector<8x16xf32>, vector<16x16xf32>, vector<8x16xf32> -> vector<8x16xf32>
    %51 = arith.addf %50, %49 : vector<8x16xf32>
    %cst_43 = arith.constant 2.500000e-01 : f32
    %52 = vector.broadcast %cst_43 : f32 to vector<8x16xf32>
    %53 = arith.mulf %51, %52 : vector<8x16xf32>
    %cst_44 = arith.constant dense<0xFF800000> : vector<8xf32>
    %54 = vector.multi_reduction <maximumf>, %53, %cst_44 [1] : vector<8x16xf32> to vector<8xf32>
    %55 = vector.shape_cast %54 : vector<8xf32> to vector<8x1xf32>
    %56 = vector.broadcast %55 : vector<8x1xf32> to vector<8x16xf32>
    %57 = arith.subf %53, %56 : vector<8x16xf32>
    %58 = math.exp %57 : vector<8x16xf32>
    %cst_45 = arith.constant dense<0.000000e+00> : vector<8xf32>
    %59 = vector.multi_reduction <add>, %58, %cst_45 [1] : vector<8x16xf32> to vector<8xf32>
    %60 = vector.shape_cast %59 : vector<8xf32> to vector<8x1xf32>
    %61 = vector.broadcast %60 : vector<8x1xf32> to vector<8x16xf32>
    %62 = arith.divf %58, %61 : vector<8x16xf32>
    %cst_46 = arith.constant dense<0.000000e+00> : vector<8x64xf32>
    %63 = tpu.matmul %62, %7, %cst_46 {dimension_numbers = #tpu.dot_dimension_numbers<[1], [0], [0], [1], [0, 0, 1, 1], [], []>} : vector<8x16xf32>, vector<16x64xf32>, vector<8x64xf32> -> vector<8x64xf32>
    %64 = tpu.concatenate %47, %63 in 0 : vector<8x64xf32>, vector<8x64xf32> -> vector<16x64xf32>
    %c0_47 = arith.constant 0 : index
    %c0_48 = arith.constant 0 : index
    %65 = vector.load %arg9[%c0_47, %c0_48] : memref<16x16xf32, #tpu.memory_space<vmem>>, vector<16x16xf32>
    %cst_49 = arith.constant dense<0.000000e+00> : vector<16x64xf32>
    %66 = tpu.matmul %65, %64, %cst_49 {dimension_numbers = #tpu.dot_dimension_numbers<[1], [0], [0], [1], [0, 0, 1, 1], [], []>} : vector<16x16xf32>, vector<16x64xf32>, vector<16x64xf32> -> vector<16x64xf32>
    %cst_50 = arith.constant dense<0.000000e+00> : vector<16xf32>
    %67 = vector.multi_reduction <add>, %66, %cst_50 [1] : vector<16x64xf32> to vector<16xf32>
    %68 = vector.shape_cast %67 : vector<16xf32> to vector<16x1xf32>
    %cst_51 = arith.constant 6.400000e+01 : f32
    %69 = vector.broadcast %cst_51 : f32 to vector<16x1xf32>
    %70 = arith.divf %68, %69 : vector<16x1xf32>
    %71 = vector.broadcast %70 : vector<16x1xf32> to vector<16x64xf32>
    %72 = arith.subf %66, %71 : vector<16x64xf32>
    %73 = arith.mulf %72, %72 : vector<16x64xf32>
    %cst_52 = arith.constant dense<0.000000e+00> : vector<16xf32>
    %74 = vector.multi_reduction <add>, %73, %cst_52 [1] : vector<16x64xf32> to vector<16xf32>
    %75 = vector.shape_cast %74 : vector<16xf32> to vector<16x1xf32>
    %cst_53 = arith.constant 6.400000e+01 : f32
    %76 = vector.broadcast %cst_53 : f32 to vector<16x1xf32>
    %77 = arith.divf %75, %76 : vector<16x1xf32>
    %78 = vector.broadcast %70 : vector<16x1xf32> to vector<16x64xf32>
    %79 = arith.subf %66, %78 : vector<16x64xf32>
    %cst_54 = arith.constant 9.99999974E-6 : f32
    %80 = vector.broadcast %cst_54 : f32 to vector<16x1xf32>
    %81 = arith.addf %77, %80 : vector<16x1xf32>
    %82 = math.rsqrt %81 : vector<16x1xf32>
    %83 = vector.broadcast %82 : vector<16x1xf32> to vector<16x64xf32>
    %84 = arith.mulf %79, %83 : vector<16x64xf32>
    %c0_55 = arith.constant 0 : index
    %c0_56 = arith.constant 0 : index
    %c0_57 = arith.constant 0 : index
    %85 = vector.load %arg10[%c0_55, %c0_56, %c0_57] : memref<1x16x64xf32, #tpu.memory_space<vmem>>, vector<1x16x64xf32>
    %86 = vector.shape_cast %85 : vector<1x16x64xf32> to vector<16x64xf32>
    %87 = vector.shape_cast %84 : vector<16x64xf32> to vector<1x16x64xf32>
    tpu.vector_store %arg10[%c0_55, %c0_56, %c0_57], %87 {strides = array<i32>} : memref<1x16x64xf32, #tpu.memory_space<vmem>>, vector<1x16x64xf32>,
    return
  }
  func.func @transform_0(%arg0: i32) -> (i32, i32, i32) {
    %c0_i32 = arith.constant 0 : i32
    %c0_i32_0 = arith.constant 0 : i32
    %c0_i32_1 = arith.constant 0 : i32
    return %arg0, %c0_i32, %c0_i32_0 : i32, i32, i32
  }
  func.func @transform_1(%arg0: i32) -> (i32, i32, i32) {
    %c0_i32 = arith.constant 0 : i32
    %c0_i32_0 = arith.constant 0 : i32
    %c0_i32_1 = arith.constant 0 : i32
    return %arg0, %c0_i32, %c0_i32_0 : i32, i32, i32
  }
  func.func @transform_2(%arg0: i32) -> (i32, i32, i32) {
    %c0_i32 = arith.constant 0 : i32
    %c0_i32_0 = arith.constant 0 : i32
    %c0_i32_1 = arith.constant 0 : i32
    return %arg0, %c0_i32, %c0_i32_0 : i32, i32, i32
  }
  func.func @transform_3(%arg0: i32) -> (i32, i32, i32) {
    %c0_i32 = arith.constant 0 : i32
    %c0_i32_0 = arith.constant 0 : i32
    %c0_i32_1 = arith.constant 0 : i32
    return %arg0, %c0_i32, %c0_i32_0 : i32, i32, i32
  }
  func.func @transform_4(%arg0: i32) -> (i32, i32, i32) {
    %c0_i32 = arith.constant 0 : i32
    %c0_i32_0 = arith.constant 0 : i32
    %c0_i32_1 = arith.constant 0 : i32
    return %arg0, %c0_i32, %c0_i32_0 : i32, i32, i32
  }
  func.func @transform_5(%arg0: i32) -> (i32, i32, i32) {
    %c0_i32 = arith.constant 0 : i32
    %c0_i32_0 = arith.constant 0 : i32
    %c0_i32_1 = arith.constant 0 : i32
    return %arg0, %c0_i32, %c0_i32_0 : i32, i32, i32
  }
  func.func @transform_6(%arg0: i32) -> (i32, i32, i32) {
    %c0_i32 = arith.constant 0 : i32
    %c0_i32_0 = arith.constant 0 : i32
    %c0_i32_1 = arith.constant 0 : i32
    %c0_i32_2 = arith.constant 0 : i32
    return %c0_i32, %c0_i32_0, %c0_i32_1 : i32, i32, i32
  }
  func.func @transform_7(%arg0: i32) -> (i32, i32) {
    %c0_i32 = arith.constant 0 : i32
    %c0_i32_0 = arith.constant 0 : i32
    %c0_i32_1 = arith.constant 0 : i32
    return %c0_i32, %c0_i32_0 : i32, i32
  }
  func.func @transform_8(%arg0: i32) -> (i32, i32) {
    %c0_i32 = arith.constant 0 : i32
    %c0_i32_0 = arith.constant 0 : i32
    %c0_i32_1 = arith.constant 0 : i32
    return %c0_i32, %c0_i32_0 : i32, i32
  }
  func.func @transform_9(%arg0: i32) -> (i32, i32, i32) {
    %c0_i32 = arith.constant 0 : i32
    %c0_i32_0 = arith.constant 0 : i32
    %c0_i32_1 = arith.constant 0 : i32
    return %arg0, %c0_i32, %c0_i32_0 : i32, i32, i32
  }
}

module attributes {stable_mosaic.version = 11 : i64} {
  func.func @_branch_kernel(%arg0: i32, %arg1: i32, %arg2: memref<1x1x8x64xf32, #tpu.memory_space<vmem>>, %arg3: memref<9x64x64xf32, #tpu.memory_space<vmem>>, %arg4: memref<1x8x72xf32, #tpu.memory_space<vmem>>, %arg5: memref<1x8x3xf32, #tpu.memory_space<vmem>>, %arg6: memref<1x8x72xf32, #tpu.memory_space<vmem>>, %arg7: memref<1x8x3xf32, #tpu.memory_space<vmem>>, %arg8: memref<64x16xf32, #tpu.memory_space<vmem>>, %arg9: memref<1x2x16x16xf32, #tpu.memory_space<vmem>>, %arg10: memref<1x6x16xf32, #tpu.memory_space<vmem>>, %arg11: memref<1x1x8x16xf32, #tpu.memory_space<vmem>>) attributes {dimension_semantics = [#tpu.dimension_semantics<parallel>, #tpu.dimension_semantics<parallel>], iteration_bounds = array<i64: 2, 2>, scalar_prefetch = 0 : i64, scratch_operands = 0 : i64, tpu.core_type = #tpu.core_type<tc>, window_params = [{transform_indices = @transform_0, window_bounds = array<i64: 1, 1, 8, 64>}, {pipeline_mode = #tpu.pipeline_mode<synchronous>, transform_indices = @transform_1, window_bounds = array<i64: 9, 64, 64>}, {transform_indices = @transform_2, window_bounds = array<i64: 1, 8, 72>}, {transform_indices = @transform_3, window_bounds = array<i64: 1, 8, 3>}, {transform_indices = @transform_4, window_bounds = array<i64: 1, 8, 72>}, {transform_indices = @transform_5, window_bounds = array<i64: 1, 8, 3>}, {pipeline_mode = #tpu.pipeline_mode<synchronous>, transform_indices = @transform_6, window_bounds = array<i64: 64, 16>}, {transform_indices = @transform_7, window_bounds = array<i64: 1, 2, 16, 16>}, {transform_indices = @transform_8, window_bounds = array<i64: 1, 6, 16>}, {transform_indices = @transform_9, window_bounds = array<i64: 1, 1, 8, 16>}]} {
    %c0 = arith.constant 0 : index
    %c0_0 = arith.constant 0 : index
    %c0_1 = arith.constant 0 : index
    %c0_2 = arith.constant 0 : index
    %0 = vector.load %arg2[%c0, %c0_0, %c0_1, %c0_2] : memref<1x1x8x64xf32, #tpu.memory_space<vmem>>, vector<1x1x8x64xf32>
    %1 = vector.shape_cast %0 : vector<1x1x8x64xf32> to vector<8x64xf32>
    %c0_3 = arith.constant 0 : index
    %c0_4 = arith.constant 0 : index
    %c0_5 = arith.constant 0 : index
    %2 = vector.load %arg3[%c0_3, %c0_4, %c0_5] : memref<9x64x64xf32, #tpu.memory_space<vmem>>, vector<1x64x64xf32>
    %3 = vector.shape_cast %2 : vector<1x64x64xf32> to vector<64x64xf32>
    %cst = arith.constant dense<0.000000e+00> : vector<8x64xf32>
    %4 = tpu.matmul %1, %3, %cst {dimension_numbers = #tpu.dot_dimension_numbers<[1], [0], [0], [1], [0, 0, 1, 1], [], []>} : vector<8x64xf32>, vector<64x64xf32>, vector<8x64xf32> -> vector<8x64xf32>
    %c1 = arith.constant 1 : index
    %c0_6 = arith.constant 0 : index
    %c0_7 = arith.constant 0 : index
    %5 = vector.load %arg3[%c1, %c0_6, %c0_7] : memref<9x64x64xf32, #tpu.memory_space<vmem>>, vector<1x64x64xf32>
    %6 = vector.shape_cast %5 : vector<1x64x64xf32> to vector<64x64xf32>
    %cst_8 = arith.constant dense<0.000000e+00> : vector<8x64xf32>
    %7 = tpu.matmul %1, %6, %cst_8 {dimension_numbers = #tpu.dot_dimension_numbers<[1], [0], [0], [1], [0, 0, 1, 1], [], []>} : vector<8x64xf32>, vector<64x64xf32>, vector<8x64xf32> -> vector<8x64xf32>
    %c2 = arith.constant 2 : index
    %c0_9 = arith.constant 0 : index
    %c0_10 = arith.constant 0 : index
    %8 = vector.load %arg3[%c2, %c0_9, %c0_10] : memref<9x64x64xf32, #tpu.memory_space<vmem>>, vector<1x64x64xf32>
    %9 = vector.shape_cast %8 : vector<1x64x64xf32> to vector<64x64xf32>
    %cst_11 = arith.constant dense<0.000000e+00> : vector<8x64xf32>
    %10 = tpu.matmul %1, %9, %cst_11 {dimension_numbers = #tpu.dot_dimension_numbers<[1], [0], [0], [1], [0, 0, 1, 1], [], []>} : vector<8x64xf32>, vector<64x64xf32>, vector<8x64xf32> -> vector<8x64xf32>
    %c3 = arith.constant 3 : index
    %c0_12 = arith.constant 0 : index
    %c0_13 = arith.constant 0 : index
    %11 = vector.load %arg3[%c3, %c0_12, %c0_13] : memref<9x64x64xf32, #tpu.memory_space<vmem>>, vector<1x64x64xf32>
    %12 = vector.shape_cast %11 : vector<1x64x64xf32> to vector<64x64xf32>
    %cst_14 = arith.constant dense<0.000000e+00> : vector<8x64xf32>
    %13 = tpu.matmul %1, %12, %cst_14 {dimension_numbers = #tpu.dot_dimension_numbers<[1], [0], [0], [1], [0, 0, 1, 1], [], []>} : vector<8x64xf32>, vector<64x64xf32>, vector<8x64xf32> -> vector<8x64xf32>
    %c4 = arith.constant 4 : index
    %c0_15 = arith.constant 0 : index
    %c0_16 = arith.constant 0 : index
    %14 = vector.load %arg3[%c4, %c0_15, %c0_16] : memref<9x64x64xf32, #tpu.memory_space<vmem>>, vector<1x64x64xf32>
    %15 = vector.shape_cast %14 : vector<1x64x64xf32> to vector<64x64xf32>
    %cst_17 = arith.constant dense<0.000000e+00> : vector<8x64xf32>
    %16 = tpu.matmul %1, %15, %cst_17 {dimension_numbers = #tpu.dot_dimension_numbers<[1], [0], [0], [1], [0, 0, 1, 1], [], []>} : vector<8x64xf32>, vector<64x64xf32>, vector<8x64xf32> -> vector<8x64xf32>
    %c5 = arith.constant 5 : index
    %c0_18 = arith.constant 0 : index
    %c0_19 = arith.constant 0 : index
    %17 = vector.load %arg3[%c5, %c0_18, %c0_19] : memref<9x64x64xf32, #tpu.memory_space<vmem>>, vector<1x64x64xf32>
    %18 = vector.shape_cast %17 : vector<1x64x64xf32> to vector<64x64xf32>
    %cst_20 = arith.constant dense<0.000000e+00> : vector<8x64xf32>
    %19 = tpu.matmul %1, %18, %cst_20 {dimension_numbers = #tpu.dot_dimension_numbers<[1], [0], [0], [1], [0, 0, 1, 1], [], []>} : vector<8x64xf32>, vector<64x64xf32>, vector<8x64xf32> -> vector<8x64xf32>
    %c6 = arith.constant 6 : index
    %c0_21 = arith.constant 0 : index
    %c0_22 = arith.constant 0 : index
    %20 = vector.load %arg3[%c6, %c0_21, %c0_22] : memref<9x64x64xf32, #tpu.memory_space<vmem>>, vector<1x64x64xf32>
    %21 = vector.shape_cast %20 : vector<1x64x64xf32> to vector<64x64xf32>
    %cst_23 = arith.constant dense<0.000000e+00> : vector<8x64xf32>
    %22 = tpu.matmul %1, %21, %cst_23 {dimension_numbers = #tpu.dot_dimension_numbers<[1], [0], [0], [1], [0, 0, 1, 1], [], []>} : vector<8x64xf32>, vector<64x64xf32>, vector<8x64xf32> -> vector<8x64xf32>
    %c7 = arith.constant 7 : index
    %c0_24 = arith.constant 0 : index
    %c0_25 = arith.constant 0 : index
    %23 = vector.load %arg3[%c7, %c0_24, %c0_25] : memref<9x64x64xf32, #tpu.memory_space<vmem>>, vector<1x64x64xf32>
    %24 = vector.shape_cast %23 : vector<1x64x64xf32> to vector<64x64xf32>
    %cst_26 = arith.constant dense<0.000000e+00> : vector<8x64xf32>
    %25 = tpu.matmul %1, %24, %cst_26 {dimension_numbers = #tpu.dot_dimension_numbers<[1], [0], [0], [1], [0, 0, 1, 1], [], []>} : vector<8x64xf32>, vector<64x64xf32>, vector<8x64xf32> -> vector<8x64xf32>
    %c8 = arith.constant 8 : index
    %c0_27 = arith.constant 0 : index
    %c0_28 = arith.constant 0 : index
    %26 = vector.load %arg3[%c8, %c0_27, %c0_28] : memref<9x64x64xf32, #tpu.memory_space<vmem>>, vector<1x64x64xf32>
    %27 = vector.shape_cast %26 : vector<1x64x64xf32> to vector<64x64xf32>
    %cst_29 = arith.constant dense<0.000000e+00> : vector<8x64xf32>
    %28 = tpu.matmul %1, %27, %cst_29 {dimension_numbers = #tpu.dot_dimension_numbers<[1], [0], [0], [1], [0, 0, 1, 1], [], []>} : vector<8x64xf32>, vector<64x64xf32>, vector<8x64xf32> -> vector<8x64xf32>
    %29 = tpu.concatenate %4, %7, %10, %13, %16, %19, %22, %25, %28 in 0 : vector<8x64xf32>, vector<8x64xf32>, vector<8x64xf32>, vector<8x64xf32>, vector<8x64xf32>, vector<8x64xf32>, vector<8x64xf32>, vector<8x64xf32>, vector<8x64xf32> -> vector<72x64xf32>
    %c0_30 = arith.constant 0 : index
    %c0_31 = arith.constant 0 : index
    %c0_32 = arith.constant 0 : index
    %30 = vector.load %arg5[%c0_30, %c0_31, %c0_32] : memref<1x8x3xf32, #tpu.memory_space<vmem>>, vector<1x8x3xf32>
    %31 = vector.shape_cast %30 : vector<1x8x3xf32> to vector<8x3xf32>
    %c0_33 = arith.constant 0 : index
    %c0_34 = arith.constant 0 : index
    %c0_35 = arith.constant 0 : index
    %32 = vector.load %arg4[%c0_33, %c0_34, %c0_35] : memref<1x8x72xf32, #tpu.memory_space<vmem>>, vector<1x8x72xf32>
    %33 = vector.shape_cast %32 : vector<1x8x72xf32> to vector<8x72xf32>
    %cst_36 = arith.constant dense<0.000000e+00> : vector<8x64xf32>
    %34 = tpu.matmul %33, %29, %cst_36 {dimension_numbers = #tpu.dot_dimension_numbers<[1], [0], [0], [1], [0, 0, 1, 1], [], []>} : vector<8x72xf32>, vector<72x64xf32>, vector<8x64xf32> -> vector<8x64xf32>
    %35 = vector.extract_strided_slice %31 {offsets = [0, 0], sizes = [8, 1], strides = [1, 1]} : vector<8x3xf32> to vector<8x1xf32>
    %36 = vector.broadcast %35 : vector<8x1xf32> to vector<8x64xf32>
    %37 = arith.addf %34, %36 : vector<8x64xf32>
    %38 = vector.shape_cast %37 : vector<8x64xf32> to vector<1x8x64xf32>
    %cst_37 = arith.constant dense<0.000000e+00> : vector<1xf32>
    %39 = vector.multi_reduction <add>, %38, %cst_37 [1, 2] : vector<1x8x64xf32> to vector<1xf32>
    %40 = vector.shape_cast %39 : vector<1xf32> to vector<1x1x1xf32>
    %41 = vector.extract %40[0, 0, 0] : f32 from vector<1x1x1xf32>
    %42 = vector.broadcast %41 : f32 to vector<1x1xf32>
    %cst_38 = arith.constant 5.120000e+02 : f32
    %43 = vector.broadcast %cst_38 : f32 to vector<1x1xf32>
    %44 = arith.divf %42, %43 : vector<1x1xf32>
    %45 = vector.broadcast %44 : vector<1x1xf32> to vector<8x64xf32>
    %46 = arith.subf %37, %45 : vector<8x64xf32>
    %47 = arith.mulf %46, %46 : vector<8x64xf32>
    %48 = vector.shape_cast %47 : vector<8x64xf32> to vector<1x8x64xf32>
    %cst_39 = arith.constant dense<0.000000e+00> : vector<1xf32>
    %49 = vector.multi_reduction <add>, %48, %cst_39 [1, 2] : vector<1x8x64xf32> to vector<1xf32>
    %50 = vector.shape_cast %49 : vector<1xf32> to vector<1x1x1xf32>
    %51 = vector.extract %50[0, 0, 0] : f32 from vector<1x1x1xf32>
    %52 = vector.broadcast %51 : f32 to vector<1x1xf32>
    %cst_40 = arith.constant 5.120000e+02 : f32
    %53 = vector.broadcast %cst_40 : f32 to vector<1x1xf32>
    %54 = arith.divf %52, %53 : vector<1x1xf32>
    %55 = vector.broadcast %44 : vector<1x1xf32> to vector<8x64xf32>
    %56 = arith.subf %37, %55 : vector<8x64xf32>
    %cst_41 = arith.constant 9.99999974E-6 : f32
    %57 = vector.broadcast %cst_41 : f32 to vector<1x1xf32>
    %58 = arith.addf %54, %57 : vector<1x1xf32>
    %59 = math.rsqrt %58 : vector<1x1xf32>
    %60 = vector.broadcast %59 : vector<1x1xf32> to vector<8x64xf32>
    %61 = arith.mulf %56, %60 : vector<8x64xf32>
    %62 = vector.extract_strided_slice %31 {offsets = [0, 1], sizes = [8, 1], strides = [1, 1]} : vector<8x3xf32> to vector<8x1xf32>
    %63 = vector.broadcast %62 : vector<8x1xf32> to vector<8x64xf32>
    %64 = arith.mulf %61, %63 : vector<8x64xf32>
    %65 = vector.extract_strided_slice %31 {offsets = [0, 2], sizes = [8, 1], strides = [1, 1]} : vector<8x3xf32> to vector<8x1xf32>
    %66 = vector.broadcast %65 : vector<8x1xf32> to vector<8x64xf32>
    %67 = arith.addf %64, %66 : vector<8x64xf32>
    %cst_42 = arith.constant 0.000000e+00 : f32
    %68 = vector.broadcast %cst_42 : f32 to vector<8x64xf32>
    %69 = arith.maximumf %67, %68 : vector<8x64xf32>
    %c0_43 = arith.constant 0 : index
    %c0_44 = arith.constant 0 : index
    %c0_45 = arith.constant 0 : index
    %70 = vector.load %arg3[%c0_43, %c0_44, %c0_45] : memref<9x64x64xf32, #tpu.memory_space<vmem>>, vector<1x64x64xf32>
    %71 = vector.shape_cast %70 : vector<1x64x64xf32> to vector<64x64xf32>
    %cst_46 = arith.constant dense<0.000000e+00> : vector<8x64xf32>
    %72 = tpu.matmul %69, %71, %cst_46 {dimension_numbers = #tpu.dot_dimension_numbers<[1], [0], [0], [1], [0, 0, 1, 1], [], []>} : vector<8x64xf32>, vector<64x64xf32>, vector<8x64xf32> -> vector<8x64xf32>
    %c1_47 = arith.constant 1 : index
    %c0_48 = arith.constant 0 : index
    %c0_49 = arith.constant 0 : index
    %73 = vector.load %arg3[%c1_47, %c0_48, %c0_49] : memref<9x64x64xf32, #tpu.memory_space<vmem>>, vector<1x64x64xf32>
    %74 = vector.shape_cast %73 : vector<1x64x64xf32> to vector<64x64xf32>
    %cst_50 = arith.constant dense<0.000000e+00> : vector<8x64xf32>
    %75 = tpu.matmul %69, %74, %cst_50 {dimension_numbers = #tpu.dot_dimension_numbers<[1], [0], [0], [1], [0, 0, 1, 1], [], []>} : vector<8x64xf32>, vector<64x64xf32>, vector<8x64xf32> -> vector<8x64xf32>
    %c2_51 = arith.constant 2 : index
    %c0_52 = arith.constant 0 : index
    %c0_53 = arith.constant 0 : index
    %76 = vector.load %arg3[%c2_51, %c0_52, %c0_53] : memref<9x64x64xf32, #tpu.memory_space<vmem>>, vector<1x64x64xf32>
    %77 = vector.shape_cast %76 : vector<1x64x64xf32> to vector<64x64xf32>
    %cst_54 = arith.constant dense<0.000000e+00> : vector<8x64xf32>
    %78 = tpu.matmul %69, %77, %cst_54 {dimension_numbers = #tpu.dot_dimension_numbers<[1], [0], [0], [1], [0, 0, 1, 1], [], []>} : vector<8x64xf32>, vector<64x64xf32>, vector<8x64xf32> -> vector<8x64xf32>
    %c3_55 = arith.constant 3 : index
    %c0_56 = arith.constant 0 : index
    %c0_57 = arith.constant 0 : index
    %79 = vector.load %arg3[%c3_55, %c0_56, %c0_57] : memref<9x64x64xf32, #tpu.memory_space<vmem>>, vector<1x64x64xf32>
    %80 = vector.shape_cast %79 : vector<1x64x64xf32> to vector<64x64xf32>
    %cst_58 = arith.constant dense<0.000000e+00> : vector<8x64xf32>
    %81 = tpu.matmul %69, %80, %cst_58 {dimension_numbers = #tpu.dot_dimension_numbers<[1], [0], [0], [1], [0, 0, 1, 1], [], []>} : vector<8x64xf32>, vector<64x64xf32>, vector<8x64xf32> -> vector<8x64xf32>
    %c4_59 = arith.constant 4 : index
    %c0_60 = arith.constant 0 : index
    %c0_61 = arith.constant 0 : index
    %82 = vector.load %arg3[%c4_59, %c0_60, %c0_61] : memref<9x64x64xf32, #tpu.memory_space<vmem>>, vector<1x64x64xf32>
    %83 = vector.shape_cast %82 : vector<1x64x64xf32> to vector<64x64xf32>
    %cst_62 = arith.constant dense<0.000000e+00> : vector<8x64xf32>
    %84 = tpu.matmul %69, %83, %cst_62 {dimension_numbers = #tpu.dot_dimension_numbers<[1], [0], [0], [1], [0, 0, 1, 1], [], []>} : vector<8x64xf32>, vector<64x64xf32>, vector<8x64xf32> -> vector<8x64xf32>
    %c5_63 = arith.constant 5 : index
    %c0_64 = arith.constant 0 : index
    %c0_65 = arith.constant 0 : index
    %85 = vector.load %arg3[%c5_63, %c0_64, %c0_65] : memref<9x64x64xf32, #tpu.memory_space<vmem>>, vector<1x64x64xf32>
    %86 = vector.shape_cast %85 : vector<1x64x64xf32> to vector<64x64xf32>
    %cst_66 = arith.constant dense<0.000000e+00> : vector<8x64xf32>
    %87 = tpu.matmul %69, %86, %cst_66 {dimension_numbers = #tpu.dot_dimension_numbers<[1], [0], [0], [1], [0, 0, 1, 1], [], []>} : vector<8x64xf32>, vector<64x64xf32>, vector<8x64xf32> -> vector<8x64xf32>
    %c6_67 = arith.constant 6 : index
    %c0_68 = arith.constant 0 : index
    %c0_69 = arith.constant 0 : index
    %88 = vector.load %arg3[%c6_67, %c0_68, %c0_69] : memref<9x64x64xf32, #tpu.memory_space<vmem>>, vector<1x64x64xf32>
    %89 = vector.shape_cast %88 : vector<1x64x64xf32> to vector<64x64xf32>
    %cst_70 = arith.constant dense<0.000000e+00> : vector<8x64xf32>
    %90 = tpu.matmul %69, %89, %cst_70 {dimension_numbers = #tpu.dot_dimension_numbers<[1], [0], [0], [1], [0, 0, 1, 1], [], []>} : vector<8x64xf32>, vector<64x64xf32>, vector<8x64xf32> -> vector<8x64xf32>
    %c7_71 = arith.constant 7 : index
    %c0_72 = arith.constant 0 : index
    %c0_73 = arith.constant 0 : index
    %91 = vector.load %arg3[%c7_71, %c0_72, %c0_73] : memref<9x64x64xf32, #tpu.memory_space<vmem>>, vector<1x64x64xf32>
    %92 = vector.shape_cast %91 : vector<1x64x64xf32> to vector<64x64xf32>
    %cst_74 = arith.constant dense<0.000000e+00> : vector<8x64xf32>
    %93 = tpu.matmul %69, %92, %cst_74 {dimension_numbers = #tpu.dot_dimension_numbers<[1], [0], [0], [1], [0, 0, 1, 1], [], []>} : vector<8x64xf32>, vector<64x64xf32>, vector<8x64xf32> -> vector<8x64xf32>
    %c8_75 = arith.constant 8 : index
    %c0_76 = arith.constant 0 : index
    %c0_77 = arith.constant 0 : index
    %94 = vector.load %arg3[%c8_75, %c0_76, %c0_77] : memref<9x64x64xf32, #tpu.memory_space<vmem>>, vector<1x64x64xf32>
    %95 = vector.shape_cast %94 : vector<1x64x64xf32> to vector<64x64xf32>
    %cst_78 = arith.constant dense<0.000000e+00> : vector<8x64xf32>
    %96 = tpu.matmul %69, %95, %cst_78 {dimension_numbers = #tpu.dot_dimension_numbers<[1], [0], [0], [1], [0, 0, 1, 1], [], []>} : vector<8x64xf32>, vector<64x64xf32>, vector<8x64xf32> -> vector<8x64xf32>
    %97 = tpu.concatenate %72, %75, %78, %81, %84, %87, %90, %93, %96 in 0 : vector<8x64xf32>, vector<8x64xf32>, vector<8x64xf32>, vector<8x64xf32>, vector<8x64xf32>, vector<8x64xf32>, vector<8x64xf32>, vector<8x64xf32>, vector<8x64xf32> -> vector<72x64xf32>
    %c0_79 = arith.constant 0 : index
    %c0_80 = arith.constant 0 : index
    %c0_81 = arith.constant 0 : index
    %98 = vector.load %arg7[%c0_79, %c0_80, %c0_81] : memref<1x8x3xf32, #tpu.memory_space<vmem>>, vector<1x8x3xf32>
    %99 = vector.shape_cast %98 : vector<1x8x3xf32> to vector<8x3xf32>
    %c0_82 = arith.constant 0 : index
    %c0_83 = arith.constant 0 : index
    %c0_84 = arith.constant 0 : index
    %100 = vector.load %arg6[%c0_82, %c0_83, %c0_84] : memref<1x8x72xf32, #tpu.memory_space<vmem>>, vector<1x8x72xf32>
    %101 = vector.shape_cast %100 : vector<1x8x72xf32> to vector<8x72xf32>
    %cst_85 = arith.constant dense<0.000000e+00> : vector<8x64xf32>
    %102 = tpu.matmul %101, %97, %cst_85 {dimension_numbers = #tpu.dot_dimension_numbers<[1], [0], [0], [1], [0, 0, 1, 1], [], []>} : vector<8x72xf32>, vector<72x64xf32>, vector<8x64xf32> -> vector<8x64xf32>
    %103 = vector.extract_strided_slice %99 {offsets = [0, 0], sizes = [8, 1], strides = [1, 1]} : vector<8x3xf32> to vector<8x1xf32>
    %104 = vector.broadcast %103 : vector<8x1xf32> to vector<8x64xf32>
    %105 = arith.addf %102, %104 : vector<8x64xf32>
    %106 = vector.shape_cast %105 : vector<8x64xf32> to vector<1x8x64xf32>
    %cst_86 = arith.constant dense<0.000000e+00> : vector<1xf32>
    %107 = vector.multi_reduction <add>, %106, %cst_86 [1, 2] : vector<1x8x64xf32> to vector<1xf32>
    %108 = vector.shape_cast %107 : vector<1xf32> to vector<1x1x1xf32>
    %109 = vector.extract %108[0, 0, 0] : f32 from vector<1x1x1xf32>
    %110 = vector.broadcast %109 : f32 to vector<1x1xf32>
    %cst_87 = arith.constant 5.120000e+02 : f32
    %111 = vector.broadcast %cst_87 : f32 to vector<1x1xf32>
    %112 = arith.divf %110, %111 : vector<1x1xf32>
    %113 = vector.broadcast %112 : vector<1x1xf32> to vector<8x64xf32>
    %114 = arith.subf %105, %113 : vector<8x64xf32>
    %115 = arith.mulf %114, %114 : vector<8x64xf32>
    %116 = vector.shape_cast %115 : vector<8x64xf32> to vector<1x8x64xf32>
    %cst_88 = arith.constant dense<0.000000e+00> : vector<1xf32>
    %117 = vector.multi_reduction <add>, %116, %cst_88 [1, 2] : vector<1x8x64xf32> to vector<1xf32>
    %118 = vector.shape_cast %117 : vector<1xf32> to vector<1x1x1xf32>
    %119 = vector.extract %118[0, 0, 0] : f32 from vector<1x1x1xf32>
    %120 = vector.broadcast %119 : f32 to vector<1x1xf32>
    %cst_89 = arith.constant 5.120000e+02 : f32
    %121 = vector.broadcast %cst_89 : f32 to vector<1x1xf32>
    %122 = arith.divf %120, %121 : vector<1x1xf32>
    %123 = vector.broadcast %112 : vector<1x1xf32> to vector<8x64xf32>
    %124 = arith.subf %105, %123 : vector<8x64xf32>
    %cst_90 = arith.constant 9.99999974E-6 : f32
    %125 = vector.broadcast %cst_90 : f32 to vector<1x1xf32>
    %126 = arith.addf %122, %125 : vector<1x1xf32>
    %127 = math.rsqrt %126 : vector<1x1xf32>
    %128 = vector.broadcast %127 : vector<1x1xf32> to vector<8x64xf32>
    %129 = arith.mulf %124, %128 : vector<8x64xf32>
    %130 = vector.extract_strided_slice %99 {offsets = [0, 1], sizes = [8, 1], strides = [1, 1]} : vector<8x3xf32> to vector<8x1xf32>
    %131 = vector.broadcast %130 : vector<8x1xf32> to vector<8x64xf32>
    %132 = arith.mulf %129, %131 : vector<8x64xf32>
    %133 = vector.extract_strided_slice %99 {offsets = [0, 2], sizes = [8, 1], strides = [1, 1]} : vector<8x3xf32> to vector<8x1xf32>
    %134 = vector.broadcast %133 : vector<8x1xf32> to vector<8x64xf32>
    %135 = arith.addf %132, %134 : vector<8x64xf32>
    %c0_91 = arith.constant 0 : index
    %c0_92 = arith.constant 0 : index
    %136 = vector.load %arg8[%c0_91, %c0_92] : memref<64x16xf32, #tpu.memory_space<vmem>>, vector<64x16xf32>
    %cst_93 = arith.constant dense<0.000000e+00> : vector<8x16xf32>
    %137 = tpu.matmul %135, %136, %cst_93 {dimension_numbers = #tpu.dot_dimension_numbers<[1], [0], [0], [1], [0, 0, 1, 1], [], []>} : vector<8x64xf32>, vector<64x16xf32>, vector<8x16xf32> -> vector<8x16xf32>
    %c0_94 = arith.constant 0 : index
    %c0_95 = arith.constant 0 : index
    %c0_96 = arith.constant 0 : index
    %138 = vector.load %arg10[%c0_94, %c0_95, %c0_96] : memref<1x6x16xf32, #tpu.memory_space<vmem>>, vector<1x6x16xf32>
    %139 = vector.shape_cast %138 : vector<1x6x16xf32> to vector<6x16xf32>
    %c0_97 = arith.constant 0 : index
    %c0_98 = arith.constant 0 : index
    %c0_99 = arith.constant 0 : index
    %c0_100 = arith.constant 0 : index
    %140 = vector.load %arg9[%c0_97, %c0_98, %c0_99, %c0_100] : memref<1x2x16x16xf32, #tpu.memory_space<vmem>>, vector<1x1x16x16xf32>
    %141 = vector.shape_cast %140 : vector<1x1x16x16xf32> to vector<16x16xf32>
    %cst_101 = arith.constant dense<0.000000e+00> : vector<8x16xf32>
    %142 = tpu.matmul %137, %141, %cst_101 {dimension_numbers = #tpu.dot_dimension_numbers<[1], [0], [0], [1], [0, 0, 1, 1], [], []>} : vector<8x16xf32>, vector<16x16xf32>, vector<8x16xf32> -> vector<8x16xf32>
    %143 = vector.extract_strided_slice %139 {offsets = [0, 0], sizes = [1, 16], strides = [1, 1]} : vector<6x16xf32> to vector<1x16xf32>
    %144 = vector.broadcast %143 : vector<1x16xf32> to vector<8x16xf32>
    %145 = arith.addf %142, %144 : vector<8x16xf32>
    %146 = vector.extract_strided_slice %139 {offsets = [1, 0], sizes = [1, 16], strides = [1, 1]} : vector<6x16xf32> to vector<1x16xf32>
    %147 = vector.extract_strided_slice %139 {offsets = [2, 0], sizes = [1, 16], strides = [1, 1]} : vector<6x16xf32> to vector<1x16xf32>
    %cst_102 = arith.constant dense<0.000000e+00> : vector<8xf32>
    %148 = vector.multi_reduction <add>, %145, %cst_102 [1] : vector<8x16xf32> to vector<8xf32>
    %149 = vector.shape_cast %148 : vector<8xf32> to vector<8x1xf32>
    %cst_103 = arith.constant 1.600000e+01 : f32
    %150 = vector.broadcast %cst_103 : f32 to vector<8x1xf32>
    %151 = arith.divf %149, %150 : vector<8x1xf32>
    %152 = vector.broadcast %151 : vector<8x1xf32> to vector<8x16xf32>
    %153 = arith.subf %145, %152 : vector<8x16xf32>
    %154 = arith.mulf %153, %153 : vector<8x16xf32>
    %cst_104 = arith.constant dense<0.000000e+00> : vector<8xf32>
    %155 = vector.multi_reduction <add>, %154, %cst_104 [1] : vector<8x16xf32> to vector<8xf32>
    %156 = vector.shape_cast %155 : vector<8xf32> to vector<8x1xf32>
    %cst_105 = arith.constant 1.600000e+01 : f32
    %157 = vector.broadcast %cst_105 : f32 to vector<8x1xf32>
    %158 = arith.divf %156, %157 : vector<8x1xf32>
    %159 = vector.broadcast %151 : vector<8x1xf32> to vector<8x16xf32>
    %160 = arith.subf %145, %159 : vector<8x16xf32>
    %cst_106 = arith.constant 9.99999974E-6 : f32
    %161 = vector.broadcast %cst_106 : f32 to vector<8x1xf32>
    %162 = arith.addf %158, %161 : vector<8x1xf32>
    %163 = math.rsqrt %162 : vector<8x1xf32>
    %164 = vector.broadcast %163 : vector<8x1xf32> to vector<8x16xf32>
    %165 = arith.mulf %160, %164 : vector<8x16xf32>
    %166 = vector.broadcast %146 : vector<1x16xf32> to vector<8x16xf32>
    %167 = arith.mulf %165, %166 : vector<8x16xf32>
    %168 = vector.broadcast %147 : vector<1x16xf32> to vector<8x16xf32>
    %169 = arith.addf %167, %168 : vector<8x16xf32>
    %cst_107 = arith.constant 0.000000e+00 : f32
    %170 = vector.broadcast %cst_107 : f32 to vector<8x16xf32>
    %171 = arith.maximumf %169, %170 : vector<8x16xf32>
    %c0_108 = arith.constant 0 : index
    %c1_109 = arith.constant 1 : index
    %c0_110 = arith.constant 0 : index
    %c0_111 = arith.constant 0 : index
    %172 = vector.load %arg9[%c0_108, %c1_109, %c0_110, %c0_111] : memref<1x2x16x16xf32, #tpu.memory_space<vmem>>, vector<1x1x16x16xf32>
    %173 = vector.shape_cast %172 : vector<1x1x16x16xf32> to vector<16x16xf32>
    %cst_112 = arith.constant dense<0.000000e+00> : vector<8x16xf32>
    %174 = tpu.matmul %171, %173, %cst_112 {dimension_numbers = #tpu.dot_dimension_numbers<[1], [0], [0], [1], [0, 0, 1, 1], [], []>} : vector<8x16xf32>, vector<16x16xf32>, vector<8x16xf32> -> vector<8x16xf32>
    %175 = vector.extract_strided_slice %139 {offsets = [3, 0], sizes = [1, 16], strides = [1, 1]} : vector<6x16xf32> to vector<1x16xf32>
    %176 = vector.broadcast %175 : vector<1x16xf32> to vector<8x16xf32>
    %177 = arith.addf %174, %176 : vector<8x16xf32>
    %178 = vector.extract_strided_slice %139 {offsets = [4, 0], sizes = [1, 16], strides = [1, 1]} : vector<6x16xf32> to vector<1x16xf32>
    %179 = vector.extract_strided_slice %139 {offsets = [5, 0], sizes = [1, 16], strides = [1, 1]} : vector<6x16xf32> to vector<1x16xf32>
    %cst_113 = arith.constant dense<0.000000e+00> : vector<8xf32>
    %180 = vector.multi_reduction <add>, %177, %cst_113 [1] : vector<8x16xf32> to vector<8xf32>
    %181 = vector.shape_cast %180 : vector<8xf32> to vector<8x1xf32>
    %cst_114 = arith.constant 1.600000e+01 : f32
    %182 = vector.broadcast %cst_114 : f32 to vector<8x1xf32>
    %183 = arith.divf %181, %182 : vector<8x1xf32>
    %184 = vector.broadcast %183 : vector<8x1xf32> to vector<8x16xf32>
    %185 = arith.subf %177, %184 : vector<8x16xf32>
    %186 = arith.mulf %185, %185 : vector<8x16xf32>
    %cst_115 = arith.constant dense<0.000000e+00> : vector<8xf32>
    %187 = vector.multi_reduction <add>, %186, %cst_115 [1] : vector<8x16xf32> to vector<8xf32>
    %188 = vector.shape_cast %187 : vector<8xf32> to vector<8x1xf32>
    %cst_116 = arith.constant 1.600000e+01 : f32
    %189 = vector.broadcast %cst_116 : f32 to vector<8x1xf32>
    %190 = arith.divf %188, %189 : vector<8x1xf32>
    %191 = vector.broadcast %183 : vector<8x1xf32> to vector<8x16xf32>
    %192 = arith.subf %177, %191 : vector<8x16xf32>
    %cst_117 = arith.constant 9.99999974E-6 : f32
    %193 = vector.broadcast %cst_117 : f32 to vector<8x1xf32>
    %194 = arith.addf %190, %193 : vector<8x1xf32>
    %195 = math.rsqrt %194 : vector<8x1xf32>
    %196 = vector.broadcast %195 : vector<8x1xf32> to vector<8x16xf32>
    %197 = arith.mulf %192, %196 : vector<8x16xf32>
    %198 = vector.broadcast %178 : vector<1x16xf32> to vector<8x16xf32>
    %199 = arith.mulf %197, %198 : vector<8x16xf32>
    %200 = vector.broadcast %179 : vector<1x16xf32> to vector<8x16xf32>
    %201 = arith.addf %199, %200 : vector<8x16xf32>
    %c0_118 = arith.constant 0 : index
    %c0_119 = arith.constant 0 : index
    %c0_120 = arith.constant 0 : index
    %c0_121 = arith.constant 0 : index
    %202 = vector.load %arg11[%c0_118, %c0_119, %c0_120, %c0_121] : memref<1x1x8x16xf32, #tpu.memory_space<vmem>>, vector<1x1x8x16xf32>
    %203 = vector.shape_cast %202 : vector<1x1x8x16xf32> to vector<8x16xf32>
    %204 = vector.shape_cast %201 : vector<8x16xf32> to vector<1x1x8x16xf32>
    tpu.vector_store %arg11[%c0_118, %c0_119, %c0_120, %c0_121], %204 {strides = array<i32>} : memref<1x1x8x16xf32, #tpu.memory_space<vmem>>, vector<1x1x8x16xf32>,
    return
  }
  func.func @transform_0(%arg0: i32, %arg1: i32) -> (i32, i32, i32, i32) {
    %c0_i32 = arith.constant 0 : i32
    %c0_i32_0 = arith.constant 0 : i32
    %c0_i32_1 = arith.constant 0 : i32
    return %arg0, %arg1, %c0_i32, %c0_i32_0 : i32, i32, i32, i32
  }
  func.func @transform_1(%arg0: i32, %arg1: i32) -> (i32, i32, i32) {
    %c0_i32 = arith.constant 0 : i32
    %c0_i32_0 = arith.constant 0 : i32
    %c0_i32_1 = arith.constant 0 : i32
    %c0_i32_2 = arith.constant 0 : i32
    return %c0_i32, %c0_i32_0, %c0_i32_1 : i32, i32, i32
  }
  func.func @transform_2(%arg0: i32, %arg1: i32) -> (i32, i32, i32) {
    %c0_i32 = arith.constant 0 : i32
    %c0_i32_0 = arith.constant 0 : i32
    %c0_i32_1 = arith.constant 0 : i32
    return %arg0, %c0_i32, %c0_i32_0 : i32, i32, i32
  }
  func.func @transform_3(%arg0: i32, %arg1: i32) -> (i32, i32, i32) {
    %c0_i32 = arith.constant 0 : i32
    %c0_i32_0 = arith.constant 0 : i32
    %c0_i32_1 = arith.constant 0 : i32
    return %arg0, %c0_i32, %c0_i32_0 : i32, i32, i32
  }
  func.func @transform_4(%arg0: i32, %arg1: i32) -> (i32, i32, i32) {
    %c0_i32 = arith.constant 0 : i32
    %c0_i32_0 = arith.constant 0 : i32
    %c0_i32_1 = arith.constant 0 : i32
    return %arg0, %c0_i32, %c0_i32_0 : i32, i32, i32
  }
  func.func @transform_5(%arg0: i32, %arg1: i32) -> (i32, i32, i32) {
    %c0_i32 = arith.constant 0 : i32
    %c0_i32_0 = arith.constant 0 : i32
    %c0_i32_1 = arith.constant 0 : i32
    return %arg0, %c0_i32, %c0_i32_0 : i32, i32, i32
  }
  func.func @transform_6(%arg0: i32, %arg1: i32) -> (i32, i32) {
    %c0_i32 = arith.constant 0 : i32
    %c0_i32_0 = arith.constant 0 : i32
    %c0_i32_1 = arith.constant 0 : i32
    return %c0_i32, %c0_i32_0 : i32, i32
  }
  func.func @transform_7(%arg0: i32, %arg1: i32) -> (i32, i32, i32, i32) {
    %c0_i32 = arith.constant 0 : i32
    %c0_i32_0 = arith.constant 0 : i32
    %c0_i32_1 = arith.constant 0 : i32
    %c0_i32_2 = arith.constant 0 : i32
    return %arg0, %c0_i32, %c0_i32_0, %c0_i32_1 : i32, i32, i32, i32
  }
  func.func @transform_8(%arg0: i32, %arg1: i32) -> (i32, i32, i32) {
    %c0_i32 = arith.constant 0 : i32
    %c0_i32_0 = arith.constant 0 : i32
    %c0_i32_1 = arith.constant 0 : i32
    return %arg0, %c0_i32, %c0_i32_0 : i32, i32, i32
  }
  func.func @transform_9(%arg0: i32, %arg1: i32) -> (i32, i32, i32, i32) {
    %c0_i32 = arith.constant 0 : i32
    %c0_i32_0 = arith.constant 0 : i32
    %c0_i32_1 = arith.constant 0 : i32
    return %arg0, %arg1, %c0_i32, %c0_i32_0 : i32, i32, i32, i32
  }
}

module attributes {stable_mosaic.version = 11 : i64} {
  func.func @_wproj_kernel(%arg0: i32, %arg1: memref<2x256xf32, #tpu.memory_space<vmem>>, %arg2: memref<256x512xf32, #tpu.memory_space<vmem>>, %arg3: memref<1x512xf32, #tpu.memory_space<vmem>>, %arg4: memref<256x128xf32, #tpu.memory_space<vmem>>, %arg5: memref<1x128xf32, #tpu.memory_space<vmem>>, %arg6: memref<256x128xf32, #tpu.memory_space<vmem>>, %arg7: memref<1x128xf32, #tpu.memory_space<vmem>>, %arg8: memref<2x128xf32, #tpu.memory_space<vmem>>, %arg9: memref<2x128xf32, #tpu.memory_space<vmem>>) attributes {dimension_semantics = [#tpu.dimension_semantics<arbitrary>], iteration_bounds = array<i64: 1>, scalar_prefetch = 0 : i64, scratch_operands = 0 : i64, tpu.core_type = #tpu.core_type<tc>, window_params = [{pipeline_mode = #tpu.pipeline_mode<synchronous>, transform_indices = @transform_0, window_bounds = array<i64: 2, 256>}, {pipeline_mode = #tpu.pipeline_mode<synchronous>, transform_indices = @transform_1, window_bounds = array<i64: 256, 512>}, {pipeline_mode = #tpu.pipeline_mode<synchronous>, transform_indices = @transform_2, window_bounds = array<i64: 1, 512>}, {pipeline_mode = #tpu.pipeline_mode<synchronous>, transform_indices = @transform_3, window_bounds = array<i64: 256, 128>}, {pipeline_mode = #tpu.pipeline_mode<synchronous>, transform_indices = @transform_4, window_bounds = array<i64: 1, 128>}, {pipeline_mode = #tpu.pipeline_mode<synchronous>, transform_indices = @transform_5, window_bounds = array<i64: 256, 128>}, {pipeline_mode = #tpu.pipeline_mode<synchronous>, transform_indices = @transform_6, window_bounds = array<i64: 1, 128>}, {pipeline_mode = #tpu.pipeline_mode<synchronous>, transform_indices = @transform_7, window_bounds = array<i64: 2, 128>}, {pipeline_mode = #tpu.pipeline_mode<synchronous>, transform_indices = @transform_8, window_bounds = array<i64: 2, 128>}]} {
    %c0 = arith.constant 0 : index
    %c0_0 = arith.constant 0 : index
    %0 = vector.load %arg1[%c0, %c0_0] : memref<2x256xf32, #tpu.memory_space<vmem>>, vector<2x256xf32>
    %c0_1 = arith.constant 0 : index
    %c0_2 = arith.constant 0 : index
    %1 = vector.load %arg2[%c0_1, %c0_2] : memref<256x512xf32, #tpu.memory_space<vmem>>, vector<256x512xf32>
    %cst = arith.constant dense<0.000000e+00> : vector<2x512xf32>
    %2 = tpu.matmul %0, %1, %cst {dimension_numbers = #tpu.dot_dimension_numbers<[1], [0], [0], [1], [0, 0, 1, 1], [], []>} : vector<2x256xf32>, vector<256x512xf32>, vector<2x512xf32> -> vector<2x512xf32>
    %c0_3 = arith.constant 0 : index
    %c0_4 = arith.constant 0 : index
    %3 = vector.load %arg3[%c0_3, %c0_4] : memref<1x512xf32, #tpu.memory_space<vmem>>, vector<1x512xf32>
    %4 = vector.broadcast %3 : vector<1x512xf32> to vector<2x512xf32>
    %5 = arith.addf %2, %4 : vector<2x512xf32>
    %6 = vector.extract_strided_slice %5 {offsets = [0, 0], sizes = [2, 256], strides = [1, 1]} : vector<2x512xf32> to vector<2x256xf32>
    %c0_5 = arith.constant 0 : index
    %c0_6 = arith.constant 0 : index
    %7 = vector.load %arg4[%c0_5, %c0_6] : memref<256x128xf32, #tpu.memory_space<vmem>>, vector<256x128xf32>
    %cst_7 = arith.constant dense<0.000000e+00> : vector<2x128xf32>
    %8 = tpu.matmul %6, %7, %cst_7 {dimension_numbers = #tpu.dot_dimension_numbers<[1], [0], [0], [1], [0, 0, 1, 1], [], []>} : vector<2x256xf32>, vector<256x128xf32>, vector<2x128xf32> -> vector<2x128xf32>
    %c0_8 = arith.constant 0 : index
    %c0_9 = arith.constant 0 : index
    %9 = vector.load %arg5[%c0_8, %c0_9] : memref<1x128xf32, #tpu.memory_space<vmem>>, vector<1x128xf32>
    %10 = vector.broadcast %9 : vector<1x128xf32> to vector<2x128xf32>
    %11 = arith.addf %8, %10 : vector<2x128xf32>
    %c0_10 = arith.constant 0 : index
    %c0_11 = arith.constant 0 : index
    %12 = vector.load %arg8[%c0_10, %c0_11] : memref<2x128xf32, #tpu.memory_space<vmem>>, vector<2x128xf32>
    tpu.vector_store %arg8[%c0_10, %c0_11], %11 {strides = array<i32>} : memref<2x128xf32, #tpu.memory_space<vmem>>, vector<2x128xf32>,
    %13 = vector.extract_strided_slice %5 {offsets = [0, 256], sizes = [2, 256], strides = [1, 1]} : vector<2x512xf32> to vector<2x256xf32>
    %c0_12 = arith.constant 0 : index
    %c0_13 = arith.constant 0 : index
    %14 = vector.load %arg6[%c0_12, %c0_13] : memref<256x128xf32, #tpu.memory_space<vmem>>, vector<256x128xf32>
    %cst_14 = arith.constant dense<0.000000e+00> : vector<2x128xf32>
    %15 = tpu.matmul %13, %14, %cst_14 {dimension_numbers = #tpu.dot_dimension_numbers<[1], [0], [0], [1], [0, 0, 1, 1], [], []>} : vector<2x256xf32>, vector<256x128xf32>, vector<2x128xf32> -> vector<2x128xf32>
    %c0_15 = arith.constant 0 : index
    %c0_16 = arith.constant 0 : index
    %16 = vector.load %arg7[%c0_15, %c0_16] : memref<1x128xf32, #tpu.memory_space<vmem>>, vector<1x128xf32>
    %17 = vector.broadcast %16 : vector<1x128xf32> to vector<2x128xf32>
    %18 = arith.addf %15, %17 : vector<2x128xf32>
    %c0_17 = arith.constant 0 : index
    %c0_18 = arith.constant 0 : index
    %19 = vector.load %arg9[%c0_17, %c0_18] : memref<2x128xf32, #tpu.memory_space<vmem>>, vector<2x128xf32>
    tpu.vector_store %arg9[%c0_17, %c0_18], %18 {strides = array<i32>} : memref<2x128xf32, #tpu.memory_space<vmem>>, vector<2x128xf32>,
    return
  }
  func.func @transform_0(%arg0: i32) -> (i32, i32) {
    %c0_i32 = arith.constant 0 : i32
    %c0_i32_0 = arith.constant 0 : i32
    %c0_i32_1 = arith.constant 0 : i32
    return %c0_i32, %c0_i32_0 : i32, i32
  }
  func.func @transform_1(%arg0: i32) -> (i32, i32) {
    %c0_i32 = arith.constant 0 : i32
    %c0_i32_0 = arith.constant 0 : i32
    %c0_i32_1 = arith.constant 0 : i32
    return %c0_i32, %c0_i32_0 : i32, i32
  }
  func.func @transform_2(%arg0: i32) -> (i32, i32) {
    %c0_i32 = arith.constant 0 : i32
    %c0_i32_0 = arith.constant 0 : i32
    %c0_i32_1 = arith.constant 0 : i32
    return %c0_i32, %c0_i32_0 : i32, i32
  }
  func.func @transform_3(%arg0: i32) -> (i32, i32) {
    %c0_i32 = arith.constant 0 : i32
    %c0_i32_0 = arith.constant 0 : i32
    %c0_i32_1 = arith.constant 0 : i32
    return %c0_i32, %c0_i32_0 : i32, i32
  }
  func.func @transform_4(%arg0: i32) -> (i32, i32) {
    %c0_i32 = arith.constant 0 : i32
    %c0_i32_0 = arith.constant 0 : i32
    %c0_i32_1 = arith.constant 0 : i32
    return %c0_i32, %c0_i32_0 : i32, i32
  }
  func.func @transform_5(%arg0: i32) -> (i32, i32) {
    %c0_i32 = arith.constant 0 : i32
    %c0_i32_0 = arith.constant 0 : i32
    %c0_i32_1 = arith.constant 0 : i32
    return %c0_i32, %c0_i32_0 : i32, i32
  }
  func.func @transform_6(%arg0: i32) -> (i32, i32) {
    %c0_i32 = arith.constant 0 : i32
    %c0_i32_0 = arith.constant 0 : i32
    %c0_i32_1 = arith.constant 0 : i32
    return %c0_i32, %c0_i32_0 : i32, i32
  }
  func.func @transform_7(%arg0: i32) -> (i32, i32) {
    %c0_i32 = arith.constant 0 : i32
    %c0_i32_0 = arith.constant 0 : i32
    %c0_i32_1 = arith.constant 0 : i32
    return %c0_i32, %c0_i32_0 : i32, i32
  }
  func.func @transform_8(%arg0: i32) -> (i32, i32) {
    %c0_i32 = arith.constant 0 : i32
    %c0_i32_0 = arith.constant 0 : i32
    %c0_i32_1 = arith.constant 0 : i32
    return %c0_i32, %c0_i32_0 : i32, i32
  }
}

module attributes {stable_mosaic.version = 11 : i64} {
  func.func @_branch_kernel(%arg0: i32, %arg1: i32, %arg2: memref<1x1x16x64xf32, #tpu.memory_space<vmem>>, %arg3: memref<9x64x64xf32, #tpu.memory_space<vmem>>, %arg4: memref<1x16x144xf32, #tpu.memory_space<vmem>>, %arg5: memref<1x16x3xf32, #tpu.memory_space<vmem>>, %arg6: memref<1x16x144xf32, #tpu.memory_space<vmem>>, %arg7: memref<1x16x3xf32, #tpu.memory_space<vmem>>, %arg8: memref<64x16xf32, #tpu.memory_space<vmem>>, %arg9: memref<1x2x16x16xf32, #tpu.memory_space<vmem>>, %arg10: memref<1x6x16xf32, #tpu.memory_space<vmem>>, %arg11: memref<1x1x16x16xf32, #tpu.memory_space<vmem>>) attributes {dimension_semantics = [#tpu.dimension_semantics<parallel>, #tpu.dimension_semantics<parallel>], iteration_bounds = array<i64: 1, 2>, scalar_prefetch = 0 : i64, scratch_operands = 0 : i64, tpu.core_type = #tpu.core_type<tc>, window_params = [{transform_indices = @transform_0, window_bounds = array<i64: 1, 1, 16, 64>}, {pipeline_mode = #tpu.pipeline_mode<synchronous>, transform_indices = @transform_1, window_bounds = array<i64: 9, 64, 64>}, {transform_indices = @transform_2, window_bounds = array<i64: 1, 16, 144>}, {transform_indices = @transform_3, window_bounds = array<i64: 1, 16, 3>}, {transform_indices = @transform_4, window_bounds = array<i64: 1, 16, 144>}, {transform_indices = @transform_5, window_bounds = array<i64: 1, 16, 3>}, {pipeline_mode = #tpu.pipeline_mode<synchronous>, transform_indices = @transform_6, window_bounds = array<i64: 64, 16>}, {transform_indices = @transform_7, window_bounds = array<i64: 1, 2, 16, 16>}, {transform_indices = @transform_8, window_bounds = array<i64: 1, 6, 16>}, {transform_indices = @transform_9, window_bounds = array<i64: 1, 1, 16, 16>}]} {
    %c0 = arith.constant 0 : index
    %c0_0 = arith.constant 0 : index
    %c0_1 = arith.constant 0 : index
    %c0_2 = arith.constant 0 : index
    %0 = vector.load %arg2[%c0, %c0_0, %c0_1, %c0_2] : memref<1x1x16x64xf32, #tpu.memory_space<vmem>>, vector<1x1x16x64xf32>
    %1 = vector.shape_cast %0 : vector<1x1x16x64xf32> to vector<16x64xf32>
    %c0_3 = arith.constant 0 : index
    %c0_4 = arith.constant 0 : index
    %c0_5 = arith.constant 0 : index
    %2 = vector.load %arg3[%c0_3, %c0_4, %c0_5] : memref<9x64x64xf32, #tpu.memory_space<vmem>>, vector<1x64x64xf32>
    %3 = vector.shape_cast %2 : vector<1x64x64xf32> to vector<64x64xf32>
    %cst = arith.constant dense<0.000000e+00> : vector<16x64xf32>
    %4 = tpu.matmul %1, %3, %cst {dimension_numbers = #tpu.dot_dimension_numbers<[1], [0], [0], [1], [0, 0, 1, 1], [], []>} : vector<16x64xf32>, vector<64x64xf32>, vector<16x64xf32> -> vector<16x64xf32>
    %c1 = arith.constant 1 : index
    %c0_6 = arith.constant 0 : index
    %c0_7 = arith.constant 0 : index
    %5 = vector.load %arg3[%c1, %c0_6, %c0_7] : memref<9x64x64xf32, #tpu.memory_space<vmem>>, vector<1x64x64xf32>
    %6 = vector.shape_cast %5 : vector<1x64x64xf32> to vector<64x64xf32>
    %cst_8 = arith.constant dense<0.000000e+00> : vector<16x64xf32>
    %7 = tpu.matmul %1, %6, %cst_8 {dimension_numbers = #tpu.dot_dimension_numbers<[1], [0], [0], [1], [0, 0, 1, 1], [], []>} : vector<16x64xf32>, vector<64x64xf32>, vector<16x64xf32> -> vector<16x64xf32>
    %c2 = arith.constant 2 : index
    %c0_9 = arith.constant 0 : index
    %c0_10 = arith.constant 0 : index
    %8 = vector.load %arg3[%c2, %c0_9, %c0_10] : memref<9x64x64xf32, #tpu.memory_space<vmem>>, vector<1x64x64xf32>
    %9 = vector.shape_cast %8 : vector<1x64x64xf32> to vector<64x64xf32>
    %cst_11 = arith.constant dense<0.000000e+00> : vector<16x64xf32>
    %10 = tpu.matmul %1, %9, %cst_11 {dimension_numbers = #tpu.dot_dimension_numbers<[1], [0], [0], [1], [0, 0, 1, 1], [], []>} : vector<16x64xf32>, vector<64x64xf32>, vector<16x64xf32> -> vector<16x64xf32>
    %c3 = arith.constant 3 : index
    %c0_12 = arith.constant 0 : index
    %c0_13 = arith.constant 0 : index
    %11 = vector.load %arg3[%c3, %c0_12, %c0_13] : memref<9x64x64xf32, #tpu.memory_space<vmem>>, vector<1x64x64xf32>
    %12 = vector.shape_cast %11 : vector<1x64x64xf32> to vector<64x64xf32>
    %cst_14 = arith.constant dense<0.000000e+00> : vector<16x64xf32>
    %13 = tpu.matmul %1, %12, %cst_14 {dimension_numbers = #tpu.dot_dimension_numbers<[1], [0], [0], [1], [0, 0, 1, 1], [], []>} : vector<16x64xf32>, vector<64x64xf32>, vector<16x64xf32> -> vector<16x64xf32>
    %c4 = arith.constant 4 : index
    %c0_15 = arith.constant 0 : index
    %c0_16 = arith.constant 0 : index
    %14 = vector.load %arg3[%c4, %c0_15, %c0_16] : memref<9x64x64xf32, #tpu.memory_space<vmem>>, vector<1x64x64xf32>
    %15 = vector.shape_cast %14 : vector<1x64x64xf32> to vector<64x64xf32>
    %cst_17 = arith.constant dense<0.000000e+00> : vector<16x64xf32>
    %16 = tpu.matmul %1, %15, %cst_17 {dimension_numbers = #tpu.dot_dimension_numbers<[1], [0], [0], [1], [0, 0, 1, 1], [], []>} : vector<16x64xf32>, vector<64x64xf32>, vector<16x64xf32> -> vector<16x64xf32>
    %c5 = arith.constant 5 : index
    %c0_18 = arith.constant 0 : index
    %c0_19 = arith.constant 0 : index
    %17 = vector.load %arg3[%c5, %c0_18, %c0_19] : memref<9x64x64xf32, #tpu.memory_space<vmem>>, vector<1x64x64xf32>
    %18 = vector.shape_cast %17 : vector<1x64x64xf32> to vector<64x64xf32>
    %cst_20 = arith.constant dense<0.000000e+00> : vector<16x64xf32>
    %19 = tpu.matmul %1, %18, %cst_20 {dimension_numbers = #tpu.dot_dimension_numbers<[1], [0], [0], [1], [0, 0, 1, 1], [], []>} : vector<16x64xf32>, vector<64x64xf32>, vector<16x64xf32> -> vector<16x64xf32>
    %c6 = arith.constant 6 : index
    %c0_21 = arith.constant 0 : index
    %c0_22 = arith.constant 0 : index
    %20 = vector.load %arg3[%c6, %c0_21, %c0_22] : memref<9x64x64xf32, #tpu.memory_space<vmem>>, vector<1x64x64xf32>
    %21 = vector.shape_cast %20 : vector<1x64x64xf32> to vector<64x64xf32>
    %cst_23 = arith.constant dense<0.000000e+00> : vector<16x64xf32>
    %22 = tpu.matmul %1, %21, %cst_23 {dimension_numbers = #tpu.dot_dimension_numbers<[1], [0], [0], [1], [0, 0, 1, 1], [], []>} : vector<16x64xf32>, vector<64x64xf32>, vector<16x64xf32> -> vector<16x64xf32>
    %c7 = arith.constant 7 : index
    %c0_24 = arith.constant 0 : index
    %c0_25 = arith.constant 0 : index
    %23 = vector.load %arg3[%c7, %c0_24, %c0_25] : memref<9x64x64xf32, #tpu.memory_space<vmem>>, vector<1x64x64xf32>
    %24 = vector.shape_cast %23 : vector<1x64x64xf32> to vector<64x64xf32>
    %cst_26 = arith.constant dense<0.000000e+00> : vector<16x64xf32>
    %25 = tpu.matmul %1, %24, %cst_26 {dimension_numbers = #tpu.dot_dimension_numbers<[1], [0], [0], [1], [0, 0, 1, 1], [], []>} : vector<16x64xf32>, vector<64x64xf32>, vector<16x64xf32> -> vector<16x64xf32>
    %c8 = arith.constant 8 : index
    %c0_27 = arith.constant 0 : index
    %c0_28 = arith.constant 0 : index
    %26 = vector.load %arg3[%c8, %c0_27, %c0_28] : memref<9x64x64xf32, #tpu.memory_space<vmem>>, vector<1x64x64xf32>
    %27 = vector.shape_cast %26 : vector<1x64x64xf32> to vector<64x64xf32>
    %cst_29 = arith.constant dense<0.000000e+00> : vector<16x64xf32>
    %28 = tpu.matmul %1, %27, %cst_29 {dimension_numbers = #tpu.dot_dimension_numbers<[1], [0], [0], [1], [0, 0, 1, 1], [], []>} : vector<16x64xf32>, vector<64x64xf32>, vector<16x64xf32> -> vector<16x64xf32>
    %29 = tpu.concatenate %4, %7, %10, %13, %16, %19, %22, %25, %28 in 0 : vector<16x64xf32>, vector<16x64xf32>, vector<16x64xf32>, vector<16x64xf32>, vector<16x64xf32>, vector<16x64xf32>, vector<16x64xf32>, vector<16x64xf32>, vector<16x64xf32> -> vector<144x64xf32>
    %c0_30 = arith.constant 0 : index
    %c0_31 = arith.constant 0 : index
    %c0_32 = arith.constant 0 : index
    %30 = vector.load %arg5[%c0_30, %c0_31, %c0_32] : memref<1x16x3xf32, #tpu.memory_space<vmem>>, vector<1x16x3xf32>
    %31 = vector.shape_cast %30 : vector<1x16x3xf32> to vector<16x3xf32>
    %c0_33 = arith.constant 0 : index
    %c0_34 = arith.constant 0 : index
    %c0_35 = arith.constant 0 : index
    %32 = vector.load %arg4[%c0_33, %c0_34, %c0_35] : memref<1x16x144xf32, #tpu.memory_space<vmem>>, vector<1x16x144xf32>
    %33 = vector.shape_cast %32 : vector<1x16x144xf32> to vector<16x144xf32>
    %cst_36 = arith.constant dense<0.000000e+00> : vector<16x64xf32>
    %34 = tpu.matmul %33, %29, %cst_36 {dimension_numbers = #tpu.dot_dimension_numbers<[1], [0], [0], [1], [0, 0, 1, 1], [], []>} : vector<16x144xf32>, vector<144x64xf32>, vector<16x64xf32> -> vector<16x64xf32>
    %35 = vector.extract_strided_slice %31 {offsets = [0, 0], sizes = [16, 1], strides = [1, 1]} : vector<16x3xf32> to vector<16x1xf32>
    %36 = vector.broadcast %35 : vector<16x1xf32> to vector<16x64xf32>
    %37 = arith.addf %34, %36 : vector<16x64xf32>
    %38 = vector.shape_cast %37 : vector<16x64xf32> to vector<1x16x64xf32>
    %cst_37 = arith.constant dense<0.000000e+00> : vector<1xf32>
    %39 = vector.multi_reduction <add>, %38, %cst_37 [1, 2] : vector<1x16x64xf32> to vector<1xf32>
    %40 = vector.shape_cast %39 : vector<1xf32> to vector<1x1x1xf32>
    %41 = vector.extract %40[0, 0, 0] : f32 from vector<1x1x1xf32>
    %42 = vector.broadcast %41 : f32 to vector<1x1xf32>
    %cst_38 = arith.constant 1.024000e+03 : f32
    %43 = vector.broadcast %cst_38 : f32 to vector<1x1xf32>
    %44 = arith.divf %42, %43 : vector<1x1xf32>
    %45 = vector.broadcast %44 : vector<1x1xf32> to vector<16x64xf32>
    %46 = arith.subf %37, %45 : vector<16x64xf32>
    %47 = arith.mulf %46, %46 : vector<16x64xf32>
    %48 = vector.shape_cast %47 : vector<16x64xf32> to vector<1x16x64xf32>
    %cst_39 = arith.constant dense<0.000000e+00> : vector<1xf32>
    %49 = vector.multi_reduction <add>, %48, %cst_39 [1, 2] : vector<1x16x64xf32> to vector<1xf32>
    %50 = vector.shape_cast %49 : vector<1xf32> to vector<1x1x1xf32>
    %51 = vector.extract %50[0, 0, 0] : f32 from vector<1x1x1xf32>
    %52 = vector.broadcast %51 : f32 to vector<1x1xf32>
    %cst_40 = arith.constant 1.024000e+03 : f32
    %53 = vector.broadcast %cst_40 : f32 to vector<1x1xf32>
    %54 = arith.divf %52, %53 : vector<1x1xf32>
    %55 = vector.broadcast %44 : vector<1x1xf32> to vector<16x64xf32>
    %56 = arith.subf %37, %55 : vector<16x64xf32>
    %cst_41 = arith.constant 9.99999974E-6 : f32
    %57 = vector.broadcast %cst_41 : f32 to vector<1x1xf32>
    %58 = arith.addf %54, %57 : vector<1x1xf32>
    %59 = math.rsqrt %58 : vector<1x1xf32>
    %60 = vector.broadcast %59 : vector<1x1xf32> to vector<16x64xf32>
    %61 = arith.mulf %56, %60 : vector<16x64xf32>
    %62 = vector.extract_strided_slice %31 {offsets = [0, 1], sizes = [16, 1], strides = [1, 1]} : vector<16x3xf32> to vector<16x1xf32>
    %63 = vector.broadcast %62 : vector<16x1xf32> to vector<16x64xf32>
    %64 = arith.mulf %61, %63 : vector<16x64xf32>
    %65 = vector.extract_strided_slice %31 {offsets = [0, 2], sizes = [16, 1], strides = [1, 1]} : vector<16x3xf32> to vector<16x1xf32>
    %66 = vector.broadcast %65 : vector<16x1xf32> to vector<16x64xf32>
    %67 = arith.addf %64, %66 : vector<16x64xf32>
    %cst_42 = arith.constant 0.000000e+00 : f32
    %68 = vector.broadcast %cst_42 : f32 to vector<16x64xf32>
    %69 = arith.maximumf %67, %68 : vector<16x64xf32>
    %c0_43 = arith.constant 0 : index
    %c0_44 = arith.constant 0 : index
    %c0_45 = arith.constant 0 : index
    %70 = vector.load %arg3[%c0_43, %c0_44, %c0_45] : memref<9x64x64xf32, #tpu.memory_space<vmem>>, vector<1x64x64xf32>
    %71 = vector.shape_cast %70 : vector<1x64x64xf32> to vector<64x64xf32>
    %cst_46 = arith.constant dense<0.000000e+00> : vector<16x64xf32>
    %72 = tpu.matmul %69, %71, %cst_46 {dimension_numbers = #tpu.dot_dimension_numbers<[1], [0], [0], [1], [0, 0, 1, 1], [], []>} : vector<16x64xf32>, vector<64x64xf32>, vector<16x64xf32> -> vector<16x64xf32>
    %c1_47 = arith.constant 1 : index
    %c0_48 = arith.constant 0 : index
    %c0_49 = arith.constant 0 : index
    %73 = vector.load %arg3[%c1_47, %c0_48, %c0_49] : memref<9x64x64xf32, #tpu.memory_space<vmem>>, vector<1x64x64xf32>
    %74 = vector.shape_cast %73 : vector<1x64x64xf32> to vector<64x64xf32>
    %cst_50 = arith.constant dense<0.000000e+00> : vector<16x64xf32>
    %75 = tpu.matmul %69, %74, %cst_50 {dimension_numbers = #tpu.dot_dimension_numbers<[1], [0], [0], [1], [0, 0, 1, 1], [], []>} : vector<16x64xf32>, vector<64x64xf32>, vector<16x64xf32> -> vector<16x64xf32>
    %c2_51 = arith.constant 2 : index
    %c0_52 = arith.constant 0 : index
    %c0_53 = arith.constant 0 : index
    %76 = vector.load %arg3[%c2_51, %c0_52, %c0_53] : memref<9x64x64xf32, #tpu.memory_space<vmem>>, vector<1x64x64xf32>
    %77 = vector.shape_cast %76 : vector<1x64x64xf32> to vector<64x64xf32>
    %cst_54 = arith.constant dense<0.000000e+00> : vector<16x64xf32>
    %78 = tpu.matmul %69, %77, %cst_54 {dimension_numbers = #tpu.dot_dimension_numbers<[1], [0], [0], [1], [0, 0, 1, 1], [], []>} : vector<16x64xf32>, vector<64x64xf32>, vector<16x64xf32> -> vector<16x64xf32>
    %c3_55 = arith.constant 3 : index
    %c0_56 = arith.constant 0 : index
    %c0_57 = arith.constant 0 : index
    %79 = vector.load %arg3[%c3_55, %c0_56, %c0_57] : memref<9x64x64xf32, #tpu.memory_space<vmem>>, vector<1x64x64xf32>
    %80 = vector.shape_cast %79 : vector<1x64x64xf32> to vector<64x64xf32>
    %cst_58 = arith.constant dense<0.000000e+00> : vector<16x64xf32>
    %81 = tpu.matmul %69, %80, %cst_58 {dimension_numbers = #tpu.dot_dimension_numbers<[1], [0], [0], [1], [0, 0, 1, 1], [], []>} : vector<16x64xf32>, vector<64x64xf32>, vector<16x64xf32> -> vector<16x64xf32>
    %c4_59 = arith.constant 4 : index
    %c0_60 = arith.constant 0 : index
    %c0_61 = arith.constant 0 : index
    %82 = vector.load %arg3[%c4_59, %c0_60, %c0_61] : memref<9x64x64xf32, #tpu.memory_space<vmem>>, vector<1x64x64xf32>
    %83 = vector.shape_cast %82 : vector<1x64x64xf32> to vector<64x64xf32>
    %cst_62 = arith.constant dense<0.000000e+00> : vector<16x64xf32>
    %84 = tpu.matmul %69, %83, %cst_62 {dimension_numbers = #tpu.dot_dimension_numbers<[1], [0], [0], [1], [0, 0, 1, 1], [], []>} : vector<16x64xf32>, vector<64x64xf32>, vector<16x64xf32> -> vector<16x64xf32>
    %c5_63 = arith.constant 5 : index
    %c0_64 = arith.constant 0 : index
    %c0_65 = arith.constant 0 : index
    %85 = vector.load %arg3[%c5_63, %c0_64, %c0_65] : memref<9x64x64xf32, #tpu.memory_space<vmem>>, vector<1x64x64xf32>
    %86 = vector.shape_cast %85 : vector<1x64x64xf32> to vector<64x64xf32>
    %cst_66 = arith.constant dense<0.000000e+00> : vector<16x64xf32>
    %87 = tpu.matmul %69, %86, %cst_66 {dimension_numbers = #tpu.dot_dimension_numbers<[1], [0], [0], [1], [0, 0, 1, 1], [], []>} : vector<16x64xf32>, vector<64x64xf32>, vector<16x64xf32> -> vector<16x64xf32>
    %c6_67 = arith.constant 6 : index
    %c0_68 = arith.constant 0 : index
    %c0_69 = arith.constant 0 : index
    %88 = vector.load %arg3[%c6_67, %c0_68, %c0_69] : memref<9x64x64xf32, #tpu.memory_space<vmem>>, vector<1x64x64xf32>
    %89 = vector.shape_cast %88 : vector<1x64x64xf32> to vector<64x64xf32>
    %cst_70 = arith.constant dense<0.000000e+00> : vector<16x64xf32>
    %90 = tpu.matmul %69, %89, %cst_70 {dimension_numbers = #tpu.dot_dimension_numbers<[1], [0], [0], [1], [0, 0, 1, 1], [], []>} : vector<16x64xf32>, vector<64x64xf32>, vector<16x64xf32> -> vector<16x64xf32>
    %c7_71 = arith.constant 7 : index
    %c0_72 = arith.constant 0 : index
    %c0_73 = arith.constant 0 : index
    %91 = vector.load %arg3[%c7_71, %c0_72, %c0_73] : memref<9x64x64xf32, #tpu.memory_space<vmem>>, vector<1x64x64xf32>
    %92 = vector.shape_cast %91 : vector<1x64x64xf32> to vector<64x64xf32>
    %cst_74 = arith.constant dense<0.000000e+00> : vector<16x64xf32>
    %93 = tpu.matmul %69, %92, %cst_74 {dimension_numbers = #tpu.dot_dimension_numbers<[1], [0], [0], [1], [0, 0, 1, 1], [], []>} : vector<16x64xf32>, vector<64x64xf32>, vector<16x64xf32> -> vector<16x64xf32>
    %c8_75 = arith.constant 8 : index
    %c0_76 = arith.constant 0 : index
    %c0_77 = arith.constant 0 : index
    %94 = vector.load %arg3[%c8_75, %c0_76, %c0_77] : memref<9x64x64xf32, #tpu.memory_space<vmem>>, vector<1x64x64xf32>
    %95 = vector.shape_cast %94 : vector<1x64x64xf32> to vector<64x64xf32>
    %cst_78 = arith.constant dense<0.000000e+00> : vector<16x64xf32>
    %96 = tpu.matmul %69, %95, %cst_78 {dimension_numbers = #tpu.dot_dimension_numbers<[1], [0], [0], [1], [0, 0, 1, 1], [], []>} : vector<16x64xf32>, vector<64x64xf32>, vector<16x64xf32> -> vector<16x64xf32>
    %97 = tpu.concatenate %72, %75, %78, %81, %84, %87, %90, %93, %96 in 0 : vector<16x64xf32>, vector<16x64xf32>, vector<16x64xf32>, vector<16x64xf32>, vector<16x64xf32>, vector<16x64xf32>, vector<16x64xf32>, vector<16x64xf32>, vector<16x64xf32> -> vector<144x64xf32>
    %c0_79 = arith.constant 0 : index
    %c0_80 = arith.constant 0 : index
    %c0_81 = arith.constant 0 : index
    %98 = vector.load %arg7[%c0_79, %c0_80, %c0_81] : memref<1x16x3xf32, #tpu.memory_space<vmem>>, vector<1x16x3xf32>
    %99 = vector.shape_cast %98 : vector<1x16x3xf32> to vector<16x3xf32>
    %c0_82 = arith.constant 0 : index
    %c0_83 = arith.constant 0 : index
    %c0_84 = arith.constant 0 : index
    %100 = vector.load %arg6[%c0_82, %c0_83, %c0_84] : memref<1x16x144xf32, #tpu.memory_space<vmem>>, vector<1x16x144xf32>
    %101 = vector.shape_cast %100 : vector<1x16x144xf32> to vector<16x144xf32>
    %cst_85 = arith.constant dense<0.000000e+00> : vector<16x64xf32>
    %102 = tpu.matmul %101, %97, %cst_85 {dimension_numbers = #tpu.dot_dimension_numbers<[1], [0], [0], [1], [0, 0, 1, 1], [], []>} : vector<16x144xf32>, vector<144x64xf32>, vector<16x64xf32> -> vector<16x64xf32>
    %103 = vector.extract_strided_slice %99 {offsets = [0, 0], sizes = [16, 1], strides = [1, 1]} : vector<16x3xf32> to vector<16x1xf32>
    %104 = vector.broadcast %103 : vector<16x1xf32> to vector<16x64xf32>
    %105 = arith.addf %102, %104 : vector<16x64xf32>
    %106 = vector.shape_cast %105 : vector<16x64xf32> to vector<1x16x64xf32>
    %cst_86 = arith.constant dense<0.000000e+00> : vector<1xf32>
    %107 = vector.multi_reduction <add>, %106, %cst_86 [1, 2] : vector<1x16x64xf32> to vector<1xf32>
    %108 = vector.shape_cast %107 : vector<1xf32> to vector<1x1x1xf32>
    %109 = vector.extract %108[0, 0, 0] : f32 from vector<1x1x1xf32>
    %110 = vector.broadcast %109 : f32 to vector<1x1xf32>
    %cst_87 = arith.constant 1.024000e+03 : f32
    %111 = vector.broadcast %cst_87 : f32 to vector<1x1xf32>
    %112 = arith.divf %110, %111 : vector<1x1xf32>
    %113 = vector.broadcast %112 : vector<1x1xf32> to vector<16x64xf32>
    %114 = arith.subf %105, %113 : vector<16x64xf32>
    %115 = arith.mulf %114, %114 : vector<16x64xf32>
    %116 = vector.shape_cast %115 : vector<16x64xf32> to vector<1x16x64xf32>
    %cst_88 = arith.constant dense<0.000000e+00> : vector<1xf32>
    %117 = vector.multi_reduction <add>, %116, %cst_88 [1, 2] : vector<1x16x64xf32> to vector<1xf32>
    %118 = vector.shape_cast %117 : vector<1xf32> to vector<1x1x1xf32>
    %119 = vector.extract %118[0, 0, 0] : f32 from vector<1x1x1xf32>
    %120 = vector.broadcast %119 : f32 to vector<1x1xf32>
    %cst_89 = arith.constant 1.024000e+03 : f32
    %121 = vector.broadcast %cst_89 : f32 to vector<1x1xf32>
    %122 = arith.divf %120, %121 : vector<1x1xf32>
    %123 = vector.broadcast %112 : vector<1x1xf32> to vector<16x64xf32>
    %124 = arith.subf %105, %123 : vector<16x64xf32>
    %cst_90 = arith.constant 9.99999974E-6 : f32
    %125 = vector.broadcast %cst_90 : f32 to vector<1x1xf32>
    %126 = arith.addf %122, %125 : vector<1x1xf32>
    %127 = math.rsqrt %126 : vector<1x1xf32>
    %128 = vector.broadcast %127 : vector<1x1xf32> to vector<16x64xf32>
    %129 = arith.mulf %124, %128 : vector<16x64xf32>
    %130 = vector.extract_strided_slice %99 {offsets = [0, 1], sizes = [16, 1], strides = [1, 1]} : vector<16x3xf32> to vector<16x1xf32>
    %131 = vector.broadcast %130 : vector<16x1xf32> to vector<16x64xf32>
    %132 = arith.mulf %129, %131 : vector<16x64xf32>
    %133 = vector.extract_strided_slice %99 {offsets = [0, 2], sizes = [16, 1], strides = [1, 1]} : vector<16x3xf32> to vector<16x1xf32>
    %134 = vector.broadcast %133 : vector<16x1xf32> to vector<16x64xf32>
    %135 = arith.addf %132, %134 : vector<16x64xf32>
    %c0_91 = arith.constant 0 : index
    %c0_92 = arith.constant 0 : index
    %136 = vector.load %arg8[%c0_91, %c0_92] : memref<64x16xf32, #tpu.memory_space<vmem>>, vector<64x16xf32>
    %cst_93 = arith.constant dense<0.000000e+00> : vector<16x16xf32>
    %137 = tpu.matmul %135, %136, %cst_93 {dimension_numbers = #tpu.dot_dimension_numbers<[1], [0], [0], [1], [0, 0, 1, 1], [], []>} : vector<16x64xf32>, vector<64x16xf32>, vector<16x16xf32> -> vector<16x16xf32>
    %c0_94 = arith.constant 0 : index
    %c0_95 = arith.constant 0 : index
    %c0_96 = arith.constant 0 : index
    %138 = vector.load %arg10[%c0_94, %c0_95, %c0_96] : memref<1x6x16xf32, #tpu.memory_space<vmem>>, vector<1x6x16xf32>
    %139 = vector.shape_cast %138 : vector<1x6x16xf32> to vector<6x16xf32>
    %c0_97 = arith.constant 0 : index
    %c0_98 = arith.constant 0 : index
    %c0_99 = arith.constant 0 : index
    %c0_100 = arith.constant 0 : index
    %140 = vector.load %arg9[%c0_97, %c0_98, %c0_99, %c0_100] : memref<1x2x16x16xf32, #tpu.memory_space<vmem>>, vector<1x1x16x16xf32>
    %141 = vector.shape_cast %140 : vector<1x1x16x16xf32> to vector<16x16xf32>
    %cst_101 = arith.constant dense<0.000000e+00> : vector<16x16xf32>
    %142 = tpu.matmul %137, %141, %cst_101 {dimension_numbers = #tpu.dot_dimension_numbers<[1], [0], [0], [1], [0, 0, 1, 1], [], []>} : vector<16x16xf32>, vector<16x16xf32>, vector<16x16xf32> -> vector<16x16xf32>
    %143 = vector.extract_strided_slice %139 {offsets = [0, 0], sizes = [1, 16], strides = [1, 1]} : vector<6x16xf32> to vector<1x16xf32>
    %144 = vector.broadcast %143 : vector<1x16xf32> to vector<16x16xf32>
    %145 = arith.addf %142, %144 : vector<16x16xf32>
    %146 = vector.extract_strided_slice %139 {offsets = [1, 0], sizes = [1, 16], strides = [1, 1]} : vector<6x16xf32> to vector<1x16xf32>
    %147 = vector.extract_strided_slice %139 {offsets = [2, 0], sizes = [1, 16], strides = [1, 1]} : vector<6x16xf32> to vector<1x16xf32>
    %cst_102 = arith.constant dense<0.000000e+00> : vector<16xf32>
    %148 = vector.multi_reduction <add>, %145, %cst_102 [1] : vector<16x16xf32> to vector<16xf32>
    %149 = vector.shape_cast %148 : vector<16xf32> to vector<16x1xf32>
    %cst_103 = arith.constant 1.600000e+01 : f32
    %150 = vector.broadcast %cst_103 : f32 to vector<16x1xf32>
    %151 = arith.divf %149, %150 : vector<16x1xf32>
    %152 = vector.broadcast %151 : vector<16x1xf32> to vector<16x16xf32>
    %153 = arith.subf %145, %152 : vector<16x16xf32>
    %154 = arith.mulf %153, %153 : vector<16x16xf32>
    %cst_104 = arith.constant dense<0.000000e+00> : vector<16xf32>
    %155 = vector.multi_reduction <add>, %154, %cst_104 [1] : vector<16x16xf32> to vector<16xf32>
    %156 = vector.shape_cast %155 : vector<16xf32> to vector<16x1xf32>
    %cst_105 = arith.constant 1.600000e+01 : f32
    %157 = vector.broadcast %cst_105 : f32 to vector<16x1xf32>
    %158 = arith.divf %156, %157 : vector<16x1xf32>
    %159 = vector.broadcast %151 : vector<16x1xf32> to vector<16x16xf32>
    %160 = arith.subf %145, %159 : vector<16x16xf32>
    %cst_106 = arith.constant 9.99999974E-6 : f32
    %161 = vector.broadcast %cst_106 : f32 to vector<16x1xf32>
    %162 = arith.addf %158, %161 : vector<16x1xf32>
    %163 = math.rsqrt %162 : vector<16x1xf32>
    %164 = vector.broadcast %163 : vector<16x1xf32> to vector<16x16xf32>
    %165 = arith.mulf %160, %164 : vector<16x16xf32>
    %166 = vector.broadcast %146 : vector<1x16xf32> to vector<16x16xf32>
    %167 = arith.mulf %165, %166 : vector<16x16xf32>
    %168 = vector.broadcast %147 : vector<1x16xf32> to vector<16x16xf32>
    %169 = arith.addf %167, %168 : vector<16x16xf32>
    %cst_107 = arith.constant 0.000000e+00 : f32
    %170 = vector.broadcast %cst_107 : f32 to vector<16x16xf32>
    %171 = arith.maximumf %169, %170 : vector<16x16xf32>
    %c0_108 = arith.constant 0 : index
    %c1_109 = arith.constant 1 : index
    %c0_110 = arith.constant 0 : index
    %c0_111 = arith.constant 0 : index
    %172 = vector.load %arg9[%c0_108, %c1_109, %c0_110, %c0_111] : memref<1x2x16x16xf32, #tpu.memory_space<vmem>>, vector<1x1x16x16xf32>
    %173 = vector.shape_cast %172 : vector<1x1x16x16xf32> to vector<16x16xf32>
    %cst_112 = arith.constant dense<0.000000e+00> : vector<16x16xf32>
    %174 = tpu.matmul %171, %173, %cst_112 {dimension_numbers = #tpu.dot_dimension_numbers<[1], [0], [0], [1], [0, 0, 1, 1], [], []>} : vector<16x16xf32>, vector<16x16xf32>, vector<16x16xf32> -> vector<16x16xf32>
    %175 = vector.extract_strided_slice %139 {offsets = [3, 0], sizes = [1, 16], strides = [1, 1]} : vector<6x16xf32> to vector<1x16xf32>
    %176 = vector.broadcast %175 : vector<1x16xf32> to vector<16x16xf32>
    %177 = arith.addf %174, %176 : vector<16x16xf32>
    %178 = vector.extract_strided_slice %139 {offsets = [4, 0], sizes = [1, 16], strides = [1, 1]} : vector<6x16xf32> to vector<1x16xf32>
    %179 = vector.extract_strided_slice %139 {offsets = [5, 0], sizes = [1, 16], strides = [1, 1]} : vector<6x16xf32> to vector<1x16xf32>
    %cst_113 = arith.constant dense<0.000000e+00> : vector<16xf32>
    %180 = vector.multi_reduction <add>, %177, %cst_113 [1] : vector<16x16xf32> to vector<16xf32>
    %181 = vector.shape_cast %180 : vector<16xf32> to vector<16x1xf32>
    %cst_114 = arith.constant 1.600000e+01 : f32
    %182 = vector.broadcast %cst_114 : f32 to vector<16x1xf32>
    %183 = arith.divf %181, %182 : vector<16x1xf32>
    %184 = vector.broadcast %183 : vector<16x1xf32> to vector<16x16xf32>
    %185 = arith.subf %177, %184 : vector<16x16xf32>
    %186 = arith.mulf %185, %185 : vector<16x16xf32>
    %cst_115 = arith.constant dense<0.000000e+00> : vector<16xf32>
    %187 = vector.multi_reduction <add>, %186, %cst_115 [1] : vector<16x16xf32> to vector<16xf32>
    %188 = vector.shape_cast %187 : vector<16xf32> to vector<16x1xf32>
    %cst_116 = arith.constant 1.600000e+01 : f32
    %189 = vector.broadcast %cst_116 : f32 to vector<16x1xf32>
    %190 = arith.divf %188, %189 : vector<16x1xf32>
    %191 = vector.broadcast %183 : vector<16x1xf32> to vector<16x16xf32>
    %192 = arith.subf %177, %191 : vector<16x16xf32>
    %cst_117 = arith.constant 9.99999974E-6 : f32
    %193 = vector.broadcast %cst_117 : f32 to vector<16x1xf32>
    %194 = arith.addf %190, %193 : vector<16x1xf32>
    %195 = math.rsqrt %194 : vector<16x1xf32>
    %196 = vector.broadcast %195 : vector<16x1xf32> to vector<16x16xf32>
    %197 = arith.mulf %192, %196 : vector<16x16xf32>
    %198 = vector.broadcast %178 : vector<1x16xf32> to vector<16x16xf32>
    %199 = arith.mulf %197, %198 : vector<16x16xf32>
    %200 = vector.broadcast %179 : vector<1x16xf32> to vector<16x16xf32>
    %201 = arith.addf %199, %200 : vector<16x16xf32>
    %c0_118 = arith.constant 0 : index
    %c0_119 = arith.constant 0 : index
    %c0_120 = arith.constant 0 : index
    %c0_121 = arith.constant 0 : index
    %202 = vector.load %arg11[%c0_118, %c0_119, %c0_120, %c0_121] : memref<1x1x16x16xf32, #tpu.memory_space<vmem>>, vector<1x1x16x16xf32>
    %203 = vector.shape_cast %202 : vector<1x1x16x16xf32> to vector<16x16xf32>
    %204 = vector.shape_cast %201 : vector<16x16xf32> to vector<1x1x16x16xf32>
    tpu.vector_store %arg11[%c0_118, %c0_119, %c0_120, %c0_121], %204 {strides = array<i32>} : memref<1x1x16x16xf32, #tpu.memory_space<vmem>>, vector<1x1x16x16xf32>,
    return
  }
  func.func @transform_0(%arg0: i32, %arg1: i32) -> (i32, i32, i32, i32) {
    %c0_i32 = arith.constant 0 : i32
    %c0_i32_0 = arith.constant 0 : i32
    %c0_i32_1 = arith.constant 0 : i32
    return %arg0, %arg1, %c0_i32, %c0_i32_0 : i32, i32, i32, i32
  }
  func.func @transform_1(%arg0: i32, %arg1: i32) -> (i32, i32, i32) {
    %c0_i32 = arith.constant 0 : i32
    %c0_i32_0 = arith.constant 0 : i32
    %c0_i32_1 = arith.constant 0 : i32
    %c0_i32_2 = arith.constant 0 : i32
    return %c0_i32, %c0_i32_0, %c0_i32_1 : i32, i32, i32
  }
  func.func @transform_2(%arg0: i32, %arg1: i32) -> (i32, i32, i32) {
    %c0_i32 = arith.constant 0 : i32
    %c0_i32_0 = arith.constant 0 : i32
    %c0_i32_1 = arith.constant 0 : i32
    return %arg0, %c0_i32, %c0_i32_0 : i32, i32, i32
  }
  func.func @transform_3(%arg0: i32, %arg1: i32) -> (i32, i32, i32) {
    %c0_i32 = arith.constant 0 : i32
    %c0_i32_0 = arith.constant 0 : i32
    %c0_i32_1 = arith.constant 0 : i32
    return %arg0, %c0_i32, %c0_i32_0 : i32, i32, i32
  }
  func.func @transform_4(%arg0: i32, %arg1: i32) -> (i32, i32, i32) {
    %c0_i32 = arith.constant 0 : i32
    %c0_i32_0 = arith.constant 0 : i32
    %c0_i32_1 = arith.constant 0 : i32
    return %arg0, %c0_i32, %c0_i32_0 : i32, i32, i32
  }
  func.func @transform_5(%arg0: i32, %arg1: i32) -> (i32, i32, i32) {
    %c0_i32 = arith.constant 0 : i32
    %c0_i32_0 = arith.constant 0 : i32
    %c0_i32_1 = arith.constant 0 : i32
    return %arg0, %c0_i32, %c0_i32_0 : i32, i32, i32
  }
  func.func @transform_6(%arg0: i32, %arg1: i32) -> (i32, i32) {
    %c0_i32 = arith.constant 0 : i32
    %c0_i32_0 = arith.constant 0 : i32
    %c0_i32_1 = arith.constant 0 : i32
    return %c0_i32, %c0_i32_0 : i32, i32
  }
  func.func @transform_7(%arg0: i32, %arg1: i32) -> (i32, i32, i32, i32) {
    %c0_i32 = arith.constant 0 : i32
    %c0_i32_0 = arith.constant 0 : i32
    %c0_i32_1 = arith.constant 0 : i32
    %c0_i32_2 = arith.constant 0 : i32
    return %arg0, %c0_i32, %c0_i32_0, %c0_i32_1 : i32, i32, i32, i32
  }
  func.func @transform_8(%arg0: i32, %arg1: i32) -> (i32, i32, i32) {
    %c0_i32 = arith.constant 0 : i32
    %c0_i32_0 = arith.constant 0 : i32
    %c0_i32_1 = arith.constant 0 : i32
    return %arg0, %c0_i32, %c0_i32_0 : i32, i32, i32
  }
  func.func @transform_9(%arg0: i32, %arg1: i32) -> (i32, i32, i32, i32) {
    %c0_i32 = arith.constant 0 : i32
    %c0_i32_0 = arith.constant 0 : i32
    %c0_i32_1 = arith.constant 0 : i32
    return %arg0, %arg1, %c0_i32, %c0_i32_0 : i32, i32, i32, i32
  }
}

</mosaic_0001>

<llo_original>
// kernel: squeeze.7
$region0: #{squeeze.7}
  %s0 = inlined_call_operand.vmem [shape: f32[1,2,16,16], index: 0, kind: input, shape index: {}]
  %s1 = inlined_call_operand.vmem [shape: f32[2,256], index: 1, kind: output, shape index: {}]
  $region1: #{squeeze.7} parent=0
    #allocation0 [shape = 'u8[8192]{0}', space=vmem, size = 0x2000, scoped, tag = 'scoped mem for output reshape']
    %v2 = vld [vmem:[%s0] ss:$8 sm:$0xf]
    %vm3 = vcmask 130048
    %4 = vst.msk [vmem:[#allocation0] ss:$8 sm:$0x3] %vm3, %v2
    %s5 = scalar_lea.vmem [#allocation0], 4294967281
    %6 = vst.msk [vmem:[%s5] ss:$8 sm:$0xc] %vm3, %v2
    %s7 = scalar_lea.vmem %s0, 7
    %s8 = smov 3
    %v9 = vld [vmem:[%s7] ss:$16 sm:%s8]
    %s10 = scalar_lea.vmem %s0, 4294967279
    %s11 = smov 12
    %v12 = vld [vmem:[%s10] ss:$16 sm:%s11]
    %vm13 = vcmask 1043458
    %v14 = vsel %vm13, %v12, %v9
    %15 = vrot.lane.b32.xlu0 %v14, 112
    %v16 = vpop.permute.xlu0 %15
    %vm17 = vcmask 1048448
    %18 = vst.msk [vmem:[#allocation0] sm:$0x3] %vm17, %v16
    %s19 = scalar_lea.vmem [#allocation0], 6
    %20 = vst.msk [vmem:[%s19] sm:$0xc] %vm17, %v16
    %s21 = scalar_lea.vmem %s0, 6
    %s22 = smov 3
    %v23 = vld [vmem:[%s21] ss:$16 sm:%s22]
    %s24 = scalar_lea.vmem %s0, 4294967278
    %s25 = smov 12
    %v26 = vld [vmem:[%s24] ss:$16 sm:%s25]
    %vm27 = vcmask 1043458
    %v28 = vsel %vm27, %v26, %v23
    %29 = vrot.lane.b32.xlu0 %v28, 96
    %v30 = vpop.permute.xlu0 %29
    %vm31 = vcmask 917248
    %32 = vst.msk [vmem:[#allocation0] sm:$0x3] %vm31, %v30
    %s33 = scalar_lea.vmem [#allocation0], 6
    %34 = vst.msk [vmem:[%s33] sm:$0xc] %vm31, %v30
    %s35 = scalar_lea.vmem %s0, 5
    %s36 = smov 3
    %v37 = vld [vmem:[%s35] ss:$16 sm:%s36]
    %s38 = scalar_lea.vmem %s0, 4294967277
    %s39 = smov 12
    %v40 = vld [vmem:[%s38] ss:$16 sm:%s39]
    %vm41 = vcmask 1043458
    %v42 = vsel %vm41, %v40, %v37
    %43 = vrot.lane.b32.xlu0 %v42, 80
    %v44 = vpop.permute.xlu0 %43
    %vm45 = vcmask 786048
    %46 = vst.msk [vmem:[#allocation0] sm:$0x3] %vm45, %v44
    %s47 = scalar_lea.vmem [#allocation0], 6
    %48 = vst.msk [vmem:[%s47] sm:$0xc] %vm45, %v44
    %s49 = scalar_lea.vmem %s0, 4
    %s50 = smov 3
    %v51 = vld [vmem:[%s49] ss:$16 sm:%s50]
    %s52 = scalar_lea.vmem %s0, 4294967276
    %s53 = smov 12
    %v54 = vld [vmem:[%s52] ss:$16 sm:%s53]
    %vm55 = vcmask 1043458
    %v56 = vsel %vm55, %v54, %v51
    %57 = vrot.lane.b32.xlu0 %v56, 64
    %v58 = vpop.permute.xlu0 %57
    %vm59 = vcmask 654848
    %60 = vst.msk [vmem:[#allocation0] sm:$0x3] %vm59, %v58
    %s61 = scalar_lea.vmem [#allocation0], 6
    %62 = vst.msk [vmem:[%s61] sm:$0xc] %vm59, %v58
    %s63 = scalar_lea.vmem %s0, 3
    %s64 = smov 3
    %v65 = vld [vmem:[%s63] ss:$16 sm:%s64]
    %s66 = scalar_lea.vmem %s0, 4294967275
    %s67 = smov 12
    %v68 = vld [vmem:[%s66] ss:$16 sm:%s67]
    %vm69 = vcmask 1043458
    %v70 = vsel %vm69, %v68, %v65
    %71 = vrot.lane.b32.xlu0 %v70, 48
    %v72 = vpop.permute.xlu0 %71
    %vm73 = vcmask 523648
    %74 = vst.msk [vmem:[#allocation0] sm:$0x3] %vm73, %v72
    %s75 = scalar_lea.vmem [#allocation0], 6
    %76 = vst.msk [vmem:[%s75] sm:$0xc] %vm73, %v72
    %s77 = scalar_lea.vmem %s0, 2
    %s78 = smov 3
    %v79 = vld [vmem:[%s77] ss:$16 sm:%s78]
    %s80 = scalar_lea.vmem %s0, 4294967274
    %s81 = smov 12
    %v82 = vld [vmem:[%s80] ss:$16 sm:%s81]
    %vm83 = vcmask 1043458
    %v84 = vsel %vm83, %v82, %v79
    %85 = vrot.lane.b32.xlu0 %v84, 32
    %v86 = vpop.permute.xlu0 %85
    %vm87 = vcmask 392448
    %88 = vst.msk [vmem:[#allocation0] sm:$0x3] %vm87, %v86
    %s89 = scalar_lea.vmem [#allocation0], 6
    %90 = vst.msk [vmem:[%s89] sm:$0xc] %vm87, %v86
    %s91 = scalar_lea.vmem %s0, 1
    %s92 = smov 3
    %v93 = vld [vmem:[%s91] ss:$16 sm:%s92]
    %s94 = scalar_lea.vmem %s0, 4294967273
    %s95 = smov 12
    %v96 = vld [vmem:[%s94] ss:$16 sm:%s95]
    %vm97 = vcmask 1043458
    %v98 = vsel %vm97, %v96, %v93
    %99 = vrot.lane.b32.xlu0 %v98, 16
    %v100 = vpop.permute.xlu0 %99
    %vm101 = vcmask 261248
    %102 = vst.msk [vmem:[#allocation0] sm:$0x3] %vm101, %v100
    %s103 = scalar_lea.vmem [#allocation0], 6
    %104 = vst.msk [vmem:[%s103] sm:$0xc] %vm101, %v100
    %s106 = sshllo.u32 0, 2
    %v108 = vld [vmem:[#allocation0] sm:%s106]
    %s109 = sshllo.u32 0, 2
    %110 = vst [vmem:[%s1] sm:%s109] %v108
    %s111 = scalar_lea.vmem [#allocation0], 8
    %v112 = vld [vmem:[%s111] sm:%s106]
    %s113 = sshllo.u32 0, 2
    %s114 = scalar_lea.vmem %s1, 2
    %115 = vst [vmem:[%s114] sm:%s113] %v112

// kernel: cla_forward.7
$region0: #{cla_forward.7}
  #allocation0 [shape = 'u32[]', space=smem, size = 0x4, offset = 0x4, fixed_abs, tag = 'smem constant byte address 0x4 - core index']
  #allocation1 [shape = 'u32[144,128]{1,0:T(1,128)}', space=vmem, size = 0x12000, scoped, tag = 'internal scratch']
  %s0 = inlined_call_operand.vmem [shape: f32[2,8,16], index: 0, kind: input, shape index: {}]
  %s1 = inlined_call_operand.vmem [shape: f32[2,8,16], index: 1, kind: input, shape index: {}]
  %s2 = inlined_call_operand.vmem [shape: f32[2,16,16], index: 2, kind: input, shape index: {}]
  %s3 = inlined_call_operand.vmem [shape: f32[2,8,16], index: 3, kind: input, shape index: {}]
  %s4 = inlined_call_operand.vmem [shape: f32[2,8,16], index: 4, kind: input, shape index: {}]
  %s5 = inlined_call_operand.vmem [shape: f32[2,16,64], index: 5, kind: input, shape index: {}]
  %s6 = inlined_call_operand.vmem [shape: f32[4,16,16], index: 6, kind: input, shape index: {}]
  %s7 = inlined_call_operand.vmem [shape: f32[4,16], index: 7, kind: input, shape index: {}]
  %s8 = inlined_call_operand.vmem [shape: f32[16,16], index: 8, kind: input, shape index: {}]
  %s9 = inlined_call_operand.vmem [shape: f32[2,16,64], index: 9, kind: output, shape index: {}]
  %s10 = sld [smem:[#allocation0]]
  $region69: #{cla_forward.7} parent=0
    _
  %s12 = ssub.s32 1, %s10
  %s13 = scalar_select 0, %s12, %s10
  loop: start=0, step=1, limit=4
  $region2: #{cla_forward.7} parent=0 // loop_pre_header
    _
  $region3: #{cla_forward.7} parent=0 // loop_header
    %s15 = sphi 0, %s19
    %p16 = scmp.ge.s32.totalorder %s15, 4
    %s25 = sphi 0, %s27
    %s28 = sphi 0, %s25
    %s29 = sphi 0, %s28
    %s45 = sphi 0, %s29
    %s51 = sphi 0, %s53
    %s54 = sphi 0, %s51
    %s55 = sphi 0, %s54
    %s71 = sphi 0, %s55
    %s77 = sphi 0, %s79
    %s80 = sphi 0, %s77
    %s81 = sphi 0, %s80
    %s97 = sphi 0, %s81
    %s103 = sphi 0, %s105
    %s106 = sphi 0, %s103
    %s107 = sphi 0, %s106
    %s123 = sphi 0, %s107
    %s129 = sphi 0, %s131
    %s132 = sphi 0, %s129
    %s133 = sphi 0, %s132
    %s149 = sphi 0, %s133
    %s155 = sphi 0, %s157
    %s158 = sphi 0, %s155
    %s159 = sphi 0, %s158
    %s175 = sphi 0, %s159
    %s179 = sphi 0, %s179
    %s181 = sphi 0, %s179
    %s182 = sphi 0, %s181
    %s196 = sphi 0, %s182
    %s200 = sphi 0, %s200
    %s202 = sphi 0, %s200
    %s203 = sphi 0, %s202
    %s217 = sphi 0, %s203
    %s221 = sphi 0, %s221
    %s223 = sphi 0, %s221
    %s224 = sphi 0, %s223
    %s238 = sphi 0, %s224
    %s244 = sphi 0, %s246
    %s247 = sphi 0, %s244
    %s248 = sphi 0, %s247
    %s264 = sphi 0, %s248
  $region4: #{cla_forward.7} parent=0 // loop_header_branch
    %18 = sbr.rel (%p16) target = $region8
  $region5: #{cla_forward.7} parent=0 // loop_body
    %s20 = ssub.s32 %s15, 1
    %s21 = ssub.s32 %s15, 2
    %s22 = sadd.s32 %s15, 1
    %s23 = ssub.s32 %s15, %s22
    %p24 = scmp.eq.s32.totalorder %s23, 0
    %s26 = sadd.s32 %s25, 1
    %s27 = scalar_select %p24, %s25, %s26
    %p30 = pneg %p24
    %p31 = scmp.eq.s32.totalorder %s15, 1
    %p32 = por %p30, %p31
    %p33 = scmp.ne.s32.totalorder %s25, %s28
    %p34 = scmp.eq.s32.totalorder %s15, 0
    %p35 = por %p33, %p34
    %p36 = scmp.ne.s32.totalorder %s25, %s28
    %p37 = scmp.eq.s32.totalorder %s20, 1
    %p38 = por %p36, %p37
    %p39 = scmp.ne.s32.totalorder %s28, %s29
    %p40 = scmp.eq.s32.totalorder %s20, 0
    %p41 = por %p39, %p40
    %p42 = scmp.ne.s32.totalorder %s28, %s29
    %p43 = scmp.eq.s32.totalorder %s21, 1
    %p44 = por %p42, %p43
    %p46 = scmp.ne.s32.totalorder %s29, %s45
    %p47 = scmp.eq.s32.totalorder %s21, 0
    %p48 = por %p46, %p47
    %s49 = ssub.s32 %s15, %s22
    %p50 = scmp.eq.s32.totalorder %s49, 0
    %s52 = sadd.s32 %s51, 1
    %s53 = scalar_select %p50, %s51, %s52
    %p56 = pneg %p50
    %p57 = scmp.eq.s32.totalorder %s15, 1
    %p58 = por %p56, %p57
    %p59 = scmp.ne.s32.totalorder %s51, %s54
    %p60 = scmp.eq.s32.totalorder %s15, 0
    %p61 = por %p59, %p60
    %p62 = scmp.ne.s32.totalorder %s51, %s54
    %p63 = scmp.eq.s32.totalorder %s20, 1
    %p64 = por %p62, %p63
    %p65 = scmp.ne.s32.totalorder %s54, %s55
    %p66 = scmp.eq.s32.totalorder %s20, 0
    %p67 = por %p65, %p66
    %p68 = scmp.ne.s32.totalorder %s54, %s55
    %p69 = scmp.eq.s32.totalorder %s21, 1
    %p70 = por %p68, %p69
    %p72 = scmp.ne.s32.totalorder %s55, %s71
    %p73 = scmp.eq.s32.totalorder %s21, 0
    %p74 = por %p72, %p73
    %s75 = ssub.s32 %s15, %s22
    %p76 = scmp.eq.s32.totalorder %s75, 0
    %s78 = sadd.s32 %s77, 1
    %s79 = scalar_select %p76, %s77, %s78
    %p82 = pneg %p76
    %p83 = scmp.eq.s32.totalorder %s15, 1
    %p84 = por %p82, %p83
    %p85 = scmp.ne.s32.totalorder %s77, %s80
    %p86 = scmp.eq.s32.totalorder %s15, 0
    %p87 = por %p85, %p86
    %p88 = scmp.ne.s32.totalorder %s77, %s80
    %p89 = scmp.eq.s32.totalorder %s20, 1
    %p90 = por %p88, %p89
    %p91 = scmp.ne.s32.totalorder %s80, %s81
    %p92 = scmp.eq.s32.totalorder %s20, 0
    %p93 = por %p91, %p92
    %p94 = scmp.ne.s32.totalorder %s80, %s81
    %p95 = scmp.eq.s32.totalorder %s21, 1
    %p96 = por %p94, %p95
    %p98 = scmp.ne.s32.totalorder %s81, %s97
    %p99 = scmp.eq.s32.totalorder %s21, 0
    %p100 = por %p98, %p99
    %s101 = ssub.s32 %s15, %s22
    %p102 = scmp.eq.s32.totalorder %s101, 0
    %s104 = sadd.s32 %s103, 1
    %s105 = scalar_select %p102, %s103, %s104
    %p108 = pneg %p102
    %p109 = scmp.eq.s32.totalorder %s15, 1
    %p110 = por %p108, %p109
    %p111 = scmp.ne.s32.totalorder %s103, %s106
    %p112 = scmp.eq.s32.totalorder %s15, 0
    %p113 = por %p111, %p112
    %p114 = scmp.ne.s32.totalorder %s103, %s106
    %p115 = scmp.eq.s32.totalorder %s20, 1
    %p116 = por %p114, %p115
    %p117 = scmp.ne.s32.totalorder %s106, %s107
    %p118 = scmp.eq.s32.totalorder %s20, 0
    %p119 = por %p117, %p118
    %p120 = scmp.ne.s32.totalorder %s106, %s107
    %p121 = scmp.eq.s32.totalorder %s21, 1
    %p122 = por %p120, %p121
    %p124 = scmp.ne.s32.totalorder %s107, %s123
    %p125 = scmp.eq.s32.totalorder %s21, 0
    %p126 = por %p124, %p125
    %s127 = ssub.s32 %s15, %s22
    %p128 = scmp.eq.s32.totalorder %s127, 0
    %s130 = sadd.s32 %s129, 1
    %s131 = scalar_select %p128, %s129, %s130
    %p134 = pneg %p128
    %p135 = scmp.eq.s32.totalorder %s15, 1
    %p136 = por %p134, %p135
    %p137 = scmp.ne.s32.totalorder %s129, %s132
    %p138 = scmp.eq.s32.totalorder %s15, 0
    %p139 = por %p137, %p138
    %p140 = scmp.ne.s32.totalorder %s129, %s132
    %p141 = scmp.eq.s32.totalorder %s20, 1
    %p142 = por %p140, %p141
    %p143 = scmp.ne.s32.totalorder %s132, %s133
    %p144 = scmp.eq.s32.totalorder %s20, 0
    %p145 = por %p143, %p144
    %p146 = scmp.ne.s32.totalorder %s132, %s133
    %p147 = scmp.eq.s32.totalorder %s21, 1
    %p148 = por %p146, %p147
    %p150 = scmp.ne.s32.totalorder %s133, %s149
    %p151 = scmp.eq.s32.totalorder %s21, 0
    %p152 = por %p150, %p151
    %s153 = ssub.s32 %s15, %s22
    %p154 = scmp.eq.s32.totalorder %s153, 0
    %s156 = sadd.s32 %s155, 1
    %s157 = scalar_select %p154, %s155, %s156
    %p160 = pneg %p154
    %p161 = scmp.eq.s32.totalorder %s15, 1
    %p162 = por %p160, %p161
    %p163 = scmp.ne.s32.totalorder %s155, %s158
    %p164 = scmp.eq.s32.totalorder %s15, 0
    %p165 = por %p163, %p164
    %p166 = scmp.ne.s32.totalorder %s155, %s158
    %p167 = scmp.eq.s32.totalorder %s20, 1
    %p168 = por %p166, %p167
    %p169 = scmp.ne.s32.totalorder %s158, %s159
    %p170 = scmp.eq.s32.totalorder %s20, 0
    %p171 = por %p169, %p170
    %p172 = scmp.ne.s32.totalorder %s158, %s159
    %p173 = scmp.eq.s32.totalorder %s21, 1
    %p174 = por %p172, %p173
    %p176 = scmp.ne.s32.totalorder %s159, %s175
    %p177 = scmp.eq.s32.totalorder %s21, 0
    %p178 = por %p176, %p177
    %s180 = sadd.s32 %s179, 1
    %p183 = scmp.eq.s32.totalorder %s15, 1
    %p184 = scmp.ne.s32.totalorder %s179, %s181
    %p185 = scmp.eq.s32.totalorder %s15, 0
    %p186 = por %p184, %p185
    %p187 = scmp.ne.s32.totalorder %s179, %s181
    %p188 = scmp.eq.s32.totalorder %s20, 1
    %p189 = por %p187, %p188
    %p190 = scmp.ne.s32.totalorder %s181, %s182
    %p191 = scmp.eq.s32.totalorder %s20, 0
    %p192 = por %p190, %p191
    %p193 = scmp.ne.s32.totalorder %s181, %s182
    %p194 = scmp.eq.s32.totalorder %s21, 1
    %p195 = por %p193, %p194
    %p197 = scmp.ne.s32.totalorder %s182, %s196
    %p198 = scmp.eq.s32.totalorder %s21, 0
    %p199 = por %p197, %p198
    %s201 = sadd.s32 %s200, 1
    %p204 = scmp.eq.s32.totalorder %s15, 1
    %p205 = scmp.ne.s32.totalorder %s200, %s202
    %p206 = scmp.eq.s32.totalorder %s15, 0
    %p207 = por %p205, %p206
    %p208 = scmp.ne.s32.totalorder %s200, %s202
    %p209 = scmp.eq.s32.totalorder %s20, 1
    %p210 = por %p208, %p209
    %p211 = scmp.ne.s32.totalorder %s202, %s203
    %p212 = scmp.eq.s32.totalorder %s20, 0
    %p213 = por %p211, %p212
    %p214 = scmp.ne.s32.totalorder %s202, %s203
    %p215 = scmp.eq.s32.totalorder %s21, 1
    %p216 = por %p214, %p215
    %p218 = scmp.ne.s32.totalorder %s203, %s217
    %p219 = scmp.eq.s32.totalorder %s21, 0
    %p220 = por %p218, %p219
    %s222 = sadd.s32 %s221, 1
    %p225 = scmp.eq.s32.totalorder %s15, 1
    %p226 = scmp.ne.s32.totalorder %s221, %s223
    %p227 = scmp.eq.s32.totalorder %s15, 0
    %p228 = por %p226, %p227
    %p229 = scmp.ne.s32.totalorder %s221, %s223
    %p230 = scmp.eq.s32.totalorder %s20, 1
    %p231 = por %p229, %p230
    %p232 = scmp.ne.s32.totalorder %s223, %s224
    %p233 = scmp.eq.s32.totalorder %s20, 0
    %p234 = por %p232, %p233
    %p235 = scmp.ne.s32.totalorder %s223, %s224
    %p236 = scmp.eq.s32.totalorder %s21, 1
    %p237 = por %p235, %p236
    %p239 = scmp.ne.s32.totalorder %s224, %s238
    %p240 = scmp.eq.s32.totalorder %s21, 0
    %p241 = por %p239, %p240
    %s242 = ssub.s32 %s15, %s22
    %p243 = scmp.eq.s32.totalorder %s242, 0
    %s245 = sadd.s32 %s244, 1
    %s246 = scalar_select %p243, %s244, %s245
    %p249 = pneg %p243
    %p250 = scmp.eq.s32.totalorder %s15, 1
    %p251 = por %p249, %p250
    %p252 = scmp.ne.s32.totalorder %s244, %s247
    %p253 = scmp.eq.s32.totalorder %s15, 0
    %p254 = por %p252, %p253
    %p255 = scmp.ne.s32.totalorder %s244, %s247
    %p256 = scmp.eq.s32.totalorder %s20, 1
    %p257 = por %p255, %p256
    %p258 = scmp.ne.s32.totalorder %s247, %s248
    %p259 = scmp.eq.s32.totalorder %s20, 0
    %p260 = por %p258, %p259
    %p261 = scmp.ne.s32.totalorder %s247, %s248
    %p262 = scmp.eq.s32.totalorder %s21, 1
    %p263 = por %p261, %p262
    %p265 = scmp.ne.s32.totalorder %s248, %s264
    %p266 = scmp.eq.s32.totalorder %s21, 0
    %p267 = por %p265, %p266
    %p268 = scmp.le.s32.totalorder 1, %s15
    %p269 = scmp.lt.s32.totalorder %s15, 3
    %p270 = pnand %p268, %p269
    %p271 = pneg %p270
    // Predicated region
    $region9: #{cla_forward.7} parent=5 // pred_check
      _
    $region10: #{cla_forward.7} parent=5 // pred_check_branch
      %273 = sbr.rel (%p270) target = $region12
    $region11: #{cla_forward.7} parent=5 // pred_region
      %s274 = ssub.s32 %s15, 1
      // Predicated region
      $region13: #{cla_forward.7} parent=11 // pred_check
        %p275 = pneg %p192
      $region14: #{cla_forward.7} parent=11 // pred_check_branch
        %277 = sbr.rel (%p275) target = $region16
      $region15: #{cla_forward.7} parent=11 // pred_region
        _
      $region16: #{cla_forward.7} parent=11 // pred_fallthru
        _
      // Predicated region
      $region17: #{cla_forward.7} parent=11 // pred_check
        %p278 = pneg %p213
      $region18: #{cla_forward.7} parent=11 // pred_check_branch
        %280 = sbr.rel (%p278) target = $region20
      $region19: #{cla_forward.7} parent=11 // pred_region
        _
      $region20: #{cla_forward.7} parent=11 // pred_fallthru
        _
      // Predicated region
      $region21: #{cla_forward.7} parent=11 // pred_check
        %p281 = pneg %p234
      $region22: #{cla_forward.7} parent=11 // pred_check_branch
        %283 = sbr.rel (%p281) target = $region24
      $region23: #{cla_forward.7} parent=11 // pred_region
        _
      $region24: #{cla_forward.7} parent=11 // pred_fallthru
        _
    $region12: #{cla_forward.7} parent=5 // pred_fallthru
      _
    %p284 = scmp.lt.s32.totalorder %s15, 2
    // Predicated region
    $region25: #{cla_forward.7} parent=5 // pred_check
      %p285 = pneg %p284
    $region26: #{cla_forward.7} parent=5 // pred_check_branch
      %287 = sbr.rel (%p285) target = $region28
    $region27: #{cla_forward.7} parent=5 // pred_region
      // Predicated region
      $region29: #{cla_forward.7} parent=27 // pred_check
        %p288 = pneg %p35
      $region30: #{cla_forward.7} parent=27 // pred_check_branch
        %290 = sbr.rel (%p288) target = $region32
      $region31: #{cla_forward.7} parent=27 // pred_region
        %p291 = scmp.lt.s32.totalorder %s15, 1
        %s292 = scalar_select %p291, %s15, 1
        %s293 = smul.addr %s292, 8
        %s294 = scalar_lea.vmem %s0, %s293
      $region32: #{cla_forward.7} parent=27 // pred_fallthru
        _
      // Predicated region
      $region33: #{cla_forward.7} parent=27 // pred_check
        %p295 = pneg %p61
      $region34: #{cla_forward.7} parent=27 // pred_check_branch
        %297 = sbr.rel (%p295) target = $region36
      $region35: #{cla_forward.7} parent=27 // pred_region
        %p298 = scmp.lt.s32.totalorder %s15, 1
        %s299 = scalar_select %p298, %s15, 1
        %s300 = smul.addr %s299, 8
        %s301 = scalar_lea.vmem %s1, %s300
      $region36: #{cla_forward.7} parent=27 // pred_fallthru
        _
      // Predicated region
      $region37: #{cla_forward.7} parent=27 // pred_check
        %p302 = pneg %p87
      $region38: #{cla_forward.7} parent=27 // pred_check_branch
        %304 = sbr.rel (%p302) target = $region40
      $region39: #{cla_forward.7} parent=27 // pred_region
        %p305 = scmp.lt.s32.totalorder %s15, 1
        %s306 = scalar_select %p305, %s15, 1
        %s307 = smul.addr %s306, 2
        %s308 = smul.addr %s307, 8
        %s309 = scalar_lea.vmem %s2, %s308
      $region40: #{cla_forward.7} parent=27 // pred_fallthru
        _
      // Predicated region
      $region41: #{cla_forward.7} parent=27 // pred_check
        %p310 = pneg %p113
      $region42: #{cla_forward.7} parent=27 // pred_check_branch
        %312 = sbr.rel (%p310) target = $region44
      $region43: #{cla_forward.7} parent=27 // pred_region
        %p313 = scmp.lt.s32.totalorder %s15, 1
        %s314 = scalar_select %p313, %s15, 1
        %s315 = smul.addr %s314, 8
        %s316 = scalar_lea.vmem %s3, %s315
      $region44: #{cla_forward.7} parent=27 // pred_fallthru
        _
      // Predicated region
      $region45: #{cla_forward.7} parent=27 // pred_check
        %p317 = pneg %p139
      $region46: #{cla_forward.7} parent=27 // pred_check_branch
        %319 = sbr.rel (%p317) target = $region48
      $region47: #{cla_forward.7} parent=27 // pred_region
        %p320 = scmp.lt.s32.totalorder %s15, 1
        %s321 = scalar_select %p320, %s15, 1
        %s322 = smul.addr %s321, 8
        %s323 = scalar_lea.vmem %s4, %s322
      $region48: #{cla_forward.7} parent=27 // pred_fallthru
        _
      // Predicated region
      $region49: #{cla_forward.7} parent=27 // pred_check
        %p324 = pneg %p165
      $region50: #{cla_forward.7} parent=27 // pred_check_branch
        %326 = sbr.rel (%p324) target = $region52
      $region51: #{cla_forward.7} parent=27 // pred_region
        %p327 = scmp.lt.s32.totalorder %s15, 1
        %s328 = scalar_select %p327, %s15, 1
        %s329 = smul.addr %s328, 2
        %s330 = smul.addr %s329, 8
        %s331 = scalar_lea.vmem %s5, %s330
      $region52: #{cla_forward.7} parent=27 // pred_fallthru
        _
    $region28: #{cla_forward.7} parent=5 // pred_fallthru
      _
    %p332 = scmp.le.s32.totalorder 1, %s15
    %p333 = scmp.lt.s32.totalorder %s15, 3
    %p334 = pnand %p332, %p333
    %p335 = pneg %p334
    // Predicated region
    $region53: #{cla_forward.7} parent=5 // pred_check
      _
    $region54: #{cla_forward.7} parent=5 // pred_check_branch
      %337 = sbr.rel (%p334) target = $region56
    $region55: #{cla_forward.7} parent=5 // pred_region
      %s338 = ssub.s32 %s15, 1
      %p339 = scmp.lt.s32.totalorder %s20, 1
      %s340 = scalar_select %p339, %s20, 1
      %s341 = smul.addr %s340, 8
      %s342 = scalar_lea.vmem %s0, %s341
      %p343 = pneg %p41
      %p344 = pneg %p38
      %p345 = scmp.lt.s32.totalorder %s20, 1
      %s346 = scalar_select %p345, %s20, 1
      %s347 = smul.addr %s346, 8
      %s348 = scalar_lea.vmem %s1, %s347
      %p349 = pneg %p67
      %p350 = pneg %p64
      %p351 = scmp.lt.s32.totalorder %s20, 1
      %s352 = scalar_select %p351, %s20, 1
      %s353 = smul.addr %s352, 2
      %s354 = smul.addr %s353, 8
      %s355 = scalar_lea.vmem %s2, %s354
      %p356 = pneg %p93
      %p357 = pneg %p90
      %p358 = scmp.lt.s32.totalorder %s20, 1
      %s359 = scalar_select %p358, %s20, 1
      %s360 = smul.addr %s359, 8
      %s361 = scalar_lea.vmem %s3, %s360
      %p362 = pneg %p119
      %p363 = pneg %p116
      %p364 = scmp.lt.s32.totalorder %s20, 1
      %s365 = scalar_select %p364, %s20, 1
      %s366 = smul.addr %s365, 8
      %s367 = scalar_lea.vmem %s4, %s366
      %p368 = pneg %p145
      %p369 = pneg %p142
      %p370 = scmp.lt.s32.totalorder %s20, 1
      %s371 = scalar_select %p370, %s20, 1
      %s372 = smul.addr %s371, 2
      %s373 = smul.addr %s372, 8
      %s374 = scalar_lea.vmem %s5, %s373
      %p375 = pneg %p171
      %p376 = pneg %p168
      %p377 = pneg %p192
      %p378 = pneg %p189
      %p379 = pneg %p213
      %p380 = pneg %p210
      %p381 = pneg %p234
      %p382 = pneg %p231
      %p383 = pneg %p260
      %p384 = pneg %p257
      %p385 = scmp.lt.s32.totalorder %s20, 1
      %s386 = scalar_select %p385, %s20, 1
      %s387 = smul.addr %s386, 2
      %s388 = smul.addr %s387, 8
      %s389 = scalar_lea.vmem %s9, %s388
      %p390 = scmp.lt.s32.totalorder %s20, 1
      %s391 = scalar_select %p390, %s20, 1
      %s392 = smul.addr %s391, 8
      %s393 = scalar_lea.vmem %s0, %s392
      %p394 = scmp.lt.s32.totalorder %s20, 1
      %s395 = scalar_select %p394, %s20, 1
      %s396 = smul.addr %s395, 8
      %s397 = scalar_lea.vmem %s1, %s396
      %p398 = scmp.lt.s32.totalorder %s20, 1
      %s399 = scalar_select %p398, %s20, 1
      %s400 = smul.addr %s399, 2
      %s401 = smul.addr %s400, 8
      %s402 = scalar_lea.vmem %s2, %s401
      %p403 = scmp.lt.s32.totalorder %s20, 1
      %s404 = scalar_select %p403, %s20, 1
      %s405 = smul.addr %s404, 8
      %s406 = scalar_lea.vmem %s3, %s405
      %p407 = scmp.lt.s32.totalorder %s20, 1
      %s408 = scalar_select %p407, %s20, 1
      %s409 = smul.addr %s408, 8
      %s410 = scalar_lea.vmem %s4, %s409
      %p411 = scmp.lt.s32.totalorder %s20, 1
      %s412 = scalar_select %p411, %s20, 1
      %s413 = smul.addr %s412, 2
      %s414 = smul.addr %s413, 8
      %s415 = scalar_lea.vmem %s5, %s414
      %p416 = scmp.lt.s32.totalorder %s20, 1
      %s417 = scalar_select %p416, %s20, 1
      %s418 = smul.addr %s417, 2
      %s419 = smul.addr %s418, 8
      %s420 = scalar_lea.vmem %s9, %s419
      %v421 = vld [vmem:[%s393] sm:$0xff]
      %v422 = vld [vmem:[%s397] sm:$0xff]
      %v423 = vld [vmem:[%s402] sm:$0xff]
      %v424 = vld [vmem:[%s402 + $0x8] sm:$0xff]
      %v425 = vld [vmem:[%s415] sm:$0xff]
      %v426 = vld [vmem:[%s415 + $0x8] sm:$0xff]
      %v427 = vld [vmem:[%s6] sm:$0xff]
      %v428 = vld [vmem:[%s6 + $0x8] sm:$0xff]
      %v429 = vld [vmem:[%s7] sm:$0x1]
      %v430 = vlaneseq
      %v431 = vshrl.u32 %v430, 7
      %v432 = vsub.s32 0, %v431
      %v433 = vrot.slane %v429, %v432
      %vm434 = vcmask 130048
      %v436 = vsel %vm434, %v421, 0
      %438 = vmatprep.subr.mxu0 0.0
      %439 = vmatpush1.msra.mxu0 %v427
      %440 = vmatprep.subr.mxu0 0.0
      %441 = vmatpush1.msra.mxu0 %v428
      %442 = vmatprep.subr.mxu0 0.0
      %443 = vmatpush1.msra.mxu0 0.0
      %444 = vmatprep.subr.mxu0 0.0
      %445 = vmatpush1.msra.mxu0 0.0
      %446 = vmatprep.subr.mxu0 0.0
      %447 = vmatpush1.msra.mxu0 0.0
      %448 = vmatprep.subr.mxu0 0.0
      %449 = vmatpush1.msra.mxu0 0.0
      %450 = vmatprep.subr.mxu0 0.0
      %451 = vmatpush1.msra.mxu0 0.0
      %452 = vmatprep.subr.mxu0 0.0
      %453 = vmatpush1.msra.mxu0 0.0
      %454 = vmatprep.subr.mxu0 0.0
      %455 = vmatpush1.msra.mxu0 0.0
      %456 = vmatprep.subr.mxu0 0.0
      %457 = vmatpush1.msra.mxu0 0.0
      %458 = vmatprep.subr.mxu0 0.0
      %459 = vmatpush1.msra.mxu0 0.0
      %460 = vmatprep.subr.mxu0 0.0
      %461 = vmatpush1.msra.mxu0 0.0
      %462 = vmatprep.subr.mxu0 0.0
      %463 = vmatpush1.msra.mxu0 0.0
      %464 = vmatprep.subr.mxu0 0.0
      %465 = vmatpush1.msra.mxu0 0.0
      %466 = vmatprep.subr.mxu0 0.0
      %467 = vmatpush1.msra.mxu0 0.0
      %468 = vmatprep.subr.mxu0 0.0
      %469 = vmatpush1.msra.mxu0 0.0
      %470 = vmatprep.subr.mxu0 0.0
      %471 = vmatpush1.msra.mxu0 0.0
      %472 = vmatprep.subr.mxu0 0.0
      %473 = vmatpush1.msra.mxu0 0.0
      %474 = vmatprep.subr.mxu0 0.0
      %475 = vmatpush1.msra.mxu0 0.0
      %476 = vmatprep.subr.mxu0 0.0
      %477 = vmatpush1.msra.mxu0 0.0
      %478 = vmatprep.subr.mxu0 0.0
      %479 = vmatpush1.msra.mxu0 0.0
      %480 = vmatprep.subr.mxu0 0.0
      %481 = vmatpush1.msra.mxu0 0.0
      %482 = vmatprep.subr.mxu0 0.0
      %483 = vmatpush1.msra.mxu0 0.0
      %484 = vmatprep.subr.mxu0 0.0
      %485 = vmatpush1.msra.mxu0 0.0
      %486 = vmatprep.subr.mxu0 0.0
      %487 = vmatpush1.msra.mxu0 0.0
      %488 = vmatprep.subr.mxu0 0.0
      %489 = vmatpush1.msra.mxu0 0.0
      %490 = vmatprep.subr.mxu0 0.0
      %491 = vmatpush1.msra.mxu0 0.0
      %492 = vmatprep.subr.mxu0 0.0
      %493 = vmatpush1.msra.mxu0 0.0
      %494 = vmatprep.subr.mxu0 0.0
      %495 = vmatpush1.msra.mxu0 0.0
      %496 = vmatprep.subr.mxu0 0.0
      %497 = vmatpush1.msra.mxu0 0.0
      %498 = vmatprep.subr.mxu0 0.0
      %499 = vmatpush1.msra.mxu0 0.0
      %500 = vmatprep.subr.mxu0 0.0
      %501 = vmatpush1.msra.mxu0 0.0
      %502 = vmatprep.mubr.f32.mxu0 0.0
      %503 = vmatmul.mubr.f32.gmra.mrb[0].mxu0 %v436
      %v504 = vpop.f32.mrb[0].mxu0
      %v505 = vadd.f32 %v433, %v504
      %v506 = vpop.f32.mrb[0].mxu0
      %507 = vdwg.mxu0
      %s508 = scalar_lea.vmem %s6, 16
      %v509 = vld [vmem:[%s508] sm:$0xff]
      %v510 = vld [vmem:[%s508 + $0x8] sm:$0xff]
      %v511 = vld [vmem:[%s7 + $0x1] sm:$0x1]
      %v512 = vlaneseq
      %v513 = vshrl.u32 %v512, 7
      %v514 = vsub.s32 0, %v513
      %v515 = vrot.slane %v511, %v514
      %v517 = vsel %vm434, %v422, 0
      %519 = vmatprep.subr.mxu0 0.0
      %520 = vmatpush1.msra.mxu0 %v509
      %521 = vmatprep.subr.mxu0 0.0
      %522 = vmatpush1.msra.mxu0 %v510
      %523 = vmatprep.subr.mxu0 0.0
      %524 = vmatpush1.msra.mxu0 0.0
      %525 = vmatprep.subr.mxu0 0.0
      %526 = vmatpush1.msra.mxu0 0.0
      %527 = vmatprep.subr.mxu0 0.0
      %528 = vmatpush1.msra.mxu0 0.0
      %529 = vmatprep.subr.mxu0 0.0
      %530 = vmatpush1.msra.mxu0 0.0
      %531 = vmatprep.subr.mxu0 0.0
      %532 = vmatpush1.msra.mxu0 0.0
      %533 = vmatprep.subr.mxu0 0.0
      %534 = vmatpush1.msra.mxu0 0.0
      %535 = vmatprep.subr.mxu0 0.0
      %536 = vmatpush1.msra.mxu0 0.0
      %537 = vmatprep.subr.mxu0 0.0
      %538 = vmatpush1.msra.mxu0 0.0
      %539 = vmatprep.subr.mxu0 0.0
      %540 = vmatpush1.msra.mxu0 0.0
      %541 = vmatprep.subr.mxu0 0.0
      %542 = vmatpush1.msra.mxu0 0.0
      %543 = vmatprep.subr.mxu0 0.0
      %544 = vmatpush1.msra.mxu0 0.0
      %545 = vmatprep.subr.mxu0 0.0
      %546 = vmatpush1.msra.mxu0 0.0
      %547 = vmatprep.subr.mxu0 0.0
      %548 = vmatpush1.msra.mxu0 0.0
      %549 = vmatprep.subr.mxu0 0.0
      %550 = vmatpush1.msra.mxu0 0.0
      %551 = vmatprep.subr.mxu0 0.0
      %552 = vmatpush1.msra.mxu0 0.0
      %553 = vmatprep.subr.mxu0 0.0
      %554 = vmatpush1.msra.mxu0 0.0
      %555 = vmatprep.subr.mxu0 0.0
      %556 = vmatpush1.msra.mxu0 0.0
      %557 = vmatprep.subr.mxu0 0.0
      %558 = vmatpush1.msra.mxu0 0.0
      %559 = vmatprep.subr.mxu0 0.0
      %560 = vmatpush1.msra.mxu0 0.0
      %561 = vmatprep.subr.mxu0 0.0
      %562 = vmatpush1.msra.mxu0 0.0
      %563 = vmatprep.subr.mxu0 0.0
      %564 = vmatpush1.msra.mxu0 0.0
      %565 = vmatprep.subr.mxu0 0.0
      %566 = vmatpush1.msra.mxu0 0.0
      %567 = vmatprep.subr.mxu0 0.0
      %568 = vmatpush1.msra.mxu0 0.0
      %569 = vmatprep.subr.mxu0 0.0
      %570 = vmatpush1.msra.mxu0 0.0
      %571 = vmatprep.subr.mxu0 0.0
      %572 = vmatpush1.msra.mxu0 0.0
      %573 = vmatprep.subr.mxu0 0.0
      %574 = vmatpush1.msra.mxu0 0.0
      %575 = vmatprep.subr.mxu0 0.0
      %576 = vmatpush1.msra.mxu0 0.0
      %577 = vmatprep.subr.mxu0 0.0
      %578 = vmatpush1.msra.mxu0 0.0
      %579 = vmatprep.subr.mxu0 0.0
      %580 = vmatpush1.msra.mxu0 0.0
      %581 = vmatprep.subr.mxu0 0.0
      %582 = vmatpush1.msra.mxu0 0.0
      %583 = vmatprep.mubr.f32.mxu0 0.0
      %584 = vmatmul.mubr.f32.gmra.mrb[0].mxu0 %v517
      %v585 = vpop.f32.mrb[0].mxu0
      %v586 = vadd.f32 %v515, %v585
      %v587 = vpop.f32.mrb[0].mxu0
      %588 = vdwg.mxu0
      %s589 = scalar_lea.vmem %s6, 32
      %v590 = vld [vmem:[%s589] sm:$0xff]
      %v591 = vld [vmem:[%s589 + $0x8] sm:$0xff]
      %v592 = vld [vmem:[%s7 + $0x2] sm:$0x1]
      %v593 = vlaneseq
      %v594 = vshrl.u32 %v593, 7
      %v595 = vsub.s32 0, %v594
      %v596 = vrot.slane %v592, %v595
      %v598 = vsel %vm434, %v423, 0
      %v601 = vsel %vm434, %v424, 0
      %603 = vmatprep.subr.mxu0 0.0
      %604 = vmatpush1.msra.mxu0 %v590
      %605 = vmatprep.subr.mxu0 0.0
      %606 = vmatpush1.msra.mxu0 %v591
      %607 = vmatprep.subr.mxu0 0.0
      %608 = vmatpush1.msra.mxu0 0.0
      %609 = vmatprep.subr.mxu0 0.0
      %610 = vmatpush1.msra.mxu0 0.0
      %611 = vmatprep.subr.mxu0 0.0
      %612 = vmatpush1.msra.mxu0 0.0
      %613 = vmatprep.subr.mxu0 0.0
      %614 = vmatpush1.msra.mxu0 0.0
      %615 = vmatprep.subr.mxu0 0.0
      %616 = vmatpush1.msra.mxu0 0.0
      %617 = vmatprep.subr.mxu0 0.0
      %618 = vmatpush1.msra.mxu0 0.0
      %619 = vmatprep.subr.mxu0 0.0
      %620 = vmatpush1.msra.mxu0 0.0
      %621 = vmatprep.subr.mxu0 0.0
      %622 = vmatpush1.msra.mxu0 0.0
      %623 = vmatprep.subr.mxu0 0.0
      %624 = vmatpush1.msra.mxu0 0.0
      %625 = vmatprep.subr.mxu0 0.0
      %626 = vmatpush1.msra.mxu0 0.0
      %627 = vmatprep.subr.mxu0 0.0
      %628 = vmatpush1.msra.mxu0 0.0
      %629 = vmatprep.subr.mxu0 0.0
      %630 = vmatpush1.msra.mxu0 0.0
      %631 = vmatprep.subr.mxu0 0.0
      %632 = vmatpush1.msra.mxu0 0.0
      %633 = vmatprep.subr.mxu0 0.0
      %634 = vmatpush1.msra.mxu0 0.0
      %635 = vmatprep.subr.mxu0 0.0
      %636 = vmatpush1.msra.mxu0 0.0
      %637 = vmatprep.subr.mxu0 0.0
      %638 = vmatpush1.msra.mxu0 0.0
      %639 = vmatprep.subr.mxu0 0.0
      %640 = vmatpush1.msra.mxu0 0.0
      %641 = vmatprep.subr.mxu0 0.0
      %642 = vmatpush1.msra.mxu0 0.0
      %643 = vmatprep.subr.mxu0 0.0
      %644 = vmatpush1.msra.mxu0 0.0
      %645 = vmatprep.subr.mxu0 0.0
      %646 = vmatpush1.msra.mxu0 0.0
      %647 = vmatprep.subr.mxu0 0.0
      %648 = vmatpush1.msra.mxu0 0.0
      %649 = vmatprep.subr.mxu0 0.0
      %650 = vmatpush1.msra.mxu0 0.0
      %651 = vmatprep.subr.mxu0 0.0
      %652 = vmatpush1.msra.mxu0 0.0
      %653 = vmatprep.subr.mxu0 0.0
      %654 = vmatpush1.msra.mxu0 0.0
      %655 = vmatprep.subr.mxu0 0.0
      %656 = vmatpush1.msra.mxu0 0.0
      %657 = vmatprep.subr.mxu0 0.0
      %658 = vmatpush1.msra.mxu0 0.0
      %659 = vmatprep.subr.mxu0 0.0
      %660 = vmatpush1.msra.mxu0 0.0
      %661 = vmatprep.subr.mxu0 0.0
      %662 = vmatpush1.msra.mxu0 0.0
      %663 = vmatprep.subr.mxu0 0.0
      %664 = vmatpush1.msra.mxu0 0.0
      %665 = vmatprep.subr.mxu0 0.0
      %666 = vmatpush1.msra.mxu0 0.0
      %667 = vmatprep.mubr.f32.mxu0 0.0
      %668 = vmatmul.mubr.f32.gmra.mrb[0].mxu0 %v598
      %v669 = vpop.f32.mrb[0].mxu0
      %v670 = vadd.f32 %v596, %v669
      %v671 = vpop.f32.mrb[0].mxu0
      %672 = vmatprep.mubr.f32.mxu0 0.0
      %673 = vmatmul.mubr.f32.gmra.mrb[0].mxu0 %v601
      %v674 = vpop.f32.mrb[0].mxu0
      %v675 = vadd.f32 %v596, %v674
      %v676 = vpop.f32.mrb[0].mxu0
      %677 = vdwg.mxu0
      %s678 = scalar_lea.vmem %s6, 48
      %v679 = vld [vmem:[%s678] sm:$0xff]
      %v680 = vld [vmem:[%s678 + $0x8] sm:$0xff]
      %v681 = vld [vmem:[%s7 + $0x3] sm:$0x1]
      %v682 = vlaneseq
      %v683 = vshrl.u32 %v682, 7
      %v684 = vsub.s32 0, %v683
      %v685 = vrot.slane %v681, %v684
      %686 = vmatprep.subr.mxu0 0.0
      %687 = vmatpush1.msra.mxu0 %v679
      %688 = vmatprep.subr.mxu0 0.0
      %689 = vmatpush1.msra.mxu0 %v680
      %690 = vmatprep.subr.mxu0 0.0
      %691 = vmatpush1.msra.mxu0 0.0
      %692 = vmatprep.subr.mxu0 0.0
      %693 = vmatpush1.msra.mxu0 0.0
      %694 = vmatprep.subr.mxu0 0.0
      %695 = vmatpush1.msra.mxu0 0.0
      %696 = vmatprep.subr.mxu0 0.0
      %697 = vmatpush1.msra.mxu0 0.0
      %698 = vmatprep.subr.mxu0 0.0
      %699 = vmatpush1.msra.mxu0 0.0
      %700 = vmatprep.subr.mxu0 0.0
      %701 = vmatpush1.msra.mxu0 0.0
      %702 = vmatprep.subr.mxu0 0.0
      %703 = vmatpush1.msra.mxu0 0.0
      %704 = vmatprep.subr.mxu0 0.0
      %705 = vmatpush1.msra.mxu0 0.0
      %706 = vmatprep.subr.mxu0 0.0
      %707 = vmatpush1.msra.mxu0 0.0
      %708 = vmatprep.subr.mxu0 0.0
      %709 = vmatpush1.msra.mxu0 0.0
      %710 = vmatprep.subr.mxu0 0.0
      %711 = vmatpush1.msra.mxu0 0.0
      %712 = vmatprep.subr.mxu0 0.0
      %713 = vmatpush1.msra.mxu0 0.0
      %714 = vmatprep.subr.mxu0 0.0
      %715 = vmatpush1.msra.mxu0 0.0
      %716 = vmatprep.subr.mxu0 0.0
      %717 = vmatpush1.msra.mxu0 0.0
      %718 = vmatprep.subr.mxu0 0.0
      %719 = vmatpush1.msra.mxu0 0.0
      %720 = vmatprep.subr.mxu0 0.0
      %721 = vmatpush1.msra.mxu0 0.0
      %722 = vmatprep.subr.mxu0 0.0
      %723 = vmatpush1.msra.mxu0 0.0
      %724 = vmatprep.subr.mxu0 0.0
      %725 = vmatpush1.msra.mxu0 0.0
      %726 = vmatprep.subr.mxu0 0.0
      %727 = vmatpush1.msra.mxu0 0.0
      %728 = vmatprep.subr.mxu0 0.0
      %729 = vmatpush1.msra.mxu0 0.0
      %730 = vmatprep.subr.mxu0 0.0
      %731 = vmatpush1.msra.mxu0 0.0
      %732 = vmatprep.subr.mxu0 0.0
      %733 = vmatpush1.msra.mxu0 0.0
      %734 = vmatprep.subr.mxu0 0.0
      %735 = vmatpush1.msra.mxu0 0.0
      %736 = vmatprep.subr.mxu0 0.0
      %737 = vmatpush1.msra.mxu0 0.0
      %738 = vmatprep.subr.mxu0 0.0
      %739 = vmatpush1.msra.mxu0 0.0
      %740 = vmatprep.subr.mxu0 0.0
      %741 = vmatpush1.msra.mxu0 0.0
      %742 = vmatprep.subr.mxu0 0.0
      %743 = vmatpush1.msra.mxu0 0.0
      %744 = vmatprep.subr.mxu0 0.0
      %745 = vmatpush1.msra.mxu0 0.0
      %746 = vmatprep.subr.mxu0 0.0
      %747 = vmatpush1.msra.mxu0 0.0
      %748 = vmatprep.subr.mxu0 0.0
      %749 = vmatpush1.msra.mxu0 0.0
      %750 = vmatprep.mubr.f32.mxu0 0.0
      %751 = vmatmul.mubr.f32.gmra.mrb[0].mxu0 %v598
      %v752 = vpop.f32.mrb[0].mxu0
      %v753 = vadd.f32 %v685, %v752
      %v754 = vpop.f32.mrb[0].mxu0
      %755 = vmatprep.mubr.f32.mxu0 0.0
      %756 = vmatmul.mubr.f32.gmra.mrb[0].mxu0 %v601
      %v757 = vpop.f32.mrb[0].mxu0
      %v758 = vadd.f32 %v685, %v757
      %v759 = vpop.f32.mrb[0].mxu0
      %760 = vdwg.mxu0
      %v761 = vld [vmem:[%s406] sm:$0xff]
      %v763 = vsel %vm434, %v505, 0
      %v766 = vsel %vm434, %v753, 0
      %v769 = vsel %vm434, %v758, 0
      %771 = vmatprep.subr.mxu0 0.0
      %772 = vmatpush1.xpose.msra.mxu0 %v766
      %773 = vmatprep.subr.mxu0 0.0
      %774 = vmatpush1.xpose.msra.mxu0 %v769
      %775 = vmatprep.subr.mxu0 0.0
      %776 = vmatpush1.xpose.msra.mxu0 0.0
      %777 = vmatprep.subr.mxu0 0.0
      %778 = vmatpush1.xpose.msra.mxu0 0.0
      %779 = vmatprep.subr.mxu0 0.0
      %780 = vmatpush1.xpose.msra.mxu0 0.0
      %781 = vmatprep.subr.mxu0 0.0
      %782 = vmatpush1.xpose.msra.mxu0 0.0
      %783 = vmatprep.subr.mxu0 0.0
      %784 = vmatpush1.xpose.msra.mxu0 0.0
      %785 = vmatprep.subr.mxu0 0.0
      %786 = vmatpush1.xpose.msra.mxu0 0.0
      %787 = vmatprep.subr.mxu0 0.0
      %788 = vmatpush1.xpose.msra.mxu0 0.0
      %789 = vmatprep.subr.mxu0 0.0
      %790 = vmatpush1.xpose.msra.mxu0 0.0
      %791 = vmatprep.subr.mxu0 0.0
      %792 = vmatpush1.xpose.msra.mxu0 0.0
      %793 = vmatprep.subr.mxu0 0.0
      %794 = vmatpush1.xpose.msra.mxu0 0.0
      %795 = vmatprep.subr.mxu0 0.0
      %796 = vmatpush1.xpose.msra.mxu0 0.0
      %797 = vmatprep.subr.mxu0 0.0
      %798 = vmatpush1.xpose.msra.mxu0 0.0
      %799 = vmatprep.subr.mxu0 0.0
      %800 = vmatpush1.xpose.msra.mxu0 0.0
      %801 = vmatprep.subr.mxu0 0.0
      %802 = vmatpush1.xpose.msra.mxu0 0.0
      %803 = vmatprep.subr.mxu0 0.0
      %804 = vmatpush1.xpose.msra.mxu0 0.0
      %805 = vmatprep.subr.mxu0 0.0
      %806 = vmatpush1.xpose.msra.mxu0 0.0
      %807 = vmatprep.subr.mxu0 0.0
      %808 = vmatpush1.xpose.msra.mxu0 0.0
      %809 = vmatprep.subr.mxu0 0.0
      %810 = vmatpush1.xpose.msra.mxu0 0.0
      %811 = vmatprep.subr.mxu0 0.0
      %812 = vmatpush1.xpose.msra.mxu0 0.0
      %813 = vmatprep.subr.mxu0 0.0
      %814 = vmatpush1.xpose.msra.mxu0 0.0
      %815 = vmatprep.subr.mxu0 0.0
      %816 = vmatpush1.xpose.msra.mxu0 0.0
      %817 = vmatprep.subr.mxu0 0.0
      %818 = vmatpush1.xpose.msra.mxu0 0.0
      %819 = vmatprep.subr.mxu0 0.0
      %820 = vmatpush1.xpose.msra.mxu0 0.0
      %821 = vmatprep.subr.mxu0 0.0
      %822 = vmatpush1.xpose.msra.mxu0 0.0
      %823 = vmatprep.subr.mxu0 0.0
      %824 = vmatpush1.xpose.msra.mxu0 0.0
      %825 = vmatprep.subr.mxu0 0.0
      %826 = vmatpush1.xpose.msra.mxu0 0.0
      %827 = vmatprep.subr.mxu0 0.0
      %828 = vmatpush1.xpose.msra.mxu0 0.0
      %829 = vmatprep.subr.mxu0 0.0
      %830 = vmatpush1.xpose.msra.mxu0 0.0
      %831 = vmatprep.subr.mxu0 0.0
      %832 = vmatpush1.xpose.msra.mxu0 0.0
      %833 = vmatprep.subr.mxu0 0.0
      %834 = vmatpush1.xpose.msra.mxu0 0.0
      %835 = vmatprep.mubr.f32.mxu0 0.0
      %836 = vmatmul.mubr.f32.gmra.mrb[0].mxu0 %v763
      %v837 = vpop.f32.mrb[0].mxu0
      %v838 = vadd.f32 %v761, %v837
      %v839 = vpop.f32.mrb[0].mxu0
      %840 = vdwg.mxu0
      %v841 = vmul.f32 %v838, 0.25
      %v842 = vsel %vm434, %v841, -inf
      %843 = vmax.xlane.f32.xlu0 %v842
      %v844 = vpop.xlane.xlu0 %843
      %v845 = vsub.f32 %v841, %v844
      %v846 = vmul.f32 %v845, 1.442695
      %v847 = vpow.pop %v846
      %v848 = vsel %vm434, %v847, 0.0
      %849 = vadd.xlane.f32.xlu0 %v848
      %v850 = vpop.xlane.xlu0 %849
      %v851 = vrcp.pop %v850
      %v852 = vmul.f32 %v847, %v851
      %v854 = vsel %vm434, %v852, 0
      %856 = vmatprep.subr.mxu0 0.0
      %857 = vmatpush1.msra.mxu0 %v425
      %858 = vmatprep.subr.mxu0 0.0
      %859 = vmatpush1.msra.mxu0 %v426
      %860 = vmatprep.subr.mxu0 0.0
      %861 = vmatpush1.msra.mxu0 0.0
      %862 = vmatprep.subr.mxu0 0.0
      %863 = vmatpush1.msra.mxu0 0.0
      %864 = vmatprep.subr.mxu0 0.0
      %865 = vmatpush1.msra.mxu0 0.0
      %866 = vmatprep.subr.mxu0 0.0
      %867 = vmatpush1.msra.mxu0 0.0
      %868 = vmatprep.subr.mxu0 0.0
      %869 = vmatpush1.msra.mxu0 0.0
      %870 = vmatprep.subr.mxu0 0.0
      %871 = vmatpush1.msra.mxu0 0.0
      %872 = vmatprep.subr.mxu0 0.0
      %873 = vmatpush1.msra.mxu0 0.0
      %874 = vmatprep.subr.mxu0 0.0
      %875 = vmatpush1.msra.mxu0 0.0
      %876 = vmatprep.subr.mxu0 0.0
      %877 = vmatpush1.msra.mxu0 0.0
      %878 = vmatprep.subr.mxu0 0.0
      %879 = vmatpush1.msra.mxu0 0.0
      %880 = vmatprep.subr.mxu0 0.0
      %881 = vmatpush1.msra.mxu0 0.0
      %882 = vmatprep.subr.mxu0 0.0
      %883 = vmatpush1.msra.mxu0 0.0
      %884 = vmatprep.subr.mxu0 0.0
      %885 = vmatpush1.msra.mxu0 0.0
      %886 = vmatprep.subr.mxu0 0.0
      %887 = vmatpush1.msra.mxu0 0.0
      %888 = vmatprep.subr.mxu0 0.0
      %889 = vmatpush1.msra.mxu0 0.0
      %890 = vmatprep.subr.mxu0 0.0
      %891 = vmatpush1.msra.mxu0 0.0
      %892 = vmatprep.subr.mxu0 0.0
      %893 = vmatpush1.msra.mxu0 0.0
      %894 = vmatprep.subr.mxu0 0.0
      %895 = vmatpush1.msra.mxu0 0.0
      %896 = vmatprep.subr.mxu0 0.0
      %897 = vmatpush1.msra.mxu0 0.0
      %898 = vmatprep.subr.mxu0 0.0
      %899 = vmatpush1.msra.mxu0 0.0
      %900 = vmatprep.subr.mxu0 0.0
      %901 = vmatpush1.msra.mxu0 0.0
      %902 = vmatprep.subr.mxu0 0.0
      %903 = vmatpush1.msra.mxu0 0.0
      %904 = vmatprep.subr.mxu0 0.0
      %905 = vmatpush1.msra.mxu0 0.0
      %906 = vmatprep.subr.mxu0 0.0
      %907 = vmatpush1.msra.mxu0 0.0
      %908 = vmatprep.subr.mxu0 0.0
      %909 = vmatpush1.msra.mxu0 0.0
      %910 = vmatprep.subr.mxu0 0.0
      %911 = vmatpush1.msra.mxu0 0.0
      %912 = vmatprep.subr.mxu0 0.0
      %913 = vmatpush1.msra.mxu0 0.0
      %914 = vmatprep.subr.mxu0 0.0
      %915 = vmatpush1.msra.mxu0 0.0
      %916 = vmatprep.subr.mxu0 0.0
      %917 = vmatpush1.msra.mxu0 0.0
      %918 = vmatprep.subr.mxu0 0.0
      %919 = vmatpush1.msra.mxu0 0.0
      %920 = vmatprep.mubr.f32.mxu0 0.0
      %921 = vmatmul.mubr.f32.gmra.mrb[0].mxu0 %v854
      %v922 = vpop.f32.mrb[0].mxu0
      %v923 = vadd.f32 0.0, %v922
      %v924 = vpop.f32.mrb[0].mxu0
      %925 = vdwg.mxu0
      %v926 = vld [vmem:[%s410] sm:$0xff]
      %v928 = vsel %vm434, %v586, 0
      %v931 = vsel %vm434, %v670, 0
      %v934 = vsel %vm434, %v675, 0
      %936 = vmatprep.subr.mxu0 0.0
      %937 = vmatpush1.xpose.msra.mxu0 %v931
      %938 = vmatprep.subr.mxu0 0.0
      %939 = vmatpush1.xpose.msra.mxu0 %v934
      %940 = vmatprep.subr.mxu0 0.0
      %941 = vmatpush1.xpose.msra.mxu0 0.0
      %942 = vmatprep.subr.mxu0 0.0
      %943 = vmatpush1.xpose.msra.mxu0 0.0
      %944 = vmatprep.subr.mxu0 0.0
      %945 = vmatpush1.xpose.msra.mxu0 0.0
      %946 = vmatprep.subr.mxu0 0.0
      %947 = vmatpush1.xpose.msra.mxu0 0.0
      %948 = vmatprep.subr.mxu0 0.0
      %949 = vmatpush1.xpose.msra.mxu0 0.0
      %950 = vmatprep.subr.mxu0 0.0
      %951 = vmatpush1.xpose.msra.mxu0 0.0
      %952 = vmatprep.subr.mxu0 0.0
      %953 = vmatpush1.xpose.msra.mxu0 0.0
      %954 = vmatprep.subr.mxu0 0.0
      %955 = vmatpush1.xpose.msra.mxu0 0.0
      %956 = vmatprep.subr.mxu0 0.0
      %957 = vmatpush1.xpose.msra.mxu0 0.0
      %958 = vmatprep.subr.mxu0 0.0
      %959 = vmatpush1.xpose.msra.mxu0 0.0
      %960 = vmatprep.subr.mxu0 0.0
      %961 = vmatpush1.xpose.msra.mxu0 0.0
      %962 = vmatprep.subr.mxu0 0.0
      %963 = vmatpush1.xpose.msra.mxu0 0.0
      %964 = vmatprep.subr.mxu0 0.0
      %965 = vmatpush1.xpose.msra.mxu0 0.0
      %966 = vmatprep.subr.mxu0 0.0
      %967 = vmatpush1.xpose.msra.mxu0 0.0
      %968 = vmatprep.subr.mxu0 0.0
      %969 = vmatpush1.xpose.msra.mxu0 0.0
      %970 = vmatprep.subr.mxu0 0.0
      %971 = vmatpush1.xpose.msra.mxu0 0.0
      %972 = vmatprep.subr.mxu0 0.0
      %973 = vmatpush1.xpose.msra.mxu0 0.0
      %974 = vmatprep.subr.mxu0 0.0
      %975 = vmatpush1.xpose.msra.mxu0 0.0
      %976 = vmatprep.subr.mxu0 0.0
      %977 = vmatpush1.xpose.msra.mxu0 0.0
      %978 = vmatprep.subr.mxu0 0.0
      %979 = vmatpush1.xpose.msra.mxu0 0.0
      %980 = vmatprep.subr.mxu0 0.0
      %981 = vmatpush1.xpose.msra.mxu0 0.0
      %982 = vmatprep.subr.mxu0 0.0
      %983 = vmatpush1.xpose.msra.mxu0 0.0
      %984 = vmatprep.subr.mxu0 0.0
      %985 = vmatpush1.xpose.msra.mxu0 0.0
      %986 = vmatprep.subr.mxu0 0.0
      %987 = vmatpush1.xpose.msra.mxu0 0.0
      %988 = vmatprep.subr.mxu0 0.0
      %989 = vmatpush1.xpose.msra.mxu0 0.0
      %990 = vmatprep.subr.mxu0 0.0
      %991 = vmatpush1.xpose.msra.mxu0 0.0
      %992 = vmatprep.subr.mxu0 0.0
      %993 = vmatpush1.xpose.msra.mxu0 0.0
      %994 = vmatprep.subr.mxu0 0.0
      %995 = vmatpush1.xpose.msra.mxu0 0.0
      %996 = vmatprep.subr.mxu0 0.0
      %997 = vmatpush1.xpose.msra.mxu0 0.0
      %998 = vmatprep.subr.mxu0 0.0
      %999 = vmatpush1.xpose.msra.mxu0 0.0
      %1000 = vmatprep.mubr.f32.mxu0 0.0
      %1001 = vmatmul.mubr.f32.gmra.mrb[0].mxu0 %v928
      %v1002 = vpop.f32.mrb[0].mxu0
      %v1003 = vadd.f32 %v926, %v1002
      %v1004 = vpop.f32.mrb[0].mxu0
      %1005 = vdwg.mxu0
      %v1006 = vmul.f32 %v1003, 0.25
      %v1007 = vsel %vm434, %v1006, -inf
      %1008 = vmax.xlane.f32.xlu0 %v1007
      %v1009 = vpop.xlane.xlu0 %1008
      %v1010 = vsub.f32 %v1006, %v1009
      %v1011 = vmul.f32 %v1010, 1.442695
      %v1012 = vpow.pop %v1011
      %v1013 = vsel %vm434, %v1012, 0.0
      %1014 = vadd.xlane.f32.xlu0 %v1013
      %v1015 = vpop.xlane.xlu0 %1014
      %v1016 = vrcp.pop %v1015
      %v1017 = vmul.f32 %v1012, %v1016
      %v1019 = vsel %vm434, %v1017, 0
      %1021 = vmatprep.subr.mxu0 0.0
      %1022 = vmatpush1.msra.mxu0 %v425
      %1023 = vmatprep.subr.mxu0 0.0
      %1024 = vmatpush1.msra.mxu0 %v426
      %1025 = vmatprep.subr.mxu0 0.0
      %1026 = vmatpush1.msra.mxu0 0.0
      %1027 = vmatprep.subr.mxu0 0.0
      %1028 = vmatpush1.msra.mxu0 0.0
      %1029 = vmatprep.subr.mxu0 0.0
      %1030 = vmatpush1.msra.mxu0 0.0
      %1031 = vmatprep.subr.mxu0 0.0
      %1032 = vmatpush1.msra.mxu0 0.0
      %1033 = vmatprep.subr.mxu0 0.0
      %1034 = vmatpush1.msra.mxu0 0.0
      %1035 = vmatprep.subr.mxu0 0.0
      %1036 = vmatpush1.msra.mxu0 0.0
      %1037 = vmatprep.subr.mxu0 0.0
      %1038 = vmatpush1.msra.mxu0 0.0
      %1039 = vmatprep.subr.mxu0 0.0
      %1040 = vmatpush1.msra.mxu0 0.0
      %1041 = vmatprep.subr.mxu0 0.0
      %1042 = vmatpush1.msra.mxu0 0.0
      %1043 = vmatprep.subr.mxu0 0.0
      %1044 = vmatpush1.msra.mxu0 0.0
      %1045 = vmatprep.subr.mxu0 0.0
      %1046 = vmatpush1.msra.mxu0 0.0
      %1047 = vmatprep.subr.mxu0 0.0
      %1048 = vmatpush1.msra.mxu0 0.0
      %1049 = vmatprep.subr.mxu0 0.0
      %1050 = vmatpush1.msra.mxu0 0.0
      %1051 = vmatprep.subr.mxu0 0.0
      %1052 = vmatpush1.msra.mxu0 0.0
      %1053 = vmatprep.subr.mxu0 0.0
      %1054 = vmatpush1.msra.mxu0 0.0
      %1055 = vmatprep.subr.mxu0 0.0
      %1056 = vmatpush1.msra.mxu0 0.0
      %1057 = vmatprep.subr.mxu0 0.0
      %1058 = vmatpush1.msra.mxu0 0.0
      %1059 = vmatprep.subr.mxu0 0.0
      %1060 = vmatpush1.msra.mxu0 0.0
      %1061 = vmatprep.subr.mxu0 0.0
      %1062 = vmatpush1.msra.mxu0 0.0
      %1063 = vmatprep.subr.mxu0 0.0
      %1064 = vmatpush1.msra.mxu0 0.0
      %1065 = vmatprep.subr.mxu0 0.0
      %1066 = vmatpush1.msra.mxu0 0.0
      %1067 = vmatprep.subr.mxu0 0.0
      %1068 = vmatpush1.msra.mxu0 0.0
      %1069 = vmatprep.subr.mxu0 0.0
      %1070 = vmatpush1.msra.mxu0 0.0
      %1071 = vmatprep.subr.mxu0 0.0
      %1072 = vmatpush1.msra.mxu0 0.0
      %1073 = vmatprep.subr.mxu0 0.0
      %1074 = vmatpush1.msra.mxu0 0.0
      %1075 = vmatprep.subr.mxu0 0.0
      %1076 = vmatpush1.msra.mxu0 0.0
      %1077 = vmatprep.subr.mxu0 0.0
      %1078 = vmatpush1.msra.mxu0 0.0
      %1079 = vmatprep.subr.mxu0 0.0
      %1080 = vmatpush1.msra.mxu0 0.0
      %1081 = vmatprep.subr.mxu0 0.0
      %1082 = vmatpush1.msra.mxu0 0.0
      %1083 = vmatprep.subr.mxu0 0.0
      %1084 = vmatpush1.msra.mxu0 0.0
      %1085 = vmatprep.mubr.f32.mxu0 0.0
      %1086 = vmatmul.mubr.f32.gmra.mrb[0].mxu0 %v1019
      %v1087 = vpop.f32.mrb[0].mxu0
      %v1088 = vadd.f32 0.0, %v1087
      %v1089 = vpop.f32.mrb[0].mxu0
      %1090 = vdwg.mxu0
      %v1091 = vld [vmem:[%s8] sm:$0xff]
      %v1092 = vld [vmem:[%s8 + $0x8] sm:$0xff]
      %v1094 = vsel %vm434, %v1091, 0
      %v1097 = vsel %vm434, %v1092, 0
      %1099 = vmatprep.subr.mxu0 0.0
      %1100 = vmatpush1.msra.mxu0 %v923
      %1101 = vmatprep.subr.mxu0 0.0
      %1102 = vmatpush1.msra.mxu0 %v1088
      %1103 = vmatprep.subr.mxu0 0.0
      %1104 = vmatpush1.msra.mxu0 0.0
      %1105 = vmatprep.subr.mxu0 0.0
      %1106 = vmatpush1.msra.mxu0 0.0
      %1107 = vmatprep.subr.mxu0 0.0
      %1108 = vmatpush1.msra.mxu0 0.0
      %1109 = vmatprep.subr.mxu0 0.0
      %1110 = vmatpush1.msra.mxu0 0.0
      %1111 = vmatprep.subr.mxu0 0.0
      %1112 = vmatpush1.msra.mxu0 0.0
      %1113 = vmatprep.subr.mxu0 0.0
      %1114 = vmatpush1.msra.mxu0 0.0
      %1115 = vmatprep.subr.mxu0 0.0
      %1116 = vmatpush1.msra.mxu0 0.0
      %1117 = vmatprep.subr.mxu0 0.0
      %1118 = vmatpush1.msra.mxu0 0.0
      %1119 = vmatprep.subr.mxu0 0.0
      %1120 = vmatpush1.msra.mxu0 0.0
      %1121 = vmatprep.subr.mxu0 0.0
      %1122 = vmatpush1.msra.mxu0 0.0
      %1123 = vmatprep.subr.mxu0 0.0
      %1124 = vmatpush1.msra.mxu0 0.0
      %1125 = vmatprep.subr.mxu0 0.0
      %1126 = vmatpush1.msra.mxu0 0.0
      %1127 = vmatprep.subr.mxu0 0.0
      %1128 = vmatpush1.msra.mxu0 0.0
      %1129 = vmatprep.subr.mxu0 0.0
      %1130 = vmatpush1.msra.mxu0 0.0
      %1131 = vmatprep.subr.mxu0 0.0
      %1132 = vmatpush1.msra.mxu0 0.0
      %1133 = vmatprep.subr.mxu0 0.0
      %1134 = vmatpush1.msra.mxu0 0.0
      %1135 = vmatprep.subr.mxu0 0.0
      %1136 = vmatpush1.msra.mxu0 0.0
      %1137 = vmatprep.subr.mxu0 0.0
      %1138 = vmatpush1.msra.mxu0 0.0
      %1139 = vmatprep.subr.mxu0 0.0
      %1140 = vmatpush1.msra.mxu0 0.0
      %1141 = vmatprep.subr.mxu0 0.0
      %1142 = vmatpush1.msra.mxu0 0.0
      %1143 = vmatprep.subr.mxu0 0.0
      %1144 = vmatpush1.msra.mxu0 0.0
      %1145 = vmatprep.subr.mxu0 0.0
      %1146 = vmatpush1.msra.mxu0 0.0
      %1147 = vmatprep.subr.mxu0 0.0
      %1148 = vmatpush1.msra.mxu0 0.0
      %1149 = vmatprep.subr.mxu0 0.0
      %1150 = vmatpush1.msra.mxu0 0.0
      %1151 = vmatprep.subr.mxu0 0.0
      %1152 = vmatpush1.msra.mxu0 0.0
      %1153 = vmatprep.subr.mxu0 0.0
      %1154 = vmatpush1.msra.mxu0 0.0
      %1155 = vmatprep.subr.mxu0 0.0
      %1156 = vmatpush1.msra.mxu0 0.0
      %1157 = vmatprep.subr.mxu0 0.0
      %1158 = vmatpush1.msra.mxu0 0.0
      %1159 = vmatprep.subr.mxu0 0.0
      %1160 = vmatpush1.msra.mxu0 0.0
      %1161 = vmatprep.subr.mxu0 0.0
      %1162 = vmatpush1.msra.mxu0 0.0
      %1163 = vmatprep.mubr.f32.mxu0 0.0
      %1164 = vmatmul.mubr.f32.gmra.mrb[0].mxu0 %v1094
      %v1165 = vpop.f32.mrb[0].mxu0
      %v1166 = vadd.f32 0.0, %v1165
      %v1167 = vpop.f32.mrb[0].mxu0
      %1168 = vmatprep.mubr.f32.mxu0 0.0
      %1169 = vmatmul.mubr.f32.gmra.mrb[0].mxu0 %v1097
      %v1170 = vpop.f32.mrb[0].mxu0
      %v1171 = vadd.f32 0.0, %v1170
      %v1172 = vpop.f32.mrb[0].mxu0
      %1173 = vdwg.mxu0
      %vm1174 = vcmask 523264
      %v1175 = vsel %vm1174, %v1166, 0.0
      %1176 = vadd.xlane.f32.xlu0 %v1175
      %v1177 = vpop.xlane.xlu0 %1176
      %v1178 = vsel %vm1174, %v1171, 0.0
      %1179 = vadd.xlane.f32.xlu0 %v1178
      %v1180 = vpop.xlane.xlu0 %1179
      %v1181 = vrcp.pop 64.0
      %v1182 = vmul.f32 %v1177, %v1181
      %v1183 = vmul.f32 %v1180, %v1181
      %v1184 = vsub.f32 %v1166, %v1182
      %v1185 = vsub.f32 %v1171, %v1183
      %v1186 = vmul.f32 %v1184, %v1184
      %v1187 = vmul.f32 %v1185, %v1185
      %v1188 = vsel %vm1174, %v1186, 0.0
      %1189 = vadd.xlane.f32.xlu0 %v1188
      %v1190 = vpop.xlane.xlu0 %1189
      %v1191 = vsel %vm1174, %v1187, 0.0
      %1192 = vadd.xlane.f32.xlu0 %v1191
      %v1193 = vpop.xlane.xlu0 %1192
      %v1194 = vmul.f32 %v1190, %v1181
      %v1195 = vmul.f32 %v1193, %v1181
      %v1196 = vadd.f32 %v1194, 1e-05
      %v1197 = vadd.f32 %v1195, 1e-05
      %v1198 = vrsqrt.pop %v1196
      %v1199 = vrsqrt.pop %v1197
      %v1200 = vmul.f32 %v1184, %v1198
      %v1201 = vmul.f32 %v1185, %v1199
      %1202 = vst.msk [vmem:[%s420] sm:$0xff] %vm1174, %v1200
      %1203 = vst.msk [vmem:[%s420 + $0x8] sm:$0xff] %vm1174, %v1201
      %p1204 = scmp.lt.s32.totalorder %s20, 1
      %s1205 = scalar_select %p1204, %s20, 1
      %s1206 = smul.addr %s1205, 2
      %s1207 = smul.addr %s1206, 8
      %s1208 = scalar_lea.vmem %s9, %s1207
      // Predicated region
      $region57: #{cla_forward.7} parent=55 // pred_check
        %p1209 = pneg %p257
      $region58: #{cla_forward.7} parent=55 // pred_check_branch
        %1211 = sbr.rel (%p1209) target = $region60
      $region59: #{cla_forward.7} parent=55 // pred_region
        _
      $region60: #{cla_forward.7} parent=55 // pred_fallthru
        _
    $region56: #{cla_forward.7} parent=5 // pred_fallthru
      _
    %p1212 = scmp.le.s32.totalorder 2, %s15
    // Predicated region
    $region61: #{cla_forward.7} parent=5 // pred_check
      %p1213 = pneg %p1212
    $region62: #{cla_forward.7} parent=5 // pred_check_branch
      %1215 = sbr.rel (%p1213) target = $region64
    $region63: #{cla_forward.7} parent=5 // pred_region
      %s1216 = ssub.s32 %s15, 2
      // Predicated region
      $region65: #{cla_forward.7} parent=63 // pred_check
        %p1217 = pneg %p263
      $region66: #{cla_forward.7} parent=63 // pred_check_branch
        %1219 = sbr.rel (%p1217) target = $region68
      $region67: #{cla_forward.7} parent=63 // pred_region
        %p1220 = scmp.lt.s32.totalorder %s21, 1
        %s1221 = scalar_select %p1220, %s21, 1
        %s1222 = smul.addr %s1221, 2
        %s1223 = smul.addr %s1222, 8
        %s1224 = scalar_lea.vmem %s9, %s1223
      $region68: #{cla_forward.7} parent=63 // pred_fallthru
        _
    $region64: #{cla_forward.7} parent=5 // pred_fallthru
      _
  $region6: #{cla_forward.7} parent=0 // loop_footer
    %s19 = sadd.s32 1, %s15
  $region7: #{cla_forward.7} parent=0 // loop_footer_branch
    %14 = sbr.rel target = $region3
  $region8: #{cla_forward.7} parent=0 // loop_exit
    _

// kernel: cla_forward.6
$region0: #{cla_forward.6}
  #allocation0 [shape = 'u32[]', space=smem, size = 0x4, offset = 0x4, fixed_abs, tag = 'smem constant byte address 0x4 - core index']
  #allocation1 [shape = 'u32[144,128]{1,0:T(1,128)}', space=vmem, size = 0x12000, scoped, tag = 'internal scratch']
  %s0 = inlined_call_operand.vmem [shape: f32[2,256], index: 0, kind: input, shape index: {}]
  %s1 = inlined_call_operand.vmem [shape: f32[256,512], index: 1, kind: input, shape index: {}]
  %s2 = inlined_call_operand.vmem [shape: f32[1,512], index: 2, kind: input, shape index: {}]
  %s3 = inlined_call_operand.vmem [shape: f32[256,128], index: 3, kind: input, shape index: {}]
  %s4 = inlined_call_operand.vmem [shape: f32[1,128], index: 4, kind: input, shape index: {}]
  %s5 = inlined_call_operand.vmem [shape: f32[256,128], index: 5, kind: input, shape index: {}]
  %s6 = inlined_call_operand.vmem [shape: f32[1,128], index: 6, kind: input, shape index: {}]
  %s7 = inlined_call_operand.vmem [shape: f32[2,128], index: 7, kind: output, shape index: {0}]
  %s8 = inlined_call_operand.vmem [shape: f32[2,128], index: 8, kind: output, shape index: {1}]
  %9 = xla_tuple %s7, %s8
  %s10 = sld [smem:[#allocation0]]
  $region46: #{cla_forward.6} parent=0
    _
  %s12 = ssub.s32 1, %s10
  %s13 = scalar_select 0, %s12, %s10
  // Predicated region
  $region2: #{cla_forward.6} parent=0 // pred_check
    _
  $region3: #{cla_forward.6} parent=0 // pred_check_branch
    %15 = sbr.rel (0) target = $region5
  $region4: #{cla_forward.6} parent=0 // pred_region
    _
  $region5: #{cla_forward.6} parent=0 // pred_fallthru
    _
  // Predicated region
  $region6: #{cla_forward.6} parent=0 // pred_check
    _
  $region7: #{cla_forward.6} parent=0 // pred_check_branch
    %17 = sbr.rel (0) target = $region9
  $region8: #{cla_forward.6} parent=0 // pred_region
    _
  $region9: #{cla_forward.6} parent=0 // pred_fallthru
    _
  // Predicated region
  $region10: #{cla_forward.6} parent=0 // pred_check
    _
  $region11: #{cla_forward.6} parent=0 // pred_check_branch
    %19 = sbr.rel (0) target = $region13
  $region12: #{cla_forward.6} parent=0 // pred_region
    _
  $region13: #{cla_forward.6} parent=0 // pred_fallthru
    _
  // Predicated region
  $region14: #{cla_forward.6} parent=0 // pred_check
    _
  $region15: #{cla_forward.6} parent=0 // pred_check_branch
    %21 = sbr.rel (0) target = $region17
  $region16: #{cla_forward.6} parent=0 // pred_region
    _
  $region17: #{cla_forward.6} parent=0 // pred_fallthru
    _
  // Predicated region
  $region18: #{cla_forward.6} parent=0 // pred_check
    _
  $region19: #{cla_forward.6} parent=0 // pred_check_branch
    %23 = sbr.rel (0) target = $region21
  $region20: #{cla_forward.6} parent=0 // pred_region
    _
  $region21: #{cla_forward.6} parent=0 // pred_fallthru
    _
  // Predicated region
  $region22: #{cla_forward.6} parent=0 // pred_check
    _
  $region23: #{cla_forward.6} parent=0 // pred_check_branch
    %25 = sbr.rel (0) target = $region25
  $region24: #{cla_forward.6} parent=0 // pred_region
    _
  $region25: #{cla_forward.6} parent=0 // pred_fallthru
    _
  // Predicated region
  $region26: #{cla_forward.6} parent=0 // pred_check
    _
  $region27: #{cla_forward.6} parent=0 // pred_check_branch
    %27 = sbr.rel (0) target = $region29
  $region28: #{cla_forward.6} parent=0 // pred_region
    _
  $region29: #{cla_forward.6} parent=0 // pred_fallthru
    _
  %v28 = vld [vmem:[%s0] sm:$0xf]
  %v29 = vld [vmem:[%s1] sm:$0xff]
  %v30 = vld [vmem:[%s1 + $0x8] sm:$0xff]
  %v31 = vld [vmem:[%s1 + $0x10] sm:$0xff]
  %v32 = vld [vmem:[%s1 + $0x18] sm:$0xff]
  %v33 = vld [vmem:[%s1 + $0x20] sm:$0xff]
  %v34 = vld [vmem:[%s1 + $0x28] sm:$0xff]
  %v35 = vld [vmem:[%s1 + $0x30] sm:$0xff]
  %v36 = vld [vmem:[%s1 + $0x38] sm:$0xff]
  %v37 = vld [vmem:[%s1 + $0x40] sm:$0xff]
  %v38 = vld [vmem:[%s1 + $0x48] sm:$0xff]
  %v39 = vld [vmem:[%s1 + $0x50] sm:$0xff]
  %v40 = vld [vmem:[%s1 + $0x58] sm:$0xff]
  %v41 = vld [vmem:[%s1 + $0x60] sm:$0xff]
  %v42 = vld [vmem:[%s1 + $0x68] sm:$0xff]
  %v43 = vld [vmem:[%s1 + $0x70] sm:$0xff]
  %v44 = vld [vmem:[%s1 + $0x78] sm:$0xff]
  %v45 = vld [vmem:[%s1 + $0x80] sm:$0xff]
  %v46 = vld [vmem:[%s1 + $0x88] sm:$0xff]
  %v47 = vld [vmem:[%s1 + $0x90] sm:$0xff]
  %v48 = vld [vmem:[%s1 + $0x98] sm:$0xff]
  %v49 = vld [vmem:[%s1 + $0xa0] sm:$0xff]
  %v50 = vld [vmem:[%s1 + $0xa8] sm:$0xff]
  %v51 = vld [vmem:[%s1 + $0xb0] sm:$0xff]
  %v52 = vld [vmem:[%s1 + $0xb8] sm:$0xff]
  %v53 = vld [vmem:[%s1 + $0xc0] sm:$0xff]
  %v54 = vld [vmem:[%s1 + $0xc8] sm:$0xff]
  %v55 = vld [vmem:[%s1 + $0xd0] sm:$0xff]
  %v56 = vld [vmem:[%s1 + $0xd8] sm:$0xff]
  %v57 = vld [vmem:[%s1 + $0xe0] sm:$0xff]
  %v58 = vld [vmem:[%s1 + $0xe8] sm:$0xff]
  %v59 = vld [vmem:[%s1 + $0xf0] sm:$0xff]
  %v60 = vld [vmem:[%s1 + $0xf8] sm:$0xff]
  %v61 = vld [vmem:[%s1 + $0x100] sm:$0xff]
  %v62 = vld [vmem:[%s1 + $0x108] sm:$0xff]
  %v63 = vld [vmem:[%s1 + $0x110] sm:$0xff]
  %v64 = vld [vmem:[%s1 + $0x118] sm:$0xff]
  %v65 = vld [vmem:[%s1 + $0x120] sm:$0xff]
  %v66 = vld [vmem:[%s1 + $0x128] sm:$0xff]
  %v67 = vld [vmem:[%s1 + $0x130] sm:$0xff]
  %v68 = vld [vmem:[%s1 + $0x138] sm:$0xff]
  %v69 = vld [vmem:[%s1 + $0x140] sm:$0xff]
  %v70 = vld [vmem:[%s1 + $0x148] sm:$0xff]
  %v71 = vld [vmem:[%s1 + $0x150] sm:$0xff]
  %v72 = vld [vmem:[%s1 + $0x158] sm:$0xff]
  %v73 = vld [vmem:[%s1 + $0x160] sm:$0xff]
  %v74 = vld [vmem:[%s1 + $0x168] sm:$0xff]
  %v75 = vld [vmem:[%s1 + $0x170] sm:$0xff]
  %v76 = vld [vmem:[%s1 + $0x178] sm:$0xff]
  %v77 = vld [vmem:[%s1 + $0x180] sm:$0xff]
  %v78 = vld [vmem:[%s1 + $0x188] sm:$0xff]
  %v79 = vld [vmem:[%s1 + $0x190] sm:$0xff]
  %v80 = vld [vmem:[%s1 + $0x198] sm:$0xff]
  %v81 = vld [vmem:[%s1 + $0x1a0] sm:$0xff]
  %v82 = vld [vmem:[%s1 + $0x1a8] sm:$0xff]
  %v83 = vld [vmem:[%s1 + $0x1b0] sm:$0xff]
  %v84 = vld [vmem:[%s1 + $0x1b8] sm:$0xff]
  %v85 = vld [vmem:[%s1 + $0x1c0] sm:$0xff]
  %v86 = vld [vmem:[%s1 + $0x1c8] sm:$0xff]
  %v87 = vld [vmem:[%s1 + $0x1d0] sm:$0xff]
  %v88 = vld [vmem:[%s1 + $0x1d8] sm:$0xff]
  %v89 = vld [vmem:[%s1 + $0x1e0] sm:$0xff]
  %v90 = vld [vmem:[%s1 + $0x1e8] sm:$0xff]
  %v91 = vld [vmem:[%s1 + $0x1f0] sm:$0xff]
  %v92 = vld [vmem:[%s1 + $0x1f8] sm:$0xff]
  %v93 = vld [vmem:[%s1 + $0x200] sm:$0xff]
  %v94 = vld [vmem:[%s1 + $0x208] sm:$0xff]
  %v95 = vld [vmem:[%s1 + $0x210] sm:$0xff]
  %v96 = vld [vmem:[%s1 + $0x218] sm:$0xff]
  %v97 = vld [vmem:[%s1 + $0x220] sm:$0xff]
  %v98 = vld [vmem:[%s1 + $0x228] sm:$0xff]
  %v99 = vld [vmem:[%s1 + $0x230] sm:$0xff]
  %v100 = vld [vmem:[%s1 + $0x238] sm:$0xff]
  %v101 = vld [vmem:[%s1 + $0x240] sm:$0xff]
  %v102 = vld [vmem:[%s1 + $0x248] sm:$0xff]
  %v103 = vld [vmem:[%s1 + $0x250] sm:$0xff]
  %v104 = vld [vmem:[%s1 + $0x258] sm:$0xff]
  %v105 = vld [vmem:[%s1 + $0x260] sm:$0xff]
  %v106 = vld [vmem:[%s1 + $0x268] sm:$0xff]
  %v107 = vld [vmem:[%s1 + $0x270] sm:$0xff]
  %v108 = vld [vmem:[%s1 + $0x278] sm:$0xff]
  %v109 = vld [vmem:[%s1 + $0x280] sm:$0xff]
  %v110 = vld [vmem:[%s1 + $0x288] sm:$0xff]
  %v111 = vld [vmem:[%s1 + $0x290] sm:$0xff]
  %v112 = vld [vmem:[%s1 + $0x298] sm:$0xff]
  %v113 = vld [vmem:[%s1 + $0x2a0] sm:$0xff]
  %v114 = vld [vmem:[%s1 + $0x2a8] sm:$0xff]
  %v115 = vld [vmem:[%s1 + $0x2b0] sm:$0xff]
  %v116 = vld [vmem:[%s1 + $0x2b8] sm:$0xff]
  %v117 = vld [vmem:[%s1 + $0x2c0] sm:$0xff]
  %v118 = vld [vmem:[%s1 + $0x2c8] sm:$0xff]
  %v119 = vld [vmem:[%s1 + $0x2d0] sm:$0xff]
  %v120 = vld [vmem:[%s1 + $0x2d8] sm:$0xff]
  %v121 = vld [vmem:[%s1 + $0x2e0] sm:$0xff]
  %v122 = vld [vmem:[%s1 + $0x2e8] sm:$0xff]
  %v123 = vld [vmem:[%s1 + $0x2f0] sm:$0xff]
  %v124 = vld [vmem:[%s1 + $0x2f8] sm:$0xff]
  %v125 = vld [vmem:[%s1 + $0x300] sm:$0xff]
  %v126 = vld [vmem:[%s1 + $0x308] sm:$0xff]
  %v127 = vld [vmem:[%s1 + $0x310] sm:$0xff]
  %v128 = vld [vmem:[%s1 + $0x318] sm:$0xff]
  %v129 = vld [vmem:[%s1 + $0x320] sm:$0xff]
  %v130 = vld [vmem:[%s1 + $0x328] sm:$0xff]
  %v131 = vld [vmem:[%s1 + $0x330] sm:$0xff]
  %v132 = vld [vmem:[%s1 + $0x338] sm:$0xff]
  %v133 = vld [vmem:[%s1 + $0x340] sm:$0xff]
  %v134 = vld [vmem:[%s1 + $0x348] sm:$0xff]
  %v135 = vld [vmem:[%s1 + $0x350] sm:$0xff]
  %v136 = vld [vmem:[%s1 + $0x358] sm:$0xff]
  %v137 = vld [vmem:[%s1 + $0x360] sm:$0xff]
  %v138 = vld [vmem:[%s1 + $0x368] sm:$0xff]
  %v139 = vld [vmem:[%s1 + $0x370] sm:$0xff]
  %v140 = vld [vmem:[%s1 + $0x378] sm:$0xff]
  %v141 = vld [vmem:[%s1 + $0x380] sm:$0xff]
  %v142 = vld [vmem:[%s1 + $0x388] sm:$0xff]
  %v143 = vld [vmem:[%s1 + $0x390] sm:$0xff]
  %v144 = vld [vmem:[%s1 + $0x398] sm:$0xff]
  %v145 = vld [vmem:[%s1 + $0x3a0] sm:$0xff]
  %v146 = vld [vmem:[%s1 + $0x3a8] sm:$0xff]
  %v147 = vld [vmem:[%s1 + $0x3b0] sm:$0xff]
  %v148 = vld [vmem:[%s1 + $0x3b8] sm:$0xff]
  %v149 = vld [vmem:[%s1 + $0x3c0] sm:$0xff]
  %v150 = vld [vmem:[%s1 + $0x3c8] sm:$0xff]
  %v151 = vld [vmem:[%s1 + $0x3d0] sm:$0xff]
  %v152 = vld [vmem:[%s1 + $0x3d8] sm:$0xff]
  %v153 = vld [vmem:[%s1 + $0x3e0] sm:$0xff]
  %v154 = vld [vmem:[%s1 + $0x3e8] sm:$0xff]
  %v155 = vld [vmem:[%s1 + $0x3f0] sm:$0xff]
  %v156 = vld [vmem:[%s1 + $0x3f8] sm:$0xff]
  %v157 = vld [vmem:[%s2] sm:$0xf]
  %v159 = vlaneseq
  %v160 = vshrl.u32 %v159, 7
  %v161 = vsub.s32 0, %v160
  %v162 = vrot.slane %v157, %v161
  %v163 = vlaneseq
  %v164 = vshrl.u32 %v163, 7
  %v165 = vsub.s32 1, %v164
  %v166 = vrot.slane %v157, %v165
  %v167 = vlaneseq
  %v168 = vshrl.u32 %v167, 7
  %v169 = vsub.s32 2, %v168
  %v170 = vrot.slane %v157, %v169
  %v171 = vlaneseq
  %v172 = vshrl.u32 %v171, 7
  %v173 = vsub.s32 3, %v172
  %v174 = vrot.slane %v157, %v173
  %v181 = vunpack.c.l.s4 1983009808
  %v182 = vunpack.c.0.s8 %v181
  %v183 = vlaneseq
  %v184 = vshrl.u32 %v183, 7
  %v185 = vsub.s32 %v182, %v184
  %v186 = vrot.slane %v28, %v185
  %v187 = vcombine.high %v186, %v186
  %190 = vmatprep.subr.mxu0 %v30
  %191 = vmatpush1.msra.mxu0 %v29
  %192 = vmatprep.subr.mxu0 %v34
  %193 = vmatpush1.msra.mxu0 %v33
  %194 = vmatprep.subr.mxu0 %v38
  %195 = vmatpush1.msra.mxu0 %v37
  %196 = vmatprep.subr.mxu0 %v42
  %197 = vmatpush1.msra.mxu0 %v41
  %198 = vmatprep.subr.mxu0 %v46
  %199 = vmatpush1.msra.mxu0 %v45
  %200 = vmatprep.subr.mxu0 %v50
  %201 = vmatpush1.msra.mxu0 %v49
  %202 = vmatprep.subr.mxu0 %v54
  %203 = vmatpush1.msra.mxu0 %v53
  %204 = vmatprep.subr.mxu0 %v58
  %205 = vmatpush1.msra.mxu0 %v57
  %206 = vmatprep.subr.mxu0 %v62
  %207 = vmatpush1.msra.mxu0 %v61
  %208 = vmatprep.subr.mxu0 %v66
  %209 = vmatpush1.msra.mxu0 %v65
  %210 = vmatprep.subr.mxu0 %v70
  %211 = vmatpush1.msra.mxu0 %v69
  %212 = vmatprep.subr.mxu0 %v74
  %213 = vmatpush1.msra.mxu0 %v73
  %214 = vmatprep.subr.mxu0 %v78
  %215 = vmatpush1.msra.mxu0 %v77
  %216 = vmatprep.subr.mxu0 %v82
  %217 = vmatpush1.msra.mxu0 %v81
  %218 = vmatprep.subr.mxu0 %v86
  %219 = vmatpush1.msra.mxu0 %v85
  %220 = vmatprep.subr.mxu0 %v90
  %221 = vmatpush1.msra.mxu0 %v89
  %222 = vmatprep.subr.mxu0 %v94
  %223 = vmatpush1.msra.mxu0 %v93
  %224 = vmatprep.subr.mxu0 %v98
  %225 = vmatpush1.msra.mxu0 %v97
  %226 = vmatprep.subr.mxu0 %v102
  %227 = vmatpush1.msra.mxu0 %v101
  %228 = vmatprep.subr.mxu0 %v106
  %229 = vmatpush1.msra.mxu0 %v105
  %230 = vmatprep.subr.mxu0 %v110
  %231 = vmatpush1.msra.mxu0 %v109
  %232 = vmatprep.subr.mxu0 %v114
  %233 = vmatpush1.msra.mxu0 %v113
  %234 = vmatprep.subr.mxu0 %v118
  %235 = vmatpush1.msra.mxu0 %v117
  %236 = vmatprep.subr.mxu0 %v122
  %237 = vmatpush1.msra.mxu0 %v121
  %238 = vmatprep.subr.mxu0 %v126
  %239 = vmatpush1.msra.mxu0 %v125
  %240 = vmatprep.subr.mxu0 %v130
  %241 = vmatpush1.msra.mxu0 %v129
  %242 = vmatprep.subr.mxu0 %v134
  %243 = vmatpush1.msra.mxu0 %v133
  %244 = vmatprep.subr.mxu0 %v138
  %245 = vmatpush1.msra.mxu0 %v137
  %246 = vmatprep.subr.mxu0 %v142
  %247 = vmatpush1.msra.mxu0 %v141
  %248 = vmatprep.subr.mxu0 %v146
  %249 = vmatpush1.msra.mxu0 %v145
  %250 = vmatprep.subr.mxu0 %v150
  %251 = vmatpush1.msra.mxu0 %v149
  %252 = vmatprep.subr.mxu0 %v154
  %253 = vmatpush1.msra.mxu0 %v153
  %254 = vmatprep.mubr.f32.mxu0 %v187
  %255 = vmatmul.mubr.f32.gmra.mrb[0].mxu0 %v186
  %v256 = vpop.f32.mrb[0].mxu0
  %v257 = vadd.f32 %v162, %v256
  %v258 = vpop.f32.mrb[0].mxu0
  %v259 = vadd.f32 %v166, %v258
  %260 = vdwg.mxu0
  %261 = vmatprep.subr.mxu0 %v32
  %262 = vmatpush1.msra.mxu0 %v31
  %263 = vmatprep.subr.mxu0 %v36
  %264 = vmatpush1.msra.mxu0 %v35
  %265 = vmatprep.subr.mxu0 %v40
  %266 = vmatpush1.msra.mxu0 %v39
  %267 = vmatprep.subr.mxu0 %v44
  %268 = vmatpush1.msra.mxu0 %v43
  %269 = vmatprep.subr.mxu0 %v48
  %270 = vmatpush1.msra.mxu0 %v47
  %271 = vmatprep.subr.mxu0 %v52
  %272 = vmatpush1.msra.mxu0 %v51
  %273 = vmatprep.subr.mxu0 %v56
  %274 = vmatpush1.msra.mxu0 %v55
  %275 = vmatprep.subr.mxu0 %v60
  %276 = vmatpush1.msra.mxu0 %v59
  %277 = vmatprep.subr.mxu0 %v64
  %278 = vmatpush1.msra.mxu0 %v63
  %279 = vmatprep.subr.mxu0 %v68
  %280 = vmatpush1.msra.mxu0 %v67
  %281 = vmatprep.subr.mxu0 %v72
  %282 = vmatpush1.msra.mxu0 %v71
  %283 = vmatprep.subr.mxu0 %v76
  %284 = vmatpush1.msra.mxu0 %v75
  %285 = vmatprep.subr.mxu0 %v80
  %286 = vmatpush1.msra.mxu0 %v79
  %287 = vmatprep.subr.mxu0 %v84
  %288 = vmatpush1.msra.mxu0 %v83
  %289 = vmatprep.subr.mxu0 %v88
  %290 = vmatpush1.msra.mxu0 %v87
  %291 = vmatprep.subr.mxu0 %v92
  %292 = vmatpush1.msra.mxu0 %v91
  %293 = vmatprep.subr.mxu0 %v96
  %294 = vmatpush1.msra.mxu0 %v95
  %295 = vmatprep.subr.mxu0 %v100
  %296 = vmatpush1.msra.mxu0 %v99
  %297 = vmatprep.subr.mxu0 %v104
  %298 = vmatpush1.msra.mxu0 %v103
  %299 = vmatprep.subr.mxu0 %v108
  %300 = vmatpush1.msra.mxu0 %v107
  %301 = vmatprep.subr.mxu0 %v112
  %302 = vmatpush1.msra.mxu0 %v111
  %303 = vmatprep.subr.mxu0 %v116
  %304 = vmatpush1.msra.mxu0 %v115
  %305 = vmatprep.subr.mxu0 %v120
  %306 = vmatpush1.msra.mxu0 %v119
  %307 = vmatprep.subr.mxu0 %v124
  %308 = vmatpush1.msra.mxu0 %v123
  %309 = vmatprep.subr.mxu0 %v128
  %310 = vmatpush1.msra.mxu0 %v127
  %311 = vmatprep.subr.mxu0 %v132
  %312 = vmatpush1.msra.mxu0 %v131
  %313 = vmatprep.subr.mxu0 %v136
  %314 = vmatpush1.msra.mxu0 %v135
  %315 = vmatprep.subr.mxu0 %v140
  %316 = vmatpush1.msra.mxu0 %v139
  %317 = vmatprep.subr.mxu0 %v144
  %318 = vmatpush1.msra.mxu0 %v143
  %319 = vmatprep.subr.mxu0 %v148
  %320 = vmatpush1.msra.mxu0 %v147
  %321 = vmatprep.subr.mxu0 %v152
  %322 = vmatpush1.msra.mxu0 %v151
  %323 = vmatprep.subr.mxu0 %v156
  %324 = vmatpush1.msra.mxu0 %v155
  %325 = vmatprep.mubr.f32.mxu0 %v187
  %326 = vmatmul.mubr.f32.gmra.mrb[0].mxu0 %v186
  %v327 = vpop.f32.mrb[0].mxu0
  %v328 = vadd.f32 %v170, %v327
  %v329 = vpop.f32.mrb[0].mxu0
  %v330 = vadd.f32 %v174, %v329
  %331 = vdwg.mxu0
  %v332 = vld [vmem:[%s3] sm:$0xff]
  %v333 = vld [vmem:[%s3 + $0x8] sm:$0xff]
  %v334 = vld [vmem:[%s3 + $0x10] sm:$0xff]
  %v335 = vld [vmem:[%s3 + $0x18] sm:$0xff]
  %v336 = vld [vmem:[%s3 + $0x20] sm:$0xff]
  %v337 = vld [vmem:[%s3 + $0x28] sm:$0xff]
  %v338 = vld [vmem:[%s3 + $0x30] sm:$0xff]
  %v339 = vld [vmem:[%s3 + $0x38] sm:$0xff]
  %v340 = vld [vmem:[%s3 + $0x40] sm:$0xff]
  %v341 = vld [vmem:[%s3 + $0x48] sm:$0xff]
  %v342 = vld [vmem:[%s3 + $0x50] sm:$0xff]
  %v343 = vld [vmem:[%s3 + $0x58] sm:$0xff]
  %v344 = vld [vmem:[%s3 + $0x60] sm:$0xff]
  %v345 = vld [vmem:[%s3 + $0x68] sm:$0xff]
  %v346 = vld [vmem:[%s3 + $0x70] sm:$0xff]
  %v347 = vld [vmem:[%s3 + $0x78] sm:$0xff]
  %v348 = vld [vmem:[%s3 + $0x80] sm:$0xff]
  %v349 = vld [vmem:[%s3 + $0x88] sm:$0xff]
  %v350 = vld [vmem:[%s3 + $0x90] sm:$0xff]
  %v351 = vld [vmem:[%s3 + $0x98] sm:$0xff]
  %v352 = vld [vmem:[%s3 + $0xa0] sm:$0xff]
  %v353 = vld [vmem:[%s3 + $0xa8] sm:$0xff]
  %v354 = vld [vmem:[%s3 + $0xb0] sm:$0xff]
  %v355 = vld [vmem:[%s3 + $0xb8] sm:$0xff]
  %v356 = vld [vmem:[%s3 + $0xc0] sm:$0xff]
  %v357 = vld [vmem:[%s3 + $0xc8] sm:$0xff]
  %v358 = vld [vmem:[%s3 + $0xd0] sm:$0xff]
  %v359 = vld [vmem:[%s3 + $0xd8] sm:$0xff]
  %v360 = vld [vmem:[%s3 + $0xe0] sm:$0xff]
  %v361 = vld [vmem:[%s3 + $0xe8] sm:$0xff]
  %v362 = vld [vmem:[%s3 + $0xf0] sm:$0xff]
  %v363 = vld [vmem:[%s3 + $0xf8] sm:$0xff]
  %v364 = vld [vmem:[%s4] sm:$0x1]
  %v366 = vlaneseq
  %v367 = vshrl.u32 %v366, 7
  %v368 = vsub.s32 0, %v367
  %v369 = vrot.slane %v364, %v368
  %371 = vmatprep.subr.mxu0 0.0
  %372 = vmatpush1.msra.mxu0 %v332
  %373 = vmatprep.subr.mxu0 0.0
  %374 = vmatpush1.msra.mxu0 %v333
  %375 = vmatprep.subr.mxu0 0.0
  %376 = vmatpush1.msra.mxu0 %v334
  %377 = vmatprep.subr.mxu0 0.0
  %378 = vmatpush1.msra.mxu0 %v335
  %379 = vmatprep.subr.mxu0 0.0
  %380 = vmatpush1.msra.mxu0 %v336
  %381 = vmatprep.subr.mxu0 0.0
  %382 = vmatpush1.msra.mxu0 %v337
  %383 = vmatprep.subr.mxu0 0.0
  %384 = vmatpush1.msra.mxu0 %v338
  %385 = vmatprep.subr.mxu0 0.0
  %386 = vmatpush1.msra.mxu0 %v339
  %387 = vmatprep.subr.mxu0 0.0
  %388 = vmatpush1.msra.mxu0 %v340
  %389 = vmatprep.subr.mxu0 0.0
  %390 = vmatpush1.msra.mxu0 %v341
  %391 = vmatprep.subr.mxu0 0.0
  %392 = vmatpush1.msra.mxu0 %v342
  %393 = vmatprep.subr.mxu0 0.0
  %394 = vmatpush1.msra.mxu0 %v343
  %395 = vmatprep.subr.mxu0 0.0
  %396 = vmatpush1.msra.mxu0 %v344
  %397 = vmatprep.subr.mxu0 0.0
  %398 = vmatpush1.msra.mxu0 %v345
  %399 = vmatprep.subr.mxu0 0.0
  %400 = vmatpush1.msra.mxu0 %v346
  %401 = vmatprep.subr.mxu0 0.0
  %402 = vmatpush1.msra.mxu0 %v347
  %403 = vmatprep.subr.mxu0 0.0
  %404 = vmatpush1.msra.mxu0 %v348
  %405 = vmatprep.subr.mxu0 0.0
  %406 = vmatpush1.msra.mxu0 %v349
  %407 = vmatprep.subr.mxu0 0.0
  %408 = vmatpush1.msra.mxu0 %v350
  %409 = vmatprep.subr.mxu0 0.0
  %410 = vmatpush1.msra.mxu0 %v351
  %411 = vmatprep.subr.mxu0 0.0
  %412 = vmatpush1.msra.mxu0 %v352
  %413 = vmatprep.subr.mxu0 0.0
  %414 = vmatpush1.msra.mxu0 %v353
  %415 = vmatprep.subr.mxu0 0.0
  %416 = vmatpush1.msra.mxu0 %v354
  %417 = vmatprep.subr.mxu0 0.0
  %418 = vmatpush1.msra.mxu0 %v355
  %419 = vmatprep.subr.mxu0 0.0
  %420 = vmatpush1.msra.mxu0 %v356
  %421 = vmatprep.subr.mxu0 0.0
  %422 = vmatpush1.msra.mxu0 %v357
  %423 = vmatprep.subr.mxu0 0.0
  %424 = vmatpush1.msra.mxu0 %v358
  %425 = vmatprep.subr.mxu0 0.0
  %426 = vmatpush1.msra.mxu0 %v359
  %427 = vmatprep.subr.mxu0 0.0
  %428 = vmatpush1.msra.mxu0 %v360
  %429 = vmatprep.subr.mxu0 0.0
  %430 = vmatpush1.msra.mxu0 %v361
  %431 = vmatprep.subr.mxu0 0.0
  %432 = vmatpush1.msra.mxu0 %v362
  %433 = vmatprep.subr.mxu0 0.0
  %434 = vmatpush1.msra.mxu0 %v363
  %435 = vmatprep.mubr.f32.mxu0 %v259
  %436 = vmatmul.mubr.f32.gmra.mrb[0].mxu0 %v257
  %v437 = vpop.f32.mrb[0].mxu0
  %v438 = vadd.f32 %v369, %v437
  %v439 = vpop.f32.mrb[0].mxu0
  %440 = vdwg.mxu0
  %441 = vst [vmem:[%s7] sm:$0x3] %v438
  %v442 = vld [vmem:[%s5] sm:$0xff]
  %v443 = vld [vmem:[%s5 + $0x8] sm:$0xff]
  %v444 = vld [vmem:[%s5 + $0x10] sm:$0xff]
  %v445 = vld [vmem:[%s5 + $0x18] sm:$0xff]
  %v446 = vld [vmem:[%s5 + $0x20] sm:$0xff]
  %v447 = vld [vmem:[%s5 + $0x28] sm:$0xff]
  %v448 = vld [vmem:[%s5 + $0x30] sm:$0xff]
  %v449 = vld [vmem:[%s5 + $0x38] sm:$0xff]
  %v450 = vld [vmem:[%s5 + $0x40] sm:$0xff]
  %v451 = vld [vmem:[%s5 + $0x48] sm:$0xff]
  %v452 = vld [vmem:[%s5 + $0x50] sm:$0xff]
  %v453 = vld [vmem:[%s5 + $0x58] sm:$0xff]
  %v454 = vld [vmem:[%s5 + $0x60] sm:$0xff]
  %v455 = vld [vmem:[%s5 + $0x68] sm:$0xff]
  %v456 = vld [vmem:[%s5 + $0x70] sm:$0xff]
  %v457 = vld [vmem:[%s5 + $0x78] sm:$0xff]
  %v458 = vld [vmem:[%s5 + $0x80] sm:$0xff]
  %v459 = vld [vmem:[%s5 + $0x88] sm:$0xff]
  %v460 = vld [vmem:[%s5 + $0x90] sm:$0xff]
  %v461 = vld [vmem:[%s5 + $0x98] sm:$0xff]
  %v462 = vld [vmem:[%s5 + $0xa0] sm:$0xff]
  %v463 = vld [vmem:[%s5 + $0xa8] sm:$0xff]
  %v464 = vld [vmem:[%s5 + $0xb0] sm:$0xff]
  %v465 = vld [vmem:[%s5 + $0xb8] sm:$0xff]
  %v466 = vld [vmem:[%s5 + $0xc0] sm:$0xff]
  %v467 = vld [vmem:[%s5 + $0xc8] sm:$0xff]
  %v468 = vld [vmem:[%s5 + $0xd0] sm:$0xff]
  %v469 = vld [vmem:[%s5 + $0xd8] sm:$0xff]
  %v470 = vld [vmem:[%s5 + $0xe0] sm:$0xff]
  %v471 = vld [vmem:[%s5 + $0xe8] sm:$0xff]
  %v472 = vld [vmem:[%s5 + $0xf0] sm:$0xff]
  %v473 = vld [vmem:[%s5 + $0xf8] sm:$0xff]
  %v474 = vld [vmem:[%s6] sm:$0x1]
  %v476 = vlaneseq
  %v477 = vshrl.u32 %v476, 7
  %v478 = vsub.s32 0, %v477
  %v479 = vrot.slane %v474, %v478
  %481 = vmatprep.subr.mxu0 0.0
  %482 = vmatpush1.msra.mxu0 %v442
  %483 = vmatprep.subr.mxu0 0.0
  %484 = vmatpush1.msra.mxu0 %v443
  %485 = vmatprep.subr.mxu0 0.0
  %486 = vmatpush1.msra.mxu0 %v444
  %487 = vmatprep.subr.mxu0 0.0
  %488 = vmatpush1.msra.mxu0 %v445
  %489 = vmatprep.subr.mxu0 0.0
  %490 = vmatpush1.msra.mxu0 %v446
  %491 = vmatprep.subr.mxu0 0.0
  %492 = vmatpush1.msra.mxu0 %v447
  %493 = vmatprep.subr.mxu0 0.0
  %494 = vmatpush1.msra.mxu0 %v448
  %495 = vmatprep.subr.mxu0 0.0
  %496 = vmatpush1.msra.mxu0 %v449
  %497 = vmatprep.subr.mxu0 0.0
  %498 = vmatpush1.msra.mxu0 %v450
  %499 = vmatprep.subr.mxu0 0.0
  %500 = vmatpush1.msra.mxu0 %v451
  %501 = vmatprep.subr.mxu0 0.0
  %502 = vmatpush1.msra.mxu0 %v452
  %503 = vmatprep.subr.mxu0 0.0
  %504 = vmatpush1.msra.mxu0 %v453
  %505 = vmatprep.subr.mxu0 0.0
  %506 = vmatpush1.msra.mxu0 %v454
  %507 = vmatprep.subr.mxu0 0.0
  %508 = vmatpush1.msra.mxu0 %v455
  %509 = vmatprep.subr.mxu0 0.0
  %510 = vmatpush1.msra.mxu0 %v456
  %511 = vmatprep.subr.mxu0 0.0
  %512 = vmatpush1.msra.mxu0 %v457
  %513 = vmatprep.subr.mxu0 0.0
  %514 = vmatpush1.msra.mxu0 %v458
  %515 = vmatprep.subr.mxu0 0.0
  %516 = vmatpush1.msra.mxu0 %v459
  %517 = vmatprep.subr.mxu0 0.0
  %518 = vmatpush1.msra.mxu0 %v460
  %519 = vmatprep.subr.mxu0 0.0
  %520 = vmatpush1.msra.mxu0 %v461
  %521 = vmatprep.subr.mxu0 0.0
  %522 = vmatpush1.msra.mxu0 %v462
  %523 = vmatprep.subr.mxu0 0.0
  %524 = vmatpush1.msra.mxu0 %v463
  %525 = vmatprep.subr.mxu0 0.0
  %526 = vmatpush1.msra.mxu0 %v464
  %527 = vmatprep.subr.mxu0 0.0
  %528 = vmatpush1.msra.mxu0 %v465
  %529 = vmatprep.subr.mxu0 0.0
  %530 = vmatpush1.msra.mxu0 %v466
  %531 = vmatprep.subr.mxu0 0.0
  %532 = vmatpush1.msra.mxu0 %v467
  %533 = vmatprep.subr.mxu0 0.0
  %534 = vmatpush1.msra.mxu0 %v468
  %535 = vmatprep.subr.mxu0 0.0
  %536 = vmatpush1.msra.mxu0 %v469
  %537 = vmatprep.subr.mxu0 0.0
  %538 = vmatpush1.msra.mxu0 %v470
  %539 = vmatprep.subr.mxu0 0.0
  %540 = vmatpush1.msra.mxu0 %v471
  %541 = vmatprep.subr.mxu0 0.0
  %542 = vmatpush1.msra.mxu0 %v472
  %543 = vmatprep.subr.mxu0 0.0
  %544 = vmatpush1.msra.mxu0 %v473
  %545 = vmatprep.mubr.f32.mxu0 %v330
  %546 = vmatmul.mubr.f32.gmra.mrb[0].mxu0 %v328
  %v547 = vpop.f32.mrb[0].mxu0
  %v548 = vadd.f32 %v479, %v547
  %v549 = vpop.f32.mrb[0].mxu0
  %550 = vdwg.mxu0
  %551 = vst [vmem:[%s8] sm:$0x3] %v548
  // Predicated region
  $region30: #{cla_forward.6} parent=0 // pred_check
    _
  $region31: #{cla_forward.6} parent=0 // pred_check_branch
    %553 = sbr.rel (0) target = $region33
  $region32: #{cla_forward.6} parent=0 // pred_region
    _
  $region33: #{cla_forward.6} parent=0 // pred_fallthru
    _
  // Predicated region
  $region34: #{cla_forward.6} parent=0 // pred_check
    _
  $region35: #{cla_forward.6} parent=0 // pred_check_branch
    %555 = sbr.rel (0) target = $region37
  $region36: #{cla_forward.6} parent=0 // pred_region
    _
  $region37: #{cla_forward.6} parent=0 // pred_fallthru
    _
  // Predicated region
  $region38: #{cla_forward.6} parent=0 // pred_check
    _
  $region39: #{cla_forward.6} parent=0 // pred_check_branch
    %557 = sbr.rel (0) target = $region41
  $region40: #{cla_forward.6} parent=0 // pred_region
    _
  $region41: #{cla_forward.6} parent=0 // pred_fallthru
    _
  // Predicated region
  $region42: #{cla_forward.6} parent=0 // pred_check
    _
  $region43: #{cla_forward.6} parent=0 // pred_check_branch
    %559 = sbr.rel (0) target = $region45
  $region44: #{cla_forward.6} parent=0 // pred_region
    _
  $region45: #{cla_forward.6} parent=0 // pred_fallthru
    _

// kernel: cla_forward.4
$region0: #{cla_forward.4}
  #allocation0 [shape = 'u32[]', space=smem, size = 0x4, offset = 0x4, fixed_abs, tag = 'smem constant byte address 0x4 - core index']
  #allocation1 [shape = 'u32[144,128]{1,0:T(1,128)}', space=vmem, size = 0x12000, scoped, tag = 'internal scratch']
  %s0 = inlined_call_operand.vmem [shape: f32[2,2,8,64], index: 0, kind: input, shape index: {}]
  %s1 = inlined_call_operand.vmem [shape: f32[9,64,64], index: 1, kind: input, shape index: {}]
  %s2 = inlined_call_operand.hbm [shape: f32[2,8,72], index: 2, kind: input, shape index: {}]
  %s3 = inlined_call_operand.vmem [shape: f32[2,8,3], index: 3, kind: input, shape index: {}]
  %s4 = inlined_call_operand.hbm [shape: f32[2,8,72], index: 4, kind: input, shape index: {}]
  %s5 = inlined_call_operand.vmem [shape: f32[2,8,3], index: 5, kind: input, shape index: {}]
  %s6 = inlined_call_operand.vmem [shape: f32[64,16], index: 6, kind: input, shape index: {}]
  %s7 = inlined_call_operand.hbm [shape: f32[2,2,16,16], index: 7, kind: input, shape index: {}]
  %s8 = inlined_call_operand.vmem [shape: f32[2,6,16], index: 8, kind: input, shape index: {}]
  %s9 = inlined_call_operand.vmem [shape: f32[2,2,8,16], index: 9, kind: output, shape index: {}]
  %s10 = sld [smem:[#allocation0]]
  $region81: #{cla_forward.4} parent=0
    _
  %s12 = ssub.s32 1, %s10
  %s13 = scalar_select 0, %s12, %s10
  $region1: #{cla_forward.4} parent=0
    #allocation2 [shape = 'u8[8192]{0}', space=vmem, size = 0x2000, scoped, tag = 'input window, operand 2']
    #allocation3 [shape = 's32[2]{0}', space=sflag, size = 0x8, scoped, tag = 'scoped memory for cla_forward.4']
    #allocation4 [shape = 'u8[8192]{0}', space=vmem, size = 0x2000, scoped, tag = 'input window, operand 4']
    #allocation5 [shape = 's32[2]{0}', space=sflag, size = 0x8, scoped, tag = 'scoped memory for cla_forward.4']
    #allocation6 [shape = 'u8[32768]{0}', space=vmem, size = 0x8000, scoped, tag = 'input window, operand 7']
    %14 = vsyncpa [#allocation3], 0
    %s15 = scalar_lea.sflag [#allocation3], 1
    %16 = vsyncpa %s15, 0
    %17 = vsyncpa [#allocation5], 0
    %s18 = scalar_lea.sflag [#allocation5], 1
    %19 = vsyncpa %s18, 0
    loop: start=0, step=1, limit=6
    $region2: #{cla_forward.4} parent=1 // loop_pre_header
      _
    $region3: #{cla_forward.4} parent=1 // loop_header
      %s21 = sphi 0, %s25
      %p22 = scmp.ge.s32.totalorder %s21, 6
      %s28 = sphi 0, %s40
      %s29 = sphi 0, %s36
      %s30 = sphi 0, %s28
      %s31 = sphi 0, %s29
      %s32 = sphi 0, %s30
      %s33 = sphi 0, %s31
      %s45 = sphi 0, %s47
      %s48 = sphi 0, %s45
      %s49 = sphi 0, %s48
      %s65 = sphi 0, %s49
      %s69 = sphi 0, %s69
      %s71 = sphi 0, %s69
      %s72 = sphi 0, %s71
      %s86 = sphi 0, %s72
      %s92 = sphi 0, %s94
      %s95 = sphi 0, %s92
      %s96 = sphi 0, %s95
      %s112 = sphi 0, %s96
      %s118 = sphi 0, %s120
      %s121 = sphi 0, %s118
      %s122 = sphi 0, %s121
      %s138 = sphi 0, %s122
      %s144 = sphi 0, %s146
      %s147 = sphi 0, %s144
      %s148 = sphi 0, %s147
      %s164 = sphi 0, %s148
      %s170 = sphi 0, %s172
      %s173 = sphi 0, %s170
      %s174 = sphi 0, %s173
      %s190 = sphi 0, %s174
      %s194 = sphi 0, %s194
      %s196 = sphi 0, %s194
      %s197 = sphi 0, %s196
      %s211 = sphi 0, %s197
      %s217 = sphi 0, %s219
      %s220 = sphi 0, %s217
      %s221 = sphi 0, %s220
      %s237 = sphi 0, %s221
      %s243 = sphi 0, %s245
      %s246 = sphi 0, %s243
      %s247 = sphi 0, %s246
      %s263 = sphi 0, %s247
      %s271 = sphi 0, %s273
      %s274 = sphi 0, %s271
      %s275 = sphi 0, %s274
      %s291 = sphi 0, %s275
    $region4: #{cla_forward.4} parent=1 // loop_header_branch
      %24 = sbr.rel (%p22) target = $region8
    $region5: #{cla_forward.4} parent=1 // loop_body
      %s26 = ssub.s32 %s21, 1
      %s27 = ssub.s32 %s21, 2
      %s34 = sadd.s32 1, %s29
      %p35 = scmp.ge.s32.totalorder %s34, 2
      %s36 = scalar_select %p35, 0, %s34
      %s37 = sadd.s32 1, %s28
      %s38 = scalar_select %p35, %s37, %s28
      %p39 = scmp.ge.s32.totalorder %s38, 2
      %s40 = scalar_select %p39, 0, %s38
      %s41 = ssub.s32 %s28, %s40
      %s42 = ssub.s32 %s29, %s36
      %s43 = sor.u32 %s41, %s42
      %p44 = scmp.eq.s32.totalorder %s43, 0
      %s46 = sadd.s32 %s45, 1
      %s47 = scalar_select %p44, %s45, %s46
      %p50 = pneg %p44
      %p51 = scmp.eq.s32.totalorder %s21, 3
      %p52 = por %p50, %p51
      %p53 = scmp.ne.s32.totalorder %s45, %s48
      %p54 = scmp.eq.s32.totalorder %s21, 0
      %p55 = por %p53, %p54
      %p56 = scmp.ne.s32.totalorder %s45, %s48
      %p57 = scmp.eq.s32.totalorder %s26, 3
      %p58 = por %p56, %p57
      %p59 = scmp.ne.s32.totalorder %s48, %s49
      %p60 = scmp.eq.s32.totalorder %s26, 0
      %p61 = por %p59, %p60
      %p62 = scmp.ne.s32.totalorder %s48, %s49
      %p63 = scmp.eq.s32.totalorder %s27, 3
      %p64 = por %p62, %p63
      %p66 = scmp.ne.s32.totalorder %s49, %s65
      %p67 = scmp.eq.s32.totalorder %s27, 0
      %p68 = por %p66, %p67
      %s70 = sadd.s32 %s69, 1
      %p73 = scmp.eq.s32.totalorder %s21, 3
      %p74 = scmp.ne.s32.totalorder %s69, %s71
      %p75 = scmp.eq.s32.totalorder %s21, 0
      %p76 = por %p74, %p75
      %p77 = scmp.ne.s32.totalorder %s69, %s71
      %p78 = scmp.eq.s32.totalorder %s26, 3
      %p79 = por %p77, %p78
      %p80 = scmp.ne.s32.totalorder %s71, %s72
      %p81 = scmp.eq.s32.totalorder %s26, 0
      %p82 = por %p80, %p81
      %p83 = scmp.ne.s32.totalorder %s71, %s72
      %p84 = scmp.eq.s32.totalorder %s27, 3
      %p85 = por %p83, %p84
      %p87 = scmp.ne.s32.totalorder %s72, %s86
      %p88 = scmp.eq.s32.totalorder %s27, 0
      %p89 = por %p87, %p88
      %s90 = ssub.s32 %s28, %s40
      %p91 = scmp.eq.s32.totalorder %s90, 0
      %s93 = sadd.s32 %s92, 1
      %s94 = scalar_select %p91, %s92, %s93
      %p97 = pneg %p91
      %p98 = scmp.eq.s32.totalorder %s21, 3
      %p99 = por %p97, %p98
      %p100 = scmp.ne.s32.totalorder %s92, %s95
      %p101 = scmp.eq.s32.totalorder %s21, 0
      %p102 = por %p100, %p101
      %p103 = scmp.ne.s32.totalorder %s92, %s95
      %p104 = scmp.eq.s32.totalorder %s26, 3
      %p105 = por %p103, %p104
      %p106 = scmp.ne.s32.totalorder %s95, %s96
      %p107 = scmp.eq.s32.totalorder %s26, 0
      %p108 = por %p106, %p107
      %p109 = scmp.ne.s32.totalorder %s95, %s96
      %p110 = scmp.eq.s32.totalorder %s27, 3
      %p111 = por %p109, %p110
      %p113 = scmp.ne.s32.totalorder %s96, %s112
      %p114 = scmp.eq.s32.totalorder %s27, 0
      %p115 = por %p113, %p114
      %s116 = ssub.s32 %s28, %s40
      %p117 = scmp.eq.s32.totalorder %s116, 0
      %s119 = sadd.s32 %s118, 1
      %s120 = scalar_select %p117, %s118, %s119
      %p123 = pneg %p117
      %p124 = scmp.eq.s32.totalorder %s21, 3
      %p125 = por %p123, %p124
      %p126 = scmp.ne.s32.totalorder %s118, %s121
      %p127 = scmp.eq.s32.totalorder %s21, 0
      %p128 = por %p126, %p127
      %p129 = scmp.ne.s32.totalorder %s118, %s121
      %p130 = scmp.eq.s32.totalorder %s26, 3
      %p131 = por %p129, %p130
      %p132 = scmp.ne.s32.totalorder %s121, %s122
      %p133 = scmp.eq.s32.totalorder %s26, 0
      %p134 = por %p132, %p133
      %p135 = scmp.ne.s32.totalorder %s121, %s122
      %p136 = scmp.eq.s32.totalorder %s27, 3
      %p137 = por %p135, %p136
      %p139 = scmp.ne.s32.totalorder %s122, %s138
      %p140 = scmp.eq.s32.totalorder %s27, 0
      %p141 = por %p139, %p140
      %s142 = ssub.s32 %s28, %s40
      %p143 = scmp.eq.s32.totalorder %s142, 0
      %s145 = sadd.s32 %s144, 1
      %s146 = scalar_select %p143, %s144, %s145
      %p149 = pneg %p143
      %p150 = scmp.eq.s32.totalorder %s21, 3
      %p151 = por %p149, %p150
      %p152 = scmp.ne.s32.totalorder %s144, %s147
      %p153 = scmp.eq.s32.totalorder %s21, 0
      %p154 = por %p152, %p153
      %p155 = scmp.ne.s32.totalorder %s144, %s147
      %p156 = scmp.eq.s32.totalorder %s26, 3
      %p157 = por %p155, %p156
      %p158 = scmp.ne.s32.totalorder %s147, %s148
      %p159 = scmp.eq.s32.totalorder %s26, 0
      %p160 = por %p158, %p159
      %p161 = scmp.ne.s32.totalorder %s147, %s148
      %p162 = scmp.eq.s32.totalorder %s27, 3
      %p163 = por %p161, %p162
      %p165 = scmp.ne.s32.totalorder %s148, %s164
      %p166 = scmp.eq.s32.totalorder %s27, 0
      %p167 = por %p165, %p166
      %s168 = ssub.s32 %s28, %s40
      %p169 = scmp.eq.s32.totalorder %s168, 0
      %s171 = sadd.s32 %s170, 1
      %s172 = scalar_select %p169, %s170, %s171
      %p175 = pneg %p169
      %p176 = scmp.eq.s32.totalorder %s21, 3
      %p177 = por %p175, %p176
      %p178 = scmp.ne.s32.totalorder %s170, %s173
      %p179 = scmp.eq.s32.totalorder %s21, 0
      %p180 = por %p178, %p179
      %p181 = scmp.ne.s32.totalorder %s170, %s173
      %p182 = scmp.eq.s32.totalorder %s26, 3
      %p183 = por %p181, %p182
      %p184 = scmp.ne.s32.totalorder %s173, %s174
      %p185 = scmp.eq.s32.totalorder %s26, 0
      %p186 = por %p184, %p185
      %p187 = scmp.ne.s32.totalorder %s173, %s174
      %p188 = scmp.eq.s32.totalorder %s27, 3
      %p189 = por %p187, %p188
      %p191 = scmp.ne.s32.totalorder %s174, %s190
      %p192 = scmp.eq.s32.totalorder %s27, 0
      %p193 = por %p191, %p192
      %s195 = sadd.s32 %s194, 1
      %p198 = scmp.eq.s32.totalorder %s21, 3
      %p199 = scmp.ne.s32.totalorder %s194, %s196
      %p200 = scmp.eq.s32.totalorder %s21, 0
      %p201 = por %p199, %p200
      %p202 = scmp.ne.s32.totalorder %s194, %s196
      %p203 = scmp.eq.s32.totalorder %s26, 3
      %p204 = por %p202, %p203
      %p205 = scmp.ne.s32.totalorder %s196, %s197
      %p206 = scmp.eq.s32.totalorder %s26, 0
      %p207 = por %p205, %p206
      %p208 = scmp.ne.s32.totalorder %s196, %s197
      %p209 = scmp.eq.s32.totalorder %s27, 3
      %p210 = por %p208, %p209
      %p212 = scmp.ne.s32.totalorder %s197, %s211
      %p213 = scmp.eq.s32.totalorder %s27, 0
      %p214 = por %p212, %p213
      %s215 = ssub.s32 %s28, %s40
      %p216 = scmp.eq.s32.totalorder %s215, 0
      %s218 = sadd.s32 %s217, 1
      %s219 = scalar_select %p216, %s217, %s218
      %p222 = pneg %p216
      %p223 = scmp.eq.s32.totalorder %s21, 3
      %p224 = por %p222, %p223
      %p225 = scmp.ne.s32.totalorder %s217, %s220
      %p226 = scmp.eq.s32.totalorder %s21, 0
      %p227 = por %p225, %p226
      %p228 = scmp.ne.s32.totalorder %s217, %s220
      %p229 = scmp.eq.s32.totalorder %s26, 3
      %p230 = por %p228, %p229
      %p231 = scmp.ne.s32.totalorder %s220, %s221
      %p232 = scmp.eq.s32.totalorder %s26, 0
      %p233 = por %p231, %p232
      %p234 = scmp.ne.s32.totalorder %s220, %s221
      %p235 = scmp.eq.s32.totalorder %s27, 3
      %p236 = por %p234, %p235
      %p238 = scmp.ne.s32.totalorder %s221, %s237
      %p239 = scmp.eq.s32.totalorder %s27, 0
      %p240 = por %p238, %p239
      %s241 = ssub.s32 %s28, %s40
      %p242 = scmp.eq.s32.totalorder %s241, 0
      %s244 = sadd.s32 %s243, 1
      %s245 = scalar_select %p242, %s243, %s244
      %p248 = pneg %p242
      %p249 = scmp.eq.s32.totalorder %s21, 3
      %p250 = por %p248, %p249
      %p251 = scmp.ne.s32.totalorder %s243, %s246
      %p252 = scmp.eq.s32.totalorder %s21, 0
      %p253 = por %p251, %p252
      %p254 = scmp.ne.s32.totalorder %s243, %s246
      %p255 = scmp.eq.s32.totalorder %s26, 3
      %p256 = por %p254, %p255
      %p257 = scmp.ne.s32.totalorder %s246, %s247
      %p258 = scmp.eq.s32.totalorder %s26, 0
      %p259 = por %p257, %p258
      %p260 = scmp.ne.s32.totalorder %s246, %s247
      %p261 = scmp.eq.s32.totalorder %s27, 3
      %p262 = por %p260, %p261
      %p264 = scmp.ne.s32.totalorder %s247, %s263
      %p265 = scmp.eq.s32.totalorder %s27, 0
      %p266 = por %p264, %p265
      %s267 = ssub.s32 %s28, %s40
      %s268 = ssub.s32 %s29, %s36
      %s269 = sor.u32 %s267, %s268
      %p270 = scmp.eq.s32.totalorder %s269, 0
      %s272 = sadd.s32 %s271, 1
      %s273 = scalar_select %p270, %s271, %s272
      %p276 = pneg %p270
      %p277 = scmp.eq.s32.totalorder %s21, 3
      %p278 = por %p276, %p277
      %p279 = scmp.ne.s32.totalorder %s271, %s274
      %p280 = scmp.eq.s32.totalorder %s21, 0
      %p281 = por %p279, %p280
      %p282 = scmp.ne.s32.totalorder %s271, %s274
      %p283 = scmp.eq.s32.totalorder %s26, 3
      %p284 = por %p282, %p283
      %p285 = scmp.ne.s32.totalorder %s274, %s275
      %p286 = scmp.eq.s32.totalorder %s26, 0
      %p287 = por %p285, %p286
      %p288 = scmp.ne.s32.totalorder %s274, %s275
      %p289 = scmp.eq.s32.totalorder %s27, 3
      %p290 = por %p288, %p289
      %p292 = scmp.ne.s32.totalorder %s275, %s291
      %p293 = scmp.eq.s32.totalorder %s27, 0
      %p294 = por %p292, %p293
      %p295 = scmp.le.s32.totalorder 1, %s21
      %p296 = scmp.lt.s32.totalorder %s21, 5
      %p297 = pnand %p295, %p296
      %p298 = pneg %p297
      // Predicated region
      $region9: #{cla_forward.4} parent=5 // pred_check
        _
      $region10: #{cla_forward.4} parent=5 // pred_check_branch
        %300 = sbr.rel (%p297) target = $region12
      $region11: #{cla_forward.4} parent=5 // pred_region
        %s301 = ssub.s32 %s21, 1
        // Predicated region
        $region13: #{cla_forward.4} parent=11 // pred_check
          %p302 = pneg %p82
        $region14: #{cla_forward.4} parent=11 // pred_check_branch
          %304 = sbr.rel (%p302) target = $region16
        $region15: #{cla_forward.4} parent=11 // pred_region
          _
        $region16: #{cla_forward.4} parent=11 // pred_fallthru
          _
        // Predicated region
        $region17: #{cla_forward.4} parent=11 // pred_check
          %p305 = pneg %p207
        $region18: #{cla_forward.4} parent=11 // pred_check_branch
          %307 = sbr.rel (%p305) target = $region20
        $region19: #{cla_forward.4} parent=11 // pred_region
          _
        $region20: #{cla_forward.4} parent=11 // pred_fallthru
          _
      $region12: #{cla_forward.4} parent=5 // pred_fallthru
        _
      %p308 = scmp.lt.s32.totalorder %s21, 4
      // Predicated region
      $region21: #{cla_forward.4} parent=5 // pred_check
        %p309 = pneg %p308
      $region22: #{cla_forward.4} parent=5 // pred_check_branch
        %311 = sbr.rel (%p309) target = $region24
      $region23: #{cla_forward.4} parent=5 // pred_region
        // Predicated region
        $region25: #{cla_forward.4} parent=23 // pred_check
          %p312 = pneg %p55
        $region26: #{cla_forward.4} parent=23 // pred_check_branch
          %314 = sbr.rel (%p312) target = $region28
        $region27: #{cla_forward.4} parent=23 // pred_region
          %p315 = scmp.lt.s32.totalorder %s28, 1
          %s316 = scalar_select %p315, %s28, 1
          %p317 = scmp.lt.s32.totalorder %s29, 1
          %s318 = scalar_select %p317, %s29, 1
          %s319 = smul.addr %s316, 2
          %s320 = sadd.s32 %s318, %s319
          %s321 = smul.addr %s320, 8
          %s322 = scalar_lea.vmem %s0, %s321
        $region28: #{cla_forward.4} parent=23 // pred_fallthru
          _
        // Predicated region
        $region29: #{cla_forward.4} parent=23 // pred_check
          %p323 = pneg %p102
        $region30: #{cla_forward.4} parent=23 // pred_check_branch
          %325 = sbr.rel (%p323) target = $region32
        $region31: #{cla_forward.4} parent=23 // pred_region
          %s326 = sand.u32 %s92, 1
          %s327 = scalar_lea.sflag [#allocation3], %s326
          %s328 = sand.u32 %s92, 1
          %s329 = smul.addr %s328, 8
          %s330 = scalar_lea.vmem [#allocation2], %s329
          %s332 = ssub.s32 128, 128
          %333 = vsyncadd %s327, %s332
          %s334 = smul.addr %s28, 128
          %s335 = scalar_lea.hbm %s2, %s334
          %s337 = sshll.u32 %s330, 4
          %s338 = int_to_ptr.vmem [resolvable:$true] %s337
          %340 = dma.hbm_to_vmem [thread:$0]  %s335, 128, %s338, %s327
        $region32: #{cla_forward.4} parent=23 // pred_fallthru
          _
        // Predicated region
        $region33: #{cla_forward.4} parent=23 // pred_check
          %p341 = pneg %p128
        $region34: #{cla_forward.4} parent=23 // pred_check_branch
          %343 = sbr.rel (%p341) target = $region36
        $region35: #{cla_forward.4} parent=23 // pred_region
          %p344 = scmp.lt.s32.totalorder %s28, 1
          %s345 = scalar_select %p344, %s28, 1
          %s346 = smul.addr %s345, 8
          %s347 = scalar_lea.vmem %s3, %s346
        $region36: #{cla_forward.4} parent=23 // pred_fallthru
          _
        // Predicated region
        $region37: #{cla_forward.4} parent=23 // pred_check
          %p348 = pneg %p154
        $region38: #{cla_forward.4} parent=23 // pred_check_branch
          %350 = sbr.rel (%p348) target = $region40
        $region39: #{cla_forward.4} parent=23 // pred_region
          %s351 = sand.u32 %s21, 1
          %s352 = scalar_lea.sflag [#allocation5], %s351
          %s353 = sand.u32 %s144, 1
          %s354 = smul.addr %s353, 8
          %s355 = scalar_lea.vmem [#allocation4], %s354
          %s357 = ssub.s32 128, 128
          %358 = vsyncadd %s352, %s357
          %s359 = smul.addr %s28, 128
          %s360 = scalar_lea.hbm %s4, %s359
          %s362 = sshll.u32 %s355, 4
          %s363 = int_to_ptr.vmem [resolvable:$true] %s362
          %365 = dma.hbm_to_vmem [thread:$0]  %s360, 128, %s363, %s352
        $region40: #{cla_forward.4} parent=23 // pred_fallthru
          _
        // Predicated region
        $region41: #{cla_forward.4} parent=23 // pred_check
          %p366 = pneg %p180
        $region42: #{cla_forward.4} parent=23 // pred_check_branch
          %368 = sbr.rel (%p366) target = $region44
        $region43: #{cla_forward.4} parent=23 // pred_region
          %p369 = scmp.lt.s32.totalorder %s28, 1
          %s370 = scalar_select %p369, %s28, 1
          %s371 = smul.addr %s370, 8
          %s372 = scalar_lea.vmem %s5, %s371
        $region44: #{cla_forward.4} parent=23 // pred_fallthru
          _
        // Predicated region
        $region45: #{cla_forward.4} parent=23 // pred_check
          %p373 = pneg %p227
        $region46: #{cla_forward.4} parent=23 // pred_check_branch
          %375 = sbr.rel (%p373) target = $region48
        $region47: #{cla_forward.4} parent=23 // pred_region
          %s376 = sand.u32 %s21, 1
          %s377 = scalar_lea.sflag [#allocation5], %s376
          %s378 = sand.u32 %s217, 1
          %s379 = smul.addr %s378, 32
          %s380 = scalar_lea.vmem [#allocation6], %s379
          %s382 = ssub.s32 512, 512
          %383 = vsyncadd %s377, %s382
          %s384 = smul.addr %s28, 4
          %s385 = smul.addr %s384, 128
          %s386 = scalar_lea.hbm %s7, %s385
          %s387 = sshll.u32 %s380, 4
          %s388 = int_to_ptr.vmem [resolvable:$true] %s387
          %393 = dma.hbm_to_vmem [thread:$0]  %s386, 512, %s388, %s377, 128, 128, 8
        $region48: #{cla_forward.4} parent=23 // pred_fallthru
          _
        // Predicated region
        $region49: #{cla_forward.4} parent=23 // pred_check
          %p394 = pneg %p253
        $region50: #{cla_forward.4} parent=23 // pred_check_branch
          %396 = sbr.rel (%p394) target = $region52
        $region51: #{cla_forward.4} parent=23 // pred_region
          %p397 = scmp.lt.s32.totalorder %s28, 1
          %s398 = scalar_select %p397, %s28, 1
          %s399 = smul.addr %s398, 8
          %s400 = scalar_lea.vmem %s8, %s399
        $region52: #{cla_forward.4} parent=23 // pred_fallthru
          _
      $region24: #{cla_forward.4} parent=5 // pred_fallthru
        _
      %p401 = scmp.le.s32.totalorder 1, %s21
      %p402 = scmp.lt.s32.totalorder %s21, 5
      %p403 = pnand %p401, %p402
      %p404 = pneg %p403
      // Predicated region
      $region53: #{cla_forward.4} parent=5 // pred_check
        _
      $region54: #{cla_forward.4} parent=5 // pred_check_branch
        %406 = sbr.rel (%p403) target = $region56
      $region55: #{cla_forward.4} parent=5 // pred_region
        %s407 = ssub.s32 %s21, 1
        %s408 = sand.u32 %s95, 1
        %s409 = scalar_lea.sflag [#allocation3], %s408
        %s410 = sand.u32 %s95, 1
        %s411 = smul.addr %s410, 8
        %s412 = scalar_lea.vmem [#allocation2], %s411
        // Predicated region
        $region57: #{cla_forward.4} parent=55 // pred_check
          %p413 = pneg %p108
        $region58: #{cla_forward.4} parent=55 // pred_check_branch
          %415 = sbr.rel (%p413) target = $region60
        $region59: #{cla_forward.4} parent=55 // pred_region
          %416 = dma.done %s409, 128
        $region60: #{cla_forward.4} parent=55 // pred_fallthru
          _
        %s417 = sand.u32 %s26, 1
        %s418 = scalar_lea.sflag [#allocation5], %s417
        %s419 = sand.u32 %s147, 1
        %s420 = smul.addr %s419, 8
        %s421 = scalar_lea.vmem [#allocation4], %s420
        // Predicated region
        $region61: #{cla_forward.4} parent=55 // pred_check
          %p422 = pneg %p160
        $region62: #{cla_forward.4} parent=55 // pred_check_branch
          %424 = sbr.rel (%p422) target = $region64
        $region63: #{cla_forward.4} parent=55 // pred_region
          %425 = dma.done %s418, 128
        $region64: #{cla_forward.4} parent=55 // pred_fallthru
          _
        %s426 = sand.u32 %s26, 1
        %s427 = scalar_lea.sflag [#allocation5], %s426
        %s428 = sand.u32 %s220, 1
        %s429 = smul.addr %s428, 32
        %s430 = scalar_lea.vmem [#allocation6], %s429
        // Predicated region
        $region65: #{cla_forward.4} parent=55 // pred_check
          %p431 = pneg %p233
        $region66: #{cla_forward.4} parent=55 // pred_check_branch
          %433 = sbr.rel (%p431) target = $region68
        $region67: #{cla_forward.4} parent=55 // pred_region
          %434 = dma.done %s427, 512
        $region68: #{cla_forward.4} parent=55 // pred_fallthru
          _
        %p435 = scmp.lt.s32.totalorder %s30, 1
        %s436 = scalar_select %p435, %s30, 1
        %p437 = scmp.lt.s32.totalorder %s31, 1
        %s438 = scalar_select %p437, %s31, 1
        %s439 = smul.addr %s436, 2
        %s440 = sadd.s32 %s438, %s439
        %s441 = smul.addr %s440, 8
        %s442 = scalar_lea.vmem %s0, %s441
        %p443 = pneg %p61
        %p444 = pneg %p58
        %p445 = pneg %p82
        %p446 = pneg %p79
        %s447 = sand.u32 %s95, 1
        %s448 = scalar_lea.sflag [#allocation3], %s447
        %s449 = sand.u32 %s95, 1
        %s450 = smul.addr %s449, 8
        %s451 = scalar_lea.vmem [#allocation2], %s450
        %p452 = pneg %p108
        %p453 = pneg %p105
        %p454 = scmp.lt.s32.totalorder %s30, 1
        %s455 = scalar_select %p454, %s30, 1
        %s456 = smul.addr %s455, 8
        %s457 = scalar_lea.vmem %s3, %s456
        %p458 = pneg %p134
        %p459 = pneg %p131
        %s460 = sand.u32 %s26, 1
        %s461 = scalar_lea.sflag [#allocation5], %s460
        %s462 = sand.u32 %s147, 1
        %s463 = smul.addr %s462, 8
        %s464 = scalar_lea.vmem [#allocation4], %s463
        %p465 = pneg %p160
        %p466 = pneg %p157
        %p467 = scmp.lt.s32.totalorder %s30, 1
        %s468 = scalar_select %p467, %s30, 1
        %s469 = smul.addr %s468, 8
        %s470 = scalar_lea.vmem %s5, %s469
        %p471 = pneg %p186
        %p472 = pneg %p183
        %p473 = pneg %p207
        %p474 = pneg %p204
        %s475 = sand.u32 %s26, 1
        %s476 = scalar_lea.sflag [#allocation5], %s475
        %s477 = sand.u32 %s220, 1
        %s478 = smul.addr %s477, 32
        %s479 = scalar_lea.vmem [#allocation6], %s478
        %p480 = pneg %p233
        %p481 = pneg %p230
        %p482 = scmp.lt.s32.totalorder %s30, 1
        %s483 = scalar_select %p482, %s30, 1
        %s484 = smul.addr %s483, 8
        %s485 = scalar_lea.vmem %s8, %s484
        %p486 = pneg %p259
        %p487 = pneg %p256
        %p488 = pneg %p287
        %p489 = pneg %p284
        %p490 = scmp.lt.s32.totalorder %s30, 1
        %s491 = scalar_select %p490, %s30, 1
        %p492 = scmp.lt.s32.totalorder %s31, 1
        %s493 = scalar_select %p492, %s31, 1
        %s494 = smul.addr %s491, 2
        %s495 = sadd.s32 %s493, %s494
        %s496 = smul.addr %s495, 8
        %s497 = scalar_lea.vmem %s9, %s496
        %p498 = scmp.lt.s32.totalorder %s30, 1
        %s499 = scalar_select %p498, %s30, 1
        %p500 = scmp.lt.s32.totalorder %s31, 1
        %s501 = scalar_select %p500, %s31, 1
        %s502 = smul.addr %s499, 2
        %s503 = sadd.s32 %s501, %s502
        %s504 = smul.addr %s503, 8
        %s505 = scalar_lea.vmem %s0, %s504
        %p506 = scmp.lt.s32.totalorder %s30, 1
        %s507 = scalar_select %p506, %s30, 1
        %s508 = smul.addr %s507, 8
        %s509 = scalar_lea.vmem %s3, %s508
        %p510 = scmp.lt.s32.totalorder %s30, 1
        %s511 = scalar_select %p510, %s30, 1
        %s512 = smul.addr %s511, 8
        %s513 = scalar_lea.vmem %s5, %s512
        %p514 = scmp.lt.s32.totalorder %s30, 1
        %s515 = scalar_select %p514, %s30, 1
        %s516 = smul.addr %s515, 8
        %s517 = scalar_lea.vmem %s8, %s516
        %p518 = scmp.lt.s32.totalorder %s30, 1
        %s519 = scalar_select %p518, %s30, 1
        %p520 = scmp.lt.s32.totalorder %s31, 1
        %s521 = scalar_select %p520, %s31, 1
        %s522 = smul.addr %s519, 2
        %s523 = sadd.s32 %s521, %s522
        %s524 = smul.addr %s523, 8
        %s525 = scalar_lea.vmem %s9, %s524
        %v526 = vld [vmem:[%s505] sm:$0xff]
        %v527 = vld [vmem:[%s1] sm:$0xff]
        %v528 = vld [vmem:[%s1 + $0x8] sm:$0xff]
        %v529 = vld [vmem:[%s1 + $0x10] sm:$0xff]
        %v530 = vld [vmem:[%s1 + $0x18] sm:$0xff]
        %v531 = vld [vmem:[%s1 + $0x20] sm:$0xff]
        %v532 = vld [vmem:[%s1 + $0x28] sm:$0xff]
        %v533 = vld [vmem:[%s1 + $0x30] sm:$0xff]
        %v534 = vld [vmem:[%s1 + $0x38] sm:$0xff]
        %vm535 = vcmask 523264
        %v537 = vsel %vm535, %v526, 0
        %539 = vmatprep.subr.mxu0 0.0
        %540 = vmatpush1.msra.mxu0 %v527
        %541 = vmatprep.subr.mxu0 0.0
        %542 = vmatpush1.msra.mxu0 %v528
        %543 = vmatprep.subr.mxu0 0.0
        %544 = vmatpush1.msra.mxu0 %v529
        %545 = vmatprep.subr.mxu0 0.0
        %546 = vmatpush1.msra.mxu0 %v530
        %547 = vmatprep.subr.mxu0 0.0
        %548 = vmatpush1.msra.mxu0 %v531
        %549 = vmatprep.subr.mxu0 0.0
        %550 = vmatpush1.msra.mxu0 %v532
        %551 = vmatprep.subr.mxu0 0.0
        %552 = vmatpush1.msra.mxu0 %v533
        %553 = vmatprep.subr.mxu0 0.0
        %554 = vmatpush1.msra.mxu0 %v534
        %555 = vmatprep.subr.mxu0 0.0
        %556 = vmatpush1.msra.mxu0 0.0
        %557 = vmatprep.subr.mxu0 0.0
        %558 = vmatpush1.msra.mxu0 0.0
        %559 = vmatprep.subr.mxu0 0.0
        %560 = vmatpush1.msra.mxu0 0.0
        %561 = vmatprep.subr.mxu0 0.0
        %562 = vmatpush1.msra.mxu0 0.0
        %563 = vmatprep.subr.mxu0 0.0
        %564 = vmatpush1.msra.mxu0 0.0
        %565 = vmatprep.subr.mxu0 0.0
        %566 = vmatpush1.msra.mxu0 0.0
        %567 = vmatprep.subr.mxu0 0.0
        %568 = vmatpush1.msra.mxu0 0.0
        %569 = vmatprep.subr.mxu0 0.0
        %570 = vmatpush1.msra.mxu0 0.0
        %571 = vmatprep.subr.mxu0 0.0
        %572 = vmatpush1.msra.mxu0 0.0
        %573 = vmatprep.subr.mxu0 0.0
        %574 = vmatpush1.msra.mxu0 0.0
        %575 = vmatprep.subr.mxu0 0.0
        %576 = vmatpush1.msra.mxu0 0.0
        %577 = vmatprep.subr.mxu0 0.0
        %578 = vmatpush1.msra.mxu0 0.0
        %579 = vmatprep.subr.mxu0 0.0
        %580 = vmatpush1.msra.mxu0 0.0
        %581 = vmatprep.subr.mxu0 0.0
        %582 = vmatpush1.msra.mxu0 0.0
        %583 = vmatprep.subr.mxu0 0.0
        %584 = vmatpush1.msra.mxu0 0.0
        %585 = vmatprep.subr.mxu0 0.0
        %586 = vmatpush1.msra.mxu0 0.0
        %587 = vmatprep.subr.mxu0 0.0
        %588 = vmatpush1.msra.mxu0 0.0
        %589 = vmatprep.subr.mxu0 0.0
        %590 = vmatpush1.msra.mxu0 0.0
        %591 = vmatprep.subr.mxu0 0.0
        %592 = vmatpush1.msra.mxu0 0.0
        %593 = vmatprep.subr.mxu0 0.0
        %594 = vmatpush1.msra.mxu0 0.0
        %595 = vmatprep.subr.mxu0 0.0
        %596 = vmatpush1.msra.mxu0 0.0
        %597 = vmatprep.subr.mxu0 0.0
        %598 = vmatpush1.msra.mxu0 0.0
        %599 = vmatprep.subr.mxu0 0.0
        %600 = vmatpush1.msra.mxu0 0.0
        %601 = vmatprep.subr.mxu0 0.0
        %602 = vmatpush1.msra.mxu0 0.0
        %603 = vmatprep.mubr.f32.mxu0 0.0
        %604 = vmatmul.mubr.f32.gmra.mrb[0].mxu0 %v537
        %v605 = vpop.f32.mrb[0].mxu0
        %v606 = vadd.f32 0.0, %v605
        %v607 = vpop.f32.mrb[0].mxu0
        %608 = vdwg.mxu0
        %s609 = scalar_lea.vmem %s1, 64
        %v610 = vld [vmem:[%s609] sm:$0xff]
        %v611 = vld [vmem:[%s609 + $0x8] sm:$0xff]
        %v612 = vld [vmem:[%s609 + $0x10] sm:$0xff]
        %v613 = vld [vmem:[%s609 + $0x18] sm:$0xff]
        %v614 = vld [vmem:[%s609 + $0x20] sm:$0xff]
        %v615 = vld [vmem:[%s609 + $0x28] sm:$0xff]
        %v616 = vld [vmem:[%s609 + $0x30] sm:$0xff]
        %v617 = vld [vmem:[%s609 + $0x38] sm:$0xff]
        %618 = vmatprep.subr.mxu0 0.0
        %619 = vmatpush1.msra.mxu0 %v610
        %620 = vmatprep.subr.mxu0 0.0
        %621 = vmatpush1.msra.mxu0 %v611
        %622 = vmatprep.subr.mxu0 0.0
        %623 = vmatpush1.msra.mxu0 %v612
        %624 = vmatprep.subr.mxu0 0.0
        %625 = vmatpush1.msra.mxu0 %v613
        %626 = vmatprep.subr.mxu0 0.0
        %627 = vmatpush1.msra.mxu0 %v614
        %628 = vmatprep.subr.mxu0 0.0
        %629 = vmatpush1.msra.mxu0 %v615
        %630 = vmatprep.subr.mxu0 0.0
        %631 = vmatpush1.msra.mxu0 %v616
        %632 = vmatprep.subr.mxu0 0.0
        %633 = vmatpush1.msra.mxu0 %v617
        %634 = vmatprep.subr.mxu0 0.0
        %635 = vmatpush1.msra.mxu0 0.0
        %636 = vmatprep.subr.mxu0 0.0
        %637 = vmatpush1.msra.mxu0 0.0
        %638 = vmatprep.subr.mxu0 0.0
        %639 = vmatpush1.msra.mxu0 0.0
        %640 = vmatprep.subr.mxu0 0.0
        %641 = vmatpush1.msra.mxu0 0.0
        %642 = vmatprep.subr.mxu0 0.0
        %643 = vmatpush1.msra.mxu0 0.0
        %644 = vmatprep.subr.mxu0 0.0
        %645 = vmatpush1.msra.mxu0 0.0
        %646 = vmatprep.subr.mxu0 0.0
        %647 = vmatpush1.msra.mxu0 0.0
        %648 = vmatprep.subr.mxu0 0.0
        %649 = vmatpush1.msra.mxu0 0.0
        %650 = vmatprep.subr.mxu0 0.0
        %651 = vmatpush1.msra.mxu0 0.0
        %652 = vmatprep.subr.mxu0 0.0
        %653 = vmatpush1.msra.mxu0 0.0
        %654 = vmatprep.subr.mxu0 0.0
        %655 = vmatpush1.msra.mxu0 0.0
        %656 = vmatprep.subr.mxu0 0.0
        %657 = vmatpush1.msra.mxu0 0.0
        %658 = vmatprep.subr.mxu0 0.0
        %659 = vmatpush1.msra.mxu0 0.0
        %660 = vmatprep.subr.mxu0 0.0
        %661 = vmatpush1.msra.mxu0 0.0
        %662 = vmatprep.subr.mxu0 0.0
        %663 = vmatpush1.msra.mxu0 0.0
        %664 = vmatprep.subr.mxu0 0.0
        %665 = vmatpush1.msra.mxu0 0.0
        %666 = vmatprep.subr.mxu0 0.0
        %667 = vmatpush1.msra.mxu0 0.0
        %668 = vmatprep.subr.mxu0 0.0
        %669 = vmatpush1.msra.mxu0 0.0
        %670 = vmatprep.subr.mxu0 0.0
        %671 = vmatpush1.msra.mxu0 0.0
        %672 = vmatprep.subr.mxu0 0.0
        %673 = vmatpush1.msra.mxu0 0.0
        %674 = vmatprep.subr.mxu0 0.0
        %675 = vmatpush1.msra.mxu0 0.0
        %676 = vmatprep.subr.mxu0 0.0
        %677 = vmatpush1.msra.mxu0 0.0
        %678 = vmatprep.subr.mxu0 0.0
        %679 = vmatpush1.msra.mxu0 0.0
        %680 = vmatprep.subr.mxu0 0.0
        %681 = vmatpush1.msra.mxu0 0.0
        %682 = vmatprep.mubr.f32.mxu0 0.0
        %683 = vmatmul.mubr.f32.gmra.mrb[0].mxu0 %v537
        %v684 = vpop.f32.mrb[0].mxu0
        %v685 = vadd.f32 0.0, %v684
        %v686 = vpop.f32.mrb[0].mxu0
        %687 = vdwg.mxu0
        %s688 = scalar_lea.vmem %s1, 128
        %v689 = vld [vmem:[%s688] sm:$0xff]
        %v690 = vld [vmem:[%s688 + $0x8] sm:$0xff]
        %v691 = vld [vmem:[%s688 + $0x10] sm:$0xff]
        %v692 = vld [vmem:[%s688 + $0x18] sm:$0xff]
        %v693 = vld [vmem:[%s688 + $0x20] sm:$0xff]
        %v694 = vld [vmem:[%s688 + $0x28] sm:$0xff]
        %v695 = vld [vmem:[%s688 + $0x30] sm:$0xff]
        %v696 = vld [vmem:[%s688 + $0x38] sm:$0xff]
        %697 = vmatprep.subr.mxu0 0.0
        %698 = vmatpush1.msra.mxu0 %v689
        %699 = vmatprep.subr.mxu0 0.0
        %700 = vmatpush1.msra.mxu0 %v690
        %701 = vmatprep.subr.mxu0 0.0
        %702 = vmatpush1.msra.mxu0 %v691
        %703 = vmatprep.subr.mxu0 0.0
        %704 = vmatpush1.msra.mxu0 %v692
        %705 = vmatprep.subr.mxu0 0.0
        %706 = vmatpush1.msra.mxu0 %v693
        %707 = vmatprep.subr.mxu0 0.0
        %708 = vmatpush1.msra.mxu0 %v694
        %709 = vmatprep.subr.mxu0 0.0
        %710 = vmatpush1.msra.mxu0 %v695
        %711 = vmatprep.subr.mxu0 0.0
        %712 = vmatpush1.msra.mxu0 %v696
        %713 = vmatprep.subr.mxu0 0.0
        %714 = vmatpush1.msra.mxu0 0.0
        %715 = vmatprep.subr.mxu0 0.0
        %716 = vmatpush1.msra.mxu0 0.0
        %717 = vmatprep.subr.mxu0 0.0
        %718 = vmatpush1.msra.mxu0 0.0
        %719 = vmatprep.subr.mxu0 0.0
        %720 = vmatpush1.msra.mxu0 0.0
        %721 = vmatprep.subr.mxu0 0.0
        %722 = vmatpush1.msra.mxu0 0.0
        %723 = vmatprep.subr.mxu0 0.0
        %724 = vmatpush1.msra.mxu0 0.0
        %725 = vmatprep.subr.mxu0 0.0
        %726 = vmatpush1.msra.mxu0 0.0
        %727 = vmatprep.subr.mxu0 0.0
        %728 = vmatpush1.msra.mxu0 0.0
        %729 = vmatprep.subr.mxu0 0.0
        %730 = vmatpush1.msra.mxu0 0.0
        %731 = vmatprep.subr.mxu0 0.0
        %732 = vmatpush1.msra.mxu0 0.0
        %733 = vmatprep.subr.mxu0 0.0
        %734 = vmatpush1.msra.mxu0 0.0
        %735 = vmatprep.subr.mxu0 0.0
        %736 = vmatpush1.msra.mxu0 0.0
        %737 = vmatprep.subr.mxu0 0.0
        %738 = vmatpush1.msra.mxu0 0.0
        %739 = vmatprep.subr.mxu0 0.0
        %740 = vmatpush1.msra.mxu0 0.0
        %741 = vmatprep.subr.mxu0 0.0
        %742 = vmatpush1.msra.mxu0 0.0
        %743 = vmatprep.subr.mxu0 0.0
        %744 = vmatpush1.msra.mxu0 0.0
        %745 = vmatprep.subr.mxu0 0.0
        %746 = vmatpush1.msra.mxu0 0.0
        %747 = vmatprep.subr.mxu0 0.0
        %748 = vmatpush1.msra.mxu0 0.0
        %749 = vmatprep.subr.mxu0 0.0
        %750 = vmatpush1.msra.mxu0 0.0
        %751 = vmatprep.subr.mxu0 0.0
        %752 = vmatpush1.msra.mxu0 0.0
        %753 = vmatprep.subr.mxu0 0.0
        %754 = vmatpush1.msra.mxu0 0.0
        %755 = vmatprep.subr.mxu0 0.0
        %756 = vmatpush1.msra.mxu0 0.0
        %757 = vmatprep.subr.mxu0 0.0
        %758 = vmatpush1.msra.mxu0 0.0
        %759 = vmatprep.subr.mxu0 0.0
        %760 = vmatpush1.msra.mxu0 0.0
        %761 = vmatprep.mubr.f32.mxu0 0.0
        %762 = vmatmul.mubr.f32.gmra.mrb[0].mxu0 %v537
        %v763 = vpop.f32.mrb[0].mxu0
        %v764 = vadd.f32 0.0, %v763
        %v765 = vpop.f32.mrb[0].mxu0
        %766 = vdwg.mxu0
        %s767 = scalar_lea.vmem %s1, 192
        %v768 = vld [vmem:[%s767] sm:$0xff]
        %v769 = vld [vmem:[%s767 + $0x8] sm:$0xff]
        %v770 = vld [vmem:[%s767 + $0x10] sm:$0xff]
        %v771 = vld [vmem:[%s767 + $0x18] sm:$0xff]
        %v772 = vld [vmem:[%s767 + $0x20] sm:$0xff]
        %v773 = vld [vmem:[%s767 + $0x28] sm:$0xff]
        %v774 = vld [vmem:[%s767 + $0x30] sm:$0xff]
        %v775 = vld [vmem:[%s767 + $0x38] sm:$0xff]
        %776 = vmatprep.subr.mxu0 0.0
        %777 = vmatpush1.msra.mxu0 %v768
        %778 = vmatprep.subr.mxu0 0.0
        %779 = vmatpush1.msra.mxu0 %v769
        %780 = vmatprep.subr.mxu0 0.0
        %781 = vmatpush1.msra.mxu0 %v770
        %782 = vmatprep.subr.mxu0 0.0
        %783 = vmatpush1.msra.mxu0 %v771
        %784 = vmatprep.subr.mxu0 0.0
        %785 = vmatpush1.msra.mxu0 %v772
        %786 = vmatprep.subr.mxu0 0.0
        %787 = vmatpush1.msra.mxu0 %v773
        %788 = vmatprep.subr.mxu0 0.0
        %789 = vmatpush1.msra.mxu0 %v774
        %790 = vmatprep.subr.mxu0 0.0
        %791 = vmatpush1.msra.mxu0 %v775
        %792 = vmatprep.subr.mxu0 0.0
        %793 = vmatpush1.msra.mxu0 0.0
        %794 = vmatprep.subr.mxu0 0.0
        %795 = vmatpush1.msra.mxu0 0.0
        %796 = vmatprep.subr.mxu0 0.0
        %797 = vmatpush1.msra.mxu0 0.0
        %798 = vmatprep.subr.mxu0 0.0
        %799 = vmatpush1.msra.mxu0 0.0
        %800 = vmatprep.subr.mxu0 0.0
        %801 = vmatpush1.msra.mxu0 0.0
        %802 = vmatprep.subr.mxu0 0.0
        %803 = vmatpush1.msra.mxu0 0.0
        %804 = vmatprep.subr.mxu0 0.0
        %805 = vmatpush1.msra.mxu0 0.0
        %806 = vmatprep.subr.mxu0 0.0
        %807 = vmatpush1.msra.mxu0 0.0
        %808 = vmatprep.subr.mxu0 0.0
        %809 = vmatpush1.msra.mxu0 0.0
        %810 = vmatprep.subr.mxu0 0.0
        %811 = vmatpush1.msra.mxu0 0.0
        %812 = vmatprep.subr.mxu0 0.0
        %813 = vmatpush1.msra.mxu0 0.0
        %814 = vmatprep.subr.mxu0 0.0
        %815 = vmatpush1.msra.mxu0 0.0
        %816 = vmatprep.subr.mxu0 0.0
        %817 = vmatpush1.msra.mxu0 0.0
        %818 = vmatprep.subr.mxu0 0.0
        %819 = vmatpush1.msra.mxu0 0.0
        %820 = vmatprep.subr.mxu0 0.0
        %821 = vmatpush1.msra.mxu0 0.0
        %822 = vmatprep.subr.mxu0 0.0
        %823 = vmatpush1.msra.mxu0 0.0
        %824 = vmatprep.subr.mxu0 0.0
        %825 = vmatpush1.msra.mxu0 0.0
        %826 = vmatprep.subr.mxu0 0.0
        %827 = vmatpush1.msra.mxu0 0.0
        %828 = vmatprep.subr.mxu0 0.0
        %829 = vmatpush1.msra.mxu0 0.0
        %830 = vmatprep.subr.mxu0 0.0
        %831 = vmatpush1.msra.mxu0 0.0
        %832 = vmatprep.subr.mxu0 0.0
        %833 = vmatpush1.msra.mxu0 0.0
        %834 = vmatprep.subr.mxu0 0.0
        %835 = vmatpush1.msra.mxu0 0.0
        %836 = vmatprep.subr.mxu0 0.0
        %837 = vmatpush1.msra.mxu0 0.0
        %838 = vmatprep.subr.mxu0 0.0
        %839 = vmatpush1.msra.mxu0 0.0
        %840 = vmatprep.mubr.f32.mxu0 0.0
        %841 = vmatmul.mubr.f32.gmra.mrb[0].mxu0 %v537
        %v842 = vpop.f32.mrb[0].mxu0
        %v843 = vadd.f32 0.0, %v842
        %v844 = vpop.f32.mrb[0].mxu0
        %845 = vdwg.mxu0
        %s846 = scalar_lea.vmem %s1, 256
        %v847 = vld [vmem:[%s846] sm:$0xff]
        %v848 = vld [vmem:[%s846 + $0x8] sm:$0xff]
        %v849 = vld [vmem:[%s846 + $0x10] sm:$0xff]
        %v850 = vld [vmem:[%s846 + $0x18] sm:$0xff]
        %v851 = vld [vmem:[%s846 + $0x20] sm:$0xff]
        %v852 = vld [vmem:[%s846 + $0x28] sm:$0xff]
        %v853 = vld [vmem:[%s846 + $0x30] sm:$0xff]
        %v854 = vld [vmem:[%s846 + $0x38] sm:$0xff]
        %855 = vmatprep.subr.mxu0 0.0
        %856 = vmatpush1.msra.mxu0 %v847
        %857 = vmatprep.subr.mxu0 0.0
        %858 = vmatpush1.msra.mxu0 %v848
        %859 = vmatprep.subr.mxu0 0.0
        %860 = vmatpush1.msra.mxu0 %v849
        %861 = vmatprep.subr.mxu0 0.0
        %862 = vmatpush1.msra.mxu0 %v850
        %863 = vmatprep.subr.mxu0 0.0
        %864 = vmatpush1.msra.mxu0 %v851
        %865 = vmatprep.subr.mxu0 0.0
        %866 = vmatpush1.msra.mxu0 %v852
        %867 = vmatprep.subr.mxu0 0.0
        %868 = vmatpush1.msra.mxu0 %v853
        %869 = vmatprep.subr.mxu0 0.0
        %870 = vmatpush1.msra.mxu0 %v854
        %871 = vmatprep.subr.mxu0 0.0
        %872 = vmatpush1.msra.mxu0 0.0
        %873 = vmatprep.subr.mxu0 0.0
        %874 = vmatpush1.msra.mxu0 0.0
        %875 = vmatprep.subr.mxu0 0.0
        %876 = vmatpush1.msra.mxu0 0.0
        %877 = vmatprep.subr.mxu0 0.0
        %878 = vmatpush1.msra.mxu0 0.0
        %879 = vmatprep.subr.mxu0 0.0
        %880 = vmatpush1.msra.mxu0 0.0
        %881 = vmatprep.subr.mxu0 0.0
        %882 = vmatpush1.msra.mxu0 0.0
        %883 = vmatprep.subr.mxu0 0.0
        %884 = vmatpush1.msra.mxu0 0.0
        %885 = vmatprep.subr.mxu0 0.0
        %886 = vmatpush1.msra.mxu0 0.0
        %887 = vmatprep.subr.mxu0 0.0
        %888 = vmatpush1.msra.mxu0 0.0
        %889 = vmatprep.subr.mxu0 0.0
        %890 = vmatpush1.msra.mxu0 0.0
        %891 = vmatprep.subr.mxu0 0.0
        %892 = vmatpush1.msra.mxu0 0.0
        %893 = vmatprep.subr.mxu0 0.0
        %894 = vmatpush1.msra.mxu0 0.0
        %895 = vmatprep.subr.mxu0 0.0
        %896 = vmatpush1.msra.mxu0 0.0
        %897 = vmatprep.subr.mxu0 0.0
        %898 = vmatpush1.msra.mxu0 0.0
        %899 = vmatprep.subr.mxu0 0.0
        %900 = vmatpush1.msra.mxu0 0.0
        %901 = vmatprep.subr.mxu0 0.0
        %902 = vmatpush1.msra.mxu0 0.0
        %903 = vmatprep.subr.mxu0 0.0
        %904 = vmatpush1.msra.mxu0 0.0
        %905 = vmatprep.subr.mxu0 0.0
        %906 = vmatpush1.msra.mxu0 0.0
        %907 = vmatprep.subr.mxu0 0.0
        %908 = vmatpush1.msra.mxu0 0.0
        %909 = vmatprep.subr.mxu0 0.0
        %910 = vmatpush1.msra.mxu0 0.0
        %911 = vmatprep.subr.mxu0 0.0
        %912 = vmatpush1.msra.mxu0 0.0
        %913 = vmatprep.subr.mxu0 0.0
        %914 = vmatpush1.msra.mxu0 0.0
        %915 = vmatprep.subr.mxu0 0.0
        %916 = vmatpush1.msra.mxu0 0.0
        %917 = vmatprep.subr.mxu0 0.0
        %918 = vmatpush1.msra.mxu0 0.0
        %919 = vmatprep.mubr.f32.mxu0 0.0
        %920 = vmatmul.mubr.f32.gmra.mrb[0].mxu0 %v537
        %v921 = vpop.f32.mrb[0].mxu0
        %v922 = vadd.f32 0.0, %v921
        %v923 = vpop.f32.mrb[0].mxu0
        %924 = vdwg.mxu0
        %s925 = scalar_lea.vmem %s1, 320
        %v926 = vld [vmem:[%s925] sm:$0xff]
        %v927 = vld [vmem:[%s925 + $0x8] sm:$0xff]
        %v928 = vld [vmem:[%s925 + $0x10] sm:$0xff]
        %v929 = vld [vmem:[%s925 + $0x18] sm:$0xff]
        %v930 = vld [vmem:[%s925 + $0x20] sm:$0xff]
        %v931 = vld [vmem:[%s925 + $0x28] sm:$0xff]
        %v932 = vld [vmem:[%s925 + $0x30] sm:$0xff]
        %v933 = vld [vmem:[%s925 + $0x38] sm:$0xff]
        %934 = vmatprep.subr.mxu0 0.0
        %935 = vmatpush1.msra.mxu0 %v926
        %936 = vmatprep.subr.mxu0 0.0
        %937 = vmatpush1.msra.mxu0 %v927
        %938 = vmatprep.subr.mxu0 0.0
        %939 = vmatpush1.msra.mxu0 %v928
        %940 = vmatprep.subr.mxu0 0.0
        %941 = vmatpush1.msra.mxu0 %v929
        %942 = vmatprep.subr.mxu0 0.0
        %943 = vmatpush1.msra.mxu0 %v930
        %944 = vmatprep.subr.mxu0 0.0
        %945 = vmatpush1.msra.mxu0 %v931
        %946 = vmatprep.subr.mxu0 0.0
        %947 = vmatpush1.msra.mxu0 %v932
        %948 = vmatprep.subr.mxu0 0.0
        %949 = vmatpush1.msra.mxu0 %v933
        %950 = vmatprep.subr.mxu0 0.0
        %951 = vmatpush1.msra.mxu0 0.0
        %952 = vmatprep.subr.mxu0 0.0
        %953 = vmatpush1.msra.mxu0 0.0
        %954 = vmatprep.subr.mxu0 0.0
        %955 = vmatpush1.msra.mxu0 0.0
        %956 = vmatprep.subr.mxu0 0.0
        %957 = vmatpush1.msra.mxu0 0.0
        %958 = vmatprep.subr.mxu0 0.0
        %959 = vmatpush1.msra.mxu0 0.0
        %960 = vmatprep.subr.mxu0 0.0
        %961 = vmatpush1.msra.mxu0 0.0
        %962 = vmatprep.subr.mxu0 0.0
        %963 = vmatpush1.msra.mxu0 0.0
        %964 = vmatprep.subr.mxu0 0.0
        %965 = vmatpush1.msra.mxu0 0.0
        %966 = vmatprep.subr.mxu0 0.0
        %967 = vmatpush1.msra.mxu0 0.0
        %968 = vmatprep.subr.mxu0 0.0
        %969 = vmatpush1.msra.mxu0 0.0
        %970 = vmatprep.subr.mxu0 0.0
        %971 = vmatpush1.msra.mxu0 0.0
        %972 = vmatprep.subr.mxu0 0.0
        %973 = vmatpush1.msra.mxu0 0.0
        %974 = vmatprep.subr.mxu0 0.0
        %975 = vmatpush1.msra.mxu0 0.0
        %976 = vmatprep.subr.mxu0 0.0
        %977 = vmatpush1.msra.mxu0 0.0
        %978 = vmatprep.subr.mxu0 0.0
        %979 = vmatpush1.msra.mxu0 0.0
        %980 = vmatprep.subr.mxu0 0.0
        %981 = vmatpush1.msra.mxu0 0.0
        %982 = vmatprep.subr.mxu0 0.0
        %983 = vmatpush1.msra.mxu0 0.0
        %984 = vmatprep.subr.mxu0 0.0
        %985 = vmatpush1.msra.mxu0 0.0
        %986 = vmatprep.subr.mxu0 0.0
        %987 = vmatpush1.msra.mxu0 0.0
        %988 = vmatprep.subr.mxu0 0.0
        %989 = vmatpush1.msra.mxu0 0.0
        %990 = vmatprep.subr.mxu0 0.0
        %991 = vmatpush1.msra.mxu0 0.0
        %992 = vmatprep.subr.mxu0 0.0
        %993 = vmatpush1.msra.mxu0 0.0
        %994 = vmatprep.subr.mxu0 0.0
        %995 = vmatpush1.msra.mxu0 0.0
        %996 = vmatprep.subr.mxu0 0.0
        %997 = vmatpush1.msra.mxu0 0.0
        %998 = vmatprep.mubr.f32.mxu0 0.0
        %999 = vmatmul.mubr.f32.gmra.mrb[0].mxu0 %v537
        %v1000 = vpop.f32.mrb[0].mxu0
        %v1001 = vadd.f32 0.0, %v1000
        %v1002 = vpop.f32.mrb[0].mxu0
        %1003 = vdwg.mxu0
        %s1004 = scalar_lea.vmem %s1, 384
        %v1005 = vld [vmem:[%s1004] sm:$0xff]
        %v1006 = vld [vmem:[%s1004 + $0x8] sm:$0xff]
        %v1007 = vld [vmem:[%s1004 + $0x10] sm:$0xff]
        %v1008 = vld [vmem:[%s1004 + $0x18] sm:$0xff]
        %v1009 = vld [vmem:[%s1004 + $0x20] sm:$0xff]
        %v1010 = vld [vmem:[%s1004 + $0x28] sm:$0xff]
        %v1011 = vld [vmem:[%s1004 + $0x30] sm:$0xff]
        %v1012 = vld [vmem:[%s1004 + $0x38] sm:$0xff]
        %1013 = vmatprep.subr.mxu0 0.0
        %1014 = vmatpush1.msra.mxu0 %v1005
        %1015 = vmatprep.subr.mxu0 0.0
        %1016 = vmatpush1.msra.mxu0 %v1006
        %1017 = vmatprep.subr.mxu0 0.0
        %1018 = vmatpush1.msra.mxu0 %v1007
        %1019 = vmatprep.subr.mxu0 0.0
        %1020 = vmatpush1.msra.mxu0 %v1008
        %1021 = vmatprep.subr.mxu0 0.0
        %1022 = vmatpush1.msra.mxu0 %v1009
        %1023 = vmatprep.subr.mxu0 0.0
        %1024 = vmatpush1.msra.mxu0 %v1010
        %1025 = vmatprep.subr.mxu0 0.0
        %1026 = vmatpush1.msra.mxu0 %v1011
        %1027 = vmatprep.subr.mxu0 0.0
        %1028 = vmatpush1.msra.mxu0 %v1012
        %1029 = vmatprep.subr.mxu0 0.0
        %1030 = vmatpush1.msra.mxu0 0.0
        %1031 = vmatprep.subr.mxu0 0.0
        %1032 = vmatpush1.msra.mxu0 0.0
        %1033 = vmatprep.subr.mxu0 0.0
        %1034 = vmatpush1.msra.mxu0 0.0
        %1035 = vmatprep.subr.mxu0 0.0
        %1036 = vmatpush1.msra.mxu0 0.0
        %1037 = vmatprep.subr.mxu0 0.0
        %1038 = vmatpush1.msra.mxu0 0.0
        %1039 = vmatprep.subr.mxu0 0.0
        %1040 = vmatpush1.msra.mxu0 0.0
        %1041 = vmatprep.subr.mxu0 0.0
        %1042 = vmatpush1.msra.mxu0 0.0
        %1043 = vmatprep.subr.mxu0 0.0
        %1044 = vmatpush1.msra.mxu0 0.0
        %1045 = vmatprep.subr.mxu0 0.0
        %1046 = vmatpush1.msra.mxu0 0.0
        %1047 = vmatprep.subr.mxu0 0.0
        %1048 = vmatpush1.msra.mxu0 0.0
        %1049 = vmatprep.subr.mxu0 0.0
        %1050 = vmatpush1.msra.mxu0 0.0
        %1051 = vmatprep.subr.mxu0 0.0
        %1052 = vmatpush1.msra.mxu0 0.0
        %1053 = vmatprep.subr.mxu0 0.0
        %1054 = vmatpush1.msra.mxu0 0.0
        %1055 = vmatprep.subr.mxu0 0.0
        %1056 = vmatpush1.msra.mxu0 0.0
        %1057 = vmatprep.subr.mxu0 0.0
        %1058 = vmatpush1.msra.mxu0 0.0
        %1059 = vmatprep.subr.mxu0 0.0
        %1060 = vmatpush1.msra.mxu0 0.0
        %1061 = vmatprep.subr.mxu0 0.0
        %1062 = vmatpush1.msra.mxu0 0.0
        %1063 = vmatprep.subr.mxu0 0.0
        %1064 = vmatpush1.msra.mxu0 0.0
        %1065 = vmatprep.subr.mxu0 0.0
        %1066 = vmatpush1.msra.mxu0 0.0
        %1067 = vmatprep.subr.mxu0 0.0
        %1068 = vmatpush1.msra.mxu0 0.0
        %1069 = vmatprep.subr.mxu0 0.0
        %1070 = vmatpush1.msra.mxu0 0.0
        %1071 = vmatprep.subr.mxu0 0.0
        %1072 = vmatpush1.msra.mxu0 0.0
        %1073 = vmatprep.subr.mxu0 0.0
        %1074 = vmatpush1.msra.mxu0 0.0
        %1075 = vmatprep.subr.mxu0 0.0
        %1076 = vmatpush1.msra.mxu0 0.0
        %1077 = vmatprep.mubr.f32.mxu0 0.0
        %1078 = vmatmul.mubr.f32.gmra.mrb[0].mxu0 %v537
        %v1079 = vpop.f32.mrb[0].mxu0
        %v1080 = vadd.f32 0.0, %v1079
        %v1081 = vpop.f32.mrb[0].mxu0
        %1082 = vdwg.mxu0
        %s1083 = scalar_lea.vmem %s1, 448
        %v1084 = vld [vmem:[%s1083] sm:$0xff]
        %v1085 = vld [vmem:[%s1083 + $0x8] sm:$0xff]
        %v1086 = vld [vmem:[%s1083 + $0x10] sm:$0xff]
        %v1087 = vld [vmem:[%s1083 + $0x18] sm:$0xff]
        %v1088 = vld [vmem:[%s1083 + $0x20] sm:$0xff]
        %v1089 = vld [vmem:[%s1083 + $0x28] sm:$0xff]
        %v1090 = vld [vmem:[%s1083 + $0x30] sm:$0xff]
        %v1091 = vld [vmem:[%s1083 + $0x38] sm:$0xff]
        %1092 = vmatprep.subr.mxu0 0.0
        %1093 = vmatpush1.msra.mxu0 %v1084
        %1094 = vmatprep.subr.mxu0 0.0
        %1095 = vmatpush1.msra.mxu0 %v1085
        %1096 = vmatprep.subr.mxu0 0.0
        %1097 = vmatpush1.msra.mxu0 %v1086
        %1098 = vmatprep.subr.mxu0 0.0
        %1099 = vmatpush1.msra.mxu0 %v1087
        %1100 = vmatprep.subr.mxu0 0.0
        %1101 = vmatpush1.msra.mxu0 %v1088
        %1102 = vmatprep.subr.mxu0 0.0
        %1103 = vmatpush1.msra.mxu0 %v1089
        %1104 = vmatprep.subr.mxu0 0.0
        %1105 = vmatpush1.msra.mxu0 %v1090
        %1106 = vmatprep.subr.mxu0 0.0
        %1107 = vmatpush1.msra.mxu0 %v1091
        %1108 = vmatprep.subr.mxu0 0.0
        %1109 = vmatpush1.msra.mxu0 0.0
        %1110 = vmatprep.subr.mxu0 0.0
        %1111 = vmatpush1.msra.mxu0 0.0
        %1112 = vmatprep.subr.mxu0 0.0
        %1113 = vmatpush1.msra.mxu0 0.0
        %1114 = vmatprep.subr.mxu0 0.0
        %1115 = vmatpush1.msra.mxu0 0.0
        %1116 = vmatprep.subr.mxu0 0.0
        %1117 = vmatpush1.msra.mxu0 0.0
        %1118 = vmatprep.subr.mxu0 0.0
        %1119 = vmatpush1.msra.mxu0 0.0
        %1120 = vmatprep.subr.mxu0 0.0
        %1121 = vmatpush1.msra.mxu0 0.0
        %1122 = vmatprep.subr.mxu0 0.0
        %1123 = vmatpush1.msra.mxu0 0.0
        %1124 = vmatprep.subr.mxu0 0.0
        %1125 = vmatpush1.msra.mxu0 0.0
        %1126 = vmatprep.subr.mxu0 0.0
        %1127 = vmatpush1.msra.mxu0 0.0
        %1128 = vmatprep.subr.mxu0 0.0
        %1129 = vmatpush1.msra.mxu0 0.0
        %1130 = vmatprep.subr.mxu0 0.0
        %1131 = vmatpush1.msra.mxu0 0.0
        %1132 = vmatprep.subr.mxu0 0.0
        %1133 = vmatpush1.msra.mxu0 0.0
        %1134 = vmatprep.subr.mxu0 0.0
        %1135 = vmatpush1.msra.mxu0 0.0
        %1136 = vmatprep.subr.mxu0 0.0
        %1137 = vmatpush1.msra.mxu0 0.0
        %1138 = vmatprep.subr.mxu0 0.0
        %1139 = vmatpush1.msra.mxu0 0.0
        %1140 = vmatprep.subr.mxu0 0.0
        %1141 = vmatpush1.msra.mxu0 0.0
        %1142 = vmatprep.subr.mxu0 0.0
        %1143 = vmatpush1.msra.mxu0 0.0
        %1144 = vmatprep.subr.mxu0 0.0
        %1145 = vmatpush1.msra.mxu0 0.0
        %1146 = vmatprep.subr.mxu0 0.0
        %1147 = vmatpush1.msra.mxu0 0.0
        %1148 = vmatprep.subr.mxu0 0.0
        %1149 = vmatpush1.msra.mxu0 0.0
        %1150 = vmatprep.subr.mxu0 0.0
        %1151 = vmatpush1.msra.mxu0 0.0
        %1152 = vmatprep.subr.mxu0 0.0
        %1153 = vmatpush1.msra.mxu0 0.0
        %1154 = vmatprep.subr.mxu0 0.0
        %1155 = vmatpush1.msra.mxu0 0.0
        %1156 = vmatprep.mubr.f32.mxu0 0.0
        %1157 = vmatmul.mubr.f32.gmra.mrb[0].mxu0 %v537
        %v1158 = vpop.f32.mrb[0].mxu0
        %v1159 = vadd.f32 0.0, %v1158
        %v1160 = vpop.f32.mrb[0].mxu0
        %1161 = vdwg.mxu0
        %s1162 = scalar_lea.vmem %s1, 512
        %v1163 = vld [vmem:[%s1162] sm:$0xff]
        %v1164 = vld [vmem:[%s1162 + $0x8] sm:$0xff]
        %v1165 = vld [vmem:[%s1162 + $0x10] sm:$0xff]
        %v1166 = vld [vmem:[%s1162 + $0x18] sm:$0xff]
        %v1167 = vld [vmem:[%s1162 + $0x20] sm:$0xff]
        %v1168 = vld [vmem:[%s1162 + $0x28] sm:$0xff]
        %v1169 = vld [vmem:[%s1162 + $0x30] sm:$0xff]
        %v1170 = vld [vmem:[%s1162 + $0x38] sm:$0xff]
        %1171 = vmatprep.subr.mxu0 0.0
        %1172 = vmatpush1.msra.mxu0 %v1163
        %1173 = vmatprep.subr.mxu0 0.0
        %1174 = vmatpush1.msra.mxu0 %v1164
        %1175 = vmatprep.subr.mxu0 0.0
        %1176 = vmatpush1.msra.mxu0 %v1165
        %1177 = vmatprep.subr.mxu0 0.0
        %1178 = vmatpush1.msra.mxu0 %v1166
        %1179 = vmatprep.subr.mxu0 0.0
        %1180 = vmatpush1.msra.mxu0 %v1167
        %1181 = vmatprep.subr.mxu0 0.0
        %1182 = vmatpush1.msra.mxu0 %v1168
        %1183 = vmatprep.subr.mxu0 0.0
        %1184 = vmatpush1.msra.mxu0 %v1169
        %1185 = vmatprep.subr.mxu0 0.0
        %1186 = vmatpush1.msra.mxu0 %v1170
        %1187 = vmatprep.subr.mxu0 0.0
        %1188 = vmatpush1.msra.mxu0 0.0
        %1189 = vmatprep.subr.mxu0 0.0
        %1190 = vmatpush1.msra.mxu0 0.0
        %1191 = vmatprep.subr.mxu0 0.0
        %1192 = vmatpush1.msra.mxu0 0.0
        %1193 = vmatprep.subr.mxu0 0.0
        %1194 = vmatpush1.msra.mxu0 0.0
        %1195 = vmatprep.subr.mxu0 0.0
        %1196 = vmatpush1.msra.mxu0 0.0
        %1197 = vmatprep.subr.mxu0 0.0
        %1198 = vmatpush1.msra.mxu0 0.0
        %1199 = vmatprep.subr.mxu0 0.0
        %1200 = vmatpush1.msra.mxu0 0.0
        %1201 = vmatprep.subr.mxu0 0.0
        %1202 = vmatpush1.msra.mxu0 0.0
        %1203 = vmatprep.subr.mxu0 0.0
        %1204 = vmatpush1.msra.mxu0 0.0
        %1205 = vmatprep.subr.mxu0 0.0
        %1206 = vmatpush1.msra.mxu0 0.0
        %1207 = vmatprep.subr.mxu0 0.0
        %1208 = vmatpush1.msra.mxu0 0.0
        %1209 = vmatprep.subr.mxu0 0.0
        %1210 = vmatpush1.msra.mxu0 0.0
        %1211 = vmatprep.subr.mxu0 0.0
        %1212 = vmatpush1.msra.mxu0 0.0
        %1213 = vmatprep.subr.mxu0 0.0
        %1214 = vmatpush1.msra.mxu0 0.0
        %1215 = vmatprep.subr.mxu0 0.0
        %1216 = vmatpush1.msra.mxu0 0.0
        %1217 = vmatprep.subr.mxu0 0.0
        %1218 = vmatpush1.msra.mxu0 0.0
        %1219 = vmatprep.subr.mxu0 0.0
        %1220 = vmatpush1.msra.mxu0 0.0
        %1221 = vmatprep.subr.mxu0 0.0
        %1222 = vmatpush1.msra.mxu0 0.0
        %1223 = vmatprep.subr.mxu0 0.0
        %1224 = vmatpush1.msra.mxu0 0.0
        %1225 = vmatprep.subr.mxu0 0.0
        %1226 = vmatpush1.msra.mxu0 0.0
        %1227 = vmatprep.subr.mxu0 0.0
        %1228 = vmatpush1.msra.mxu0 0.0
        %1229 = vmatprep.subr.mxu0 0.0
        %1230 = vmatpush1.msra.mxu0 0.0
        %1231 = vmatprep.subr.mxu0 0.0
        %1232 = vmatpush1.msra.mxu0 0.0
        %1233 = vmatprep.subr.mxu0 0.0
        %1234 = vmatpush1.msra.mxu0 0.0
        %1235 = vmatprep.mubr.f32.mxu0 0.0
        %1236 = vmatmul.mubr.f32.gmra.mrb[0].mxu0 %v537
        %v1237 = vpop.f32.mrb[0].mxu0
        %v1238 = vadd.f32 0.0, %v1237
        %v1239 = vpop.f32.mrb[0].mxu0
        %1240 = vdwg.mxu0
        %v1241 = vld [vmem:[%s509] sm:$0xff]
        %v1242 = vld [vmem:[%s412] sm:$0xff]
        %1244 = vset.pattern.permute.xlu0 0
        %1245 = vperm.xlu0 %1244, %v1241
        %v1246 = vpop.permute.xlu0 %1245
        %vm1248 = vcmask 588800
        %v1250 = vsel %vm1248, %v1242, 0
        %1252 = vmatprep.subr.mxu0 0.0
        %1253 = vmatpush1.msra.mxu0 %v606
        %1254 = vmatprep.subr.mxu0 0.0
        %1255 = vmatpush1.msra.mxu0 %v685
        %1256 = vmatprep.subr.mxu0 0.0
        %1257 = vmatpush1.msra.mxu0 %v764
        %1258 = vmatprep.subr.mxu0 0.0
        %1259 = vmatpush1.msra.mxu0 %v843
        %1260 = vmatprep.subr.mxu0 0.0
        %1261 = vmatpush1.msra.mxu0 %v922
        %1262 = vmatprep.subr.mxu0 0.0
        %1263 = vmatpush1.msra.mxu0 %v1001
        %1264 = vmatprep.subr.mxu0 0.0
        %1265 = vmatpush1.msra.mxu0 %v1080
        %1266 = vmatprep.subr.mxu0 0.0
        %1267 = vmatpush1.msra.mxu0 %v1159
        %1268 = vmatprep.subr.mxu0 0.0
        %1269 = vmatpush1.msra.mxu0 %v1238
        %1270 = vmatprep.subr.mxu0 0.0
        %1271 = vmatpush1.msra.mxu0 0.0
        %1272 = vmatprep.subr.mxu0 0.0
        %1273 = vmatpush1.msra.mxu0 0.0
        %1274 = vmatprep.subr.mxu0 0.0
        %1275 = vmatpush1.msra.mxu0 0.0
        %1276 = vmatprep.subr.mxu0 0.0
        %1277 = vmatpush1.msra.mxu0 0.0
        %1278 = vmatprep.subr.mxu0 0.0
        %1279 = vmatpush1.msra.mxu0 0.0
        %1280 = vmatprep.subr.mxu0 0.0
        %1281 = vmatpush1.msra.mxu0 0.0
        %1282 = vmatprep.subr.mxu0 0.0
        %1283 = vmatpush1.msra.mxu0 0.0
        %1284 = vmatprep.subr.mxu0 0.0
        %1285 = vmatpush1.msra.mxu0 0.0
        %1286 = vmatprep.subr.mxu0 0.0
        %1287 = vmatpush1.msra.mxu0 0.0
        %1288 = vmatprep.subr.mxu0 0.0
        %1289 = vmatpush1.msra.mxu0 0.0
        %1290 = vmatprep.subr.mxu0 0.0
        %1291 = vmatpush1.msra.mxu0 0.0
        %1292 = vmatprep.subr.mxu0 0.0
        %1293 = vmatpush1.msra.mxu0 0.0
        %1294 = vmatprep.subr.mxu0 0.0
        %1295 = vmatpush1.msra.mxu0 0.0
        %1296 = vmatprep.subr.mxu0 0.0
        %1297 = vmatpush1.msra.mxu0 0.0
        %1298 = vmatprep.subr.mxu0 0.0
        %1299 = vmatpush1.msra.mxu0 0.0
        %1300 = vmatprep.subr.mxu0 0.0
        %1301 = vmatpush1.msra.mxu0 0.0
        %1302 = vmatprep.subr.mxu0 0.0
        %1303 = vmatpush1.msra.mxu0 0.0
        %1304 = vmatprep.subr.mxu0 0.0
        %1305 = vmatpush1.msra.mxu0 0.0
        %1306 = vmatprep.subr.mxu0 0.0
        %1307 = vmatpush1.msra.mxu0 0.0
        %1308 = vmatprep.subr.mxu0 0.0
        %1309 = vmatpush1.msra.mxu0 0.0
        %1310 = vmatprep.subr.mxu0 0.0
        %1311 = vmatpush1.msra.mxu0 0.0
        %1312 = vmatprep.subr.mxu0 0.0
        %1313 = vmatpush1.msra.mxu0 0.0
        %1314 = vmatprep.subr.mxu0 0.0
        %1315 = vmatpush1.msra.mxu0 0.0
        %1316 = vmatprep.mubr.f32.mxu0 0.0
        %1317 = vmatmul.mubr.f32.gmra.mrb[0].mxu0 %v1250
        %v1318 = vpop.f32.mrb[0].mxu0
        %v1319 = vadd.f32 %v1246, %v1318
        %v1320 = vpop.f32.mrb[0].mxu0
        %1321 = vdwg.mxu0
        %v1322 = vsel %vm535, %v1319, 0.0
        %1323 = vadd.xlane.f32.xlu0 %v1322
        %v1324 = vpop.xlane.xlu0 %1323
        %v1325 = vrot.slane %v1324, 4
        %v1326 = vadd.f32 %v1324, %v1325
        %v1327 = vrot.slane %v1326, 2
        %v1328 = vadd.f32 %v1326, %v1327
        %v1329 = vrot.slane %v1328, 1
        %v1330 = vadd.f32 %v1328, %v1329
        %s1331 = vtos %v1330
        %v1332 = vstv %s1331
        %v1333 = vrcp.pop 512.0
        %v1334 = vmul.f32 %v1332, %v1333
        %v1335 = vsub.f32 %v1319, %v1334
        %v1336 = vmul.f32 %v1335, %v1335
        %v1337 = vsel %vm535, %v1336, 0.0
        %1338 = vadd.xlane.f32.xlu0 %v1337
        %v1339 = vpop.xlane.xlu0 %1338
        %v1340 = vrot.slane %v1339, 4
        %v1341 = vadd.f32 %v1339, %v1340
        %v1342 = vrot.slane %v1341, 2
        %v1343 = vadd.f32 %v1341, %v1342
        %v1344 = vrot.slane %v1343, 1
        %v1345 = vadd.f32 %v1343, %v1344
        %s1346 = vtos %v1345
        %v1347 = vstv %s1346
        %v1348 = vmul.f32 %v1347, %v1333
        %v1349 = vadd.f32 %v1348, 1e-05
        %v1350 = vrsqrt.pop %v1349
        %v1351 = vmul.f32 %v1335, %v1350
        %1352 = vset.pattern.permute.xlu0 1
        %1353 = vperm.xlu0 %1352, %v1241
        %v1354 = vpop.permute.xlu0 %1353
        %v1356 = vmul.f32 %v1351, %v1354
        %1357 = vset.pattern.permute.xlu0 2
        %1358 = vperm.xlu0 %1357, %v1241
        %v1359 = vpop.permute.xlu0 %1358
        %v1361 = vadd.f32 %v1356, %v1359
        %v1362 = vmax.f32 %v1361, 0.0
        %v1364 = vsel %vm535, %v1362, 0
        %1366 = vmatprep.subr.mxu0 0.0
        %1367 = vmatpush1.msra.mxu0 %v527
        %1368 = vmatprep.subr.mxu0 0.0
        %1369 = vmatpush1.msra.mxu0 %v528
        %1370 = vmatprep.subr.mxu0 0.0
        %1371 = vmatpush1.msra.mxu0 %v529
        %1372 = vmatprep.subr.mxu0 0.0
        %1373 = vmatpush1.msra.mxu0 %v530
        %1374 = vmatprep.subr.mxu0 0.0
        %1375 = vmatpush1.msra.mxu0 %v531
        %1376 = vmatprep.subr.mxu0 0.0
        %1377 = vmatpush1.msra.mxu0 %v532
        %1378 = vmatprep.subr.mxu0 0.0
        %1379 = vmatpush1.msra.mxu0 %v533
        %1380 = vmatprep.subr.mxu0 0.0
        %1381 = vmatpush1.msra.mxu0 %v534
        %1382 = vmatprep.subr.mxu0 0.0
        %1383 = vmatpush1.msra.mxu0 0.0
        %1384 = vmatprep.subr.mxu0 0.0
        %1385 = vmatpush1.msra.mxu0 0.0
        %1386 = vmatprep.subr.mxu0 0.0
        %1387 = vmatpush1.msra.mxu0 0.0
        %1388 = vmatprep.subr.mxu0 0.0
        %1389 = vmatpush1.msra.mxu0 0.0
        %1390 = vmatprep.subr.mxu0 0.0
        %1391 = vmatpush1.msra.mxu0 0.0
        %1392 = vmatprep.subr.mxu0 0.0
        %1393 = vmatpush1.msra.mxu0 0.0
        %1394 = vmatprep.subr.mxu0 0.0
        %1395 = vmatpush1.msra.mxu0 0.0
        %1396 = vmatprep.subr.mxu0 0.0
        %1397 = vmatpush1.msra.mxu0 0.0
        %1398 = vmatprep.subr.mxu0 0.0
        %1399 = vmatpush1.msra.mxu0 0.0
        %1400 = vmatprep.subr.mxu0 0.0
        %1401 = vmatpush1.msra.mxu0 0.0
        %1402 = vmatprep.subr.mxu0 0.0
        %1403 = vmatpush1.msra.mxu0 0.0
        %1404 = vmatprep.subr.mxu0 0.0
        %1405 = vmatpush1.msra.mxu0 0.0
        %1406 = vmatprep.subr.mxu0 0.0
        %1407 = vmatpush1.msra.mxu0 0.0
        %1408 = vmatprep.subr.mxu0 0.0
        %1409 = vmatpush1.msra.mxu0 0.0
        %1410 = vmatprep.subr.mxu0 0.0
        %1411 = vmatpush1.msra.mxu0 0.0
        %1412 = vmatprep.subr.mxu0 0.0
        %1413 = vmatpush1.msra.mxu0 0.0
        %1414 = vmatprep.subr.mxu0 0.0
        %1415 = vmatpush1.msra.mxu0 0.0
        %1416 = vmatprep.subr.mxu0 0.0
        %1417 = vmatpush1.msra.mxu0 0.0
        %1418 = vmatprep.subr.mxu0 0.0
        %1419 = vmatpush1.msra.mxu0 0.0
        %1420 = vmatprep.subr.mxu0 0.0
        %1421 = vmatpush1.msra.mxu0 0.0
        %1422 = vmatprep.subr.mxu0 0.0
        %1423 = vmatpush1.msra.mxu0 0.0
        %1424 = vmatprep.subr.mxu0 0.0
        %1425 = vmatpush1.msra.mxu0 0.0
        %1426 = vmatprep.subr.mxu0 0.0
        %1427 = vmatpush1.msra.mxu0 0.0
        %1428 = vmatprep.subr.mxu0 0.0
        %1429 = vmatpush1.msra.mxu0 0.0
        %1430 = vmatprep.mubr.f32.mxu0 0.0
        %1431 = vmatmul.mubr.f32.gmra.mrb[0].mxu0 %v1364
        %v1432 = vpop.f32.mrb[0].mxu0
        %v1433 = vadd.f32 0.0, %v1432
        %v1434 = vpop.f32.mrb[0].mxu0
        %1435 = vdwg.mxu0
        %1436 = vmatprep.subr.mxu0 0.0
        %1437 = vmatpush1.msra.mxu0 %v610
        %1438 = vmatprep.subr.mxu0 0.0
        %1439 = vmatpush1.msra.mxu0 %v611
        %1440 = vmatprep.subr.mxu0 0.0
        %1441 = vmatpush1.msra.mxu0 %v612
        %1442 = vmatprep.subr.mxu0 0.0
        %1443 = vmatpush1.msra.mxu0 %v613
        %1444 = vmatprep.subr.mxu0 0.0
        %1445 = vmatpush1.msra.mxu0 %v614
        %1446 = vmatprep.subr.mxu0 0.0
        %1447 = vmatpush1.msra.mxu0 %v615
        %1448 = vmatprep.subr.mxu0 0.0
        %1449 = vmatpush1.msra.mxu0 %v616
        %1450 = vmatprep.subr.mxu0 0.0
        %1451 = vmatpush1.msra.mxu0 %v617
        %1452 = vmatprep.subr.mxu0 0.0
        %1453 = vmatpush1.msra.mxu0 0.0
        %1454 = vmatprep.subr.mxu0 0.0
        %1455 = vmatpush1.msra.mxu0 0.0
        %1456 = vmatprep.subr.mxu0 0.0
        %1457 = vmatpush1.msra.mxu0 0.0
        %1458 = vmatprep.subr.mxu0 0.0
        %1459 = vmatpush1.msra.mxu0 0.0
        %1460 = vmatprep.subr.mxu0 0.0
        %1461 = vmatpush1.msra.mxu0 0.0
        %1462 = vmatprep.subr.mxu0 0.0
        %1463 = vmatpush1.msra.mxu0 0.0
        %1464 = vmatprep.subr.mxu0 0.0
        %1465 = vmatpush1.msra.mxu0 0.0
        %1466 = vmatprep.subr.mxu0 0.0
        %1467 = vmatpush1.msra.mxu0 0.0
        %1468 = vmatprep.subr.mxu0 0.0
        %1469 = vmatpush1.msra.mxu0 0.0
        %1470 = vmatprep.subr.mxu0 0.0
        %1471 = vmatpush1.msra.mxu0 0.0
        %1472 = vmatprep.subr.mxu0 0.0
        %1473 = vmatpush1.msra.mxu0 0.0
        %1474 = vmatprep.subr.mxu0 0.0
        %1475 = vmatpush1.msra.mxu0 0.0
        %1476 = vmatprep.subr.mxu0 0.0
        %1477 = vmatpush1.msra.mxu0 0.0
        %1478 = vmatprep.subr.mxu0 0.0
        %1479 = vmatpush1.msra.mxu0 0.0
        %1480 = vmatprep.subr.mxu0 0.0
        %1481 = vmatpush1.msra.mxu0 0.0
        %1482 = vmatprep.subr.mxu0 0.0
        %1483 = vmatpush1.msra.mxu0 0.0
        %1484 = vmatprep.subr.mxu0 0.0
        %1485 = vmatpush1.msra.mxu0 0.0
        %1486 = vmatprep.subr.mxu0 0.0
        %1487 = vmatpush1.msra.mxu0 0.0
        %1488 = vmatprep.subr.mxu0 0.0
        %1489 = vmatpush1.msra.mxu0 0.0
        %1490 = vmatprep.subr.mxu0 0.0
        %1491 = vmatpush1.msra.mxu0 0.0
        %1492 = vmatprep.subr.mxu0 0.0
        %1493 = vmatpush1.msra.mxu0 0.0
        %1494 = vmatprep.subr.mxu0 0.0
        %1495 = vmatpush1.msra.mxu0 0.0
        %1496 = vmatprep.subr.mxu0 0.0
        %1497 = vmatpush1.msra.mxu0 0.0
        %1498 = vmatprep.subr.mxu0 0.0
        %1499 = vmatpush1.msra.mxu0 0.0
        %1500 = vmatprep.mubr.f32.mxu0 0.0
        %1501 = vmatmul.mubr.f32.gmra.mrb[0].mxu0 %v1364
        %v1502 = vpop.f32.mrb[0].mxu0
        %v1503 = vadd.f32 0.0, %v1502
        %v1504 = vpop.f32.mrb[0].mxu0
        %1505 = vdwg.mxu0
        %1506 = vmatprep.subr.mxu0 0.0
        %1507 = vmatpush1.msra.mxu0 %v689
        %1508 = vmatprep.subr.mxu0 0.0
        %1509 = vmatpush1.msra.mxu0 %v690
        %1510 = vmatprep.subr.mxu0 0.0
        %1511 = vmatpush1.msra.mxu0 %v691
        %1512 = vmatprep.subr.mxu0 0.0
        %1513 = vmatpush1.msra.mxu0 %v692
        %1514 = vmatprep.subr.mxu0 0.0
        %1515 = vmatpush1.msra.mxu0 %v693
        %1516 = vmatprep.subr.mxu0 0.0
        %1517 = vmatpush1.msra.mxu0 %v694
        %1518 = vmatprep.subr.mxu0 0.0
        %1519 = vmatpush1.msra.mxu0 %v695
        %1520 = vmatprep.subr.mxu0 0.0
        %1521 = vmatpush1.msra.mxu0 %v696
        %1522 = vmatprep.subr.mxu0 0.0
        %1523 = vmatpush1.msra.mxu0 0.0
        %1524 = vmatprep.subr.mxu0 0.0
        %1525 = vmatpush1.msra.mxu0 0.0
        %1526 = vmatprep.subr.mxu0 0.0
        %1527 = vmatpush1.msra.mxu0 0.0
        %1528 = vmatprep.subr.mxu0 0.0
        %1529 = vmatpush1.msra.mxu0 0.0
        %1530 = vmatprep.subr.mxu0 0.0
        %1531 = vmatpush1.msra.mxu0 0.0
        %1532 = vmatprep.subr.mxu0 0.0
        %1533 = vmatpush1.msra.mxu0 0.0
        %1534 = vmatprep.subr.mxu0 0.0
        %1535 = vmatpush1.msra.mxu0 0.0
        %1536 = vmatprep.subr.mxu0 0.0
        %1537 = vmatpush1.msra.mxu0 0.0
        %1538 = vmatprep.subr.mxu0 0.0
        %1539 = vmatpush1.msra.mxu0 0.0
        %1540 = vmatprep.subr.mxu0 0.0
        %1541 = vmatpush1.msra.mxu0 0.0
        %1542 = vmatprep.subr.mxu0 0.0
        %1543 = vmatpush1.msra.mxu0 0.0
        %1544 = vmatprep.subr.mxu0 0.0
        %1545 = vmatpush1.msra.mxu0 0.0
        %1546 = vmatprep.subr.mxu0 0.0
        %1547 = vmatpush1.msra.mxu0 0.0
        %1548 = vmatprep.subr.mxu0 0.0
        %1549 = vmatpush1.msra.mxu0 0.0
        %1550 = vmatprep.subr.mxu0 0.0
        %1551 = vmatpush1.msra.mxu0 0.0
        %1552 = vmatprep.subr.mxu0 0.0
        %1553 = vmatpush1.msra.mxu0 0.0
        %1554 = vmatprep.subr.mxu0 0.0
        %1555 = vmatpush1.msra.mxu0 0.0
        %1556 = vmatprep.subr.mxu0 0.0
        %1557 = vmatpush1.msra.mxu0 0.0
        %1558 = vmatprep.subr.mxu0 0.0
        %1559 = vmatpush1.msra.mxu0 0.0
        %1560 = vmatprep.subr.mxu0 0.0
        %1561 = vmatpush1.msra.mxu0 0.0
        %1562 = vmatprep.subr.mxu0 0.0
        %1563 = vmatpush1.msra.mxu0 0.0
        %1564 = vmatprep.subr.mxu0 0.0
        %1565 = vmatpush1.msra.mxu0 0.0
        %1566 = vmatprep.subr.mxu0 0.0
        %1567 = vmatpush1.msra.mxu0 0.0
        %1568 = vmatprep.subr.mxu0 0.0
        %1569 = vmatpush1.msra.mxu0 0.0
        %1570 = vmatprep.mubr.f32.mxu0 0.0
        %1571 = vmatmul.mubr.f32.gmra.mrb[0].mxu0 %v1364
        %v1572 = vpop.f32.mrb[0].mxu0
        %v1573 = vadd.f32 0.0, %v1572
        %v1574 = vpop.f32.mrb[0].mxu0
        %1575 = vdwg.mxu0
        %1576 = vmatprep.subr.mxu0 0.0
        %1577 = vmatpush1.msra.mxu0 %v768
        %1578 = vmatprep.subr.mxu0 0.0
        %1579 = vmatpush1.msra.mxu0 %v769
        %1580 = vmatprep.subr.mxu0 0.0
        %1581 = vmatpush1.msra.mxu0 %v770
        %1582 = vmatprep.subr.mxu0 0.0
        %1583 = vmatpush1.msra.mxu0 %v771
        %1584 = vmatprep.subr.mxu0 0.0
        %1585 = vmatpush1.msra.mxu0 %v772
        %1586 = vmatprep.subr.mxu0 0.0
        %1587 = vmatpush1.msra.mxu0 %v773
        %1588 = vmatprep.subr.mxu0 0.0
        %1589 = vmatpush1.msra.mxu0 %v774
        %1590 = vmatprep.subr.mxu0 0.0
        %1591 = vmatpush1.msra.mxu0 %v775
        %1592 = vmatprep.subr.mxu0 0.0
        %1593 = vmatpush1.msra.mxu0 0.0
        %1594 = vmatprep.subr.mxu0 0.0
        %1595 = vmatpush1.msra.mxu0 0.0
        %1596 = vmatprep.subr.mxu0 0.0
        %1597 = vmatpush1.msra.mxu0 0.0
        %1598 = vmatprep.subr.mxu0 0.0
        %1599 = vmatpush1.msra.mxu0 0.0
        %1600 = vmatprep.subr.mxu0 0.0
        %1601 = vmatpush1.msra.mxu0 0.0
        %1602 = vmatprep.subr.mxu0 0.0
        %1603 = vmatpush1.msra.mxu0 0.0
        %1604 = vmatprep.subr.mxu0 0.0
        %1605 = vmatpush1.msra.mxu0 0.0
        %1606 = vmatprep.subr.mxu0 0.0
        %1607 = vmatpush1.msra.mxu0 0.0
        %1608 = vmatprep.subr.mxu0 0.0
        %1609 = vmatpush1.msra.mxu0 0.0
        %1610 = vmatprep.subr.mxu0 0.0
        %1611 = vmatpush1.msra.mxu0 0.0
        %1612 = vmatprep.subr.mxu0 0.0
        %1613 = vmatpush1.msra.mxu0 0.0
        %1614 = vmatprep.subr.mxu0 0.0
        %1615 = vmatpush1.msra.mxu0 0.0
        %1616 = vmatprep.subr.mxu0 0.0
        %1617 = vmatpush1.msra.mxu0 0.0
        %1618 = vmatprep.subr.mxu0 0.0
        %1619 = vmatpush1.msra.mxu0 0.0
        %1620 = vmatprep.subr.mxu0 0.0
        %1621 = vmatpush1.msra.mxu0 0.0
        %1622 = vmatprep.subr.mxu0 0.0
        %1623 = vmatpush1.msra.mxu0 0.0
        %1624 = vmatprep.subr.mxu0 0.0
        %1625 = vmatpush1.msra.mxu0 0.0
        %1626 = vmatprep.subr.mxu0 0.0
        %1627 = vmatpush1.msra.mxu0 0.0
        %1628 = vmatprep.subr.mxu0 0.0
        %1629 = vmatpush1.msra.mxu0 0.0
        %1630 = vmatprep.subr.mxu0 0.0
        %1631 = vmatpush1.msra.mxu0 0.0
        %1632 = vmatprep.subr.mxu0 0.0
        %1633 = vmatpush1.msra.mxu0 0.0
        %1634 = vmatprep.subr.mxu0 0.0
        %1635 = vmatpush1.msra.mxu0 0.0
        %1636 = vmatprep.subr.mxu0 0.0
        %1637 = vmatpush1.msra.mxu0 0.0
        %1638 = vmatprep.subr.mxu0 0.0
        %1639 = vmatpush1.msra.mxu0 0.0
        %1640 = vmatprep.mubr.f32.mxu0 0.0
        %1641 = vmatmul.mubr.f32.gmra.mrb[0].mxu0 %v1364
        %v1642 = vpop.f32.mrb[0].mxu0
        %v1643 = vadd.f32 0.0, %v1642
        %v1644 = vpop.f32.mrb[0].mxu0
        %1645 = vdwg.mxu0
        %1646 = vmatprep.subr.mxu0 0.0
        %1647 = vmatpush1.msra.mxu0 %v847
        %1648 = vmatprep.subr.mxu0 0.0
        %1649 = vmatpush1.msra.mxu0 %v848
        %1650 = vmatprep.subr.mxu0 0.0
        %1651 = vmatpush1.msra.mxu0 %v849
        %1652 = vmatprep.subr.mxu0 0.0
        %1653 = vmatpush1.msra.mxu0 %v850
        %1654 = vmatprep.subr.mxu0 0.0
        %1655 = vmatpush1.msra.mxu0 %v851
        %1656 = vmatprep.subr.mxu0 0.0
        %1657 = vmatpush1.msra.mxu0 %v852
        %1658 = vmatprep.subr.mxu0 0.0
        %1659 = vmatpush1.msra.mxu0 %v853
        %1660 = vmatprep.subr.mxu0 0.0
        %1661 = vmatpush1.msra.mxu0 %v854
        %1662 = vmatprep.subr.mxu0 0.0
        %1663 = vmatpush1.msra.mxu0 0.0
        %1664 = vmatprep.subr.mxu0 0.0
        %1665 = vmatpush1.msra.mxu0 0.0
        %1666 = vmatprep.subr.mxu0 0.0
        %1667 = vmatpush1.msra.mxu0 0.0
        %1668 = vmatprep.subr.mxu0 0.0
        %1669 = vmatpush1.msra.mxu0 0.0
        %1670 = vmatprep.subr.mxu0 0.0
        %1671 = vmatpush1.msra.mxu0 0.0
        %1672 = vmatprep.subr.mxu0 0.0
        %1673 = vmatpush1.msra.mxu0 0.0
        %1674 = vmatprep.subr.mxu0 0.0
        %1675 = vmatpush1.msra.mxu0 0.0
        %1676 = vmatprep.subr.mxu0 0.0
        %1677 = vmatpush1.msra.mxu0 0.0
        %1678 = vmatprep.subr.mxu0 0.0
        %1679 = vmatpush1.msra.mxu0 0.0
        %1680 = vmatprep.subr.mxu0 0.0
        %1681 = vmatpush1.msra.mxu0 0.0
        %1682 = vmatprep.subr.mxu0 0.0
        %1683 = vmatpush1.msra.mxu0 0.0
        %1684 = vmatprep.subr.mxu0 0.0
        %1685 = vmatpush1.msra.mxu0 0.0
        %1686 = vmatprep.subr.mxu0 0.0
        %1687 = vmatpush1.msra.mxu0 0.0
        %1688 = vmatprep.subr.mxu0 0.0
        %1689 = vmatpush1.msra.mxu0 0.0
        %1690 = vmatprep.subr.mxu0 0.0
        %1691 = vmatpush1.msra.mxu0 0.0
        %1692 = vmatprep.subr.mxu0 0.0
        %1693 = vmatpush1.msra.mxu0 0.0
        %1694 = vmatprep.subr.mxu0 0.0
        %1695 = vmatpush1.msra.mxu0 0.0
        %1696 = vmatprep.subr.mxu0 0.0
        %1697 = vmatpush1.msra.mxu0 0.0
        %1698 = vmatprep.subr.mxu0 0.0
        %1699 = vmatpush1.msra.mxu0 0.0
        %1700 = vmatprep.subr.mxu0 0.0
        %1701 = vmatpush1.msra.mxu0 0.0
        %1702 = vmatprep.subr.mxu0 0.0
        %1703 = vmatpush1.msra.mxu0 0.0
        %1704 = vmatprep.subr.mxu0 0.0
        %1705 = vmatpush1.msra.mxu0 0.0
        %1706 = vmatprep.subr.mxu0 0.0
        %1707 = vmatpush1.msra.mxu0 0.0
        %1708 = vmatprep.subr.mxu0 0.0
        %1709 = vmatpush1.msra.mxu0 0.0
        %1710 = vmatprep.mubr.f32.mxu0 0.0
        %1711 = vmatmul.mubr.f32.gmra.mrb[0].mxu0 %v1364
        %v1712 = vpop.f32.mrb[0].mxu0
        %v1713 = vadd.f32 0.0, %v1712
        %v1714 = vpop.f32.mrb[0].mxu0
        %1715 = vdwg.mxu0
        %1716 = vmatprep.subr.mxu0 0.0
        %1717 = vmatpush1.msra.mxu0 %v926
        %1718 = vmatprep.subr.mxu0 0.0
        %1719 = vmatpush1.msra.mxu0 %v927
        %1720 = vmatprep.subr.mxu0 0.0
        %1721 = vmatpush1.msra.mxu0 %v928
        %1722 = vmatprep.subr.mxu0 0.0
        %1723 = vmatpush1.msra.mxu0 %v929
        %1724 = vmatprep.subr.mxu0 0.0
        %1725 = vmatpush1.msra.mxu0 %v930
        %1726 = vmatprep.subr.mxu0 0.0
        %1727 = vmatpush1.msra.mxu0 %v931
        %1728 = vmatprep.subr.mxu0 0.0
        %1729 = vmatpush1.msra.mxu0 %v932
        %1730 = vmatprep.subr.mxu0 0.0
        %1731 = vmatpush1.msra.mxu0 %v933
        %1732 = vmatprep.subr.mxu0 0.0
        %1733 = vmatpush1.msra.mxu0 0.0
        %1734 = vmatprep.subr.mxu0 0.0
        %1735 = vmatpush1.msra.mxu0 0.0
        %1736 = vmatprep.subr.mxu0 0.0
        %1737 = vmatpush1.msra.mxu0 0.0
        %1738 = vmatprep.subr.mxu0 0.0
        %1739 = vmatpush1.msra.mxu0 0.0
        %1740 = vmatprep.subr.mxu0 0.0
        %1741 = vmatpush1.msra.mxu0 0.0
        %1742 = vmatprep.subr.mxu0 0.0
        %1743 = vmatpush1.msra.mxu0 0.0
        %1744 = vmatprep.subr.mxu0 0.0
        %1745 = vmatpush1.msra.mxu0 0.0
        %1746 = vmatprep.subr.mxu0 0.0
        %1747 = vmatpush1.msra.mxu0 0.0
        %1748 = vmatprep.subr.mxu0 0.0
        %1749 = vmatpush1.msra.mxu0 0.0
        %1750 = vmatprep.subr.mxu0 0.0
        %1751 = vmatpush1.msra.mxu0 0.0
        %1752 = vmatprep.subr.mxu0 0.0
        %1753 = vmatpush1.msra.mxu0 0.0
        %1754 = vmatprep.subr.mxu0 0.0
        %1755 = vmatpush1.msra.mxu0 0.0
        %1756 = vmatprep.subr.mxu0 0.0
        %1757 = vmatpush1.msra.mxu0 0.0
        %1758 = vmatprep.subr.mxu0 0.0
        %1759 = vmatpush1.msra.mxu0 0.0
        %1760 = vmatprep.subr.mxu0 0.0
        %1761 = vmatpush1.msra.mxu0 0.0
        %1762 = vmatprep.subr.mxu0 0.0
        %1763 = vmatpush1.msra.mxu0 0.0
        %1764 = vmatprep.subr.mxu0 0.0
        %1765 = vmatpush1.msra.mxu0 0.0
        %1766 = vmatprep.subr.mxu0 0.0
        %1767 = vmatpush1.msra.mxu0 0.0
        %1768 = vmatprep.subr.mxu0 0.0
        %1769 = vmatpush1.msra.mxu0 0.0
        %1770 = vmatprep.subr.mxu0 0.0
        %1771 = vmatpush1.msra.mxu0 0.0
        %1772 = vmatprep.subr.mxu0 0.0
        %1773 = vmatpush1.msra.mxu0 0.0
        %1774 = vmatprep.subr.mxu0 0.0
        %1775 = vmatpush1.msra.mxu0 0.0
        %1776 = vmatprep.subr.mxu0 0.0
        %1777 = vmatpush1.msra.mxu0 0.0
        %1778 = vmatprep.subr.mxu0 0.0
        %1779 = vmatpush1.msra.mxu0 0.0
        %1780 = vmatprep.mubr.f32.mxu0 0.0
        %1781 = vmatmul.mubr.f32.gmra.mrb[0].mxu0 %v1364
        %v1782 = vpop.f32.mrb[0].mxu0
        %v1783 = vadd.f32 0.0, %v1782
        %v1784 = vpop.f32.mrb[0].mxu0
        %1785 = vdwg.mxu0
        %1786 = vmatprep.subr.mxu0 0.0
        %1787 = vmatpush1.msra.mxu0 %v1005
        %1788 = vmatprep.subr.mxu0 0.0
        %1789 = vmatpush1.msra.mxu0 %v1006
        %1790 = vmatprep.subr.mxu0 0.0
        %1791 = vmatpush1.msra.mxu0 %v1007
        %1792 = vmatprep.subr.mxu0 0.0
        %1793 = vmatpush1.msra.mxu0 %v1008
        %1794 = vmatprep.subr.mxu0 0.0
        %1795 = vmatpush1.msra.mxu0 %v1009
        %1796 = vmatprep.subr.mxu0 0.0
        %1797 = vmatpush1.msra.mxu0 %v1010
        %1798 = vmatprep.subr.mxu0 0.0
        %1799 = vmatpush1.msra.mxu0 %v1011
        %1800 = vmatprep.subr.mxu0 0.0
        %1801 = vmatpush1.msra.mxu0 %v1012
        %1802 = vmatprep.subr.mxu0 0.0
        %1803 = vmatpush1.msra.mxu0 0.0
        %1804 = vmatprep.subr.mxu0 0.0
        %1805 = vmatpush1.msra.mxu0 0.0
        %1806 = vmatprep.subr.mxu0 0.0
        %1807 = vmatpush1.msra.mxu0 0.0
        %1808 = vmatprep.subr.mxu0 0.0
        %1809 = vmatpush1.msra.mxu0 0.0
        %1810 = vmatprep.subr.mxu0 0.0
        %1811 = vmatpush1.msra.mxu0 0.0
        %1812 = vmatprep.subr.mxu0 0.0
        %1813 = vmatpush1.msra.mxu0 0.0
        %1814 = vmatprep.subr.mxu0 0.0
        %1815 = vmatpush1.msra.mxu0 0.0
        %1816 = vmatprep.subr.mxu0 0.0
        %1817 = vmatpush1.msra.mxu0 0.0
        %1818 = vmatprep.subr.mxu0 0.0
        %1819 = vmatpush1.msra.mxu0 0.0
        %1820 = vmatprep.subr.mxu0 0.0
        %1821 = vmatpush1.msra.mxu0 0.0
        %1822 = vmatprep.subr.mxu0 0.0
        %1823 = vmatpush1.msra.mxu0 0.0
        %1824 = vmatprep.subr.mxu0 0.0
        %1825 = vmatpush1.msra.mxu0 0.0
        %1826 = vmatprep.subr.mxu0 0.0
        %1827 = vmatpush1.msra.mxu0 0.0
        %1828 = vmatprep.subr.mxu0 0.0
        %1829 = vmatpush1.msra.mxu0 0.0
        %1830 = vmatprep.subr.mxu0 0.0
        %1831 = vmatpush1.msra.mxu0 0.0
        %1832 = vmatprep.subr.mxu0 0.0
        %1833 = vmatpush1.msra.mxu0 0.0
        %1834 = vmatprep.subr.mxu0 0.0
        %1835 = vmatpush1.msra.mxu0 0.0
        %1836 = vmatprep.subr.mxu0 0.0
        %1837 = vmatpush1.msra.mxu0 0.0
        %1838 = vmatprep.subr.mxu0 0.0
        %1839 = vmatpush1.msra.mxu0 0.0
        %1840 = vmatprep.subr.mxu0 0.0
        %1841 = vmatpush1.msra.mxu0 0.0
        %1842 = vmatprep.subr.mxu0 0.0
        %1843 = vmatpush1.msra.mxu0 0.0
        %1844 = vmatprep.subr.mxu0 0.0
        %1845 = vmatpush1.msra.mxu0 0.0
        %1846 = vmatprep.subr.mxu0 0.0
        %1847 = vmatpush1.msra.mxu0 0.0
        %1848 = vmatprep.subr.mxu0 0.0
        %1849 = vmatpush1.msra.mxu0 0.0
        %1850 = vmatprep.mubr.f32.mxu0 0.0
        %1851 = vmatmul.mubr.f32.gmra.mrb[0].mxu0 %v1364
        %v1852 = vpop.f32.mrb[0].mxu0
        %v1853 = vadd.f32 0.0, %v1852
        %v1854 = vpop.f32.mrb[0].mxu0
        %1855 = vdwg.mxu0
        %1856 = vmatprep.subr.mxu0 0.0
        %1857 = vmatpush1.msra.mxu0 %v1084
        %1858 = vmatprep.subr.mxu0 0.0
        %1859 = vmatpush1.msra.mxu0 %v1085
        %1860 = vmatprep.subr.mxu0 0.0
        %1861 = vmatpush1.msra.mxu0 %v1086
        %1862 = vmatprep.subr.mxu0 0.0
        %1863 = vmatpush1.msra.mxu0 %v1087
        %1864 = vmatprep.subr.mxu0 0.0
        %1865 = vmatpush1.msra.mxu0 %v1088
        %1866 = vmatprep.subr.mxu0 0.0
        %1867 = vmatpush1.msra.mxu0 %v1089
        %1868 = vmatprep.subr.mxu0 0.0
        %1869 = vmatpush1.msra.mxu0 %v1090
        %1870 = vmatprep.subr.mxu0 0.0
        %1871 = vmatpush1.msra.mxu0 %v1091
        %1872 = vmatprep.subr.mxu0 0.0
        %1873 = vmatpush1.msra.mxu0 0.0
        %1874 = vmatprep.subr.mxu0 0.0
        %1875 = vmatpush1.msra.mxu0 0.0
        %1876 = vmatprep.subr.mxu0 0.0
        %1877 = vmatpush1.msra.mxu0 0.0
        %1878 = vmatprep.subr.mxu0 0.0
        %1879 = vmatpush1.msra.mxu0 0.0
        %1880 = vmatprep.subr.mxu0 0.0
        %1881 = vmatpush1.msra.mxu0 0.0
        %1882 = vmatprep.subr.mxu0 0.0
        %1883 = vmatpush1.msra.mxu0 0.0
        %1884 = vmatprep.subr.mxu0 0.0
        %1885 = vmatpush1.msra.mxu0 0.0
        %1886 = vmatprep.subr.mxu0 0.0
        %1887 = vmatpush1.msra.mxu0 0.0
        %1888 = vmatprep.subr.mxu0 0.0
        %1889 = vmatpush1.msra.mxu0 0.0
        %1890 = vmatprep.subr.mxu0 0.0
        %1891 = vmatpush1.msra.mxu0 0.0
        %1892 = vmatprep.subr.mxu0 0.0
        %1893 = vmatpush1.msra.mxu0 0.0
        %1894 = vmatprep.subr.mxu0 0.0
        %1895 = vmatpush1.msra.mxu0 0.0
        %1896 = vmatprep.subr.mxu0 0.0
        %1897 = vmatpush1.msra.mxu0 0.0
        %1898 = vmatprep.subr.mxu0 0.0
        %1899 = vmatpush1.msra.mxu0 0.0
        %1900 = vmatprep.subr.mxu0 0.0
        %1901 = vmatpush1.msra.mxu0 0.0
        %1902 = vmatprep.subr.mxu0 0.0
        %1903 = vmatpush1.msra.mxu0 0.0
        %1904 = vmatprep.subr.mxu0 0.0
        %1905 = vmatpush1.msra.mxu0 0.0
        %1906 = vmatprep.subr.mxu0 0.0
        %1907 = vmatpush1.msra.mxu0 0.0
        %1908 = vmatprep.subr.mxu0 0.0
        %1909 = vmatpush1.msra.mxu0 0.0
        %1910 = vmatprep.subr.mxu0 0.0
        %1911 = vmatpush1.msra.mxu0 0.0
        %1912 = vmatprep.subr.mxu0 0.0
        %1913 = vmatpush1.msra.mxu0 0.0
        %1914 = vmatprep.subr.mxu0 0.0
        %1915 = vmatpush1.msra.mxu0 0.0
        %1916 = vmatprep.subr.mxu0 0.0
        %1917 = vmatpush1.msra.mxu0 0.0
        %1918 = vmatprep.subr.mxu0 0.0
        %1919 = vmatpush1.msra.mxu0 0.0
        %1920 = vmatprep.mubr.f32.mxu0 0.0
        %1921 = vmatmul.mubr.f32.gmra.mrb[0].mxu0 %v1364
        %v1922 = vpop.f32.mrb[0].mxu0
        %v1923 = vadd.f32 0.0, %v1922
        %v1924 = vpop.f32.mrb[0].mxu0
        %1925 = vdwg.mxu0
        %1926 = vmatprep.subr.mxu0 0.0
        %1927 = vmatpush1.msra.mxu0 %v1163
        %1928 = vmatprep.subr.mxu0 0.0
        %1929 = vmatpush1.msra.mxu0 %v1164
        %1930 = vmatprep.subr.mxu0 0.0
        %1931 = vmatpush1.msra.mxu0 %v1165
        %1932 = vmatprep.subr.mxu0 0.0
        %1933 = vmatpush1.msra.mxu0 %v1166
        %1934 = vmatprep.subr.mxu0 0.0
        %1935 = vmatpush1.msra.mxu0 %v1167
        %1936 = vmatprep.subr.mxu0 0.0
        %1937 = vmatpush1.msra.mxu0 %v1168
        %1938 = vmatprep.subr.mxu0 0.0
        %1939 = vmatpush1.msra.mxu0 %v1169
        %1940 = vmatprep.subr.mxu0 0.0
        %1941 = vmatpush1.msra.mxu0 %v1170
        %1942 = vmatprep.subr.mxu0 0.0
        %1943 = vmatpush1.msra.mxu0 0.0
        %1944 = vmatprep.subr.mxu0 0.0
        %1945 = vmatpush1.msra.mxu0 0.0
        %1946 = vmatprep.subr.mxu0 0.0
        %1947 = vmatpush1.msra.mxu0 0.0
        %1948 = vmatprep.subr.mxu0 0.0
        %1949 = vmatpush1.msra.mxu0 0.0
        %1950 = vmatprep.subr.mxu0 0.0
        %1951 = vmatpush1.msra.mxu0 0.0
        %1952 = vmatprep.subr.mxu0 0.0
        %1953 = vmatpush1.msra.mxu0 0.0
        %1954 = vmatprep.subr.mxu0 0.0
        %1955 = vmatpush1.msra.mxu0 0.0
        %1956 = vmatprep.subr.mxu0 0.0
        %1957 = vmatpush1.msra.mxu0 0.0
        %1958 = vmatprep.subr.mxu0 0.0
        %1959 = vmatpush1.msra.mxu0 0.0
        %1960 = vmatprep.subr.mxu0 0.0
        %1961 = vmatpush1.msra.mxu0 0.0
        %1962 = vmatprep.subr.mxu0 0.0
        %1963 = vmatpush1.msra.mxu0 0.0
        %1964 = vmatprep.subr.mxu0 0.0
        %1965 = vmatpush1.msra.mxu0 0.0
        %1966 = vmatprep.subr.mxu0 0.0
        %1967 = vmatpush1.msra.mxu0 0.0
        %1968 = vmatprep.subr.mxu0 0.0
        %1969 = vmatpush1.msra.mxu0 0.0
        %1970 = vmatprep.subr.mxu0 0.0
        %1971 = vmatpush1.msra.mxu0 0.0
        %1972 = vmatprep.subr.mxu0 0.0
        %1973 = vmatpush1.msra.mxu0 0.0
        %1974 = vmatprep.subr.mxu0 0.0
        %1975 = vmatpush1.msra.mxu0 0.0
        %1976 = vmatprep.subr.mxu0 0.0
        %1977 = vmatpush1.msra.mxu0 0.0
        %1978 = vmatprep.subr.mxu0 0.0
        %1979 = vmatpush1.msra.mxu0 0.0
        %1980 = vmatprep.subr.mxu0 0.0
        %1981 = vmatpush1.msra.mxu0 0.0
        %1982 = vmatprep.subr.mxu0 0.0
        %1983 = vmatpush1.msra.mxu0 0.0
        %1984 = vmatprep.subr.mxu0 0.0
        %1985 = vmatpush1.msra.mxu0 0.0
        %1986 = vmatprep.subr.mxu0 0.0
        %1987 = vmatpush1.msra.mxu0 0.0
        %1988 = vmatprep.subr.mxu0 0.0
        %1989 = vmatpush1.msra.mxu0 0.0
        %1990 = vmatprep.mubr.f32.mxu0 0.0
        %1991 = vmatmul.mubr.f32.gmra.mrb[0].mxu0 %v1364
        %v1992 = vpop.f32.mrb[0].mxu0
        %v1993 = vadd.f32 0.0, %v1992
        %v1994 = vpop.f32.mrb[0].mxu0
        %1995 = vdwg.mxu0
        %v1996 = vld [vmem:[%s513] sm:$0xff]
        %v1997 = vld [vmem:[%s421] sm:$0xff]
        %1999 = vset.pattern.permute.xlu0 0
        %2000 = vperm.xlu0 %1999, %v1996
        %v2001 = vpop.permute.xlu0 %2000
        %v2004 = vsel %vm1248, %v1997, 0
        %2006 = vmatprep.subr.mxu0 0.0
        %2007 = vmatpush1.msra.mxu0 %v1433
        %2008 = vmatprep.subr.mxu0 0.0
        %2009 = vmatpush1.msra.mxu0 %v1503
        %2010 = vmatprep.subr.mxu0 0.0
        %2011 = vmatpush1.msra.mxu0 %v1573
        %2012 = vmatprep.subr.mxu0 0.0
        %2013 = vmatpush1.msra.mxu0 %v1643
        %2014 = vmatprep.subr.mxu0 0.0
        %2015 = vmatpush1.msra.mxu0 %v1713
        %2016 = vmatprep.subr.mxu0 0.0
        %2017 = vmatpush1.msra.mxu0 %v1783
        %2018 = vmatprep.subr.mxu0 0.0
        %2019 = vmatpush1.msra.mxu0 %v1853
        %2020 = vmatprep.subr.mxu0 0.0
        %2021 = vmatpush1.msra.mxu0 %v1923
        %2022 = vmatprep.subr.mxu0 0.0
        %2023 = vmatpush1.msra.mxu0 %v1993
        %2024 = vmatprep.subr.mxu0 0.0
        %2025 = vmatpush1.msra.mxu0 0.0
        %2026 = vmatprep.subr.mxu0 0.0
        %2027 = vmatpush1.msra.mxu0 0.0
        %2028 = vmatprep.subr.mxu0 0.0
        %2029 = vmatpush1.msra.mxu0 0.0
        %2030 = vmatprep.subr.mxu0 0.0
        %2031 = vmatpush1.msra.mxu0 0.0
        %2032 = vmatprep.subr.mxu0 0.0
        %2033 = vmatpush1.msra.mxu0 0.0
        %2034 = vmatprep.subr.mxu0 0.0
        %2035 = vmatpush1.msra.mxu0 0.0
        %2036 = vmatprep.subr.mxu0 0.0
        %2037 = vmatpush1.msra.mxu0 0.0
        %2038 = vmatprep.subr.mxu0 0.0
        %2039 = vmatpush1.msra.mxu0 0.0
        %2040 = vmatprep.subr.mxu0 0.0
        %2041 = vmatpush1.msra.mxu0 0.0
        %2042 = vmatprep.subr.mxu0 0.0
        %2043 = vmatpush1.msra.mxu0 0.0
        %2044 = vmatprep.subr.mxu0 0.0
        %2045 = vmatpush1.msra.mxu0 0.0
        %2046 = vmatprep.subr.mxu0 0.0
        %2047 = vmatpush1.msra.mxu0 0.0
        %2048 = vmatprep.subr.mxu0 0.0
        %2049 = vmatpush1.msra.mxu0 0.0
        %2050 = vmatprep.subr.mxu0 0.0
        %2051 = vmatpush1.msra.mxu0 0.0
        %2052 = vmatprep.subr.mxu0 0.0
        %2053 = vmatpush1.msra.mxu0 0.0
        %2054 = vmatprep.subr.mxu0 0.0
        %2055 = vmatpush1.msra.mxu0 0.0
        %2056 = vmatprep.subr.mxu0 0.0
        %2057 = vmatpush1.msra.mxu0 0.0
        %2058 = vmatprep.subr.mxu0 0.0
        %2059 = vmatpush1.msra.mxu0 0.0
        %2060 = vmatprep.subr.mxu0 0.0
        %2061 = vmatpush1.msra.mxu0 0.0
        %2062 = vmatprep.subr.mxu0 0.0
        %2063 = vmatpush1.msra.mxu0 0.0
        %2064 = vmatprep.subr.mxu0 0.0
        %2065 = vmatpush1.msra.mxu0 0.0
        %2066 = vmatprep.subr.mxu0 0.0
        %2067 = vmatpush1.msra.mxu0 0.0
        %2068 = vmatprep.subr.mxu0 0.0
        %2069 = vmatpush1.msra.mxu0 0.0
        %2070 = vmatprep.mubr.f32.mxu0 0.0
        %2071 = vmatmul.mubr.f32.gmra.mrb[0].mxu0 %v2004
        %v2072 = vpop.f32.mrb[0].mxu0
        %v2073 = vadd.f32 %v2001, %v2072
        %v2074 = vpop.f32.mrb[0].mxu0
        %2075 = vdwg.mxu0
        %v2076 = vsel %vm535, %v2073, 0.0
        %2077 = vadd.xlane.f32.xlu0 %v2076
        %v2078 = vpop.xlane.xlu0 %2077
        %v2079 = vrot.slane %v2078, 4
        %v2080 = vadd.f32 %v2078, %v2079
        %v2081 = vrot.slane %v2080, 2
        %v2082 = vadd.f32 %v2080, %v2081
        %v2083 = vrot.slane %v2082, 1
        %v2084 = vadd.f32 %v2082, %v2083
        %s2085 = vtos %v2084
        %v2086 = vstv %s2085
        %v2087 = vmul.f32 %v2086, %v1333
        %v2088 = vsub.f32 %v2073, %v2087
        %v2089 = vmul.f32 %v2088, %v2088
        %v2090 = vsel %vm535, %v2089, 0.0
        %2091 = vadd.xlane.f32.xlu0 %v2090
        %v2092 = vpop.xlane.xlu0 %2091
        %v2093 = vrot.slane %v2092, 4
        %v2094 = vadd.f32 %v2092, %v2093
        %v2095 = vrot.slane %v2094, 2
        %v2096 = vadd.f32 %v2094, %v2095
        %v2097 = vrot.slane %v2096, 1
        %v2098 = vadd.f32 %v2096, %v2097
        %s2099 = vtos %v2098
        %v2100 = vstv %s2099
        %v2101 = vmul.f32 %v2100, %v1333
        %v2102 = vadd.f32 %v2101, 1e-05
        %v2103 = vrsqrt.pop %v2102
        %v2104 = vmul.f32 %v2088, %v2103
        %2105 = vset.pattern.permute.xlu0 1
        %2106 = vperm.xlu0 %2105, %v1996
        %v2107 = vpop.permute.xlu0 %2106
        %v2109 = vmul.f32 %v2104, %v2107
        %2110 = vset.pattern.permute.xlu0 2
        %2111 = vperm.xlu0 %2110, %v1996
        %v2112 = vpop.permute.xlu0 %2111
        %v2114 = vadd.f32 %v2109, %v2112
        %v2115 = vld [vmem:[%s6] sm:$0xff]
        %v2116 = vld [vmem:[%s6 + $0x8] sm:$0xff]
        %v2117 = vld [vmem:[%s6 + $0x10] sm:$0xff]
        %v2118 = vld [vmem:[%s6 + $0x18] sm:$0xff]
        %v2119 = vld [vmem:[%s6 + $0x20] sm:$0xff]
        %v2120 = vld [vmem:[%s6 + $0x28] sm:$0xff]
        %v2121 = vld [vmem:[%s6 + $0x30] sm:$0xff]
        %v2122 = vld [vmem:[%s6 + $0x38] sm:$0xff]
        %v2124 = vsel %vm535, %v2114, 0
        %2126 = vmatprep.subr.mxu0 0.0
        %2127 = vmatpush1.msra.mxu0 %v2115
        %2128 = vmatprep.subr.mxu0 0.0
        %2129 = vmatpush1.msra.mxu0 %v2116
        %2130 = vmatprep.subr.mxu0 0.0
        %2131 = vmatpush1.msra.mxu0 %v2117
        %2132 = vmatprep.subr.mxu0 0.0
        %2133 = vmatpush1.msra.mxu0 %v2118
        %2134 = vmatprep.subr.mxu0 0.0
        %2135 = vmatpush1.msra.mxu0 %v2119
        %2136 = vmatprep.subr.mxu0 0.0
        %2137 = vmatpush1.msra.mxu0 %v2120
        %2138 = vmatprep.subr.mxu0 0.0
        %2139 = vmatpush1.msra.mxu0 %v2121
        %2140 = vmatprep.subr.mxu0 0.0
        %2141 = vmatpush1.msra.mxu0 %v2122
        %2142 = vmatprep.subr.mxu0 0.0
        %2143 = vmatpush1.msra.mxu0 0.0
        %2144 = vmatprep.subr.mxu0 0.0
        %2145 = vmatpush1.msra.mxu0 0.0
        %2146 = vmatprep.subr.mxu0 0.0
        %2147 = vmatpush1.msra.mxu0 0.0
        %2148 = vmatprep.subr.mxu0 0.0
        %2149 = vmatpush1.msra.mxu0 0.0
        %2150 = vmatprep.subr.mxu0 0.0
        %2151 = vmatpush1.msra.mxu0 0.0
        %2152 = vmatprep.subr.mxu0 0.0
        %2153 = vmatpush1.msra.mxu0 0.0
        %2154 = vmatprep.subr.mxu0 0.0
        %2155 = vmatpush1.msra.mxu0 0.0
        %2156 = vmatprep.subr.mxu0 0.0
        %2157 = vmatpush1.msra.mxu0 0.0
        %2158 = vmatprep.subr.mxu0 0.0
        %2159 = vmatpush1.msra.mxu0 0.0
        %2160 = vmatprep.subr.mxu0 0.0
        %2161 = vmatpush1.msra.mxu0 0.0
        %2162 = vmatprep.subr.mxu0 0.0
        %2163 = vmatpush1.msra.mxu0 0.0
        %2164 = vmatprep.subr.mxu0 0.0
        %2165 = vmatpush1.msra.mxu0 0.0
        %2166 = vmatprep.subr.mxu0 0.0
        %2167 = vmatpush1.msra.mxu0 0.0
        %2168 = vmatprep.subr.mxu0 0.0
        %2169 = vmatpush1.msra.mxu0 0.0
        %2170 = vmatprep.subr.mxu0 0.0
        %2171 = vmatpush1.msra.mxu0 0.0
        %2172 = vmatprep.subr.mxu0 0.0
        %2173 = vmatpush1.msra.mxu0 0.0
        %2174 = vmatprep.subr.mxu0 0.0
        %2175 = vmatpush1.msra.mxu0 0.0
        %2176 = vmatprep.subr.mxu0 0.0
        %2177 = vmatpush1.msra.mxu0 0.0
        %2178 = vmatprep.subr.mxu0 0.0
        %2179 = vmatpush1.msra.mxu0 0.0
        %2180 = vmatprep.subr.mxu0 0.0
        %2181 = vmatpush1.msra.mxu0 0.0
        %2182 = vmatprep.subr.mxu0 0.0
        %2183 = vmatpush1.msra.mxu0 0.0
        %2184 = vmatprep.subr.mxu0 0.0
        %2185 = vmatpush1.msra.mxu0 0.0
        %2186 = vmatprep.subr.mxu0 0.0
        %2187 = vmatpush1.msra.mxu0 0.0
        %2188 = vmatprep.subr.mxu0 0.0
        %2189 = vmatpush1.msra.mxu0 0.0
        %2190 = vmatprep.mubr.f32.mxu0 0.0
        %2191 = vmatmul.mubr.f32.gmra.mrb[0].mxu0 %v2124
        %v2192 = vpop.f32.mrb[0].mxu0
        %v2193 = vadd.f32 0.0, %v2192
        %v2194 = vpop.f32.mrb[0].mxu0
        %2195 = vdwg.mxu0
        %v2196 = vld [vmem:[%s517] sm:$0x3f]
        %v2197 = vld [vmem:[%s430] sm:$0xff]
        %v2198 = vld [vmem:[%s430 + $0x8] sm:$0xff]
        %v2199 = vlaneseq
        %v2200 = vshrl.u32 %v2199, 7
        %v2201 = vsub.s32 0, %v2200
        %v2202 = vrot.slane %v2196, %v2201
        %vm2203 = vcmask 130048
        %v2205 = vsel %vm2203, %v2193, 0
        %2207 = vmatprep.subr.mxu0 0.0
        %2208 = vmatpush1.msra.mxu0 %v2197
        %2209 = vmatprep.subr.mxu0 0.0
        %2210 = vmatpush1.msra.mxu0 %v2198
        %2211 = vmatprep.subr.mxu0 0.0
        %2212 = vmatpush1.msra.mxu0 0.0
        %2213 = vmatprep.subr.mxu0 0.0
        %2214 = vmatpush1.msra.mxu0 0.0
        %2215 = vmatprep.subr.mxu0 0.0
        %2216 = vmatpush1.msra.mxu0 0.0
        %2217 = vmatprep.subr.mxu0 0.0
        %2218 = vmatpush1.msra.mxu0 0.0
        %2219 = vmatprep.subr.mxu0 0.0
        %2220 = vmatpush1.msra.mxu0 0.0
        %2221 = vmatprep.subr.mxu0 0.0
        %2222 = vmatpush1.msra.mxu0 0.0
        %2223 = vmatprep.subr.mxu0 0.0
        %2224 = vmatpush1.msra.mxu0 0.0
        %2225 = vmatprep.subr.mxu0 0.0
        %2226 = vmatpush1.msra.mxu0 0.0
        %2227 = vmatprep.subr.mxu0 0.0
        %2228 = vmatpush1.msra.mxu0 0.0
        %2229 = vmatprep.subr.mxu0 0.0
        %2230 = vmatpush1.msra.mxu0 0.0
        %2231 = vmatprep.subr.mxu0 0.0
        %2232 = vmatpush1.msra.mxu0 0.0
        %2233 = vmatprep.subr.mxu0 0.0
        %2234 = vmatpush1.msra.mxu0 0.0
        %2235 = vmatprep.subr.mxu0 0.0
        %2236 = vmatpush1.msra.mxu0 0.0
        %2237 = vmatprep.subr.mxu0 0.0
        %2238 = vmatpush1.msra.mxu0 0.0
        %2239 = vmatprep.subr.mxu0 0.0
        %2240 = vmatpush1.msra.mxu0 0.0
        %2241 = vmatprep.subr.mxu0 0.0
        %2242 = vmatpush1.msra.mxu0 0.0
        %2243 = vmatprep.subr.mxu0 0.0
        %2244 = vmatpush1.msra.mxu0 0.0
        %2245 = vmatprep.subr.mxu0 0.0
        %2246 = vmatpush1.msra.mxu0 0.0
        %2247 = vmatprep.subr.mxu0 0.0
        %2248 = vmatpush1.msra.mxu0 0.0
        %2249 = vmatprep.subr.mxu0 0.0
        %2250 = vmatpush1.msra.mxu0 0.0
        %2251 = vmatprep.subr.mxu0 0.0
        %2252 = vmatpush1.msra.mxu0 0.0
        %2253 = vmatprep.subr.mxu0 0.0
        %2254 = vmatpush1.msra.mxu0 0.0
        %2255 = vmatprep.subr.mxu0 0.0
        %2256 = vmatpush1.msra.mxu0 0.0
        %2257 = vmatprep.subr.mxu0 0.0
        %2258 = vmatpush1.msra.mxu0 0.0
        %2259 = vmatprep.subr.mxu0 0.0
        %2260 = vmatpush1.msra.mxu0 0.0
        %2261 = vmatprep.subr.mxu0 0.0
        %2262 = vmatpush1.msra.mxu0 0.0
        %2263 = vmatprep.subr.mxu0 0.0
        %2264 = vmatpush1.msra.mxu0 0.0
        %2265 = vmatprep.subr.mxu0 0.0
        %2266 = vmatpush1.msra.mxu0 0.0
        %2267 = vmatprep.subr.mxu0 0.0
        %2268 = vmatpush1.msra.mxu0 0.0
        %2269 = vmatprep.subr.mxu0 0.0
        %2270 = vmatpush1.msra.mxu0 0.0
        %2271 = vmatprep.mubr.f32.mxu0 0.0
        %2272 = vmatmul.mubr.f32.gmra.mrb[0].mxu0 %v2205
        %v2273 = vpop.f32.mrb[0].mxu0
        %v2274 = vadd.f32 %v2202, %v2273
        %v2275 = vpop.f32.mrb[0].mxu0
        %2276 = vdwg.mxu0
        %v2277 = vsel %vm2203, %v2274, 0.0
        %2278 = vadd.xlane.f32.xlu0 %v2277
        %v2279 = vpop.xlane.xlu0 %2278
        %v2280 = vrcp.pop 16.0
        %v2281 = vmul.f32 %v2279, %v2280
        %v2282 = vsub.f32 %v2274, %v2281
        %v2283 = vmul.f32 %v2282, %v2282
        %v2284 = vsel %vm2203, %v2283, 0.0
        %2285 = vadd.xlane.f32.xlu0 %v2284
        %v2286 = vpop.xlane.xlu0 %2285
        %v2287 = vmul.f32 %v2286, %v2280
        %v2288 = vadd.f32 %v2287, 1e-05
        %v2289 = vrsqrt.pop %v2288
        %v2290 = vmul.f32 %v2282, %v2289
        %v2291 = vlaneseq
        %v2292 = vshrl.u32 %v2291, 7
        %v2293 = vsub.s32 1, %v2292
        %v2294 = vrot.slane %v2196, %v2293
        %v2295 = vmul.f32 %v2290, %v2294
        %v2296 = vlaneseq
        %v2297 = vshrl.u32 %v2296, 7
        %v2298 = vsub.s32 2, %v2297
        %v2299 = vrot.slane %v2196, %v2298
        %v2300 = vadd.f32 %v2295, %v2299
        %v2301 = vmax.f32 %v2300, 0.0
        %s2302 = scalar_lea.vmem %s430, 16 [#allocation6]
        %v2303 = vld [vmem:[%s2302] sm:$0xff]
        %v2304 = vld [vmem:[%s2302 + $0x8] sm:$0xff]
        %v2305 = vlaneseq
        %v2306 = vshrl.u32 %v2305, 7
        %v2307 = vsub.s32 3, %v2306
        %v2308 = vrot.slane %v2196, %v2307
        %v2310 = vsel %vm2203, %v2301, 0
        %2312 = vmatprep.subr.mxu0 0.0
        %2313 = vmatpush1.msra.mxu0 %v2303
        %2314 = vmatprep.subr.mxu0 0.0
        %2315 = vmatpush1.msra.mxu0 %v2304
        %2316 = vmatprep.subr.mxu0 0.0
        %2317 = vmatpush1.msra.mxu0 0.0
        %2318 = vmatprep.subr.mxu0 0.0
        %2319 = vmatpush1.msra.mxu0 0.0
        %2320 = vmatprep.subr.mxu0 0.0
        %2321 = vmatpush1.msra.mxu0 0.0
        %2322 = vmatprep.subr.mxu0 0.0
        %2323 = vmatpush1.msra.mxu0 0.0
        %2324 = vmatprep.subr.mxu0 0.0
        %2325 = vmatpush1.msra.mxu0 0.0
        %2326 = vmatprep.subr.mxu0 0.0
        %2327 = vmatpush1.msra.mxu0 0.0
        %2328 = vmatprep.subr.mxu0 0.0
        %2329 = vmatpush1.msra.mxu0 0.0
        %2330 = vmatprep.subr.mxu0 0.0
        %2331 = vmatpush1.msra.mxu0 0.0
        %2332 = vmatprep.subr.mxu0 0.0
        %2333 = vmatpush1.msra.mxu0 0.0
        %2334 = vmatprep.subr.mxu0 0.0
        %2335 = vmatpush1.msra.mxu0 0.0
        %2336 = vmatprep.subr.mxu0 0.0
        %2337 = vmatpush1.msra.mxu0 0.0
        %2338 = vmatprep.subr.mxu0 0.0
        %2339 = vmatpush1.msra.mxu0 0.0
        %2340 = vmatprep.subr.mxu0 0.0
        %2341 = vmatpush1.msra.mxu0 0.0
        %2342 = vmatprep.subr.mxu0 0.0
        %2343 = vmatpush1.msra.mxu0 0.0
        %2344 = vmatprep.subr.mxu0 0.0
        %2345 = vmatpush1.msra.mxu0 0.0
        %2346 = vmatprep.subr.mxu0 0.0
        %2347 = vmatpush1.msra.mxu0 0.0
        %2348 = vmatprep.subr.mxu0 0.0
        %2349 = vmatpush1.msra.mxu0 0.0
        %2350 = vmatprep.subr.mxu0 0.0
        %2351 = vmatpush1.msra.mxu0 0.0
        %2352 = vmatprep.subr.mxu0 0.0
        %2353 = vmatpush1.msra.mxu0 0.0
        %2354 = vmatprep.subr.mxu0 0.0
        %2355 = vmatpush1.msra.mxu0 0.0
        %2356 = vmatprep.subr.mxu0 0.0
        %2357 = vmatpush1.msra.mxu0 0.0
        %2358 = vmatprep.subr.mxu0 0.0
        %2359 = vmatpush1.msra.mxu0 0.0
        %2360 = vmatprep.subr.mxu0 0.0
        %2361 = vmatpush1.msra.mxu0 0.0
        %2362 = vmatprep.subr.mxu0 0.0
        %2363 = vmatpush1.msra.mxu0 0.0
        %2364 = vmatprep.subr.mxu0 0.0
        %2365 = vmatpush1.msra.mxu0 0.0
        %2366 = vmatprep.subr.mxu0 0.0
        %2367 = vmatpush1.msra.mxu0 0.0
        %2368 = vmatprep.subr.mxu0 0.0
        %2369 = vmatpush1.msra.mxu0 0.0
        %2370 = vmatprep.subr.mxu0 0.0
        %2371 = vmatpush1.msra.mxu0 0.0
        %2372 = vmatprep.subr.mxu0 0.0
        %2373 = vmatpush1.msra.mxu0 0.0
        %2374 = vmatprep.subr.mxu0 0.0
        %2375 = vmatpush1.msra.mxu0 0.0
        %2376 = vmatprep.mubr.f32.mxu0 0.0
        %2377 = vmatmul.mubr.f32.gmra.mrb[0].mxu0 %v2310
        %v2378 = vpop.f32.mrb[0].mxu0
        %v2379 = vadd.f32 %v2308, %v2378
        %v2380 = vpop.f32.mrb[0].mxu0
        %2381 = vdwg.mxu0
        %v2382 = vsel %vm2203, %v2379, 0.0
        %2383 = vadd.xlane.f32.xlu0 %v2382
        %v2384 = vpop.xlane.xlu0 %2383
        %v2385 = vmul.f32 %v2384, %v2280
        %v2386 = vsub.f32 %v2379, %v2385
        %v2387 = vmul.f32 %v2386, %v2386
        %v2388 = vsel %vm2203, %v2387, 0.0
        %2389 = vadd.xlane.f32.xlu0 %v2388
        %v2390 = vpop.xlane.xlu0 %2389
        %v2391 = vmul.f32 %v2390, %v2280
        %v2392 = vadd.f32 %v2391, 1e-05
        %v2393 = vrsqrt.pop %v2392
        %v2394 = vmul.f32 %v2386, %v2393
        %v2395 = vlaneseq
        %v2396 = vshrl.u32 %v2395, 7
        %v2397 = vsub.s32 4, %v2396
        %v2398 = vrot.slane %v2196, %v2397
        %v2399 = vmul.f32 %v2394, %v2398
        %v2400 = vlaneseq
        %v2401 = vshrl.u32 %v2400, 7
        %v2402 = vsub.s32 5, %v2401
        %v2403 = vrot.slane %v2196, %v2402
        %v2404 = vadd.f32 %v2399, %v2403
        %2405 = vst.msk [vmem:[%s525] sm:$0xff] %vm2203, %v2404
        %p2406 = scmp.lt.s32.totalorder %s30, 1
        %s2407 = scalar_select %p2406, %s30, 1
        %p2408 = scmp.lt.s32.totalorder %s31, 1
        %s2409 = scalar_select %p2408, %s31, 1
        %s2410 = smul.addr %s2407, 2
        %s2411 = sadd.s32 %s2409, %s2410
        %s2412 = smul.addr %s2411, 8
        %s2413 = scalar_lea.vmem %s9, %s2412
        // Predicated region
        $region69: #{cla_forward.4} parent=55 // pred_check
          %p2414 = pneg %p284
        $region70: #{cla_forward.4} parent=55 // pred_check_branch
          %2416 = sbr.rel (%p2414) target = $region72
        $region71: #{cla_forward.4} parent=55 // pred_region
          _
        $region72: #{cla_forward.4} parent=55 // pred_fallthru
          _
      $region56: #{cla_forward.4} parent=5 // pred_fallthru
        _
      %p2417 = scmp.le.s32.totalorder 2, %s21
      // Predicated region
      $region73: #{cla_forward.4} parent=5 // pred_check
        %p2418 = pneg %p2417
      $region74: #{cla_forward.4} parent=5 // pred_check_branch
        %2420 = sbr.rel (%p2418) target = $region76
      $region75: #{cla_forward.4} parent=5 // pred_region
        %s2421 = ssub.s32 %s21, 2
        // Predicated region
        $region77: #{cla_forward.4} parent=75 // pred_check
          %p2422 = pneg %p290
        $region78: #{cla_forward.4} parent=75 // pred_check_branch
          %2424 = sbr.rel (%p2422) target = $region80
        $region79: #{cla_forward.4} parent=75 // pred_region
          %p2425 = scmp.lt.s32.totalorder %s32, 1
          %s2426 = scalar_select %p2425, %s32, 1
          %p2427 = scmp.lt.s32.totalorder %s33, 1
          %s2428 = scalar_select %p2427, %s33, 1
          %s2429 = smul.addr %s2426, 2
          %s2430 = sadd.s32 %s2428, %s2429
          %s2431 = smul.addr %s2430, 8
          %s2432 = scalar_lea.vmem %s9, %s2431
        $region80: #{cla_forward.4} parent=75 // pred_fallthru
          _
      $region76: #{cla_forward.4} parent=5 // pred_fallthru
        _
    $region6: #{cla_forward.4} parent=1 // loop_footer
      %s25 = sadd.s32 1, %s21
    $region7: #{cla_forward.4} parent=1 // loop_footer_branch
      %20 = sbr.rel target = $region3
    $region8: #{cla_forward.4} parent=1 // loop_exit
      _
    %2433 = vsyncpa [#allocation3], 1
    %s2434 = scalar_lea.sflag [#allocation3], 1
    %2435 = vsyncpa %s2434, 1
    %2436 = vsyncpa [#allocation5], 1
    %s2437 = scalar_lea.sflag [#allocation5], 1
    %2438 = vsyncpa %s2437, 1

// kernel: cla_forward.5
$region0: #{cla_forward.5}
  #allocation0 [shape = 'u32[]', space=smem, size = 0x4, offset = 0x4, fixed_abs, tag = 'smem constant byte address 0x4 - core index']
  #allocation1 [shape = 'u32[144,128]{1,0:T(1,128)}', space=vmem, size = 0x12000, scoped, tag = 'internal scratch']
  %s0 = inlined_call_operand.vmem [shape: f32[1,2,16,64], index: 0, kind: input, shape index: {}]
  %s1 = inlined_call_operand.vmem [shape: f32[9,64,64], index: 1, kind: input, shape index: {}]
  %s2 = inlined_call_operand.vmem [shape: f32[1,16,144], index: 2, kind: input, shape index: {}]
  %s3 = inlined_call_operand.vmem [shape: f32[1,16,3], index: 3, kind: input, shape index: {}]
  %s4 = inlined_call_operand.hbm [shape: f32[1,16,144], index: 4, kind: input, shape index: {}]
  %s5 = inlined_call_operand.vmem [shape: f32[1,16,3], index: 5, kind: input, shape index: {}]
  %s6 = inlined_call_operand.vmem [shape: f32[64,16], index: 6, kind: input, shape index: {}]
  %s7 = inlined_call_operand.hbm [shape: f32[1,2,16,16], index: 7, kind: input, shape index: {}]
  %s8 = inlined_call_operand.vmem [shape: f32[1,6,16], index: 8, kind: input, shape index: {}]
  %s9 = inlined_call_operand.vmem [shape: f32[1,2,16,16], index: 9, kind: output, shape index: {}]
  %s10 = sld [smem:[#allocation0]]
  $region77: #{cla_forward.5} parent=0
    _
  %s12 = ssub.s32 1, %s10
  %s13 = scalar_select 0, %s12, %s10
  $region1: #{cla_forward.5} parent=0
    #allocation2 [shape = 'u8[16384]{0}', space=vmem, size = 0x4000, scoped, tag = 'input window, operand 4, single buffered']
    #allocation3 [shape = 's32[2]{0}', space=sflag, size = 0x8, scoped, tag = 'scoped memory for cla_forward.5']
    #allocation4 [shape = 'u8[16384]{0}', space=vmem, size = 0x4000, scoped, tag = 'input window, operand 7, single buffered']
    #allocation5 [shape = 's32[1]{0}', space=sflag, size = 0x4, scoped, tag = 'scoped memory for cla_forward.5']
    %14 = vsyncpa [#allocation3], 0
    %15 = vsyncpa [#allocation5], 0
    loop: start=0, step=1, limit=4
    $region2: #{cla_forward.5} parent=1 // loop_pre_header
      _
    $region3: #{cla_forward.5} parent=1 // loop_header
      %s17 = sphi 0, %s21
      %p18 = scmp.ge.s32.totalorder %s17, 4
      %s24 = sphi 0, %s36
      %s25 = sphi 0, %s32
      %s26 = sphi 0, %s24
      %s27 = sphi 0, %s25
      %s28 = sphi 0, %s26
      %s29 = sphi 0, %s27
      %s41 = sphi 0, %s43
      %s44 = sphi 0, %s41
      %s45 = sphi 0, %s44
      %s61 = sphi 0, %s45
      %s65 = sphi 0, %s65
      %s67 = sphi 0, %s65
      %s68 = sphi 0, %s67
      %s82 = sphi 0, %s68
      %s88 = sphi 0, %s90
      %s91 = sphi 0, %s88
      %s92 = sphi 0, %s91
      %s108 = sphi 0, %s92
      %s114 = sphi 0, %s116
      %s117 = sphi 0, %s114
      %s118 = sphi 0, %s117
      %s134 = sphi 0, %s118
      %s140 = sphi 0, %s142
      %s143 = sphi 0, %s140
      %s144 = sphi 0, %s143
      %s160 = sphi 0, %s144
      %s166 = sphi 0, %s168
      %s169 = sphi 0, %s166
      %s170 = sphi 0, %s169
      %s186 = sphi 0, %s170
      %s190 = sphi 0, %s190
      %s192 = sphi 0, %s190
      %s193 = sphi 0, %s192
      %s207 = sphi 0, %s193
      %s213 = sphi 0, %s215
      %s216 = sphi 0, %s213
      %s217 = sphi 0, %s216
      %s233 = sphi 0, %s217
      %s239 = sphi 0, %s241
      %s242 = sphi 0, %s239
      %s243 = sphi 0, %s242
      %s259 = sphi 0, %s243
      %s267 = sphi 0, %s269
      %s270 = sphi 0, %s267
      %s271 = sphi 0, %s270
      %s287 = sphi 0, %s271
    $region4: #{cla_forward.5} parent=1 // loop_header_branch
      %20 = sbr.rel (%p18) target = $region8
    $region5: #{cla_forward.5} parent=1 // loop_body
      %s22 = ssub.s32 %s17, 1
      %s23 = ssub.s32 %s17, 2
      %s30 = sadd.s32 1, %s25
      %p31 = scmp.ge.s32.totalorder %s30, 2
      %s32 = scalar_select %p31, 0, %s30
      %s33 = sadd.s32 1, %s24
      %s34 = scalar_select %p31, %s33, %s24
      %p35 = scmp.ge.s32.totalorder %s34, 1
      %s36 = scalar_select %p35, 0, %s34
      %s37 = ssub.s32 %s24, %s36
      %s38 = ssub.s32 %s25, %s32
      %s39 = sor.u32 %s37, %s38
      %p40 = scmp.eq.s32.totalorder %s39, 0
      %s42 = sadd.s32 %s41, 1
      %s43 = scalar_select %p40, %s41, %s42
      %p46 = pneg %p40
      %p47 = scmp.eq.s32.totalorder %s17, 1
      %p48 = por %p46, %p47
      %p49 = scmp.ne.s32.totalorder %s41, %s44
      %p50 = scmp.eq.s32.totalorder %s17, 0
      %p51 = por %p49, %p50
      %p52 = scmp.ne.s32.totalorder %s41, %s44
      %p53 = scmp.eq.s32.totalorder %s22, 1
      %p54 = por %p52, %p53
      %p55 = scmp.ne.s32.totalorder %s44, %s45
      %p56 = scmp.eq.s32.totalorder %s22, 0
      %p57 = por %p55, %p56
      %p58 = scmp.ne.s32.totalorder %s44, %s45
      %p59 = scmp.eq.s32.totalorder %s23, 1
      %p60 = por %p58, %p59
      %p62 = scmp.ne.s32.totalorder %s45, %s61
      %p63 = scmp.eq.s32.totalorder %s23, 0
      %p64 = por %p62, %p63
      %s66 = sadd.s32 %s65, 1
      %p69 = scmp.eq.s32.totalorder %s17, 1
      %p70 = scmp.ne.s32.totalorder %s65, %s67
      %p71 = scmp.eq.s32.totalorder %s17, 0
      %p72 = por %p70, %p71
      %p73 = scmp.ne.s32.totalorder %s65, %s67
      %p74 = scmp.eq.s32.totalorder %s22, 1
      %p75 = por %p73, %p74
      %p76 = scmp.ne.s32.totalorder %s67, %s68
      %p77 = scmp.eq.s32.totalorder %s22, 0
      %p78 = por %p76, %p77
      %p79 = scmp.ne.s32.totalorder %s67, %s68
      %p80 = scmp.eq.s32.totalorder %s23, 1
      %p81 = por %p79, %p80
      %p83 = scmp.ne.s32.totalorder %s68, %s82
      %p84 = scmp.eq.s32.totalorder %s23, 0
      %p85 = por %p83, %p84
      %s86 = ssub.s32 %s24, %s36
      %p87 = scmp.eq.s32.totalorder %s86, 0
      %s89 = sadd.s32 %s88, 1
      %s90 = scalar_select %p87, %s88, %s89
      %p93 = pneg %p87
      %p94 = scmp.eq.s32.totalorder %s17, 1
      %p95 = por %p93, %p94
      %p96 = scmp.ne.s32.totalorder %s88, %s91
      %p97 = scmp.eq.s32.totalorder %s17, 0
      %p98 = por %p96, %p97
      %p99 = scmp.ne.s32.totalorder %s88, %s91
      %p100 = scmp.eq.s32.totalorder %s22, 1
      %p101 = por %p99, %p100
      %p102 = scmp.ne.s32.totalorder %s91, %s92
      %p103 = scmp.eq.s32.totalorder %s22, 0
      %p104 = por %p102, %p103
      %p105 = scmp.ne.s32.totalorder %s91, %s92
      %p106 = scmp.eq.s32.totalorder %s23, 1
      %p107 = por %p105, %p106
      %p109 = scmp.ne.s32.totalorder %s92, %s108
      %p110 = scmp.eq.s32.totalorder %s23, 0
      %p111 = por %p109, %p110
      %s112 = ssub.s32 %s24, %s36
      %p113 = scmp.eq.s32.totalorder %s112, 0
      %s115 = sadd.s32 %s114, 1
      %s116 = scalar_select %p113, %s114, %s115
      %p119 = pneg %p113
      %p120 = scmp.eq.s32.totalorder %s17, 1
      %p121 = por %p119, %p120
      %p122 = scmp.ne.s32.totalorder %s114, %s117
      %p123 = scmp.eq.s32.totalorder %s17, 0
      %p124 = por %p122, %p123
      %p125 = scmp.ne.s32.totalorder %s114, %s117
      %p126 = scmp.eq.s32.totalorder %s22, 1
      %p127 = por %p125, %p126
      %p128 = scmp.ne.s32.totalorder %s117, %s118
      %p129 = scmp.eq.s32.totalorder %s22, 0
      %p130 = por %p128, %p129
      %p131 = scmp.ne.s32.totalorder %s117, %s118
      %p132 = scmp.eq.s32.totalorder %s23, 1
      %p133 = por %p131, %p132
      %p135 = scmp.ne.s32.totalorder %s118, %s134
      %p136 = scmp.eq.s32.totalorder %s23, 0
      %p137 = por %p135, %p136
      %s138 = ssub.s32 %s24, %s36
      %p139 = scmp.eq.s32.totalorder %s138, 0
      %s141 = sadd.s32 %s140, 1
      %s142 = scalar_select %p139, %s140, %s141
      %p145 = pneg %p139
      %p146 = scmp.eq.s32.totalorder %s17, 1
      %p147 = por %p145, %p146
      %p148 = scmp.ne.s32.totalorder %s140, %s143
      %p149 = scmp.eq.s32.totalorder %s17, 0
      %p150 = por %p148, %p149
      %p151 = scmp.ne.s32.totalorder %s140, %s143
      %p152 = scmp.eq.s32.totalorder %s22, 1
      %p153 = por %p151, %p152
      %p154 = scmp.ne.s32.totalorder %s143, %s144
      %p155 = scmp.eq.s32.totalorder %s22, 0
      %p156 = por %p154, %p155
      %p157 = scmp.ne.s32.totalorder %s143, %s144
      %p158 = scmp.eq.s32.totalorder %s23, 1
      %p159 = por %p157, %p158
      %p161 = scmp.ne.s32.totalorder %s144, %s160
      %p162 = scmp.eq.s32.totalorder %s23, 0
      %p163 = por %p161, %p162
      %s164 = ssub.s32 %s24, %s36
      %p165 = scmp.eq.s32.totalorder %s164, 0
      %s167 = sadd.s32 %s166, 1
      %s168 = scalar_select %p165, %s166, %s167
      %p171 = pneg %p165
      %p172 = scmp.eq.s32.totalorder %s17, 1
      %p173 = por %p171, %p172
      %p174 = scmp.ne.s32.totalorder %s166, %s169
      %p175 = scmp.eq.s32.totalorder %s17, 0
      %p176 = por %p174, %p175
      %p177 = scmp.ne.s32.totalorder %s166, %s169
      %p178 = scmp.eq.s32.totalorder %s22, 1
      %p179 = por %p177, %p178
      %p180 = scmp.ne.s32.totalorder %s169, %s170
      %p181 = scmp.eq.s32.totalorder %s22, 0
      %p182 = por %p180, %p181
      %p183 = scmp.ne.s32.totalorder %s169, %s170
      %p184 = scmp.eq.s32.totalorder %s23, 1
      %p185 = por %p183, %p184
      %p187 = scmp.ne.s32.totalorder %s170, %s186
      %p188 = scmp.eq.s32.totalorder %s23, 0
      %p189 = por %p187, %p188
      %s191 = sadd.s32 %s190, 1
      %p194 = scmp.eq.s32.totalorder %s17, 1
      %p195 = scmp.ne.s32.totalorder %s190, %s192
      %p196 = scmp.eq.s32.totalorder %s17, 0
      %p197 = por %p195, %p196
      %p198 = scmp.ne.s32.totalorder %s190, %s192
      %p199 = scmp.eq.s32.totalorder %s22, 1
      %p200 = por %p198, %p199
      %p201 = scmp.ne.s32.totalorder %s192, %s193
      %p202 = scmp.eq.s32.totalorder %s22, 0
      %p203 = por %p201, %p202
      %p204 = scmp.ne.s32.totalorder %s192, %s193
      %p205 = scmp.eq.s32.totalorder %s23, 1
      %p206 = por %p204, %p205
      %p208 = scmp.ne.s32.totalorder %s193, %s207
      %p209 = scmp.eq.s32.totalorder %s23, 0
      %p210 = por %p208, %p209
      %s211 = ssub.s32 %s24, %s36
      %p212 = scmp.eq.s32.totalorder %s211, 0
      %s214 = sadd.s32 %s213, 1
      %s215 = scalar_select %p212, %s213, %s214
      %p218 = pneg %p212
      %p219 = scmp.eq.s32.totalorder %s17, 1
      %p220 = por %p218, %p219
      %p221 = scmp.ne.s32.totalorder %s213, %s216
      %p222 = scmp.eq.s32.totalorder %s17, 0
      %p223 = por %p221, %p222
      %p224 = scmp.ne.s32.totalorder %s213, %s216
      %p225 = scmp.eq.s32.totalorder %s22, 1
      %p226 = por %p224, %p225
      %p227 = scmp.ne.s32.totalorder %s216, %s217
      %p228 = scmp.eq.s32.totalorder %s22, 0
      %p229 = por %p227, %p228
      %p230 = scmp.ne.s32.totalorder %s216, %s217
      %p231 = scmp.eq.s32.totalorder %s23, 1
      %p232 = por %p230, %p231
      %p234 = scmp.ne.s32.totalorder %s217, %s233
      %p235 = scmp.eq.s32.totalorder %s23, 0
      %p236 = por %p234, %p235
      %s237 = ssub.s32 %s24, %s36
      %p238 = scmp.eq.s32.totalorder %s237, 0
      %s240 = sadd.s32 %s239, 1
      %s241 = scalar_select %p238, %s239, %s240
      %p244 = pneg %p238
      %p245 = scmp.eq.s32.totalorder %s17, 1
      %p246 = por %p244, %p245
      %p247 = scmp.ne.s32.totalorder %s239, %s242
      %p248 = scmp.eq.s32.totalorder %s17, 0
      %p249 = por %p247, %p248
      %p250 = scmp.ne.s32.totalorder %s239, %s242
      %p251 = scmp.eq.s32.totalorder %s22, 1
      %p252 = por %p250, %p251
      %p253 = scmp.ne.s32.totalorder %s242, %s243
      %p254 = scmp.eq.s32.totalorder %s22, 0
      %p255 = por %p253, %p254
      %p256 = scmp.ne.s32.totalorder %s242, %s243
      %p257 = scmp.eq.s32.totalorder %s23, 1
      %p258 = por %p256, %p257
      %p260 = scmp.ne.s32.totalorder %s243, %s259
      %p261 = scmp.eq.s32.totalorder %s23, 0
      %p262 = por %p260, %p261
      %s263 = ssub.s32 %s24, %s36
      %s264 = ssub.s32 %s25, %s32
      %s265 = sor.u32 %s263, %s264
      %p266 = scmp.eq.s32.totalorder %s265, 0
      %s268 = sadd.s32 %s267, 1
      %s269 = scalar_select %p266, %s267, %s268
      %p272 = pneg %p266
      %p273 = scmp.eq.s32.totalorder %s17, 1
      %p274 = por %p272, %p273
      %p275 = scmp.ne.s32.totalorder %s267, %s270
      %p276 = scmp.eq.s32.totalorder %s17, 0
      %p277 = por %p275, %p276
      %p278 = scmp.ne.s32.totalorder %s267, %s270
      %p279 = scmp.eq.s32.totalorder %s22, 1
      %p280 = por %p278, %p279
      %p281 = scmp.ne.s32.totalorder %s270, %s271
      %p282 = scmp.eq.s32.totalorder %s22, 0
      %p283 = por %p281, %p282
      %p284 = scmp.ne.s32.totalorder %s270, %s271
      %p285 = scmp.eq.s32.totalorder %s23, 1
      %p286 = por %p284, %p285
      %p288 = scmp.ne.s32.totalorder %s271, %s287
      %p289 = scmp.eq.s32.totalorder %s23, 0
      %p290 = por %p288, %p289
      %p291 = scmp.le.s32.totalorder 1, %s17
      %p292 = scmp.lt.s32.totalorder %s17, 3
      %p293 = pnand %p291, %p292
      %p294 = pneg %p293
      // Predicated region
      $region9: #{cla_forward.5} parent=5 // pred_check
        _
      $region10: #{cla_forward.5} parent=5 // pred_check_branch
        %296 = sbr.rel (%p293) target = $region12
      $region11: #{cla_forward.5} parent=5 // pred_region
        %s297 = ssub.s32 %s17, 1
        // Predicated region
        $region13: #{cla_forward.5} parent=11 // pred_check
          %p298 = pneg %p78
        $region14: #{cla_forward.5} parent=11 // pred_check_branch
          %300 = sbr.rel (%p298) target = $region16
        $region15: #{cla_forward.5} parent=11 // pred_region
          _
        $region16: #{cla_forward.5} parent=11 // pred_fallthru
          _
        // Predicated region
        $region17: #{cla_forward.5} parent=11 // pred_check
          %p301 = pneg %p104
        $region18: #{cla_forward.5} parent=11 // pred_check_branch
          %303 = sbr.rel (%p301) target = $region20
        $region19: #{cla_forward.5} parent=11 // pred_region
          %p304 = scmp.lt.s32.totalorder %s26, 0
          %s305 = scalar_select %p304, %s26, 0
          %s306 = smul.addr %s305, 4
          %s307 = smul.addr %s306, 8
          %s308 = scalar_lea.vmem %s2, %s307
        $region20: #{cla_forward.5} parent=11 // pred_fallthru
          _
        // Predicated region
        $region21: #{cla_forward.5} parent=11 // pred_check
          %p309 = pneg %p130
        $region22: #{cla_forward.5} parent=11 // pred_check_branch
          %311 = sbr.rel (%p309) target = $region24
        $region23: #{cla_forward.5} parent=11 // pred_region
          %p312 = scmp.lt.s32.totalorder %s26, 0
          %s313 = scalar_select %p312, %s26, 0
          %s314 = smul.addr %s313, 2
          %s315 = smul.addr %s314, 8
          %s316 = scalar_lea.vmem %s3, %s315
        $region24: #{cla_forward.5} parent=11 // pred_fallthru
          _
        // Predicated region
        $region25: #{cla_forward.5} parent=11 // pred_check
          %p317 = pneg %p156
        $region26: #{cla_forward.5} parent=11 // pred_check_branch
          %319 = sbr.rel (%p317) target = $region28
        $region27: #{cla_forward.5} parent=11 // pred_region
          %s321 = ssub.s32 512, 512
          %322 = vsyncadd [#allocation3], %s321
          %s323 = smul.addr %s26, 4
          %s324 = smul.addr %s323, 128
          %s325 = scalar_lea.hbm %s4, %s324
          %s326 = sshll.u32 [#allocation2], 4
          %s327 = int_to_ptr.vmem [resolvable:$true] %s326
          %332 = dma.hbm_to_vmem [thread:$0]  %s325, 512, %s327, [#allocation3], 256, 256, 16
        $region28: #{cla_forward.5} parent=11 // pred_fallthru
          _
        // Predicated region
        $region29: #{cla_forward.5} parent=11 // pred_check
          %p333 = pneg %p182
        $region30: #{cla_forward.5} parent=11 // pred_check_branch
          %335 = sbr.rel (%p333) target = $region32
        $region31: #{cla_forward.5} parent=11 // pred_region
          %p336 = scmp.lt.s32.totalorder %s26, 0
          %s337 = scalar_select %p336, %s26, 0
          %s338 = smul.addr %s337, 2
          %s339 = smul.addr %s338, 8
          %s340 = scalar_lea.vmem %s5, %s339
        $region32: #{cla_forward.5} parent=11 // pred_fallthru
          _
        // Predicated region
        $region33: #{cla_forward.5} parent=11 // pred_check
          %p341 = pneg %p203
        $region34: #{cla_forward.5} parent=11 // pred_check_branch
          %343 = sbr.rel (%p341) target = $region36
        $region35: #{cla_forward.5} parent=11 // pred_region
          _
        $region36: #{cla_forward.5} parent=11 // pred_fallthru
          _
        // Predicated region
        $region37: #{cla_forward.5} parent=11 // pred_check
          %p344 = pneg %p229
        $region38: #{cla_forward.5} parent=11 // pred_check_branch
          %346 = sbr.rel (%p344) target = $region40
        $region39: #{cla_forward.5} parent=11 // pred_region
          %s348 = ssub.s32 512, 512
          %349 = vsyncadd [#allocation5], %s348
          %s350 = smul.addr %s26, 4
          %s351 = smul.addr %s350, 128
          %s352 = scalar_lea.hbm %s7, %s351
          %s353 = sshll.u32 [#allocation4], 4
          %s354 = int_to_ptr.vmem [resolvable:$true] %s353
          %359 = dma.hbm_to_vmem [thread:$0]  %s352, 512, %s354, [#allocation5], 128, 128, 8
        $region40: #{cla_forward.5} parent=11 // pred_fallthru
          _
        // Predicated region
        $region41: #{cla_forward.5} parent=11 // pred_check
          %p360 = pneg %p255
        $region42: #{cla_forward.5} parent=11 // pred_check_branch
          %362 = sbr.rel (%p360) target = $region44
        $region43: #{cla_forward.5} parent=11 // pred_region
          %p363 = scmp.lt.s32.totalorder %s26, 0
          %s364 = scalar_select %p363, %s26, 0
          %s365 = smul.addr %s364, 8
          %s366 = scalar_lea.vmem %s8, %s365
        $region44: #{cla_forward.5} parent=11 // pred_fallthru
          _
      $region12: #{cla_forward.5} parent=5 // pred_fallthru
        _
      %p367 = scmp.lt.s32.totalorder %s17, 2
      // Predicated region
      $region45: #{cla_forward.5} parent=5 // pred_check
        %p368 = pneg %p367
      $region46: #{cla_forward.5} parent=5 // pred_check_branch
        %370 = sbr.rel (%p368) target = $region48
      $region47: #{cla_forward.5} parent=5 // pred_region
        // Predicated region
        $region49: #{cla_forward.5} parent=47 // pred_check
          %p371 = pneg %p51
        $region50: #{cla_forward.5} parent=47 // pred_check_branch
          %373 = sbr.rel (%p371) target = $region52
        $region51: #{cla_forward.5} parent=47 // pred_region
          %p374 = scmp.lt.s32.totalorder %s24, 0
          %s375 = scalar_select %p374, %s24, 0
          %p376 = scmp.lt.s32.totalorder %s25, 1
          %s377 = scalar_select %p376, %s25, 1
          %s378 = smul.addr %s377, 2
          %s379 = smul.addr %s375, 4
          %s380 = sadd.s32 %s378, %s379
          %s381 = smul.addr %s380, 8
          %s382 = scalar_lea.vmem %s0, %s381
        $region52: #{cla_forward.5} parent=47 // pred_fallthru
          _
      $region48: #{cla_forward.5} parent=5 // pred_fallthru
        _
      %p383 = scmp.le.s32.totalorder 1, %s17
      %p384 = scmp.lt.s32.totalorder %s17, 3
      %p385 = pnand %p383, %p384
      %p386 = pneg %p385
      // Predicated region
      $region53: #{cla_forward.5} parent=5 // pred_check
        _
      $region54: #{cla_forward.5} parent=5 // pred_check_branch
        %388 = sbr.rel (%p385) target = $region56
      $region55: #{cla_forward.5} parent=5 // pred_region
        %s389 = ssub.s32 %s17, 1
        // Predicated region
        $region57: #{cla_forward.5} parent=55 // pred_check
          %p390 = pneg %p156
        $region58: #{cla_forward.5} parent=55 // pred_check_branch
          %392 = sbr.rel (%p390) target = $region60
        $region59: #{cla_forward.5} parent=55 // pred_region
          %393 = dma.done [#allocation3], 512
        $region60: #{cla_forward.5} parent=55 // pred_fallthru
          _
        // Predicated region
        $region61: #{cla_forward.5} parent=55 // pred_check
          %p394 = pneg %p229
        $region62: #{cla_forward.5} parent=55 // pred_check_branch
          %396 = sbr.rel (%p394) target = $region64
        $region63: #{cla_forward.5} parent=55 // pred_region
          %397 = dma.done [#allocation5], 512
        $region64: #{cla_forward.5} parent=55 // pred_fallthru
          _
        %p398 = scmp.lt.s32.totalorder %s26, 0
        %s399 = scalar_select %p398, %s26, 0
        %p400 = scmp.lt.s32.totalorder %s27, 1
        %s401 = scalar_select %p400, %s27, 1
        %s402 = smul.addr %s401, 2
        %s403 = smul.addr %s399, 4
        %s404 = sadd.s32 %s402, %s403
        %s405 = smul.addr %s404, 8
        %s406 = scalar_lea.vmem %s0, %s405
        %p407 = pneg %p57
        %p408 = pneg %p54
        %p409 = pneg %p78
        %p410 = pneg %p75
        %p411 = scmp.lt.s32.totalorder %s26, 0
        %s412 = scalar_select %p411, %s26, 0
        %s413 = smul.addr %s412, 4
        %s414 = smul.addr %s413, 8
        %s415 = scalar_lea.vmem %s2, %s414
        %p416 = pneg %p104
        %p417 = pneg %p101
        %p418 = scmp.lt.s32.totalorder %s26, 0
        %s419 = scalar_select %p418, %s26, 0
        %s420 = smul.addr %s419, 2
        %s421 = smul.addr %s420, 8
        %s422 = scalar_lea.vmem %s3, %s421
        %p423 = pneg %p130
        %p424 = pneg %p127
        %p425 = pneg %p156
        %p426 = pneg %p153
        %p427 = scmp.lt.s32.totalorder %s26, 0
        %s428 = scalar_select %p427, %s26, 0
        %s429 = smul.addr %s428, 2
        %s430 = smul.addr %s429, 8
        %s431 = scalar_lea.vmem %s5, %s430
        %p432 = pneg %p182
        %p433 = pneg %p179
        %p434 = pneg %p203
        %p435 = pneg %p200
        %p436 = pneg %p229
        %p437 = pneg %p226
        %p438 = scmp.lt.s32.totalorder %s26, 0
        %s439 = scalar_select %p438, %s26, 0
        %s440 = smul.addr %s439, 8
        %s441 = scalar_lea.vmem %s8, %s440
        %p442 = pneg %p255
        %p443 = pneg %p252
        %p444 = pneg %p283
        %p445 = pneg %p280
        %p446 = scmp.lt.s32.totalorder %s26, 0
        %s447 = scalar_select %p446, %s26, 0
        %p448 = scmp.lt.s32.totalorder %s27, 1
        %s449 = scalar_select %p448, %s27, 1
        %s450 = smul.addr %s449, 2
        %s451 = smul.addr %s447, 4
        %s452 = sadd.s32 %s450, %s451
        %s453 = smul.addr %s452, 8
        %s454 = scalar_lea.vmem %s9, %s453
        %p455 = scmp.lt.s32.totalorder %s26, 0
        %s456 = scalar_select %p455, %s26, 0
        %p457 = scmp.lt.s32.totalorder %s27, 1
        %s458 = scalar_select %p457, %s27, 1
        %s459 = smul.addr %s458, 2
        %s460 = smul.addr %s456, 4
        %s461 = sadd.s32 %s459, %s460
        %s462 = smul.addr %s461, 8
        %s463 = scalar_lea.vmem %s0, %s462
        %p464 = scmp.lt.s32.totalorder %s26, 0
        %s465 = scalar_select %p464, %s26, 0
        %s466 = smul.addr %s465, 4
        %s467 = smul.addr %s466, 8
        %s468 = scalar_lea.vmem %s2, %s467
        %p469 = scmp.lt.s32.totalorder %s26, 0
        %s470 = scalar_select %p469, %s26, 0
        %s471 = smul.addr %s470, 2
        %s472 = smul.addr %s471, 8
        %s473 = scalar_lea.vmem %s3, %s472
        %p474 = scmp.lt.s32.totalorder %s26, 0
        %s475 = scalar_select %p474, %s26, 0
        %s476 = smul.addr %s475, 2
        %s477 = smul.addr %s476, 8
        %s478 = scalar_lea.vmem %s5, %s477
        %p479 = scmp.lt.s32.totalorder %s26, 0
        %s480 = scalar_select %p479, %s26, 0
        %s481 = smul.addr %s480, 8
        %s482 = scalar_lea.vmem %s8, %s481
        %p483 = scmp.lt.s32.totalorder %s26, 0
        %s484 = scalar_select %p483, %s26, 0
        %p485 = scmp.lt.s32.totalorder %s27, 1
        %s486 = scalar_select %p485, %s27, 1
        %s487 = smul.addr %s486, 2
        %s488 = smul.addr %s484, 4
        %s489 = sadd.s32 %s487, %s488
        %s490 = smul.addr %s489, 8
        %s491 = scalar_lea.vmem %s9, %s490
        %v492 = vld [vmem:[%s463] sm:$0xff]
        %v493 = vld [vmem:[%s463 + $0x8] sm:$0xff]
        %v494 = vld [vmem:[%s1] sm:$0xff]
        %v495 = vld [vmem:[%s1 + $0x8] sm:$0xff]
        %v496 = vld [vmem:[%s1 + $0x10] sm:$0xff]
        %v497 = vld [vmem:[%s1 + $0x18] sm:$0xff]
        %v498 = vld [vmem:[%s1 + $0x20] sm:$0xff]
        %v499 = vld [vmem:[%s1 + $0x28] sm:$0xff]
        %v500 = vld [vmem:[%s1 + $0x30] sm:$0xff]
        %v501 = vld [vmem:[%s1 + $0x38] sm:$0xff]
        %vm502 = vcmask 523264
        %v504 = vsel %vm502, %v492, 0
        %v507 = vsel %vm502, %v493, 0
        %509 = vmatprep.subr.mxu0 0.0
        %510 = vmatpush1.msra.mxu0 %v494
        %511 = vmatprep.subr.mxu0 0.0
        %512 = vmatpush1.msra.mxu0 %v495
        %513 = vmatprep.subr.mxu0 0.0
        %514 = vmatpush1.msra.mxu0 %v496
        %515 = vmatprep.subr.mxu0 0.0
        %516 = vmatpush1.msra.mxu0 %v497
        %517 = vmatprep.subr.mxu0 0.0
        %518 = vmatpush1.msra.mxu0 %v498
        %519 = vmatprep.subr.mxu0 0.0
        %520 = vmatpush1.msra.mxu0 %v499
        %521 = vmatprep.subr.mxu0 0.0
        %522 = vmatpush1.msra.mxu0 %v500
        %523 = vmatprep.subr.mxu0 0.0
        %524 = vmatpush1.msra.mxu0 %v501
        %525 = vmatprep.subr.mxu0 0.0
        %526 = vmatpush1.msra.mxu0 0.0
        %527 = vmatprep.subr.mxu0 0.0
        %528 = vmatpush1.msra.mxu0 0.0
        %529 = vmatprep.subr.mxu0 0.0
        %530 = vmatpush1.msra.mxu0 0.0
        %531 = vmatprep.subr.mxu0 0.0
        %532 = vmatpush1.msra.mxu0 0.0
        %533 = vmatprep.subr.mxu0 0.0
        %534 = vmatpush1.msra.mxu0 0.0
        %535 = vmatprep.subr.mxu0 0.0
        %536 = vmatpush1.msra.mxu0 0.0
        %537 = vmatprep.subr.mxu0 0.0
        %538 = vmatpush1.msra.mxu0 0.0
        %539 = vmatprep.subr.mxu0 0.0
        %540 = vmatpush1.msra.mxu0 0.0
        %541 = vmatprep.subr.mxu0 0.0
        %542 = vmatpush1.msra.mxu0 0.0
        %543 = vmatprep.subr.mxu0 0.0
        %544 = vmatpush1.msra.mxu0 0.0
        %545 = vmatprep.subr.mxu0 0.0
        %546 = vmatpush1.msra.mxu0 0.0
        %547 = vmatprep.subr.mxu0 0.0
        %548 = vmatpush1.msra.mxu0 0.0
        %549 = vmatprep.subr.mxu0 0.0
        %550 = vmatpush1.msra.mxu0 0.0
        %551 = vmatprep.subr.mxu0 0.0
        %552 = vmatpush1.msra.mxu0 0.0
        %553 = vmatprep.subr.mxu0 0.0
        %554 = vmatpush1.msra.mxu0 0.0
        %555 = vmatprep.subr.mxu0 0.0
        %556 = vmatpush1.msra.mxu0 0.0
        %557 = vmatprep.subr.mxu0 0.0
        %558 = vmatpush1.msra.mxu0 0.0
        %559 = vmatprep.subr.mxu0 0.0
        %560 = vmatpush1.msra.mxu0 0.0
        %561 = vmatprep.subr.mxu0 0.0
        %562 = vmatpush1.msra.mxu0 0.0
        %563 = vmatprep.subr.mxu0 0.0
        %564 = vmatpush1.msra.mxu0 0.0
        %565 = vmatprep.subr.mxu0 0.0
        %566 = vmatpush1.msra.mxu0 0.0
        %567 = vmatprep.subr.mxu0 0.0
        %568 = vmatpush1.msra.mxu0 0.0
        %569 = vmatprep.subr.mxu0 0.0
        %570 = vmatpush1.msra.mxu0 0.0
        %571 = vmatprep.subr.mxu0 0.0
        %572 = vmatpush1.msra.mxu0 0.0
        %573 = vmatprep.mubr.f32.mxu0 0.0
        %574 = vmatmul.mubr.f32.gmra.mrb[0].mxu0 %v504
        %v575 = vpop.f32.mrb[0].mxu0
        %v576 = vadd.f32 0.0, %v575
        %v577 = vpop.f32.mrb[0].mxu0
        %578 = vmatprep.mubr.f32.mxu0 0.0
        %579 = vmatmul.mubr.f32.gmra.mrb[0].mxu0 %v507
        %v580 = vpop.f32.mrb[0].mxu0
        %v581 = vadd.f32 0.0, %v580
        %v582 = vpop.f32.mrb[0].mxu0
        %583 = vdwg.mxu0
        %s584 = scalar_lea.vmem %s1, 64
        %v585 = vld [vmem:[%s584] sm:$0xff]
        %v586 = vld [vmem:[%s584 + $0x8] sm:$0xff]
        %v587 = vld [vmem:[%s584 + $0x10] sm:$0xff]
        %v588 = vld [vmem:[%s584 + $0x18] sm:$0xff]
        %v589 = vld [vmem:[%s584 + $0x20] sm:$0xff]
        %v590 = vld [vmem:[%s584 + $0x28] sm:$0xff]
        %v591 = vld [vmem:[%s584 + $0x30] sm:$0xff]
        %v592 = vld [vmem:[%s584 + $0x38] sm:$0xff]
        %593 = vmatprep.subr.mxu0 0.0
        %594 = vmatpush1.msra.mxu0 %v585
        %595 = vmatprep.subr.mxu0 0.0
        %596 = vmatpush1.msra.mxu0 %v586
        %597 = vmatprep.subr.mxu0 0.0
        %598 = vmatpush1.msra.mxu0 %v587
        %599 = vmatprep.subr.mxu0 0.0
        %600 = vmatpush1.msra.mxu0 %v588
        %601 = vmatprep.subr.mxu0 0.0
        %602 = vmatpush1.msra.mxu0 %v589
        %603 = vmatprep.subr.mxu0 0.0
        %604 = vmatpush1.msra.mxu0 %v590
        %605 = vmatprep.subr.mxu0 0.0
        %606 = vmatpush1.msra.mxu0 %v591
        %607 = vmatprep.subr.mxu0 0.0
        %608 = vmatpush1.msra.mxu0 %v592
        %609 = vmatprep.subr.mxu0 0.0
        %610 = vmatpush1.msra.mxu0 0.0
        %611 = vmatprep.subr.mxu0 0.0
        %612 = vmatpush1.msra.mxu0 0.0
        %613 = vmatprep.subr.mxu0 0.0
        %614 = vmatpush1.msra.mxu0 0.0
        %615 = vmatprep.subr.mxu0 0.0
        %616 = vmatpush1.msra.mxu0 0.0
        %617 = vmatprep.subr.mxu0 0.0
        %618 = vmatpush1.msra.mxu0 0.0
        %619 = vmatprep.subr.mxu0 0.0
        %620 = vmatpush1.msra.mxu0 0.0
        %621 = vmatprep.subr.mxu0 0.0
        %622 = vmatpush1.msra.mxu0 0.0
        %623 = vmatprep.subr.mxu0 0.0
        %624 = vmatpush1.msra.mxu0 0.0
        %625 = vmatprep.subr.mxu0 0.0
        %626 = vmatpush1.msra.mxu0 0.0
        %627 = vmatprep.subr.mxu0 0.0
        %628 = vmatpush1.msra.mxu0 0.0
        %629 = vmatprep.subr.mxu0 0.0
        %630 = vmatpush1.msra.mxu0 0.0
        %631 = vmatprep.subr.mxu0 0.0
        %632 = vmatpush1.msra.mxu0 0.0
        %633 = vmatprep.subr.mxu0 0.0
        %634 = vmatpush1.msra.mxu0 0.0
        %635 = vmatprep.subr.mxu0 0.0
        %636 = vmatpush1.msra.mxu0 0.0
        %637 = vmatprep.subr.mxu0 0.0
        %638 = vmatpush1.msra.mxu0 0.0
        %639 = vmatprep.subr.mxu0 0.0
        %640 = vmatpush1.msra.mxu0 0.0
        %641 = vmatprep.subr.mxu0 0.0
        %642 = vmatpush1.msra.mxu0 0.0
        %643 = vmatprep.subr.mxu0 0.0
        %644 = vmatpush1.msra.mxu0 0.0
        %645 = vmatprep.subr.mxu0 0.0
        %646 = vmatpush1.msra.mxu0 0.0
        %647 = vmatprep.subr.mxu0 0.0
        %648 = vmatpush1.msra.mxu0 0.0
        %649 = vmatprep.subr.mxu0 0.0
        %650 = vmatpush1.msra.mxu0 0.0
        %651 = vmatprep.subr.mxu0 0.0
        %652 = vmatpush1.msra.mxu0 0.0
        %653 = vmatprep.subr.mxu0 0.0
        %654 = vmatpush1.msra.mxu0 0.0
        %655 = vmatprep.subr.mxu0 0.0
        %656 = vmatpush1.msra.mxu0 0.0
        %657 = vmatprep.mubr.f32.mxu0 0.0
        %658 = vmatmul.mubr.f32.gmra.mrb[0].mxu0 %v504
        %v659 = vpop.f32.mrb[0].mxu0
        %v660 = vadd.f32 0.0, %v659
        %v661 = vpop.f32.mrb[0].mxu0
        %662 = vmatprep.mubr.f32.mxu0 0.0
        %663 = vmatmul.mubr.f32.gmra.mrb[0].mxu0 %v507
        %v664 = vpop.f32.mrb[0].mxu0
        %v665 = vadd.f32 0.0, %v664
        %v666 = vpop.f32.mrb[0].mxu0
        %667 = vdwg.mxu0
        %s668 = scalar_lea.vmem %s1, 128
        %v669 = vld [vmem:[%s668] sm:$0xff]
        %v670 = vld [vmem:[%s668 + $0x8] sm:$0xff]
        %v671 = vld [vmem:[%s668 + $0x10] sm:$0xff]
        %v672 = vld [vmem:[%s668 + $0x18] sm:$0xff]
        %v673 = vld [vmem:[%s668 + $0x20] sm:$0xff]
        %v674 = vld [vmem:[%s668 + $0x28] sm:$0xff]
        %v675 = vld [vmem:[%s668 + $0x30] sm:$0xff]
        %v676 = vld [vmem:[%s668 + $0x38] sm:$0xff]
        %677 = vmatprep.subr.mxu0 0.0
        %678 = vmatpush1.msra.mxu0 %v669
        %679 = vmatprep.subr.mxu0 0.0
        %680 = vmatpush1.msra.mxu0 %v670
        %681 = vmatprep.subr.mxu0 0.0
        %682 = vmatpush1.msra.mxu0 %v671
        %683 = vmatprep.subr.mxu0 0.0
        %684 = vmatpush1.msra.mxu0 %v672
        %685 = vmatprep.subr.mxu0 0.0
        %686 = vmatpush1.msra.mxu0 %v673
        %687 = vmatprep.subr.mxu0 0.0
        %688 = vmatpush1.msra.mxu0 %v674
        %689 = vmatprep.subr.mxu0 0.0
        %690 = vmatpush1.msra.mxu0 %v675
        %691 = vmatprep.subr.mxu0 0.0
        %692 = vmatpush1.msra.mxu0 %v676
        %693 = vmatprep.subr.mxu0 0.0
        %694 = vmatpush1.msra.mxu0 0.0
        %695 = vmatprep.subr.mxu0 0.0
        %696 = vmatpush1.msra.mxu0 0.0
        %697 = vmatprep.subr.mxu0 0.0
        %698 = vmatpush1.msra.mxu0 0.0
        %699 = vmatprep.subr.mxu0 0.0
        %700 = vmatpush1.msra.mxu0 0.0
        %701 = vmatprep.subr.mxu0 0.0
        %702 = vmatpush1.msra.mxu0 0.0
        %703 = vmatprep.subr.mxu0 0.0
        %704 = vmatpush1.msra.mxu0 0.0
        %705 = vmatprep.subr.mxu0 0.0
        %706 = vmatpush1.msra.mxu0 0.0
        %707 = vmatprep.subr.mxu0 0.0
        %708 = vmatpush1.msra.mxu0 0.0
        %709 = vmatprep.subr.mxu0 0.0
        %710 = vmatpush1.msra.mxu0 0.0
        %711 = vmatprep.subr.mxu0 0.0
        %712 = vmatpush1.msra.mxu0 0.0
        %713 = vmatprep.subr.mxu0 0.0
        %714 = vmatpush1.msra.mxu0 0.0
        %715 = vmatprep.subr.mxu0 0.0
        %716 = vmatpush1.msra.mxu0 0.0
        %717 = vmatprep.subr.mxu0 0.0
        %718 = vmatpush1.msra.mxu0 0.0
        %719 = vmatprep.subr.mxu0 0.0
        %720 = vmatpush1.msra.mxu0 0.0
        %721 = vmatprep.subr.mxu0 0.0
        %722 = vmatpush1.msra.mxu0 0.0
        %723 = vmatprep.subr.mxu0 0.0
        %724 = vmatpush1.msra.mxu0 0.0
        %725 = vmatprep.subr.mxu0 0.0
        %726 = vmatpush1.msra.mxu0 0.0
        %727 = vmatprep.subr.mxu0 0.0
        %728 = vmatpush1.msra.mxu0 0.0
        %729 = vmatprep.subr.mxu0 0.0
        %730 = vmatpush1.msra.mxu0 0.0
        %731 = vmatprep.subr.mxu0 0.0
        %732 = vmatpush1.msra.mxu0 0.0
        %733 = vmatprep.subr.mxu0 0.0
        %734 = vmatpush1.msra.mxu0 0.0
        %735 = vmatprep.subr.mxu0 0.0
        %736 = vmatpush1.msra.mxu0 0.0
        %737 = vmatprep.subr.mxu0 0.0
        %738 = vmatpush1.msra.mxu0 0.0
        %739 = vmatprep.subr.mxu0 0.0
        %740 = vmatpush1.msra.mxu0 0.0
        %741 = vmatprep.mubr.f32.mxu0 0.0
        %742 = vmatmul.mubr.f32.gmra.mrb[0].mxu0 %v504
        %v743 = vpop.f32.mrb[0].mxu0
        %v744 = vadd.f32 0.0, %v743
        %v745 = vpop.f32.mrb[0].mxu0
        %746 = vmatprep.mubr.f32.mxu0 0.0
        %747 = vmatmul.mubr.f32.gmra.mrb[0].mxu0 %v507
        %v748 = vpop.f32.mrb[0].mxu0
        %v749 = vadd.f32 0.0, %v748
        %v750 = vpop.f32.mrb[0].mxu0
        %751 = vdwg.mxu0
        %s752 = scalar_lea.vmem %s1, 192
        %v753 = vld [vmem:[%s752] sm:$0xff]
        %v754 = vld [vmem:[%s752 + $0x8] sm:$0xff]
        %v755 = vld [vmem:[%s752 + $0x10] sm:$0xff]
        %v756 = vld [vmem:[%s752 + $0x18] sm:$0xff]
        %v757 = vld [vmem:[%s752 + $0x20] sm:$0xff]
        %v758 = vld [vmem:[%s752 + $0x28] sm:$0xff]
        %v759 = vld [vmem:[%s752 + $0x30] sm:$0xff]
        %v760 = vld [vmem:[%s752 + $0x38] sm:$0xff]
        %761 = vmatprep.subr.mxu0 0.0
        %762 = vmatpush1.msra.mxu0 %v753
        %763 = vmatprep.subr.mxu0 0.0
        %764 = vmatpush1.msra.mxu0 %v754
        %765 = vmatprep.subr.mxu0 0.0
        %766 = vmatpush1.msra.mxu0 %v755
        %767 = vmatprep.subr.mxu0 0.0
        %768 = vmatpush1.msra.mxu0 %v756
        %769 = vmatprep.subr.mxu0 0.0
        %770 = vmatpush1.msra.mxu0 %v757
        %771 = vmatprep.subr.mxu0 0.0
        %772 = vmatpush1.msra.mxu0 %v758
        %773 = vmatprep.subr.mxu0 0.0
        %774 = vmatpush1.msra.mxu0 %v759
        %775 = vmatprep.subr.mxu0 0.0
        %776 = vmatpush1.msra.mxu0 %v760
        %777 = vmatprep.subr.mxu0 0.0
        %778 = vmatpush1.msra.mxu0 0.0
        %779 = vmatprep.subr.mxu0 0.0
        %780 = vmatpush1.msra.mxu0 0.0
        %781 = vmatprep.subr.mxu0 0.0
        %782 = vmatpush1.msra.mxu0 0.0
        %783 = vmatprep.subr.mxu0 0.0
        %784 = vmatpush1.msra.mxu0 0.0
        %785 = vmatprep.subr.mxu0 0.0
        %786 = vmatpush1.msra.mxu0 0.0
        %787 = vmatprep.subr.mxu0 0.0
        %788 = vmatpush1.msra.mxu0 0.0
        %789 = vmatprep.subr.mxu0 0.0
        %790 = vmatpush1.msra.mxu0 0.0
        %791 = vmatprep.subr.mxu0 0.0
        %792 = vmatpush1.msra.mxu0 0.0
        %793 = vmatprep.subr.mxu0 0.0
        %794 = vmatpush1.msra.mxu0 0.0
        %795 = vmatprep.subr.mxu0 0.0
        %796 = vmatpush1.msra.mxu0 0.0
        %797 = vmatprep.subr.mxu0 0.0
        %798 = vmatpush1.msra.mxu0 0.0
        %799 = vmatprep.subr.mxu0 0.0
        %800 = vmatpush1.msra.mxu0 0.0
        %801 = vmatprep.subr.mxu0 0.0
        %802 = vmatpush1.msra.mxu0 0.0
        %803 = vmatprep.subr.mxu0 0.0
        %804 = vmatpush1.msra.mxu0 0.0
        %805 = vmatprep.subr.mxu0 0.0
        %806 = vmatpush1.msra.mxu0 0.0
        %807 = vmatprep.subr.mxu0 0.0
        %808 = vmatpush1.msra.mxu0 0.0
        %809 = vmatprep.subr.mxu0 0.0
        %810 = vmatpush1.msra.mxu0 0.0
        %811 = vmatprep.subr.mxu0 0.0
        %812 = vmatpush1.msra.mxu0 0.0
        %813 = vmatprep.subr.mxu0 0.0
        %814 = vmatpush1.msra.mxu0 0.0
        %815 = vmatprep.subr.mxu0 0.0
        %816 = vmatpush1.msra.mxu0 0.0
        %817 = vmatprep.subr.mxu0 0.0
        %818 = vmatpush1.msra.mxu0 0.0
        %819 = vmatprep.subr.mxu0 0.0
        %820 = vmatpush1.msra.mxu0 0.0
        %821 = vmatprep.subr.mxu0 0.0
        %822 = vmatpush1.msra.mxu0 0.0
        %823 = vmatprep.subr.mxu0 0.0
        %824 = vmatpush1.msra.mxu0 0.0
        %825 = vmatprep.mubr.f32.mxu0 0.0
        %826 = vmatmul.mubr.f32.gmra.mrb[0].mxu0 %v504
        %v827 = vpop.f32.mrb[0].mxu0
        %v828 = vadd.f32 0.0, %v827
        %v829 = vpop.f32.mrb[0].mxu0
        %830 = vmatprep.mubr.f32.mxu0 0.0
        %831 = vmatmul.mubr.f32.gmra.mrb[0].mxu0 %v507
        %v832 = vpop.f32.mrb[0].mxu0
        %v833 = vadd.f32 0.0, %v832
        %v834 = vpop.f32.mrb[0].mxu0
        %835 = vdwg.mxu0
        %s836 = scalar_lea.vmem %s1, 256
        %v837 = vld [vmem:[%s836] sm:$0xff]
        %v838 = vld [vmem:[%s836 + $0x8] sm:$0xff]
        %v839 = vld [vmem:[%s836 + $0x10] sm:$0xff]
        %v840 = vld [vmem:[%s836 + $0x18] sm:$0xff]
        %v841 = vld [vmem:[%s836 + $0x20] sm:$0xff]
        %v842 = vld [vmem:[%s836 + $0x28] sm:$0xff]
        %v843 = vld [vmem:[%s836 + $0x30] sm:$0xff]
        %v844 = vld [vmem:[%s836 + $0x38] sm:$0xff]
        %845 = vmatprep.subr.mxu0 0.0
        %846 = vmatpush1.msra.mxu0 %v837
        %847 = vmatprep.subr.mxu0 0.0
        %848 = vmatpush1.msra.mxu0 %v838
        %849 = vmatprep.subr.mxu0 0.0
        %850 = vmatpush1.msra.mxu0 %v839
        %851 = vmatprep.subr.mxu0 0.0
        %852 = vmatpush1.msra.mxu0 %v840
        %853 = vmatprep.subr.mxu0 0.0
        %854 = vmatpush1.msra.mxu0 %v841
        %855 = vmatprep.subr.mxu0 0.0
        %856 = vmatpush1.msra.mxu0 %v842
        %857 = vmatprep.subr.mxu0 0.0
        %858 = vmatpush1.msra.mxu0 %v843
        %859 = vmatprep.subr.mxu0 0.0
        %860 = vmatpush1.msra.mxu0 %v844
        %861 = vmatprep.subr.mxu0 0.0
        %862 = vmatpush1.msra.mxu0 0.0
        %863 = vmatprep.subr.mxu0 0.0
        %864 = vmatpush1.msra.mxu0 0.0
        %865 = vmatprep.subr.mxu0 0.0
        %866 = vmatpush1.msra.mxu0 0.0
        %867 = vmatprep.subr.mxu0 0.0
        %868 = vmatpush1.msra.mxu0 0.0
        %869 = vmatprep.subr.mxu0 0.0
        %870 = vmatpush1.msra.mxu0 0.0
        %871 = vmatprep.subr.mxu0 0.0
        %872 = vmatpush1.msra.mxu0 0.0
        %873 = vmatprep.subr.mxu0 0.0
        %874 = vmatpush1.msra.mxu0 0.0
        %875 = vmatprep.subr.mxu0 0.0
        %876 = vmatpush1.msra.mxu0 0.0
        %877 = vmatprep.subr.mxu0 0.0
        %878 = vmatpush1.msra.mxu0 0.0
        %879 = vmatprep.subr.mxu0 0.0
        %880 = vmatpush1.msra.mxu0 0.0
        %881 = vmatprep.subr.mxu0 0.0
        %882 = vmatpush1.msra.mxu0 0.0
        %883 = vmatprep.subr.mxu0 0.0
        %884 = vmatpush1.msra.mxu0 0.0
        %885 = vmatprep.subr.mxu0 0.0
        %886 = vmatpush1.msra.mxu0 0.0
        %887 = vmatprep.subr.mxu0 0.0
        %888 = vmatpush1.msra.mxu0 0.0
        %889 = vmatprep.subr.mxu0 0.0
        %890 = vmatpush1.msra.mxu0 0.0
        %891 = vmatprep.subr.mxu0 0.0
        %892 = vmatpush1.msra.mxu0 0.0
        %893 = vmatprep.subr.mxu0 0.0
        %894 = vmatpush1.msra.mxu0 0.0
        %895 = vmatprep.subr.mxu0 0.0
        %896 = vmatpush1.msra.mxu0 0.0
        %897 = vmatprep.subr.mxu0 0.0
        %898 = vmatpush1.msra.mxu0 0.0
        %899 = vmatprep.subr.mxu0 0.0
        %900 = vmatpush1.msra.mxu0 0.0
        %901 = vmatprep.subr.mxu0 0.0
        %902 = vmatpush1.msra.mxu0 0.0
        %903 = vmatprep.subr.mxu0 0.0
        %904 = vmatpush1.msra.mxu0 0.0
        %905 = vmatprep.subr.mxu0 0.0
        %906 = vmatpush1.msra.mxu0 0.0
        %907 = vmatprep.subr.mxu0 0.0
        %908 = vmatpush1.msra.mxu0 0.0
        %909 = vmatprep.mubr.f32.mxu0 0.0
        %910 = vmatmul.mubr.f32.gmra.mrb[0].mxu0 %v504
        %v911 = vpop.f32.mrb[0].mxu0
        %v912 = vadd.f32 0.0, %v911
        %v913 = vpop.f32.mrb[0].mxu0
        %914 = vmatprep.mubr.f32.mxu0 0.0
        %915 = vmatmul.mubr.f32.gmra.mrb[0].mxu0 %v507
        %v916 = vpop.f32.mrb[0].mxu0
        %v917 = vadd.f32 0.0, %v916
        %v918 = vpop.f32.mrb[0].mxu0
        %919 = vdwg.mxu0
        %s920 = scalar_lea.vmem %s1, 320
        %v921 = vld [vmem:[%s920] sm:$0xff]
        %v922 = vld [vmem:[%s920 + $0x8] sm:$0xff]
        %v923 = vld [vmem:[%s920 + $0x10] sm:$0xff]
        %v924 = vld [vmem:[%s920 + $0x18] sm:$0xff]
        %v925 = vld [vmem:[%s920 + $0x20] sm:$0xff]
        %v926 = vld [vmem:[%s920 + $0x28] sm:$0xff]
        %v927 = vld [vmem:[%s920 + $0x30] sm:$0xff]
        %v928 = vld [vmem:[%s920 + $0x38] sm:$0xff]
        %929 = vmatprep.subr.mxu0 0.0
        %930 = vmatpush1.msra.mxu0 %v921
        %931 = vmatprep.subr.mxu0 0.0
        %932 = vmatpush1.msra.mxu0 %v922
        %933 = vmatprep.subr.mxu0 0.0
        %934 = vmatpush1.msra.mxu0 %v923
        %935 = vmatprep.subr.mxu0 0.0
        %936 = vmatpush1.msra.mxu0 %v924
        %937 = vmatprep.subr.mxu0 0.0
        %938 = vmatpush1.msra.mxu0 %v925
        %939 = vmatprep.subr.mxu0 0.0
        %940 = vmatpush1.msra.mxu0 %v926
        %941 = vmatprep.subr.mxu0 0.0
        %942 = vmatpush1.msra.mxu0 %v927
        %943 = vmatprep.subr.mxu0 0.0
        %944 = vmatpush1.msra.mxu0 %v928
        %945 = vmatprep.subr.mxu0 0.0
        %946 = vmatpush1.msra.mxu0 0.0
        %947 = vmatprep.subr.mxu0 0.0
        %948 = vmatpush1.msra.mxu0 0.0
        %949 = vmatprep.subr.mxu0 0.0
        %950 = vmatpush1.msra.mxu0 0.0
        %951 = vmatprep.subr.mxu0 0.0
        %952 = vmatpush1.msra.mxu0 0.0
        %953 = vmatprep.subr.mxu0 0.0
        %954 = vmatpush1.msra.mxu0 0.0
        %955 = vmatprep.subr.mxu0 0.0
        %956 = vmatpush1.msra.mxu0 0.0
        %957 = vmatprep.subr.mxu0 0.0
        %958 = vmatpush1.msra.mxu0 0.0
        %959 = vmatprep.subr.mxu0 0.0
        %960 = vmatpush1.msra.mxu0 0.0
        %961 = vmatprep.subr.mxu0 0.0
        %962 = vmatpush1.msra.mxu0 0.0
        %963 = vmatprep.subr.mxu0 0.0
        %964 = vmatpush1.msra.mxu0 0.0
        %965 = vmatprep.subr.mxu0 0.0
        %966 = vmatpush1.msra.mxu0 0.0
        %967 = vmatprep.subr.mxu0 0.0
        %968 = vmatpush1.msra.mxu0 0.0
        %969 = vmatprep.subr.mxu0 0.0
        %970 = vmatpush1.msra.mxu0 0.0
        %971 = vmatprep.subr.mxu0 0.0
        %972 = vmatpush1.msra.mxu0 0.0
        %973 = vmatprep.subr.mxu0 0.0
        %974 = vmatpush1.msra.mxu0 0.0
        %975 = vmatprep.subr.mxu0 0.0
        %976 = vmatpush1.msra.mxu0 0.0
        %977 = vmatprep.subr.mxu0 0.0
        %978 = vmatpush1.msra.mxu0 0.0
        %979 = vmatprep.subr.mxu0 0.0
        %980 = vmatpush1.msra.mxu0 0.0
        %981 = vmatprep.subr.mxu0 0.0
        %982 = vmatpush1.msra.mxu0 0.0
        %983 = vmatprep.subr.mxu0 0.0
        %984 = vmatpush1.msra.mxu0 0.0
        %985 = vmatprep.subr.mxu0 0.0
        %986 = vmatpush1.msra.mxu0 0.0
        %987 = vmatprep.subr.mxu0 0.0
        %988 = vmatpush1.msra.mxu0 0.0
        %989 = vmatprep.subr.mxu0 0.0
        %990 = vmatpush1.msra.mxu0 0.0
        %991 = vmatprep.subr.mxu0 0.0
        %992 = vmatpush1.msra.mxu0 0.0
        %993 = vmatprep.mubr.f32.mxu0 0.0
        %994 = vmatmul.mubr.f32.gmra.mrb[0].mxu0 %v504
        %v995 = vpop.f32.mrb[0].mxu0
        %v996 = vadd.f32 0.0, %v995
        %v997 = vpop.f32.mrb[0].mxu0
        %998 = vmatprep.mubr.f32.mxu0 0.0
        %999 = vmatmul.mubr.f32.gmra.mrb[0].mxu0 %v507
        %v1000 = vpop.f32.mrb[0].mxu0
        %v1001 = vadd.f32 0.0, %v1000
        %v1002 = vpop.f32.mrb[0].mxu0
        %1003 = vdwg.mxu0
        %s1004 = scalar_lea.vmem %s1, 384
        %v1005 = vld [vmem:[%s1004] sm:$0xff]
        %v1006 = vld [vmem:[%s1004 + $0x8] sm:$0xff]
        %v1007 = vld [vmem:[%s1004 + $0x10] sm:$0xff]
        %v1008 = vld [vmem:[%s1004 + $0x18] sm:$0xff]
        %v1009 = vld [vmem:[%s1004 + $0x20] sm:$0xff]
        %v1010 = vld [vmem:[%s1004 + $0x28] sm:$0xff]
        %v1011 = vld [vmem:[%s1004 + $0x30] sm:$0xff]
        %v1012 = vld [vmem:[%s1004 + $0x38] sm:$0xff]
        %1013 = vmatprep.subr.mxu0 0.0
        %1014 = vmatpush1.msra.mxu0 %v1005
        %1015 = vmatprep.subr.mxu0 0.0
        %1016 = vmatpush1.msra.mxu0 %v1006
        %1017 = vmatprep.subr.mxu0 0.0
        %1018 = vmatpush1.msra.mxu0 %v1007
        %1019 = vmatprep.subr.mxu0 0.0
        %1020 = vmatpush1.msra.mxu0 %v1008
        %1021 = vmatprep.subr.mxu0 0.0
        %1022 = vmatpush1.msra.mxu0 %v1009
        %1023 = vmatprep.subr.mxu0 0.0
        %1024 = vmatpush1.msra.mxu0 %v1010
        %1025 = vmatprep.subr.mxu0 0.0
        %1026 = vmatpush1.msra.mxu0 %v1011
        %1027 = vmatprep.subr.mxu0 0.0
        %1028 = vmatpush1.msra.mxu0 %v1012
        %1029 = vmatprep.subr.mxu0 0.0
        %1030 = vmatpush1.msra.mxu0 0.0
        %1031 = vmatprep.subr.mxu0 0.0
        %1032 = vmatpush1.msra.mxu0 0.0
        %1033 = vmatprep.subr.mxu0 0.0
        %1034 = vmatpush1.msra.mxu0 0.0
        %1035 = vmatprep.subr.mxu0 0.0
        %1036 = vmatpush1.msra.mxu0 0.0
        %1037 = vmatprep.subr.mxu0 0.0
        %1038 = vmatpush1.msra.mxu0 0.0
        %1039 = vmatprep.subr.mxu0 0.0
        %1040 = vmatpush1.msra.mxu0 0.0
        %1041 = vmatprep.subr.mxu0 0.0
        %1042 = vmatpush1.msra.mxu0 0.0
        %1043 = vmatprep.subr.mxu0 0.0
        %1044 = vmatpush1.msra.mxu0 0.0
        %1045 = vmatprep.subr.mxu0 0.0
        %1046 = vmatpush1.msra.mxu0 0.0
        %1047 = vmatprep.subr.mxu0 0.0
        %1048 = vmatpush1.msra.mxu0 0.0
        %1049 = vmatprep.subr.mxu0 0.0
        %1050 = vmatpush1.msra.mxu0 0.0
        %1051 = vmatprep.subr.mxu0 0.0
        %1052 = vmatpush1.msra.mxu0 0.0
        %1053 = vmatprep.subr.mxu0 0.0
        %1054 = vmatpush1.msra.mxu0 0.0
        %1055 = vmatprep.subr.mxu0 0.0
        %1056 = vmatpush1.msra.mxu0 0.0
        %1057 = vmatprep.subr.mxu0 0.0
        %1058 = vmatpush1.msra.mxu0 0.0
        %1059 = vmatprep.subr.mxu0 0.0
        %1060 = vmatpush1.msra.mxu0 0.0
        %1061 = vmatprep.subr.mxu0 0.0
        %1062 = vmatpush1.msra.mxu0 0.0
        %1063 = vmatprep.subr.mxu0 0.0
        %1064 = vmatpush1.msra.mxu0 0.0
        %1065 = vmatprep.subr.mxu0 0.0
        %1066 = vmatpush1.msra.mxu0 0.0
        %1067 = vmatprep.subr.mxu0 0.0
        %1068 = vmatpush1.msra.mxu0 0.0
        %1069 = vmatprep.subr.mxu0 0.0
        %1070 = vmatpush1.msra.mxu0 0.0
        %1071 = vmatprep.subr.mxu0 0.0
        %1072 = vmatpush1.msra.mxu0 0.0
        %1073 = vmatprep.subr.mxu0 0.0
        %1074 = vmatpush1.msra.mxu0 0.0
        %1075 = vmatprep.subr.mxu0 0.0
        %1076 = vmatpush1.msra.mxu0 0.0
        %1077 = vmatprep.mubr.f32.mxu0 0.0
        %1078 = vmatmul.mubr.f32.gmra.mrb[0].mxu0 %v504
        %v1079 = vpop.f32.mrb[0].mxu0
        %v1080 = vadd.f32 0.0, %v1079
        %v1081 = vpop.f32.mrb[0].mxu0
        %1082 = vmatprep.mubr.f32.mxu0 0.0
        %1083 = vmatmul.mubr.f32.gmra.mrb[0].mxu0 %v507
        %v1084 = vpop.f32.mrb[0].mxu0
        %v1085 = vadd.f32 0.0, %v1084
        %v1086 = vpop.f32.mrb[0].mxu0
        %1087 = vdwg.mxu0
        %s1088 = scalar_lea.vmem %s1, 448
        %v1089 = vld [vmem:[%s1088] sm:$0xff]
        %v1090 = vld [vmem:[%s1088 + $0x8] sm:$0xff]
        %v1091 = vld [vmem:[%s1088 + $0x10] sm:$0xff]
        %v1092 = vld [vmem:[%s1088 + $0x18] sm:$0xff]
        %v1093 = vld [vmem:[%s1088 + $0x20] sm:$0xff]
        %v1094 = vld [vmem:[%s1088 + $0x28] sm:$0xff]
        %v1095 = vld [vmem:[%s1088 + $0x30] sm:$0xff]
        %v1096 = vld [vmem:[%s1088 + $0x38] sm:$0xff]
        %1097 = vmatprep.subr.mxu0 0.0
        %1098 = vmatpush1.msra.mxu0 %v1089
        %1099 = vmatprep.subr.mxu0 0.0
        %1100 = vmatpush1.msra.mxu0 %v1090
        %1101 = vmatprep.subr.mxu0 0.0
        %1102 = vmatpush1.msra.mxu0 %v1091
        %1103 = vmatprep.subr.mxu0 0.0
        %1104 = vmatpush1.msra.mxu0 %v1092
        %1105 = vmatprep.subr.mxu0 0.0
        %1106 = vmatpush1.msra.mxu0 %v1093
        %1107 = vmatprep.subr.mxu0 0.0
        %1108 = vmatpush1.msra.mxu0 %v1094
        %1109 = vmatprep.subr.mxu0 0.0
        %1110 = vmatpush1.msra.mxu0 %v1095
        %1111 = vmatprep.subr.mxu0 0.0
        %1112 = vmatpush1.msra.mxu0 %v1096
        %1113 = vmatprep.subr.mxu0 0.0
        %1114 = vmatpush1.msra.mxu0 0.0
        %1115 = vmatprep.subr.mxu0 0.0
        %1116 = vmatpush1.msra.mxu0 0.0
        %1117 = vmatprep.subr.mxu0 0.0
        %1118 = vmatpush1.msra.mxu0 0.0
        %1119 = vmatprep.subr.mxu0 0.0
        %1120 = vmatpush1.msra.mxu0 0.0
        %1121 = vmatprep.subr.mxu0 0.0
        %1122 = vmatpush1.msra.mxu0 0.0
        %1123 = vmatprep.subr.mxu0 0.0
        %1124 = vmatpush1.msra.mxu0 0.0
        %1125 = vmatprep.subr.mxu0 0.0
        %1126 = vmatpush1.msra.mxu0 0.0
        %1127 = vmatprep.subr.mxu0 0.0
        %1128 = vmatpush1.msra.mxu0 0.0
        %1129 = vmatprep.subr.mxu0 0.0
        %1130 = vmatpush1.msra.mxu0 0.0
        %1131 = vmatprep.subr.mxu0 0.0
        %1132 = vmatpush1.msra.mxu0 0.0
        %1133 = vmatprep.subr.mxu0 0.0
        %1134 = vmatpush1.msra.mxu0 0.0
        %1135 = vmatprep.subr.mxu0 0.0
        %1136 = vmatpush1.msra.mxu0 0.0
        %1137 = vmatprep.subr.mxu0 0.0
        %1138 = vmatpush1.msra.mxu0 0.0
        %1139 = vmatprep.subr.mxu0 0.0
        %1140 = vmatpush1.msra.mxu0 0.0
        %1141 = vmatprep.subr.mxu0 0.0
        %1142 = vmatpush1.msra.mxu0 0.0
        %1143 = vmatprep.subr.mxu0 0.0
        %1144 = vmatpush1.msra.mxu0 0.0
        %1145 = vmatprep.subr.mxu0 0.0
        %1146 = vmatpush1.msra.mxu0 0.0
        %1147 = vmatprep.subr.mxu0 0.0
        %1148 = vmatpush1.msra.mxu0 0.0
        %1149 = vmatprep.subr.mxu0 0.0
        %1150 = vmatpush1.msra.mxu0 0.0
        %1151 = vmatprep.subr.mxu0 0.0
        %1152 = vmatpush1.msra.mxu0 0.0
        %1153 = vmatprep.subr.mxu0 0.0
        %1154 = vmatpush1.msra.mxu0 0.0
        %1155 = vmatprep.subr.mxu0 0.0
        %1156 = vmatpush1.msra.mxu0 0.0
        %1157 = vmatprep.subr.mxu0 0.0
        %1158 = vmatpush1.msra.mxu0 0.0
        %1159 = vmatprep.subr.mxu0 0.0
        %1160 = vmatpush1.msra.mxu0 0.0
        %1161 = vmatprep.mubr.f32.mxu0 0.0
        %1162 = vmatmul.mubr.f32.gmra.mrb[0].mxu0 %v504
        %v1163 = vpop.f32.mrb[0].mxu0
        %v1164 = vadd.f32 0.0, %v1163
        %v1165 = vpop.f32.mrb[0].mxu0
        %1166 = vmatprep.mubr.f32.mxu0 0.0
        %1167 = vmatmul.mubr.f32.gmra.mrb[0].mxu0 %v507
        %v1168 = vpop.f32.mrb[0].mxu0
        %v1169 = vadd.f32 0.0, %v1168
        %v1170 = vpop.f32.mrb[0].mxu0
        %1171 = vdwg.mxu0
        %s1172 = scalar_lea.vmem %s1, 512
        %v1173 = vld [vmem:[%s1172] sm:$0xff]
        %v1174 = vld [vmem:[%s1172 + $0x8] sm:$0xff]
        %v1175 = vld [vmem:[%s1172 + $0x10] sm:$0xff]
        %v1176 = vld [vmem:[%s1172 + $0x18] sm:$0xff]
        %v1177 = vld [vmem:[%s1172 + $0x20] sm:$0xff]
        %v1178 = vld [vmem:[%s1172 + $0x28] sm:$0xff]
        %v1179 = vld [vmem:[%s1172 + $0x30] sm:$0xff]
        %v1180 = vld [vmem:[%s1172 + $0x38] sm:$0xff]
        %1181 = vmatprep.subr.mxu0 0.0
        %1182 = vmatpush1.msra.mxu0 %v1173
        %1183 = vmatprep.subr.mxu0 0.0
        %1184 = vmatpush1.msra.mxu0 %v1174
        %1185 = vmatprep.subr.mxu0 0.0
        %1186 = vmatpush1.msra.mxu0 %v1175
        %1187 = vmatprep.subr.mxu0 0.0
        %1188 = vmatpush1.msra.mxu0 %v1176
        %1189 = vmatprep.subr.mxu0 0.0
        %1190 = vmatpush1.msra.mxu0 %v1177
        %1191 = vmatprep.subr.mxu0 0.0
        %1192 = vmatpush1.msra.mxu0 %v1178
        %1193 = vmatprep.subr.mxu0 0.0
        %1194 = vmatpush1.msra.mxu0 %v1179
        %1195 = vmatprep.subr.mxu0 0.0
        %1196 = vmatpush1.msra.mxu0 %v1180
        %1197 = vmatprep.subr.mxu0 0.0
        %1198 = vmatpush1.msra.mxu0 0.0
        %1199 = vmatprep.subr.mxu0 0.0
        %1200 = vmatpush1.msra.mxu0 0.0
        %1201 = vmatprep.subr.mxu0 0.0
        %1202 = vmatpush1.msra.mxu0 0.0
        %1203 = vmatprep.subr.mxu0 0.0
        %1204 = vmatpush1.msra.mxu0 0.0
        %1205 = vmatprep.subr.mxu0 0.0
        %1206 = vmatpush1.msra.mxu0 0.0
        %1207 = vmatprep.subr.mxu0 0.0
        %1208 = vmatpush1.msra.mxu0 0.0
        %1209 = vmatprep.subr.mxu0 0.0
        %1210 = vmatpush1.msra.mxu0 0.0
        %1211 = vmatprep.subr.mxu0 0.0
        %1212 = vmatpush1.msra.mxu0 0.0
        %1213 = vmatprep.subr.mxu0 0.0
        %1214 = vmatpush1.msra.mxu0 0.0
        %1215 = vmatprep.subr.mxu0 0.0
        %1216 = vmatpush1.msra.mxu0 0.0
        %1217 = vmatprep.subr.mxu0 0.0
        %1218 = vmatpush1.msra.mxu0 0.0
        %1219 = vmatprep.subr.mxu0 0.0
        %1220 = vmatpush1.msra.mxu0 0.0
        %1221 = vmatprep.subr.mxu0 0.0
        %1222 = vmatpush1.msra.mxu0 0.0
        %1223 = vmatprep.subr.mxu0 0.0
        %1224 = vmatpush1.msra.mxu0 0.0
        %1225 = vmatprep.subr.mxu0 0.0
        %1226 = vmatpush1.msra.mxu0 0.0
        %1227 = vmatprep.subr.mxu0 0.0
        %1228 = vmatpush1.msra.mxu0 0.0
        %1229 = vmatprep.subr.mxu0 0.0
        %1230 = vmatpush1.msra.mxu0 0.0
        %1231 = vmatprep.subr.mxu0 0.0
        %1232 = vmatpush1.msra.mxu0 0.0
        %1233 = vmatprep.subr.mxu0 0.0
        %1234 = vmatpush1.msra.mxu0 0.0
        %1235 = vmatprep.subr.mxu0 0.0
        %1236 = vmatpush1.msra.mxu0 0.0
        %1237 = vmatprep.subr.mxu0 0.0
        %1238 = vmatpush1.msra.mxu0 0.0
        %1239 = vmatprep.subr.mxu0 0.0
        %1240 = vmatpush1.msra.mxu0 0.0
        %1241 = vmatprep.subr.mxu0 0.0
        %1242 = vmatpush1.msra.mxu0 0.0
        %1243 = vmatprep.subr.mxu0 0.0
        %1244 = vmatpush1.msra.mxu0 0.0
        %1245 = vmatprep.mubr.f32.mxu0 0.0
        %1246 = vmatmul.mubr.f32.gmra.mrb[0].mxu0 %v504
        %v1247 = vpop.f32.mrb[0].mxu0
        %v1248 = vadd.f32 0.0, %v1247
        %v1249 = vpop.f32.mrb[0].mxu0
        %1250 = vmatprep.mubr.f32.mxu0 0.0
        %1251 = vmatmul.mubr.f32.gmra.mrb[0].mxu0 %v507
        %v1252 = vpop.f32.mrb[0].mxu0
        %v1253 = vadd.f32 0.0, %v1252
        %v1254 = vpop.f32.mrb[0].mxu0
        %1255 = vdwg.mxu0
        %v1256 = vld [vmem:[%s473] sm:$0xff]
        %v1257 = vld [vmem:[%s473 + $0x8] sm:$0xff]
        %v1258 = vld [vmem:[%s468] sm:$0xff]
        %v1259 = vld [vmem:[%s468 + $0x8] sm:$0xff]
        %v1260 = vld [vmem:[%s468 + $0x10] sm:$0xff]
        %v1261 = vld [vmem:[%s468 + $0x18] sm:$0xff]
        %1263 = vset.pattern.permute.xlu0 0
        %1264 = vperm.xlu0 %1263, %v1256
        %v1265 = vpop.permute.xlu0 %1264
        %1268 = vset.pattern.permute.xlu0 0
        %1269 = vperm.xlu0 %1268, %v1257
        %v1270 = vpop.permute.xlu0 %1269
        %vm1272 = vcmask 130048
        %v1274 = vsel %vm1272, %v1259, 0
        %v1277 = vsel %vm1272, %v1261, 0
        %1279 = vmatprep.subr.mxu0 0.0
        %1280 = vmatpush1.msra.mxu0 %v576
        %1281 = vmatprep.subr.mxu0 0.0
        %1282 = vmatpush1.msra.mxu0 %v581
        %1283 = vmatprep.subr.mxu0 0.0
        %1284 = vmatpush1.msra.mxu0 %v660
        %1285 = vmatprep.subr.mxu0 0.0
        %1286 = vmatpush1.msra.mxu0 %v665
        %1287 = vmatprep.subr.mxu0 0.0
        %1288 = vmatpush1.msra.mxu0 %v744
        %1289 = vmatprep.subr.mxu0 0.0
        %1290 = vmatpush1.msra.mxu0 %v749
        %1291 = vmatprep.subr.mxu0 0.0
        %1292 = vmatpush1.msra.mxu0 %v828
        %1293 = vmatprep.subr.mxu0 0.0
        %1294 = vmatpush1.msra.mxu0 %v833
        %1295 = vmatprep.subr.mxu0 0.0
        %1296 = vmatpush1.msra.mxu0 %v912
        %1297 = vmatprep.subr.mxu0 0.0
        %1298 = vmatpush1.msra.mxu0 %v917
        %1299 = vmatprep.subr.mxu0 0.0
        %1300 = vmatpush1.msra.mxu0 %v996
        %1301 = vmatprep.subr.mxu0 0.0
        %1302 = vmatpush1.msra.mxu0 %v1001
        %1303 = vmatprep.subr.mxu0 0.0
        %1304 = vmatpush1.msra.mxu0 %v1080
        %1305 = vmatprep.subr.mxu0 0.0
        %1306 = vmatpush1.msra.mxu0 %v1085
        %1307 = vmatprep.subr.mxu0 0.0
        %1308 = vmatpush1.msra.mxu0 %v1164
        %1309 = vmatprep.subr.mxu0 0.0
        %1310 = vmatpush1.msra.mxu0 %v1169
        %1311 = vmatprep.subr.mxu0 0.0
        %1312 = vmatpush1.msra.mxu0 %v1248
        %1313 = vmatprep.subr.mxu0 0.0
        %1314 = vmatpush1.msra.mxu0 %v1253
        %1315 = vmatprep.subr.mxu0 0.0
        %1316 = vmatpush1.msra.mxu0 0.0
        %1317 = vmatprep.subr.mxu0 0.0
        %1318 = vmatpush1.msra.mxu0 0.0
        %1319 = vmatprep.subr.mxu0 0.0
        %1320 = vmatpush1.msra.mxu0 0.0
        %1321 = vmatprep.subr.mxu0 0.0
        %1322 = vmatpush1.msra.mxu0 0.0
        %1323 = vmatprep.subr.mxu0 0.0
        %1324 = vmatpush1.msra.mxu0 0.0
        %1325 = vmatprep.subr.mxu0 0.0
        %1326 = vmatpush1.msra.mxu0 0.0
        %1327 = vmatprep.subr.mxu0 0.0
        %1328 = vmatpush1.msra.mxu0 0.0
        %1329 = vmatprep.subr.mxu0 0.0
        %1330 = vmatpush1.msra.mxu0 0.0
        %1331 = vmatprep.subr.mxu0 0.0
        %1332 = vmatpush1.msra.mxu0 0.0
        %1333 = vmatprep.subr.mxu0 0.0
        %1334 = vmatpush1.msra.mxu0 0.0
        %1335 = vmatprep.subr.mxu0 0.0
        %1336 = vmatpush1.msra.mxu0 0.0
        %1337 = vmatprep.subr.mxu0 0.0
        %1338 = vmatpush1.msra.mxu0 0.0
        %1339 = vmatprep.subr.mxu0 0.0
        %1340 = vmatpush1.msra.mxu0 0.0
        %1341 = vmatprep.subr.mxu0 0.0
        %1342 = vmatpush1.msra.mxu0 0.0
        %1343 = vmatprep.mubr.f32.mxu0 %v1274
        %1344 = vmatmul.mubr.f32.gmra.mrb[0].mxu0 %v1258
        %v1345 = vpop.f32.mrb[0].mxu0
        %v1346 = vadd.f32 %v1265, %v1345
        %v1347 = vpop.f32.mrb[0].mxu0
        %1348 = vmatprep.mubr.f32.mxu0 %v1277
        %1349 = vmatmul.mubr.f32.gmra.mrb[0].mxu0 %v1260
        %v1350 = vpop.f32.mrb[0].mxu0
        %v1351 = vadd.f32 %v1270, %v1350
        %v1352 = vpop.f32.mrb[0].mxu0
        %1353 = vdwg.mxu0
        %v1354 = vsel %vm502, %v1346, 0.0
        %v1355 = vsel %vm502, %v1351, 0.0
        %v1356 = vadd.f32 %v1354, %v1355
        %1357 = vadd.xlane.f32.xlu0 %v1356
        %v1358 = vpop.xlane.xlu0 %1357
        %v1359 = vrot.slane %v1358, 4
        %v1360 = vadd.f32 %v1358, %v1359
        %v1361 = vrot.slane %v1360, 2
        %v1362 = vadd.f32 %v1360, %v1361
        %v1363 = vrot.slane %v1362, 1
        %v1364 = vadd.f32 %v1362, %v1363
        %s1365 = vtos %v1364
        %v1366 = vstv %s1365
        %v1367 = vrcp.pop 1024.0
        %v1368 = vmul.f32 %v1366, %v1367
        %v1369 = vsub.f32 %v1346, %v1368
        %v1370 = vsub.f32 %v1351, %v1368
        %v1371 = vmul.f32 %v1369, %v1369
        %v1372 = vmul.f32 %v1370, %v1370
        %v1373 = vsel %vm502, %v1371, 0.0
        %v1374 = vsel %vm502, %v1372, 0.0
        %v1375 = vadd.f32 %v1373, %v1374
        %1376 = vadd.xlane.f32.xlu0 %v1375
        %v1377 = vpop.xlane.xlu0 %1376
        %v1378 = vrot.slane %v1377, 4
        %v1379 = vadd.f32 %v1377, %v1378
        %v1380 = vrot.slane %v1379, 2
        %v1381 = vadd.f32 %v1379, %v1380
        %v1382 = vrot.slane %v1381, 1
        %v1383 = vadd.f32 %v1381, %v1382
        %s1384 = vtos %v1383
        %v1385 = vstv %s1384
        %v1386 = vmul.f32 %v1385, %v1367
        %v1387 = vadd.f32 %v1386, 1e-05
        %v1388 = vrsqrt.pop %v1387
        %v1389 = vmul.f32 %v1369, %v1388
        %v1390 = vmul.f32 %v1370, %v1388
        %1391 = vset.pattern.permute.xlu0 1
        %1392 = vperm.xlu0 %1391, %v1256
        %v1393 = vpop.permute.xlu0 %1392
        %1395 = vset.pattern.permute.xlu0 1
        %1396 = vperm.xlu0 %1395, %v1257
        %v1397 = vpop.permute.xlu0 %1396
        %v1399 = vmul.f32 %v1389, %v1393
        %v1400 = vmul.f32 %v1390, %v1397
        %1401 = vset.pattern.permute.xlu0 2
        %1402 = vperm.xlu0 %1401, %v1256
        %v1403 = vpop.permute.xlu0 %1402
        %1405 = vset.pattern.permute.xlu0 2
        %1406 = vperm.xlu0 %1405, %v1257
        %v1407 = vpop.permute.xlu0 %1406
        %v1409 = vadd.f32 %v1399, %v1403
        %v1410 = vadd.f32 %v1400, %v1407
        %v1411 = vmax.f32 %v1409, 0.0
        %v1412 = vmax.f32 %v1410, 0.0
        %v1414 = vsel %vm502, %v1411, 0
        %v1417 = vsel %vm502, %v1412, 0
        %1419 = vmatprep.subr.mxu0 0.0
        %1420 = vmatpush1.msra.mxu0 %v494
        %1421 = vmatprep.subr.mxu0 0.0
        %1422 = vmatpush1.msra.mxu0 %v495
        %1423 = vmatprep.subr.mxu0 0.0
        %1424 = vmatpush1.msra.mxu0 %v496
        %1425 = vmatprep.subr.mxu0 0.0
        %1426 = vmatpush1.msra.mxu0 %v497
        %1427 = vmatprep.subr.mxu0 0.0
        %1428 = vmatpush1.msra.mxu0 %v498
        %1429 = vmatprep.subr.mxu0 0.0
        %1430 = vmatpush1.msra.mxu0 %v499
        %1431 = vmatprep.subr.mxu0 0.0
        %1432 = vmatpush1.msra.mxu0 %v500
        %1433 = vmatprep.subr.mxu0 0.0
        %1434 = vmatpush1.msra.mxu0 %v501
        %1435 = vmatprep.subr.mxu0 0.0
        %1436 = vmatpush1.msra.mxu0 0.0
        %1437 = vmatprep.subr.mxu0 0.0
        %1438 = vmatpush1.msra.mxu0 0.0
        %1439 = vmatprep.subr.mxu0 0.0
        %1440 = vmatpush1.msra.mxu0 0.0
        %1441 = vmatprep.subr.mxu0 0.0
        %1442 = vmatpush1.msra.mxu0 0.0
        %1443 = vmatprep.subr.mxu0 0.0
        %1444 = vmatpush1.msra.mxu0 0.0
        %1445 = vmatprep.subr.mxu0 0.0
        %1446 = vmatpush1.msra.mxu0 0.0
        %1447 = vmatprep.subr.mxu0 0.0
        %1448 = vmatpush1.msra.mxu0 0.0
        %1449 = vmatprep.subr.mxu0 0.0
        %1450 = vmatpush1.msra.mxu0 0.0
        %1451 = vmatprep.subr.mxu0 0.0
        %1452 = vmatpush1.msra.mxu0 0.0
        %1453 = vmatprep.subr.mxu0 0.0
        %1454 = vmatpush1.msra.mxu0 0.0
        %1455 = vmatprep.subr.mxu0 0.0
        %1456 = vmatpush1.msra.mxu0 0.0
        %1457 = vmatprep.subr.mxu0 0.0
        %1458 = vmatpush1.msra.mxu0 0.0
        %1459 = vmatprep.subr.mxu0 0.0
        %1460 = vmatpush1.msra.mxu0 0.0
        %1461 = vmatprep.subr.mxu0 0.0
        %1462 = vmatpush1.msra.mxu0 0.0
        %1463 = vmatprep.subr.mxu0 0.0
        %1464 = vmatpush1.msra.mxu0 0.0
        %1465 = vmatprep.subr.mxu0 0.0
        %1466 = vmatpush1.msra.mxu0 0.0
        %1467 = vmatprep.subr.mxu0 0.0
        %1468 = vmatpush1.msra.mxu0 0.0
        %1469 = vmatprep.subr.mxu0 0.0
        %1470 = vmatpush1.msra.mxu0 0.0
        %1471 = vmatprep.subr.mxu0 0.0
        %1472 = vmatpush1.msra.mxu0 0.0
        %1473 = vmatprep.subr.mxu0 0.0
        %1474 = vmatpush1.msra.mxu0 0.0
        %1475 = vmatprep.subr.mxu0 0.0
        %1476 = vmatpush1.msra.mxu0 0.0
        %1477 = vmatprep.subr.mxu0 0.0
        %1478 = vmatpush1.msra.mxu0 0.0
        %1479 = vmatprep.subr.mxu0 0.0
        %1480 = vmatpush1.msra.mxu0 0.0
        %1481 = vmatprep.subr.mxu0 0.0
        %1482 = vmatpush1.msra.mxu0 0.0
        %1483 = vmatprep.mubr.f32.mxu0 0.0
        %1484 = vmatmul.mubr.f32.gmra.mrb[0].mxu0 %v1414
        %v1485 = vpop.f32.mrb[0].mxu0
        %v1486 = vadd.f32 0.0, %v1485
        %v1487 = vpop.f32.mrb[0].mxu0
        %1488 = vmatprep.mubr.f32.mxu0 0.0
        %1489 = vmatmul.mubr.f32.gmra.mrb[0].mxu0 %v1417
        %v1490 = vpop.f32.mrb[0].mxu0
        %v1491 = vadd.f32 0.0, %v1490
        %v1492 = vpop.f32.mrb[0].mxu0
        %1493 = vdwg.mxu0
        %1494 = vmatprep.subr.mxu0 0.0
        %1495 = vmatpush1.msra.mxu0 %v585
        %1496 = vmatprep.subr.mxu0 0.0
        %1497 = vmatpush1.msra.mxu0 %v586
        %1498 = vmatprep.subr.mxu0 0.0
        %1499 = vmatpush1.msra.mxu0 %v587
        %1500 = vmatprep.subr.mxu0 0.0
        %1501 = vmatpush1.msra.mxu0 %v588
        %1502 = vmatprep.subr.mxu0 0.0
        %1503 = vmatpush1.msra.mxu0 %v589
        %1504 = vmatprep.subr.mxu0 0.0
        %1505 = vmatpush1.msra.mxu0 %v590
        %1506 = vmatprep.subr.mxu0 0.0
        %1507 = vmatpush1.msra.mxu0 %v591
        %1508 = vmatprep.subr.mxu0 0.0
        %1509 = vmatpush1.msra.mxu0 %v592
        %1510 = vmatprep.subr.mxu0 0.0
        %1511 = vmatpush1.msra.mxu0 0.0
        %1512 = vmatprep.subr.mxu0 0.0
        %1513 = vmatpush1.msra.mxu0 0.0
        %1514 = vmatprep.subr.mxu0 0.0
        %1515 = vmatpush1.msra.mxu0 0.0
        %1516 = vmatprep.subr.mxu0 0.0
        %1517 = vmatpush1.msra.mxu0 0.0
        %1518 = vmatprep.subr.mxu0 0.0
        %1519 = vmatpush1.msra.mxu0 0.0
        %1520 = vmatprep.subr.mxu0 0.0
        %1521 = vmatpush1.msra.mxu0 0.0
        %1522 = vmatprep.subr.mxu0 0.0
        %1523 = vmatpush1.msra.mxu0 0.0
        %1524 = vmatprep.subr.mxu0 0.0
        %1525 = vmatpush1.msra.mxu0 0.0
        %1526 = vmatprep.subr.mxu0 0.0
        %1527 = vmatpush1.msra.mxu0 0.0
        %1528 = vmatprep.subr.mxu0 0.0
        %1529 = vmatpush1.msra.mxu0 0.0
        %1530 = vmatprep.subr.mxu0 0.0
        %1531 = vmatpush1.msra.mxu0 0.0
        %1532 = vmatprep.subr.mxu0 0.0
        %1533 = vmatpush1.msra.mxu0 0.0
        %1534 = vmatprep.subr.mxu0 0.0
        %1535 = vmatpush1.msra.mxu0 0.0
        %1536 = vmatprep.subr.mxu0 0.0
        %1537 = vmatpush1.msra.mxu0 0.0
        %1538 = vmatprep.subr.mxu0 0.0
        %1539 = vmatpush1.msra.mxu0 0.0
        %1540 = vmatprep.subr.mxu0 0.0
        %1541 = vmatpush1.msra.mxu0 0.0
        %1542 = vmatprep.subr.mxu0 0.0
        %1543 = vmatpush1.msra.mxu0 0.0
        %1544 = vmatprep.subr.mxu0 0.0
        %1545 = vmatpush1.msra.mxu0 0.0
        %1546 = vmatprep.subr.mxu0 0.0
        %1547 = vmatpush1.msra.mxu0 0.0
        %1548 = vmatprep.subr.mxu0 0.0
        %1549 = vmatpush1.msra.mxu0 0.0
        %1550 = vmatprep.subr.mxu0 0.0
        %1551 = vmatpush1.msra.mxu0 0.0
        %1552 = vmatprep.subr.mxu0 0.0
        %1553 = vmatpush1.msra.mxu0 0.0
        %1554 = vmatprep.subr.mxu0 0.0
        %1555 = vmatpush1.msra.mxu0 0.0
        %1556 = vmatprep.subr.mxu0 0.0
        %1557 = vmatpush1.msra.mxu0 0.0
        %1558 = vmatprep.mubr.f32.mxu0 0.0
        %1559 = vmatmul.mubr.f32.gmra.mrb[0].mxu0 %v1414
        %v1560 = vpop.f32.mrb[0].mxu0
        %v1561 = vadd.f32 0.0, %v1560
        %v1562 = vpop.f32.mrb[0].mxu0
        %1563 = vmatprep.mubr.f32.mxu0 0.0
        %1564 = vmatmul.mubr.f32.gmra.mrb[0].mxu0 %v1417
        %v1565 = vpop.f32.mrb[0].mxu0
        %v1566 = vadd.f32 0.0, %v1565
        %v1567 = vpop.f32.mrb[0].mxu0
        %1568 = vdwg.mxu0
        %1569 = vmatprep.subr.mxu0 0.0
        %1570 = vmatpush1.msra.mxu0 %v669
        %1571 = vmatprep.subr.mxu0 0.0
        %1572 = vmatpush1.msra.mxu0 %v670
        %1573 = vmatprep.subr.mxu0 0.0
        %1574 = vmatpush1.msra.mxu0 %v671
        %1575 = vmatprep.subr.mxu0 0.0
        %1576 = vmatpush1.msra.mxu0 %v672
        %1577 = vmatprep.subr.mxu0 0.0
        %1578 = vmatpush1.msra.mxu0 %v673
        %1579 = vmatprep.subr.mxu0 0.0
        %1580 = vmatpush1.msra.mxu0 %v674
        %1581 = vmatprep.subr.mxu0 0.0
        %1582 = vmatpush1.msra.mxu0 %v675
        %1583 = vmatprep.subr.mxu0 0.0
        %1584 = vmatpush1.msra.mxu0 %v676
        %1585 = vmatprep.subr.mxu0 0.0
        %1586 = vmatpush1.msra.mxu0 0.0
        %1587 = vmatprep.subr.mxu0 0.0
        %1588 = vmatpush1.msra.mxu0 0.0
        %1589 = vmatprep.subr.mxu0 0.0
        %1590 = vmatpush1.msra.mxu0 0.0
        %1591 = vmatprep.subr.mxu0 0.0
        %1592 = vmatpush1.msra.mxu0 0.0
        %1593 = vmatprep.subr.mxu0 0.0
        %1594 = vmatpush1.msra.mxu0 0.0
        %1595 = vmatprep.subr.mxu0 0.0
        %1596 = vmatpush1.msra.mxu0 0.0
        %1597 = vmatprep.subr.mxu0 0.0
        %1598 = vmatpush1.msra.mxu0 0.0
        %1599 = vmatprep.subr.mxu0 0.0
        %1600 = vmatpush1.msra.mxu0 0.0
        %1601 = vmatprep.subr.mxu0 0.0
        %1602 = vmatpush1.msra.mxu0 0.0
        %1603 = vmatprep.subr.mxu0 0.0
        %1604 = vmatpush1.msra.mxu0 0.0
        %1605 = vmatprep.subr.mxu0 0.0
        %1606 = vmatpush1.msra.mxu0 0.0
        %1607 = vmatprep.subr.mxu0 0.0
        %1608 = vmatpush1.msra.mxu0 0.0
        %1609 = vmatprep.subr.mxu0 0.0
        %1610 = vmatpush1.msra.mxu0 0.0
        %1611 = vmatprep.subr.mxu0 0.0
        %1612 = vmatpush1.msra.mxu0 0.0
        %1613 = vmatprep.subr.mxu0 0.0
        %1614 = vmatpush1.msra.mxu0 0.0
        %1615 = vmatprep.subr.mxu0 0.0
        %1616 = vmatpush1.msra.mxu0 0.0
        %1617 = vmatprep.subr.mxu0 0.0
        %1618 = vmatpush1.msra.mxu0 0.0
        %1619 = vmatprep.subr.mxu0 0.0
        %1620 = vmatpush1.msra.mxu0 0.0
        %1621 = vmatprep.subr.mxu0 0.0
        %1622 = vmatpush1.msra.mxu0 0.0
        %1623 = vmatprep.subr.mxu0 0.0
        %1624 = vmatpush1.msra.mxu0 0.0
        %1625 = vmatprep.subr.mxu0 0.0
        %1626 = vmatpush1.msra.mxu0 0.0
        %1627 = vmatprep.subr.mxu0 0.0
        %1628 = vmatpush1.msra.mxu0 0.0
        %1629 = vmatprep.subr.mxu0 0.0
        %1630 = vmatpush1.msra.mxu0 0.0
        %1631 = vmatprep.subr.mxu0 0.0
        %1632 = vmatpush1.msra.mxu0 0.0
        %1633 = vmatprep.mubr.f32.mxu0 0.0
        %1634 = vmatmul.mubr.f32.gmra.mrb[0].mxu0 %v1414
        %v1635 = vpop.f32.mrb[0].mxu0
        %v1636 = vadd.f32 0.0, %v1635
        %v1637 = vpop.f32.mrb[0].mxu0
        %1638 = vmatprep.mubr.f32.mxu0 0.0
        %1639 = vmatmul.mubr.f32.gmra.mrb[0].mxu0 %v1417
        %v1640 = vpop.f32.mrb[0].mxu0
        %v1641 = vadd.f32 0.0, %v1640
        %v1642 = vpop.f32.mrb[0].mxu0
        %1643 = vdwg.mxu0
        %1644 = vmatprep.subr.mxu0 0.0
        %1645 = vmatpush1.msra.mxu0 %v753
        %1646 = vmatprep.subr.mxu0 0.0
        %1647 = vmatpush1.msra.mxu0 %v754
        %1648 = vmatprep.subr.mxu0 0.0
        %1649 = vmatpush1.msra.mxu0 %v755
        %1650 = vmatprep.subr.mxu0 0.0
        %1651 = vmatpush1.msra.mxu0 %v756
        %1652 = vmatprep.subr.mxu0 0.0
        %1653 = vmatpush1.msra.mxu0 %v757
        %1654 = vmatprep.subr.mxu0 0.0
        %1655 = vmatpush1.msra.mxu0 %v758
        %1656 = vmatprep.subr.mxu0 0.0
        %1657 = vmatpush1.msra.mxu0 %v759
        %1658 = vmatprep.subr.mxu0 0.0
        %1659 = vmatpush1.msra.mxu0 %v760
        %1660 = vmatprep.subr.mxu0 0.0
        %1661 = vmatpush1.msra.mxu0 0.0
        %1662 = vmatprep.subr.mxu0 0.0
        %1663 = vmatpush1.msra.mxu0 0.0
        %1664 = vmatprep.subr.mxu0 0.0
        %1665 = vmatpush1.msra.mxu0 0.0
        %1666 = vmatprep.subr.mxu0 0.0
        %1667 = vmatpush1.msra.mxu0 0.0
        %1668 = vmatprep.subr.mxu0 0.0
        %1669 = vmatpush1.msra.mxu0 0.0
        %1670 = vmatprep.subr.mxu0 0.0
        %1671 = vmatpush1.msra.mxu0 0.0
        %1672 = vmatprep.subr.mxu0 0.0
        %1673 = vmatpush1.msra.mxu0 0.0
        %1674 = vmatprep.subr.mxu0 0.0
        %1675 = vmatpush1.msra.mxu0 0.0
        %1676 = vmatprep.subr.mxu0 0.0
        %1677 = vmatpush1.msra.mxu0 0.0
        %1678 = vmatprep.subr.mxu0 0.0
        %1679 = vmatpush1.msra.mxu0 0.0
        %1680 = vmatprep.subr.mxu0 0.0
        %1681 = vmatpush1.msra.mxu0 0.0
        %1682 = vmatprep.subr.mxu0 0.0
        %1683 = vmatpush1.msra.mxu0 0.0
        %1684 = vmatprep.subr.mxu0 0.0
        %1685 = vmatpush1.msra.mxu0 0.0
        %1686 = vmatprep.subr.mxu0 0.0
        %1687 = vmatpush1.msra.mxu0 0.0
        %1688 = vmatprep.subr.mxu0 0.0
        %1689 = vmatpush1.msra.mxu0 0.0
        %1690 = vmatprep.subr.mxu0 0.0
        %1691 = vmatpush1.msra.mxu0 0.0
        %1692 = vmatprep.subr.mxu0 0.0
        %1693 = vmatpush1.msra.mxu0 0.0
        %1694 = vmatprep.subr.mxu0 0.0
        %1695 = vmatpush1.msra.mxu0 0.0
        %1696 = vmatprep.subr.mxu0 0.0
        %1697 = vmatpush1.msra.mxu0 0.0
        %1698 = vmatprep.subr.mxu0 0.0
        %1699 = vmatpush1.msra.mxu0 0.0
        %1700 = vmatprep.subr.mxu0 0.0
        %1701 = vmatpush1.msra.mxu0 0.0
        %1702 = vmatprep.subr.mxu0 0.0
        %1703 = vmatpush1.msra.mxu0 0.0
        %1704 = vmatprep.subr.mxu0 0.0
        %1705 = vmatpush1.msra.mxu0 0.0
        %1706 = vmatprep.subr.mxu0 0.0
        %1707 = vmatpush1.msra.mxu0 0.0
        %1708 = vmatprep.mubr.f32.mxu0 0.0
        %1709 = vmatmul.mubr.f32.gmra.mrb[0].mxu0 %v1414
        %v1710 = vpop.f32.mrb[0].mxu0
        %v1711 = vadd.f32 0.0, %v1710
        %v1712 = vpop.f32.mrb[0].mxu0
        %1713 = vmatprep.mubr.f32.mxu0 0.0
        %1714 = vmatmul.mubr.f32.gmra.mrb[0].mxu0 %v1417
        %v1715 = vpop.f32.mrb[0].mxu0
        %v1716 = vadd.f32 0.0, %v1715
        %v1717 = vpop.f32.mrb[0].mxu0
        %1718 = vdwg.mxu0
        %1719 = vmatprep.subr.mxu0 0.0
        %1720 = vmatpush1.msra.mxu0 %v837
        %1721 = vmatprep.subr.mxu0 0.0
        %1722 = vmatpush1.msra.mxu0 %v838
        %1723 = vmatprep.subr.mxu0 0.0
        %1724 = vmatpush1.msra.mxu0 %v839
        %1725 = vmatprep.subr.mxu0 0.0
        %1726 = vmatpush1.msra.mxu0 %v840
        %1727 = vmatprep.subr.mxu0 0.0
        %1728 = vmatpush1.msra.mxu0 %v841
        %1729 = vmatprep.subr.mxu0 0.0
        %1730 = vmatpush1.msra.mxu0 %v842
        %1731 = vmatprep.subr.mxu0 0.0
        %1732 = vmatpush1.msra.mxu0 %v843
        %1733 = vmatprep.subr.mxu0 0.0
        %1734 = vmatpush1.msra.mxu0 %v844
        %1735 = vmatprep.subr.mxu0 0.0
        %1736 = vmatpush1.msra.mxu0 0.0
        %1737 = vmatprep.subr.mxu0 0.0
        %1738 = vmatpush1.msra.mxu0 0.0
        %1739 = vmatprep.subr.mxu0 0.0
        %1740 = vmatpush1.msra.mxu0 0.0
        %1741 = vmatprep.subr.mxu0 0.0
        %1742 = vmatpush1.msra.mxu0 0.0
        %1743 = vmatprep.subr.mxu0 0.0
        %1744 = vmatpush1.msra.mxu0 0.0
        %1745 = vmatprep.subr.mxu0 0.0
        %1746 = vmatpush1.msra.mxu0 0.0
        %1747 = vmatprep.subr.mxu0 0.0
        %1748 = vmatpush1.msra.mxu0 0.0
        %1749 = vmatprep.subr.mxu0 0.0
        %1750 = vmatpush1.msra.mxu0 0.0
        %1751 = vmatprep.subr.mxu0 0.0
        %1752 = vmatpush1.msra.mxu0 0.0
        %1753 = vmatprep.subr.mxu0 0.0
        %1754 = vmatpush1.msra.mxu0 0.0
        %1755 = vmatprep.subr.mxu0 0.0
        %1756 = vmatpush1.msra.mxu0 0.0
        %1757 = vmatprep.subr.mxu0 0.0
        %1758 = vmatpush1.msra.mxu0 0.0
        %1759 = vmatprep.subr.mxu0 0.0
        %1760 = vmatpush1.msra.mxu0 0.0
        %1761 = vmatprep.subr.mxu0 0.0
        %1762 = vmatpush1.msra.mxu0 0.0
        %1763 = vmatprep.subr.mxu0 0.0
        %1764 = vmatpush1.msra.mxu0 0.0
        %1765 = vmatprep.subr.mxu0 0.0
        %1766 = vmatpush1.msra.mxu0 0.0
        %1767 = vmatprep.subr.mxu0 0.0
        %1768 = vmatpush1.msra.mxu0 0.0
        %1769 = vmatprep.subr.mxu0 0.0
        %1770 = vmatpush1.msra.mxu0 0.0
        %1771 = vmatprep.subr.mxu0 0.0
        %1772 = vmatpush1.msra.mxu0 0.0
        %1773 = vmatprep.subr.mxu0 0.0
        %1774 = vmatpush1.msra.mxu0 0.0
        %1775 = vmatprep.subr.mxu0 0.0
        %1776 = vmatpush1.msra.mxu0 0.0
        %1777 = vmatprep.subr.mxu0 0.0
        %1778 = vmatpush1.msra.mxu0 0.0
        %1779 = vmatprep.subr.mxu0 0.0
        %1780 = vmatpush1.msra.mxu0 0.0
        %1781 = vmatprep.subr.mxu0 0.0
        %1782 = vmatpush1.msra.mxu0 0.0
        %1783 = vmatprep.mubr.f32.mxu0 0.0
        %1784 = vmatmul.mubr.f32.gmra.mrb[0].mxu0 %v1414
        %v1785 = vpop.f32.mrb[0].mxu0
        %v1786 = vadd.f32 0.0, %v1785
        %v1787 = vpop.f32.mrb[0].mxu0
        %1788 = vmatprep.mubr.f32.mxu0 0.0
        %1789 = vmatmul.mubr.f32.gmra.mrb[0].mxu0 %v1417
        %v1790 = vpop.f32.mrb[0].mxu0
        %v1791 = vadd.f32 0.0, %v1790
        %v1792 = vpop.f32.mrb[0].mxu0
        %1793 = vdwg.mxu0
        %1794 = vmatprep.subr.mxu0 0.0
        %1795 = vmatpush1.msra.mxu0 %v921
        %1796 = vmatprep.subr.mxu0 0.0
        %1797 = vmatpush1.msra.mxu0 %v922
        %1798 = vmatprep.subr.mxu0 0.0
        %1799 = vmatpush1.msra.mxu0 %v923
        %1800 = vmatprep.subr.mxu0 0.0
        %1801 = vmatpush1.msra.mxu0 %v924
        %1802 = vmatprep.subr.mxu0 0.0
        %1803 = vmatpush1.msra.mxu0 %v925
        %1804 = vmatprep.subr.mxu0 0.0
        %1805 = vmatpush1.msra.mxu0 %v926
        %1806 = vmatprep.subr.mxu0 0.0
        %1807 = vmatpush1.msra.mxu0 %v927
        %1808 = vmatprep.subr.mxu0 0.0
        %1809 = vmatpush1.msra.mxu0 %v928
        %1810 = vmatprep.subr.mxu0 0.0
        %1811 = vmatpush1.msra.mxu0 0.0
        %1812 = vmatprep.subr.mxu0 0.0
        %1813 = vmatpush1.msra.mxu0 0.0
        %1814 = vmatprep.subr.mxu0 0.0
        %1815 = vmatpush1.msra.mxu0 0.0
        %1816 = vmatprep.subr.mxu0 0.0
        %1817 = vmatpush1.msra.mxu0 0.0
        %1818 = vmatprep.subr.mxu0 0.0
        %1819 = vmatpush1.msra.mxu0 0.0
        %1820 = vmatprep.subr.mxu0 0.0
        %1821 = vmatpush1.msra.mxu0 0.0
        %1822 = vmatprep.subr.mxu0 0.0
        %1823 = vmatpush1.msra.mxu0 0.0
        %1824 = vmatprep.subr.mxu0 0.0
        %1825 = vmatpush1.msra.mxu0 0.0
        %1826 = vmatprep.subr.mxu0 0.0
        %1827 = vmatpush1.msra.mxu0 0.0
        %1828 = vmatprep.subr.mxu0 0.0
        %1829 = vmatpush1.msra.mxu0 0.0
        %1830 = vmatprep.subr.mxu0 0.0
        %1831 = vmatpush1.msra.mxu0 0.0
        %1832 = vmatprep.subr.mxu0 0.0
        %1833 = vmatpush1.msra.mxu0 0.0
        %1834 = vmatprep.subr.mxu0 0.0
        %1835 = vmatpush1.msra.mxu0 0.0
        %1836 = vmatprep.subr.mxu0 0.0
        %1837 = vmatpush1.msra.mxu0 0.0
        %1838 = vmatprep.subr.mxu0 0.0
        %1839 = vmatpush1.msra.mxu0 0.0
        %1840 = vmatprep.subr.mxu0 0.0
        %1841 = vmatpush1.msra.mxu0 0.0
        %1842 = vmatprep.subr.mxu0 0.0
        %1843 = vmatpush1.msra.mxu0 0.0
        %1844 = vmatprep.subr.mxu0 0.0
        %1845 = vmatpush1.msra.mxu0 0.0
        %1846 = vmatprep.subr.mxu0 0.0
        %1847 = vmatpush1.msra.mxu0 0.0
        %1848 = vmatprep.subr.mxu0 0.0
        %1849 = vmatpush1.msra.mxu0 0.0
        %1850 = vmatprep.subr.mxu0 0.0
        %1851 = vmatpush1.msra.mxu0 0.0
        %1852 = vmatprep.subr.mxu0 0.0
        %1853 = vmatpush1.msra.mxu0 0.0
        %1854 = vmatprep.subr.mxu0 0.0
        %1855 = vmatpush1.msra.mxu0 0.0
        %1856 = vmatprep.subr.mxu0 0.0
        %1857 = vmatpush1.msra.mxu0 0.0
        %1858 = vmatprep.mubr.f32.mxu0 0.0
        %1859 = vmatmul.mubr.f32.gmra.mrb[0].mxu0 %v1414
        %v1860 = vpop.f32.mrb[0].mxu0
        %v1861 = vadd.f32 0.0, %v1860
        %v1862 = vpop.f32.mrb[0].mxu0
        %1863 = vmatprep.mubr.f32.mxu0 0.0
        %1864 = vmatmul.mubr.f32.gmra.mrb[0].mxu0 %v1417
        %v1865 = vpop.f32.mrb[0].mxu0
        %v1866 = vadd.f32 0.0, %v1865
        %v1867 = vpop.f32.mrb[0].mxu0
        %1868 = vdwg.mxu0
        %1869 = vmatprep.subr.mxu0 0.0
        %1870 = vmatpush1.msra.mxu0 %v1005
        %1871 = vmatprep.subr.mxu0 0.0
        %1872 = vmatpush1.msra.mxu0 %v1006
        %1873 = vmatprep.subr.mxu0 0.0
        %1874 = vmatpush1.msra.mxu0 %v1007
        %1875 = vmatprep.subr.mxu0 0.0
        %1876 = vmatpush1.msra.mxu0 %v1008
        %1877 = vmatprep.subr.mxu0 0.0
        %1878 = vmatpush1.msra.mxu0 %v1009
        %1879 = vmatprep.subr.mxu0 0.0
        %1880 = vmatpush1.msra.mxu0 %v1010
        %1881 = vmatprep.subr.mxu0 0.0
        %1882 = vmatpush1.msra.mxu0 %v1011
        %1883 = vmatprep.subr.mxu0 0.0
        %1884 = vmatpush1.msra.mxu0 %v1012
        %1885 = vmatprep.subr.mxu0 0.0
        %1886 = vmatpush1.msra.mxu0 0.0
        %1887 = vmatprep.subr.mxu0 0.0
        %1888 = vmatpush1.msra.mxu0 0.0
        %1889 = vmatprep.subr.mxu0 0.0
        %1890 = vmatpush1.msra.mxu0 0.0
        %1891 = vmatprep.subr.mxu0 0.0
        %1892 = vmatpush1.msra.mxu0 0.0
        %1893 = vmatprep.subr.mxu0 0.0
        %1894 = vmatpush1.msra.mxu0 0.0
        %1895 = vmatprep.subr.mxu0 0.0
        %1896 = vmatpush1.msra.mxu0 0.0
        %1897 = vmatprep.subr.mxu0 0.0
        %1898 = vmatpush1.msra.mxu0 0.0
        %1899 = vmatprep.subr.mxu0 0.0
        %1900 = vmatpush1.msra.mxu0 0.0
        %1901 = vmatprep.subr.mxu0 0.0
        %1902 = vmatpush1.msra.mxu0 0.0
        %1903 = vmatprep.subr.mxu0 0.0
        %1904 = vmatpush1.msra.mxu0 0.0
        %1905 = vmatprep.subr.mxu0 0.0
        %1906 = vmatpush1.msra.mxu0 0.0
        %1907 = vmatprep.subr.mxu0 0.0
        %1908 = vmatpush1.msra.mxu0 0.0
        %1909 = vmatprep.subr.mxu0 0.0
        %1910 = vmatpush1.msra.mxu0 0.0
        %1911 = vmatprep.subr.mxu0 0.0
        %1912 = vmatpush1.msra.mxu0 0.0
        %1913 = vmatprep.subr.mxu0 0.0
        %1914 = vmatpush1.msra.mxu0 0.0
        %1915 = vmatprep.subr.mxu0 0.0
        %1916 = vmatpush1.msra.mxu0 0.0
        %1917 = vmatprep.subr.mxu0 0.0
        %1918 = vmatpush1.msra.mxu0 0.0
        %1919 = vmatprep.subr.mxu0 0.0
        %1920 = vmatpush1.msra.mxu0 0.0
        %1921 = vmatprep.subr.mxu0 0.0
        %1922 = vmatpush1.msra.mxu0 0.0
        %1923 = vmatprep.subr.mxu0 0.0
        %1924 = vmatpush1.msra.mxu0 0.0
        %1925 = vmatprep.subr.mxu0 0.0
        %1926 = vmatpush1.msra.mxu0 0.0
        %1927 = vmatprep.subr.mxu0 0.0
        %1928 = vmatpush1.msra.mxu0 0.0
        %1929 = vmatprep.subr.mxu0 0.0
        %1930 = vmatpush1.msra.mxu0 0.0
        %1931 = vmatprep.subr.mxu0 0.0
        %1932 = vmatpush1.msra.mxu0 0.0
        %1933 = vmatprep.mubr.f32.mxu0 0.0
        %1934 = vmatmul.mubr.f32.gmra.mrb[0].mxu0 %v1414
        %v1935 = vpop.f32.mrb[0].mxu0
        %v1936 = vadd.f32 0.0, %v1935
        %v1937 = vpop.f32.mrb[0].mxu0
        %1938 = vmatprep.mubr.f32.mxu0 0.0
        %1939 = vmatmul.mubr.f32.gmra.mrb[0].mxu0 %v1417
        %v1940 = vpop.f32.mrb[0].mxu0
        %v1941 = vadd.f32 0.0, %v1940
        %v1942 = vpop.f32.mrb[0].mxu0
        %1943 = vdwg.mxu0
        %1944 = vmatprep.subr.mxu0 0.0
        %1945 = vmatpush1.msra.mxu0 %v1089
        %1946 = vmatprep.subr.mxu0 0.0
        %1947 = vmatpush1.msra.mxu0 %v1090
        %1948 = vmatprep.subr.mxu0 0.0
        %1949 = vmatpush1.msra.mxu0 %v1091
        %1950 = vmatprep.subr.mxu0 0.0
        %1951 = vmatpush1.msra.mxu0 %v1092
        %1952 = vmatprep.subr.mxu0 0.0
        %1953 = vmatpush1.msra.mxu0 %v1093
        %1954 = vmatprep.subr.mxu0 0.0
        %1955 = vmatpush1.msra.mxu0 %v1094
        %1956 = vmatprep.subr.mxu0 0.0
        %1957 = vmatpush1.msra.mxu0 %v1095
        %1958 = vmatprep.subr.mxu0 0.0
        %1959 = vmatpush1.msra.mxu0 %v1096
        %1960 = vmatprep.subr.mxu0 0.0
        %1961 = vmatpush1.msra.mxu0 0.0
        %1962 = vmatprep.subr.mxu0 0.0
        %1963 = vmatpush1.msra.mxu0 0.0
        %1964 = vmatprep.subr.mxu0 0.0
        %1965 = vmatpush1.msra.mxu0 0.0
        %1966 = vmatprep.subr.mxu0 0.0
        %1967 = vmatpush1.msra.mxu0 0.0
        %1968 = vmatprep.subr.mxu0 0.0
        %1969 = vmatpush1.msra.mxu0 0.0
        %1970 = vmatprep.subr.mxu0 0.0
        %1971 = vmatpush1.msra.mxu0 0.0
        %1972 = vmatprep.subr.mxu0 0.0
        %1973 = vmatpush1.msra.mxu0 0.0
        %1974 = vmatprep.subr.mxu0 0.0
        %1975 = vmatpush1.msra.mxu0 0.0
        %1976 = vmatprep.subr.mxu0 0.0
        %1977 = vmatpush1.msra.mxu0 0.0
        %1978 = vmatprep.subr.mxu0 0.0
        %1979 = vmatpush1.msra.mxu0 0.0
        %1980 = vmatprep.subr.mxu0 0.0
        %1981 = vmatpush1.msra.mxu0 0.0
        %1982 = vmatprep.subr.mxu0 0.0
        %1983 = vmatpush1.msra.mxu0 0.0
        %1984 = vmatprep.subr.mxu0 0.0
        %1985 = vmatpush1.msra.mxu0 0.0
        %1986 = vmatprep.subr.mxu0 0.0
        %1987 = vmatpush1.msra.mxu0 0.0
        %1988 = vmatprep.subr.mxu0 0.0
        %1989 = vmatpush1.msra.mxu0 0.0
        %1990 = vmatprep.subr.mxu0 0.0
        %1991 = vmatpush1.msra.mxu0 0.0
        %1992 = vmatprep.subr.mxu0 0.0
        %1993 = vmatpush1.msra.mxu0 0.0
        %1994 = vmatprep.subr.mxu0 0.0
        %1995 = vmatpush1.msra.mxu0 0.0
        %1996 = vmatprep.subr.mxu0 0.0
        %1997 = vmatpush1.msra.mxu0 0.0
        %1998 = vmatprep.subr.mxu0 0.0
        %1999 = vmatpush1.msra.mxu0 0.0
        %2000 = vmatprep.subr.mxu0 0.0
        %2001 = vmatpush1.msra.mxu0 0.0
        %2002 = vmatprep.subr.mxu0 0.0
        %2003 = vmatpush1.msra.mxu0 0.0
        %2004 = vmatprep.subr.mxu0 0.0
        %2005 = vmatpush1.msra.mxu0 0.0
        %2006 = vmatprep.subr.mxu0 0.0
        %2007 = vmatpush1.msra.mxu0 0.0
        %2008 = vmatprep.mubr.f32.mxu0 0.0
        %2009 = vmatmul.mubr.f32.gmra.mrb[0].mxu0 %v1414
        %v2010 = vpop.f32.mrb[0].mxu0
        %v2011 = vadd.f32 0.0, %v2010
        %v2012 = vpop.f32.mrb[0].mxu0
        %2013 = vmatprep.mubr.f32.mxu0 0.0
        %2014 = vmatmul.mubr.f32.gmra.mrb[0].mxu0 %v1417
        %v2015 = vpop.f32.mrb[0].mxu0
        %v2016 = vadd.f32 0.0, %v2015
        %v2017 = vpop.f32.mrb[0].mxu0
        %2018 = vdwg.mxu0
        %2019 = vmatprep.subr.mxu0 0.0
        %2020 = vmatpush1.msra.mxu0 %v1173
        %2021 = vmatprep.subr.mxu0 0.0
        %2022 = vmatpush1.msra.mxu0 %v1174
        %2023 = vmatprep.subr.mxu0 0.0
        %2024 = vmatpush1.msra.mxu0 %v1175
        %2025 = vmatprep.subr.mxu0 0.0
        %2026 = vmatpush1.msra.mxu0 %v1176
        %2027 = vmatprep.subr.mxu0 0.0
        %2028 = vmatpush1.msra.mxu0 %v1177
        %2029 = vmatprep.subr.mxu0 0.0
        %2030 = vmatpush1.msra.mxu0 %v1178
        %2031 = vmatprep.subr.mxu0 0.0
        %2032 = vmatpush1.msra.mxu0 %v1179
        %2033 = vmatprep.subr.mxu0 0.0
        %2034 = vmatpush1.msra.mxu0 %v1180
        %2035 = vmatprep.subr.mxu0 0.0
        %2036 = vmatpush1.msra.mxu0 0.0
        %2037 = vmatprep.subr.mxu0 0.0
        %2038 = vmatpush1.msra.mxu0 0.0
        %2039 = vmatprep.subr.mxu0 0.0
        %2040 = vmatpush1.msra.mxu0 0.0
        %2041 = vmatprep.subr.mxu0 0.0
        %2042 = vmatpush1.msra.mxu0 0.0
        %2043 = vmatprep.subr.mxu0 0.0
        %2044 = vmatpush1.msra.mxu0 0.0
        %2045 = vmatprep.subr.mxu0 0.0
        %2046 = vmatpush1.msra.mxu0 0.0
        %2047 = vmatprep.subr.mxu0 0.0
        %2048 = vmatpush1.msra.mxu0 0.0
        %2049 = vmatprep.subr.mxu0 0.0
        %2050 = vmatpush1.msra.mxu0 0.0
        %2051 = vmatprep.subr.mxu0 0.0
        %2052 = vmatpush1.msra.mxu0 0.0
        %2053 = vmatprep.subr.mxu0 0.0
        %2054 = vmatpush1.msra.mxu0 0.0
        %2055 = vmatprep.subr.mxu0 0.0
        %2056 = vmatpush1.msra.mxu0 0.0
        %2057 = vmatprep.subr.mxu0 0.0
        %2058 = vmatpush1.msra.mxu0 0.0
        %2059 = vmatprep.subr.mxu0 0.0
        %2060 = vmatpush1.msra.mxu0 0.0
        %2061 = vmatprep.subr.mxu0 0.0
        %2062 = vmatpush1.msra.mxu0 0.0
        %2063 = vmatprep.subr.mxu0 0.0
        %2064 = vmatpush1.msra.mxu0 0.0
        %2065 = vmatprep.subr.mxu0 0.0
        %2066 = vmatpush1.msra.mxu0 0.0
        %2067 = vmatprep.subr.mxu0 0.0
        %2068 = vmatpush1.msra.mxu0 0.0
        %2069 = vmatprep.subr.mxu0 0.0
        %2070 = vmatpush1.msra.mxu0 0.0
        %2071 = vmatprep.subr.mxu0 0.0
        %2072 = vmatpush1.msra.mxu0 0.0
        %2073 = vmatprep.subr.mxu0 0.0
        %2074 = vmatpush1.msra.mxu0 0.0
        %2075 = vmatprep.subr.mxu0 0.0
        %2076 = vmatpush1.msra.mxu0 0.0
        %2077 = vmatprep.subr.mxu0 0.0
        %2078 = vmatpush1.msra.mxu0 0.0
        %2079 = vmatprep.subr.mxu0 0.0
        %2080 = vmatpush1.msra.mxu0 0.0
        %2081 = vmatprep.subr.mxu0 0.0
        %2082 = vmatpush1.msra.mxu0 0.0
        %2083 = vmatprep.mubr.f32.mxu0 0.0
        %2084 = vmatmul.mubr.f32.gmra.mrb[0].mxu0 %v1414
        %v2085 = vpop.f32.mrb[0].mxu0
        %v2086 = vadd.f32 0.0, %v2085
        %v2087 = vpop.f32.mrb[0].mxu0
        %2088 = vmatprep.mubr.f32.mxu0 0.0
        %2089 = vmatmul.mubr.f32.gmra.mrb[0].mxu0 %v1417
        %v2090 = vpop.f32.mrb[0].mxu0
        %v2091 = vadd.f32 0.0, %v2090
        %v2092 = vpop.f32.mrb[0].mxu0
        %2093 = vdwg.mxu0
        %v2094 = vld [vmem:[%s478] sm:$0xff]
        %v2095 = vld [vmem:[%s478 + $0x8] sm:$0xff]
        %v2096 = vld [vmem:[#allocation2] sm:$0xff]
        %v2097 = vld [vmem:[#allocation2 + $0x8] sm:$0xff]
        %v2098 = vld [vmem:[#allocation2 + $0x10] sm:$0xff]
        %v2099 = vld [vmem:[#allocation2 + $0x18] sm:$0xff]
        %2101 = vset.pattern.permute.xlu0 0
        %2102 = vperm.xlu0 %2101, %v2094
        %v2103 = vpop.permute.xlu0 %2102
        %2106 = vset.pattern.permute.xlu0 0
        %2107 = vperm.xlu0 %2106, %v2095
        %v2108 = vpop.permute.xlu0 %2107
        %v2111 = vsel %vm1272, %v2097, 0
        %v2114 = vsel %vm1272, %v2099, 0
        %2116 = vmatprep.subr.mxu0 0.0
        %2117 = vmatpush1.msra.mxu0 %v1486
        %2118 = vmatprep.subr.mxu0 0.0
        %2119 = vmatpush1.msra.mxu0 %v1491
        %2120 = vmatprep.subr.mxu0 0.0
        %2121 = vmatpush1.msra.mxu0 %v1561
        %2122 = vmatprep.subr.mxu0 0.0
        %2123 = vmatpush1.msra.mxu0 %v1566
        %2124 = vmatprep.subr.mxu0 0.0
        %2125 = vmatpush1.msra.mxu0 %v1636
        %2126 = vmatprep.subr.mxu0 0.0
        %2127 = vmatpush1.msra.mxu0 %v1641
        %2128 = vmatprep.subr.mxu0 0.0
        %2129 = vmatpush1.msra.mxu0 %v1711
        %2130 = vmatprep.subr.mxu0 0.0
        %2131 = vmatpush1.msra.mxu0 %v1716
        %2132 = vmatprep.subr.mxu0 0.0
        %2133 = vmatpush1.msra.mxu0 %v1786
        %2134 = vmatprep.subr.mxu0 0.0
        %2135 = vmatpush1.msra.mxu0 %v1791
        %2136 = vmatprep.subr.mxu0 0.0
        %2137 = vmatpush1.msra.mxu0 %v1861
        %2138 = vmatprep.subr.mxu0 0.0
        %2139 = vmatpush1.msra.mxu0 %v1866
        %2140 = vmatprep.subr.mxu0 0.0
        %2141 = vmatpush1.msra.mxu0 %v1936
        %2142 = vmatprep.subr.mxu0 0.0
        %2143 = vmatpush1.msra.mxu0 %v1941
        %2144 = vmatprep.subr.mxu0 0.0
        %2145 = vmatpush1.msra.mxu0 %v2011
        %2146 = vmatprep.subr.mxu0 0.0
        %2147 = vmatpush1.msra.mxu0 %v2016
        %2148 = vmatprep.subr.mxu0 0.0
        %2149 = vmatpush1.msra.mxu0 %v2086
        %2150 = vmatprep.subr.mxu0 0.0
        %2151 = vmatpush1.msra.mxu0 %v2091
        %2152 = vmatprep.subr.mxu0 0.0
        %2153 = vmatpush1.msra.mxu0 0.0
        %2154 = vmatprep.subr.mxu0 0.0
        %2155 = vmatpush1.msra.mxu0 0.0
        %2156 = vmatprep.subr.mxu0 0.0
        %2157 = vmatpush1.msra.mxu0 0.0
        %2158 = vmatprep.subr.mxu0 0.0
        %2159 = vmatpush1.msra.mxu0 0.0
        %2160 = vmatprep.subr.mxu0 0.0
        %2161 = vmatpush1.msra.mxu0 0.0
        %2162 = vmatprep.subr.mxu0 0.0
        %2163 = vmatpush1.msra.mxu0 0.0
        %2164 = vmatprep.subr.mxu0 0.0
        %2165 = vmatpush1.msra.mxu0 0.0
        %2166 = vmatprep.subr.mxu0 0.0
        %2167 = vmatpush1.msra.mxu0 0.0
        %2168 = vmatprep.subr.mxu0 0.0
        %2169 = vmatpush1.msra.mxu0 0.0
        %2170 = vmatprep.subr.mxu0 0.0
        %2171 = vmatpush1.msra.mxu0 0.0
        %2172 = vmatprep.subr.mxu0 0.0
        %2173 = vmatpush1.msra.mxu0 0.0
        %2174 = vmatprep.subr.mxu0 0.0
        %2175 = vmatpush1.msra.mxu0 0.0
        %2176 = vmatprep.subr.mxu0 0.0
        %2177 = vmatpush1.msra.mxu0 0.0
        %2178 = vmatprep.subr.mxu0 0.0
        %2179 = vmatpush1.msra.mxu0 0.0
        %2180 = vmatprep.mubr.f32.mxu0 %v2111
        %2181 = vmatmul.mubr.f32.gmra.mrb[0].mxu0 %v2096
        %v2182 = vpop.f32.mrb[0].mxu0
        %v2183 = vadd.f32 %v2103, %v2182
        %v2184 = vpop.f32.mrb[0].mxu0
        %2185 = vmatprep.mubr.f32.mxu0 %v2114
        %2186 = vmatmul.mubr.f32.gmra.mrb[0].mxu0 %v2098
        %v2187 = vpop.f32.mrb[0].mxu0
        %v2188 = vadd.f32 %v2108, %v2187
        %v2189 = vpop.f32.mrb[0].mxu0
        %2190 = vdwg.mxu0
        %v2191 = vsel %vm502, %v2183, 0.0
        %v2192 = vsel %vm502, %v2188, 0.0
        %v2193 = vadd.f32 %v2191, %v2192
        %2194 = vadd.xlane.f32.xlu0 %v2193
        %v2195 = vpop.xlane.xlu0 %2194
        %v2196 = vrot.slane %v2195, 4
        %v2197 = vadd.f32 %v2195, %v2196
        %v2198 = vrot.slane %v2197, 2
        %v2199 = vadd.f32 %v2197, %v2198
        %v2200 = vrot.slane %v2199, 1
        %v2201 = vadd.f32 %v2199, %v2200
        %s2202 = vtos %v2201
        %v2203 = vstv %s2202
        %v2204 = vmul.f32 %v2203, %v1367
        %v2205 = vsub.f32 %v2183, %v2204
        %v2206 = vsub.f32 %v2188, %v2204
        %v2207 = vmul.f32 %v2205, %v2205
        %v2208 = vmul.f32 %v2206, %v2206
        %v2209 = vsel %vm502, %v2207, 0.0
        %v2210 = vsel %vm502, %v2208, 0.0
        %v2211 = vadd.f32 %v2209, %v2210
        %2212 = vadd.xlane.f32.xlu0 %v2211
        %v2213 = vpop.xlane.xlu0 %2212
        %v2214 = vrot.slane %v2213, 4
        %v2215 = vadd.f32 %v2213, %v2214
        %v2216 = vrot.slane %v2215, 2
        %v2217 = vadd.f32 %v2215, %v2216
        %v2218 = vrot.slane %v2217, 1
        %v2219 = vadd.f32 %v2217, %v2218
        %s2220 = vtos %v2219
        %v2221 = vstv %s2220
        %v2222 = vmul.f32 %v2221, %v1367
        %v2223 = vadd.f32 %v2222, 1e-05
        %v2224 = vrsqrt.pop %v2223
        %v2225 = vmul.f32 %v2205, %v2224
        %v2226 = vmul.f32 %v2206, %v2224
        %2227 = vset.pattern.permute.xlu0 1
        %2228 = vperm.xlu0 %2227, %v2094
        %v2229 = vpop.permute.xlu0 %2228
        %2231 = vset.pattern.permute.xlu0 1
        %2232 = vperm.xlu0 %2231, %v2095
        %v2233 = vpop.permute.xlu0 %2232
        %v2235 = vmul.f32 %v2225, %v2229
        %v2236 = vmul.f32 %v2226, %v2233
        %2237 = vset.pattern.permute.xlu0 2
        %2238 = vperm.xlu0 %2237, %v2094
        %v2239 = vpop.permute.xlu0 %2238
        %2241 = vset.pattern.permute.xlu0 2
        %2242 = vperm.xlu0 %2241, %v2095
        %v2243 = vpop.permute.xlu0 %2242
        %v2245 = vadd.f32 %v2235, %v2239
        %v2246 = vadd.f32 %v2236, %v2243
        %v2247 = vld [vmem:[%s6] sm:$0xff]
        %v2248 = vld [vmem:[%s6 + $0x8] sm:$0xff]
        %v2249 = vld [vmem:[%s6 + $0x10] sm:$0xff]
        %v2250 = vld [vmem:[%s6 + $0x18] sm:$0xff]
        %v2251 = vld [vmem:[%s6 + $0x20] sm:$0xff]
        %v2252 = vld [vmem:[%s6 + $0x28] sm:$0xff]
        %v2253 = vld [vmem:[%s6 + $0x30] sm:$0xff]
        %v2254 = vld [vmem:[%s6 + $0x38] sm:$0xff]
        %v2256 = vsel %vm502, %v2245, 0
        %v2259 = vsel %vm502, %v2246, 0
        %2261 = vmatprep.subr.mxu0 0.0
        %2262 = vmatpush1.msra.mxu0 %v2247
        %2263 = vmatprep.subr.mxu0 0.0
        %2264 = vmatpush1.msra.mxu0 %v2248
        %2265 = vmatprep.subr.mxu0 0.0
        %2266 = vmatpush1.msra.mxu0 %v2249
        %2267 = vmatprep.subr.mxu0 0.0
        %2268 = vmatpush1.msra.mxu0 %v2250
        %2269 = vmatprep.subr.mxu0 0.0
        %2270 = vmatpush1.msra.mxu0 %v2251
        %2271 = vmatprep.subr.mxu0 0.0
        %2272 = vmatpush1.msra.mxu0 %v2252
        %2273 = vmatprep.subr.mxu0 0.0
        %2274 = vmatpush1.msra.mxu0 %v2253
        %2275 = vmatprep.subr.mxu0 0.0
        %2276 = vmatpush1.msra.mxu0 %v2254
        %2277 = vmatprep.subr.mxu0 0.0
        %2278 = vmatpush1.msra.mxu0 0.0
        %2279 = vmatprep.subr.mxu0 0.0
        %2280 = vmatpush1.msra.mxu0 0.0
        %2281 = vmatprep.subr.mxu0 0.0
        %2282 = vmatpush1.msra.mxu0 0.0
        %2283 = vmatprep.subr.mxu0 0.0
        %2284 = vmatpush1.msra.mxu0 0.0
        %2285 = vmatprep.subr.mxu0 0.0
        %2286 = vmatpush1.msra.mxu0 0.0
        %2287 = vmatprep.subr.mxu0 0.0
        %2288 = vmatpush1.msra.mxu0 0.0
        %2289 = vmatprep.subr.mxu0 0.0
        %2290 = vmatpush1.msra.mxu0 0.0
        %2291 = vmatprep.subr.mxu0 0.0
        %2292 = vmatpush1.msra.mxu0 0.0
        %2293 = vmatprep.subr.mxu0 0.0
        %2294 = vmatpush1.msra.mxu0 0.0
        %2295 = vmatprep.subr.mxu0 0.0
        %2296 = vmatpush1.msra.mxu0 0.0
        %2297 = vmatprep.subr.mxu0 0.0
        %2298 = vmatpush1.msra.mxu0 0.0
        %2299 = vmatprep.subr.mxu0 0.0
        %2300 = vmatpush1.msra.mxu0 0.0
        %2301 = vmatprep.subr.mxu0 0.0
        %2302 = vmatpush1.msra.mxu0 0.0
        %2303 = vmatprep.subr.mxu0 0.0
        %2304 = vmatpush1.msra.mxu0 0.0
        %2305 = vmatprep.subr.mxu0 0.0
        %2306 = vmatpush1.msra.mxu0 0.0
        %2307 = vmatprep.subr.mxu0 0.0
        %2308 = vmatpush1.msra.mxu0 0.0
        %2309 = vmatprep.subr.mxu0 0.0
        %2310 = vmatpush1.msra.mxu0 0.0
        %2311 = vmatprep.subr.mxu0 0.0
        %2312 = vmatpush1.msra.mxu0 0.0
        %2313 = vmatprep.subr.mxu0 0.0
        %2314 = vmatpush1.msra.mxu0 0.0
        %2315 = vmatprep.subr.mxu0 0.0
        %2316 = vmatpush1.msra.mxu0 0.0
        %2317 = vmatprep.subr.mxu0 0.0
        %2318 = vmatpush1.msra.mxu0 0.0
        %2319 = vmatprep.subr.mxu0 0.0
        %2320 = vmatpush1.msra.mxu0 0.0
        %2321 = vmatprep.subr.mxu0 0.0
        %2322 = vmatpush1.msra.mxu0 0.0
        %2323 = vmatprep.subr.mxu0 0.0
        %2324 = vmatpush1.msra.mxu0 0.0
        %2325 = vmatprep.mubr.f32.mxu0 0.0
        %2326 = vmatmul.mubr.f32.gmra.mrb[0].mxu0 %v2256
        %v2327 = vpop.f32.mrb[0].mxu0
        %v2328 = vadd.f32 0.0, %v2327
        %v2329 = vpop.f32.mrb[0].mxu0
        %2330 = vmatprep.mubr.f32.mxu0 0.0
        %2331 = vmatmul.mubr.f32.gmra.mrb[0].mxu0 %v2259
        %v2332 = vpop.f32.mrb[0].mxu0
        %v2333 = vadd.f32 0.0, %v2332
        %v2334 = vpop.f32.mrb[0].mxu0
        %2335 = vdwg.mxu0
        %v2336 = vld [vmem:[%s482] sm:$0x3f]
        %v2337 = vld [vmem:[#allocation4] sm:$0xff]
        %v2338 = vld [vmem:[#allocation4 + $0x8] sm:$0xff]
        %v2339 = vlaneseq
        %v2340 = vshrl.u32 %v2339, 7
        %v2341 = vsub.s32 0, %v2340
        %v2342 = vrot.slane %v2336, %v2341
        %v2344 = vsel %vm1272, %v2328, 0
        %v2347 = vsel %vm1272, %v2333, 0
        %2349 = vmatprep.subr.mxu0 0.0
        %2350 = vmatpush1.msra.mxu0 %v2337
        %2351 = vmatprep.subr.mxu0 0.0
        %2352 = vmatpush1.msra.mxu0 %v2338
        %2353 = vmatprep.subr.mxu0 0.0
        %2354 = vmatpush1.msra.mxu0 0.0
        %2355 = vmatprep.subr.mxu0 0.0
        %2356 = vmatpush1.msra.mxu0 0.0
        %2357 = vmatprep.subr.mxu0 0.0
        %2358 = vmatpush1.msra.mxu0 0.0
        %2359 = vmatprep.subr.mxu0 0.0
        %2360 = vmatpush1.msra.mxu0 0.0
        %2361 = vmatprep.subr.mxu0 0.0
        %2362 = vmatpush1.msra.mxu0 0.0
        %2363 = vmatprep.subr.mxu0 0.0
        %2364 = vmatpush1.msra.mxu0 0.0
        %2365 = vmatprep.subr.mxu0 0.0
        %2366 = vmatpush1.msra.mxu0 0.0
        %2367 = vmatprep.subr.mxu0 0.0
        %2368 = vmatpush1.msra.mxu0 0.0
        %2369 = vmatprep.subr.mxu0 0.0
        %2370 = vmatpush1.msra.mxu0 0.0
        %2371 = vmatprep.subr.mxu0 0.0
        %2372 = vmatpush1.msra.mxu0 0.0
        %2373 = vmatprep.subr.mxu0 0.0
        %2374 = vmatpush1.msra.mxu0 0.0
        %2375 = vmatprep.subr.mxu0 0.0
        %2376 = vmatpush1.msra.mxu0 0.0
        %2377 = vmatprep.subr.mxu0 0.0
        %2378 = vmatpush1.msra.mxu0 0.0
        %2379 = vmatprep.subr.mxu0 0.0
        %2380 = vmatpush1.msra.mxu0 0.0
        %2381 = vmatprep.subr.mxu0 0.0
        %2382 = vmatpush1.msra.mxu0 0.0
        %2383 = vmatprep.subr.mxu0 0.0
        %2384 = vmatpush1.msra.mxu0 0.0
        %2385 = vmatprep.subr.mxu0 0.0
        %2386 = vmatpush1.msra.mxu0 0.0
        %2387 = vmatprep.subr.mxu0 0.0
        %2388 = vmatpush1.msra.mxu0 0.0
        %2389 = vmatprep.subr.mxu0 0.0
        %2390 = vmatpush1.msra.mxu0 0.0
        %2391 = vmatprep.subr.mxu0 0.0
        %2392 = vmatpush1.msra.mxu0 0.0
        %2393 = vmatprep.subr.mxu0 0.0
        %2394 = vmatpush1.msra.mxu0 0.0
        %2395 = vmatprep.subr.mxu0 0.0
        %2396 = vmatpush1.msra.mxu0 0.0
        %2397 = vmatprep.subr.mxu0 0.0
        %2398 = vmatpush1.msra.mxu0 0.0
        %2399 = vmatprep.subr.mxu0 0.0
        %2400 = vmatpush1.msra.mxu0 0.0
        %2401 = vmatprep.subr.mxu0 0.0
        %2402 = vmatpush1.msra.mxu0 0.0
        %2403 = vmatprep.subr.mxu0 0.0
        %2404 = vmatpush1.msra.mxu0 0.0
        %2405 = vmatprep.subr.mxu0 0.0
        %2406 = vmatpush1.msra.mxu0 0.0
        %2407 = vmatprep.subr.mxu0 0.0
        %2408 = vmatpush1.msra.mxu0 0.0
        %2409 = vmatprep.subr.mxu0 0.0
        %2410 = vmatpush1.msra.mxu0 0.0
        %2411 = vmatprep.subr.mxu0 0.0
        %2412 = vmatpush1.msra.mxu0 0.0
        %2413 = vmatprep.mubr.f32.mxu0 0.0
        %2414 = vmatmul.mubr.f32.gmra.mrb[0].mxu0 %v2344
        %v2415 = vpop.f32.mrb[0].mxu0
        %v2416 = vadd.f32 %v2342, %v2415
        %v2417 = vpop.f32.mrb[0].mxu0
        %2418 = vmatprep.mubr.f32.mxu0 0.0
        %2419 = vmatmul.mubr.f32.gmra.mrb[0].mxu0 %v2347
        %v2420 = vpop.f32.mrb[0].mxu0
        %v2421 = vadd.f32 %v2342, %v2420
        %v2422 = vpop.f32.mrb[0].mxu0
        %2423 = vdwg.mxu0
        %v2424 = vsel %vm1272, %v2416, 0.0
        %2425 = vadd.xlane.f32.xlu0 %v2424
        %v2426 = vpop.xlane.xlu0 %2425
        %v2427 = vsel %vm1272, %v2421, 0.0
        %2428 = vadd.xlane.f32.xlu0 %v2427
        %v2429 = vpop.xlane.xlu0 %2428
        %v2430 = vrcp.pop 16.0
        %v2431 = vmul.f32 %v2426, %v2430
        %v2432 = vmul.f32 %v2429, %v2430
        %v2433 = vsub.f32 %v2416, %v2431
        %v2434 = vsub.f32 %v2421, %v2432
        %v2435 = vmul.f32 %v2433, %v2433
        %v2436 = vmul.f32 %v2434, %v2434
        %v2437 = vsel %vm1272, %v2435, 0.0
        %2438 = vadd.xlane.f32.xlu0 %v2437
        %v2439 = vpop.xlane.xlu0 %2438
        %v2440 = vsel %vm1272, %v2436, 0.0
        %2441 = vadd.xlane.f32.xlu0 %v2440
        %v2442 = vpop.xlane.xlu0 %2441
        %v2443 = vmul.f32 %v2439, %v2430
        %v2444 = vmul.f32 %v2442, %v2430
        %v2445 = vadd.f32 %v2443, 1e-05
        %v2446 = vadd.f32 %v2444, 1e-05
        %v2447 = vrsqrt.pop %v2445
        %v2448 = vrsqrt.pop %v2446
        %v2449 = vmul.f32 %v2433, %v2447
        %v2450 = vmul.f32 %v2434, %v2448
        %v2451 = vlaneseq
        %v2452 = vshrl.u32 %v2451, 7
        %v2453 = vsub.s32 1, %v2452
        %v2454 = vrot.slane %v2336, %v2453
        %v2455 = vmul.f32 %v2449, %v2454
        %v2456 = vmul.f32 %v2450, %v2454
        %v2457 = vlaneseq
        %v2458 = vshrl.u32 %v2457, 7
        %v2459 = vsub.s32 2, %v2458
        %v2460 = vrot.slane %v2336, %v2459
        %v2461 = vadd.f32 %v2455, %v2460
        %v2462 = vadd.f32 %v2456, %v2460
        %v2463 = vmax.f32 %v2461, 0.0
        %v2464 = vmax.f32 %v2462, 0.0
        %s2465 = scalar_lea.vmem [#allocation4], 16
        %v2466 = vld [vmem:[%s2465] sm:$0xff]
        %v2467 = vld [vmem:[%s2465 + $0x8] sm:$0xff]
        %v2468 = vlaneseq
        %v2469 = vshrl.u32 %v2468, 7
        %v2470 = vsub.s32 3, %v2469
        %v2471 = vrot.slane %v2336, %v2470
        %v2473 = vsel %vm1272, %v2463, 0
        %v2476 = vsel %vm1272, %v2464, 0
        %2478 = vmatprep.subr.mxu0 0.0
        %2479 = vmatpush1.msra.mxu0 %v2466
        %2480 = vmatprep.subr.mxu0 0.0
        %2481 = vmatpush1.msra.mxu0 %v2467
        %2482 = vmatprep.subr.mxu0 0.0
        %2483 = vmatpush1.msra.mxu0 0.0
        %2484 = vmatprep.subr.mxu0 0.0
        %2485 = vmatpush1.msra.mxu0 0.0
        %2486 = vmatprep.subr.mxu0 0.0
        %2487 = vmatpush1.msra.mxu0 0.0
        %2488 = vmatprep.subr.mxu0 0.0
        %2489 = vmatpush1.msra.mxu0 0.0
        %2490 = vmatprep.subr.mxu0 0.0
        %2491 = vmatpush1.msra.mxu0 0.0
        %2492 = vmatprep.subr.mxu0 0.0
        %2493 = vmatpush1.msra.mxu0 0.0
        %2494 = vmatprep.subr.mxu0 0.0
        %2495 = vmatpush1.msra.mxu0 0.0
        %2496 = vmatprep.subr.mxu0 0.0
        %2497 = vmatpush1.msra.mxu0 0.0
        %2498 = vmatprep.subr.mxu0 0.0
        %2499 = vmatpush1.msra.mxu0 0.0
        %2500 = vmatprep.subr.mxu0 0.0
        %2501 = vmatpush1.msra.mxu0 0.0
        %2502 = vmatprep.subr.mxu0 0.0
        %2503 = vmatpush1.msra.mxu0 0.0
        %2504 = vmatprep.subr.mxu0 0.0
        %2505 = vmatpush1.msra.mxu0 0.0
        %2506 = vmatprep.subr.mxu0 0.0
        %2507 = vmatpush1.msra.mxu0 0.0
        %2508 = vmatprep.subr.mxu0 0.0
        %2509 = vmatpush1.msra.mxu0 0.0
        %2510 = vmatprep.subr.mxu0 0.0
        %2511 = vmatpush1.msra.mxu0 0.0
        %2512 = vmatprep.subr.mxu0 0.0
        %2513 = vmatpush1.msra.mxu0 0.0
        %2514 = vmatprep.subr.mxu0 0.0
        %2515 = vmatpush1.msra.mxu0 0.0
        %2516 = vmatprep.subr.mxu0 0.0
        %2517 = vmatpush1.msra.mxu0 0.0
        %2518 = vmatprep.subr.mxu0 0.0
        %2519 = vmatpush1.msra.mxu0 0.0
        %2520 = vmatprep.subr.mxu0 0.0
        %2521 = vmatpush1.msra.mxu0 0.0
        %2522 = vmatprep.subr.mxu0 0.0
        %2523 = vmatpush1.msra.mxu0 0.0
        %2524 = vmatprep.subr.mxu0 0.0
        %2525 = vmatpush1.msra.mxu0 0.0
        %2526 = vmatprep.subr.mxu0 0.0
        %2527 = vmatpush1.msra.mxu0 0.0
        %2528 = vmatprep.subr.mxu0 0.0
        %2529 = vmatpush1.msra.mxu0 0.0
        %2530 = vmatprep.subr.mxu0 0.0
        %2531 = vmatpush1.msra.mxu0 0.0
        %2532 = vmatprep.subr.mxu0 0.0
        %2533 = vmatpush1.msra.mxu0 0.0
        %2534 = vmatprep.subr.mxu0 0.0
        %2535 = vmatpush1.msra.mxu0 0.0
        %2536 = vmatprep.subr.mxu0 0.0
        %2537 = vmatpush1.msra.mxu0 0.0
        %2538 = vmatprep.subr.mxu0 0.0
        %2539 = vmatpush1.msra.mxu0 0.0
        %2540 = vmatprep.subr.mxu0 0.0
        %2541 = vmatpush1.msra.mxu0 0.0
        %2542 = vmatprep.mubr.f32.mxu0 0.0
        %2543 = vmatmul.mubr.f32.gmra.mrb[0].mxu0 %v2473
        %v2544 = vpop.f32.mrb[0].mxu0
        %v2545 = vadd.f32 %v2471, %v2544
        %v2546 = vpop.f32.mrb[0].mxu0
        %2547 = vmatprep.mubr.f32.mxu0 0.0
        %2548 = vmatmul.mubr.f32.gmra.mrb[0].mxu0 %v2476
        %v2549 = vpop.f32.mrb[0].mxu0
        %v2550 = vadd.f32 %v2471, %v2549
        %v2551 = vpop.f32.mrb[0].mxu0
        %2552 = vdwg.mxu0
        %v2553 = vsel %vm1272, %v2545, 0.0
        %2554 = vadd.xlane.f32.xlu0 %v2553
        %v2555 = vpop.xlane.xlu0 %2554
        %v2556 = vsel %vm1272, %v2550, 0.0
        %2557 = vadd.xlane.f32.xlu0 %v2556
        %v2558 = vpop.xlane.xlu0 %2557
        %v2559 = vmul.f32 %v2555, %v2430
        %v2560 = vmul.f32 %v2558, %v2430
        %v2561 = vsub.f32 %v2545, %v2559
        %v2562 = vsub.f32 %v2550, %v2560
        %v2563 = vmul.f32 %v2561, %v2561
        %v2564 = vmul.f32 %v2562, %v2562
        %v2565 = vsel %vm1272, %v2563, 0.0
        %2566 = vadd.xlane.f32.xlu0 %v2565
        %v2567 = vpop.xlane.xlu0 %2566
        %v2568 = vsel %vm1272, %v2564, 0.0
        %2569 = vadd.xlane.f32.xlu0 %v2568
        %v2570 = vpop.xlane.xlu0 %2569
        %v2571 = vmul.f32 %v2567, %v2430
        %v2572 = vmul.f32 %v2570, %v2430
        %v2573 = vadd.f32 %v2571, 1e-05
        %v2574 = vadd.f32 %v2572, 1e-05
        %v2575 = vrsqrt.pop %v2573
        %v2576 = vrsqrt.pop %v2574
        %v2577 = vmul.f32 %v2561, %v2575
        %v2578 = vmul.f32 %v2562, %v2576
        %v2579 = vlaneseq
        %v2580 = vshrl.u32 %v2579, 7
        %v2581 = vsub.s32 4, %v2580
        %v2582 = vrot.slane %v2336, %v2581
        %v2583 = vmul.f32 %v2577, %v2582
        %v2584 = vmul.f32 %v2578, %v2582
        %v2585 = vlaneseq
        %v2586 = vshrl.u32 %v2585, 7
        %v2587 = vsub.s32 5, %v2586
        %v2588 = vrot.slane %v2336, %v2587
        %v2589 = vadd.f32 %v2583, %v2588
        %v2590 = vadd.f32 %v2584, %v2588
        %2591 = vst.msk [vmem:[%s491] sm:$0xff] %vm1272, %v2589
        %2592 = vst.msk [vmem:[%s491 + $0x8] sm:$0xff] %vm1272, %v2590
        %p2593 = scmp.lt.s32.totalorder %s26, 0
        %s2594 = scalar_select %p2593, %s26, 0
        %p2595 = scmp.lt.s32.totalorder %s27, 1
        %s2596 = scalar_select %p2595, %s27, 1
        %s2597 = smul.addr %s2596, 2
        %s2598 = smul.addr %s2594, 4
        %s2599 = sadd.s32 %s2597, %s2598
        %s2600 = smul.addr %s2599, 8
        %s2601 = scalar_lea.vmem %s9, %s2600
        // Predicated region
        $region65: #{cla_forward.5} parent=55 // pred_check
          %p2602 = pneg %p280
        $region66: #{cla_forward.5} parent=55 // pred_check_branch
          %2604 = sbr.rel (%p2602) target = $region68
        $region67: #{cla_forward.5} parent=55 // pred_region
          _
        $region68: #{cla_forward.5} parent=55 // pred_fallthru
          _
      $region56: #{cla_forward.5} parent=5 // pred_fallthru
        _
      %p2605 = scmp.le.s32.totalorder 2, %s17
      // Predicated region
      $region69: #{cla_forward.5} parent=5 // pred_check
        %p2606 = pneg %p2605
      $region70: #{cla_forward.5} parent=5 // pred_check_branch
        %2608 = sbr.rel (%p2606) target = $region72
      $region71: #{cla_forward.5} parent=5 // pred_region
        %s2609 = ssub.s32 %s17, 2
        // Predicated region
        $region73: #{cla_forward.5} parent=71 // pred_check
          %p2610 = pneg %p286
        $region74: #{cla_forward.5} parent=71 // pred_check_branch
          %2612 = sbr.rel (%p2610) target = $region76
        $region75: #{cla_forward.5} parent=71 // pred_region
          %p2613 = scmp.lt.s32.totalorder %s28, 0
          %s2614 = scalar_select %p2613, %s28, 0
          %p2615 = scmp.lt.s32.totalorder %s29, 1
          %s2616 = scalar_select %p2615, %s29, 1
          %s2617 = smul.addr %s2616, 2
          %s2618 = smul.addr %s2614, 4
          %s2619 = sadd.s32 %s2617, %s2618
          %s2620 = smul.addr %s2619, 8
          %s2621 = scalar_lea.vmem %s9, %s2620
        $region76: #{cla_forward.5} parent=71 // pred_fallthru
          _
      $region72: #{cla_forward.5} parent=5 // pred_fallthru
        _
    $region6: #{cla_forward.5} parent=1 // loop_footer
      %s21 = sadd.s32 1, %s17
    $region7: #{cla_forward.5} parent=1 // loop_footer_branch
      %16 = sbr.rel target = $region3
    $region8: #{cla_forward.5} parent=1 // loop_exit
      _
    %2622 = vsyncpa [#allocation3], 1
    %s2623 = scalar_lea.sflag [#allocation3], 1
    %2624 = vsyncpa %s2623, 1
    %2625 = vsyncpa [#allocation5], 1

</llo_original>
